<compile_context>
chip_gen: v7x
topology: tpu7x:2x2x1
jax: 0.10.0
libtpu: 0.0.40
codegen_flags: <defaults>
</compile_context>

<pallas_src>
import functools

import jax
import jax.numpy as jnp
from jax import lax
from jax.experimental import pallas as pl
from jax.experimental.pallas import tpu as pltpu

EPS = 1e-5
LANE = 128


def _round_up(x, m):
    return (x + m - 1) // m * m


def _vmem_limit_bytes():
    # Per-generation VMEM budget: ~3/4 of physical, capped at 100 MiB.
    # -> ~48 MiB on v7x (64 MiB physical), ~96 MiB on v5e/v6e (128 MiB physical).
    try:
        cap = int(pltpu.get_tpu_info().vmem_capacity_bytes)
    except Exception:
        cap = 128 * 1024 * 1024
    return int(min((cap * 3) // 4, 100 * 1024 * 1024))


def _compiler_params():
    return pltpu.CompilerParams(
        dimension_semantics=("parallel",),      # one image per grid step
        vmem_limit_bytes=_vmem_limit_bytes(),
    )


# ----------------------------- in-kernel helpers -----------------------------


def _conv3x3_from_slab(src_ref, w_ref, *, wp, rows_out):
    """3x3/pad=1 conv on a zero-padded row slab held in VMEM.

    src_ref : ((H+3)*wp, Cin) ref — padded image rows, flattened with stride wp.
    w_ref   : (9, Cin, Cout) ref — tap-major weights (kh*3+kw).
    Returns the f32 accumulator (rows_out, Cout); slab row o = h*wp + w holds output
    pixel (h, w) for w < wp-2 (the last two columns per row-block are garbage).
    Tap (kh, kw) is the shifted contiguous window starting at row kh*wp + kw.
    """
    acc = None
    for k in range(9):
        kh, kw = divmod(k, 3)
        tap = src_ref[pl.ds(kh * wp + kw, rows_out), :]
        part = jnp.dot(tap, w_ref[k], preferred_element_type=jnp.float32)
        acc = part if acc is None else acc + part
    return acc


def _emit_stats(stats_ref, acc, mask):
    """Per-image (sum, sum-of-squares) over valid rows, from the f32 accumulator."""
    am = acc * mask                              # mask is 0/1, so am*acc == mask*acc^2
    stats_ref[0:1, :] = jnp.sum(am, axis=0, keepdims=True)
    stats_ref[1:2, :] = jnp.sum(am * acc, axis=0, keepdims=True)


# ----------------------------- kernels ---------------------------------------


def _conv1_kernel(x_ref, w_ref, b_ref, mask_ref, y_ref, stats_ref, *, wp, rows_out):
    """conv1 on the padded input slab + per-image BN1 batch statistics."""
    acc = _conv3x3_from_slab(x_ref, w_ref, wp=wp, rows_out=rows_out) + b_ref[...]
    y_ref[...] = acc.astype(y_ref.dtype)         # raw conv1 output, compute dtype
    _emit_stats(stats_ref, acc, mask_ref[...])


def _conv2_kernel(y1_ref, w_ref, b_ref, mask_ref, scale1_ref, shift1_ref, alpha_ref,
                  y_ref, stats_ref, x2_scr, *, wp, rows_out, rows_in, c_in):
    """Fused BN1 affine + PReLU on conv1's raw output, then conv2 + BN2 statistics."""
    head = wp + 1
    tail = rows_in - head - rows_out
    # Zero padding ring / tail rows of the scratch slab (re-done every step so it is
    # correct on both v7x TensorCores; it is a tiny VMEM fill).
    x2_scr[pl.ds(0, head), :] = jnp.zeros((head, c_in), x2_scr.dtype)
    x2_scr[pl.ds(head + rows_out, tail), :] = jnp.zeros((tail, c_in), x2_scr.dtype)

    y1 = y1_ref[:, 0:c_in].astype(jnp.float32)
    a1 = y1 * scale1_ref[...] + shift1_ref[...]          # BN1 affine (f32)
    a1 = jnp.where(a1 > 0, a1, alpha_ref[0] * a1)        # PReLU, alpha from SMEM
    a1 = a1 * mask_ref[...]                               # zero garbage cols -> pad ring
    x2_scr[pl.ds(head, rows_out), :] = a1.astype(x2_scr.dtype)

    acc = _conv3x3_from_slab(x2_scr, w_ref, wp=wp, rows_out=rows_out) + b_ref[...]
    y_ref[...] = acc.astype(y_ref.dtype)
    _emit_stats(stats_ref, acc, mask_ref[...])


def _affine_add_kernel(y2_ref, scale_ref, shift_ref, x_ref, o_ref, *, wp, rows_out, c):
    """Folded BN2 affine + residual add (residual read from the unpadded-C input slab)."""
    y = y2_ref[:, 0:c].astype(jnp.float32) * scale_ref[...] + shift_ref[...]
    res = x_ref[pl.ds(wp + 1, rows_out), :].astype(jnp.float32)
    o_ref[...] = (res + y).astype(o_ref.dtype)


# ----------------------------- pallas_call wrappers ---------------------------


def conv1_call(x_slab, w, b, mask, *, wp, rows_out, cpad, out_dtype):
    n, rows_in, c = x_slab.shape
    kern = functools.partial(_conv1_kernel, wp=wp, rows_out=rows_out)
    return pl.pallas_call(
        kern,
        out_shape=(jax.ShapeDtypeStruct((n, rows_out, cpad), out_dtype),
                   jax.ShapeDtypeStruct((n, 2, cpad), jnp.float32)),
        grid=(n,),
        in_specs=[pl.BlockSpec((None, rows_in, c), lambda i: (i, 0, 0)),
                  pl.BlockSpec((9, c, cpad), lambda i: (0, 0, 0)),   # VMEM-resident
                  pl.BlockSpec((1, cpad), lambda i: (0, 0)),
                  pl.BlockSpec((rows_out, 1), lambda i: (0, 0))],
        out_specs=(pl.BlockSpec((None, rows_out, cpad), lambda i: (i, 0, 0)),
                   pl.BlockSpec((None, 2, cpad), lambda i: (i, 0, 0))),
        compiler_params=_compiler_params(),
    )(x_slab, w, b, mask)


def conv2_call(y1_slab, w, b, mask, scale1, shift1, alpha, *, wp, rows_in, c,
               compute_dtype):
    n, rows_out, cpad = y1_slab.shape
    kern = functools.partial(_conv2_kernel, wp=wp, rows_out=rows_out,
                             rows_in=rows_in, c_in=c)
    return pl.pallas_call(
        kern,
        out_shape=(jax.ShapeDtypeStruct((n, rows_out, cpad), compute_dtype),
                   jax.ShapeDtypeStruct((n, 2, cpad), jnp.float32)),
        grid=(n,),
        in_specs=[pl.BlockSpec((None, rows_out, cpad), lambda i: (i, 0, 0)),
                  pl.BlockSpec((9, c, cpad), lambda i: (0, 0, 0)),   # VMEM-resident
                  pl.BlockSpec((1, cpad), lambda i: (0, 0)),
                  pl.BlockSpec((rows_out, 1), lambda i: (0, 0)),
                  pl.BlockSpec((1, c), lambda i: (0, 0)),
                  pl.BlockSpec((1, c), lambda i: (0, 0)),
                  pl.BlockSpec(memory_space=pltpu.MemorySpace.SMEM)],
        out_specs=(pl.BlockSpec((None, rows_out, cpad), lambda i: (i, 0, 0)),
                   pl.BlockSpec((None, 2, cpad), lambda i: (i, 0, 0))),
        scratch_shapes=[pltpu.VMEM((rows_in, c), compute_dtype)],
        compiler_params=_compiler_params(),
    )(y1_slab, w, b, mask, scale1, shift1, alpha)


def affine_add_call(y2_slab, scale2, shift2, x_slab, *, wp, c):
    n, rows_out, cpad = y2_slab.shape
    rows_in = x_slab.shape[1]
    kern = functools.partial(_affine_add_kernel, wp=wp, rows_out=rows_out, c=c)
    return pl.pallas_call(
        kern,
        out_shape=jax.ShapeDtypeStruct((n, rows_out, c), jnp.float32),
        grid=(n,),
        in_specs=[pl.BlockSpec((None, rows_out, cpad), lambda i: (i, 0, 0)),
                  pl.BlockSpec((1, c), lambda i: (0, 0)),
                  pl.BlockSpec((1, c), lambda i: (0, 0)),
                  pl.BlockSpec((None, rows_in, c), lambda i: (i, 0, 0))],
        out_specs=pl.BlockSpec((None, rows_out, c), lambda i: (i, 0, 0)),
        compiler_params=_compiler_params(),
    )(y2_slab, scale2, shift2, x_slab)


# ----------------------------- glue ------------------------------------------


def _prep_weight(w33, cpad, dtype):
    kh, kw, cin, cout = w33.shape
    wm = w33.reshape(kh * kw, cin, cout)                  # tap-major
    wm = jnp.pad(wm, ((0, 0), (0, 0), (0, cpad - cout)))
    return wm.astype(dtype)


def _prep_bias(b, cpad):
    return jnp.pad(b.astype(jnp.float32), (0, cpad - b.shape[0])).reshape(1, cpad)


def _bn_affine(stats, gamma, beta, count, c):
    """Cross-image reduce of (sum, sumsq) -> folded (scale, shift).  Tiny, XLA-side."""
    # NOTE: E[x^2]-E[x]^2 in f32 (biased variance, training-mode BN); fine for
    # well-centered activations.  TODO(synk): Welford-style combine if needed.
    s = jnp.sum(stats[:, 0, :c], axis=0)
    ss = jnp.sum(stats[:, 1, :c], axis=0)
    mean = s / count
    var = jnp.maximum(ss / count - mean * mean, 0.0)
    scale = gamma.astype(jnp.float32) * lax.rsqrt(var + EPS)
    shift = beta.astype(jnp.float32) - mean * scale
    return scale.reshape(1, c), shift.reshape(1, c)


def _residual_block_impl(x_nchw, p, *, compute_dtype=jnp.bfloat16):
    """Forward of the PyTorch ResidualBlock (training-mode BN).  NCHW in/out."""
    n, c, h, w = x_nchw.shape
    wp = w + 2                                  # padded width (stride of one slab row-block)
    rows_in = (h + 3) * wp                      # padded-image slab rows (1 top / 2 bottom rows)
    rows_out = h * wp                           # output slab rows (cols >= w are garbage)
    cpad = _round_up(c, LANE)                   # lane-dense conv outputs
    pixels = n * h * w

    # Padded NHWC image flattened to a row slab: the 9 taps become constant row shifts.
    x_nhwc = jnp.transpose(x_nchw, (0, 2, 3, 1))
    x_slab = jnp.pad(x_nhwc, ((0, 0), (1, 2), (1, 1), (0, 0)))
    x_slab = x_slab.reshape(n, rows_in, c).astype(compute_dtype)

    # 1.0 on valid output columns, 0.0 on the two garbage columns per row-block.
    mask = ((jnp.arange(rows_out, dtype=jnp.int32) % wp) < w)
    mask = mask.astype(jnp.float32).reshape(rows_out, 1)

    w1 = _prep_weight(p["w1"], cpad, compute_dtype)
    w2 = _prep_weight(p["w2"], cpad, compute_dtype)
    b1, b2 = _prep_bias(p["b1"], cpad), _prep_bias(p["b2"], cpad)
    alpha = p["alpha"].astype(jnp.float32).reshape(1)

    # conv1 (raw) + BN1 batch statistics
    y1_slab, stats1 = conv1_call(x_slab, w1, b1, mask, wp=wp, rows_out=rows_out,
                                 cpad=cpad, out_dtype=compute_dtype)
    scale1, shift1 = _bn_affine(stats1, p["g1"], p["bt1"], pixels, c)

    # conv2 with fused BN1-affine + PReLU on its input, + BN2 batch statistics
    y2_slab, stats2 = conv2_call(y1_slab, w2, b2, mask, scale1, shift1, alpha,
                                 wp=wp, rows_in=rows_in, c=c,
                                 compute_dtype=compute_dtype)
    scale2, shift2 = _bn_affine(stats2, p["g2"], p["bt2"], pixels, c)

    # BN2 affine + residual add (residual from the unpadded-C input slab)
    out_slab = affine_add_call(y2_slab, scale2, shift2, x_slab, wp=wp, c=c)

    out = out_slab.reshape(n, h, wp, c)[:, :, :w, :]      # drop garbage columns
    return jnp.transpose(out, (0, 3, 1, 2))               # back to NCHW


residual_block = jax.jit(_residual_block_impl, static_argnames=("compute_dtype",))


# ----------------------------- reference (pure JAX) ---------------------------


def reference(x_nchw, p):
    def conv(x, w33, b):
        w = jnp.transpose(w33, (3, 2, 0, 1))               # -> OIHW
        y = lax.conv_general_dilated(x, w, (1, 1), "SAME",
                                     dimension_numbers=("NCHW", "OIHW", "NCHW"))
        return y + b.reshape(1, -1, 1, 1)

    def bn(x, g, bt):
        mean = jnp.mean(x, axis=(0, 2, 3), keepdims=True)
        var = jnp.mean((x - mean) ** 2, axis=(0, 2, 3), keepdims=True)
        return ((x - mean) * lax.rsqrt(var + EPS)
                * g.reshape(1, -1, 1, 1) + bt.reshape(1, -1, 1, 1))

    r = bn(conv(x_nchw, p["w1"], p["b1"]), p["g1"], p["bt1"])
    r = jnp.where(r > 0, r, p["alpha"][0] * r)
    r = bn(conv(r, p["w2"], p["b2"]), p["g2"], p["bt2"])
    return x_nchw + r


# ----------------------------- main -------------------------------------------


if __name__ == "__main__":
    N, C, H, W = 2, 4, 16, 16
    key = jax.random.PRNGKey(0)
    ks = jax.random.split(key, 10)

    fan_in = C * 9
    bound = 1.0 / (fan_in ** 0.5)
    params = {
        # conv weights stored as (kh, kw, Cin, Cout)
        "w1": jax.random.uniform(ks[0], (3, 3, C, C), jnp.float32, -bound, bound),
        "b1": jax.random.uniform(ks[1], (C,), jnp.float32, -bound, bound),
        "g1": 1.0 + 0.1 * jax.random.normal(ks[2], (C,), jnp.float32),
        "bt1": 0.1 * jax.random.normal(ks[3], (C,), jnp.float32),
        "alpha": jnp.full((1,), 0.25, jnp.float32),          # PReLU default init
        "w2": jax.random.uniform(ks[4], (3, 3, C, C), jnp.float32, -bound, bound),
        "b2": jax.random.uniform(ks[5], (C,), jnp.float32, -bound, bound),
        "g2": 1.0 + 0.1 * jax.random.normal(ks[6], (C,), jnp.float32),
        "bt2": 0.1 * jax.random.normal(ks[7], (C,), jnp.float32),
    }

    x = jax.random.normal(ks[8], (N, C, H, W), jnp.float32)
    ref = jax.block_until_ready(reference(x, params))

    # f32 end-to-end path: must match the reference tightly.
    out_f32 = jax.block_until_ready(
        residual_block(x, params, compute_dtype=jnp.float32))
    assert out_f32.shape == (N, C, H, W)
    err_f32 = float(jnp.max(jnp.abs(out_f32 - ref)))
    if not err_f32 < 2e-3:
        raise AssertionError(f"f32 Pallas ResidualBlock mismatch (max err {err_f32})")

    # Default bf16 matmul/intermediate path (BN/PReLU math stays f32).
    out_bf16 = jax.block_until_ready(residual_block(x, params))
    err_bf16 = float(jnp.max(jnp.abs(out_bf16 - ref)))
    if not err_bf16 < 0.25:
        raise AssertionError(f"bf16 Pallas ResidualBlock mismatch (max err {err_bf16})")

    print("KERNEL_OK")
</pallas_src>

<mosaic_0001>
module attributes {stable_mosaic.version = 11 : i64} {
  func.func @_conv1_kernel(%arg0: i32, %arg1: memref<1x342x4xf32, #tpu.memory_space<vmem>>, %arg2: memref<9x4x128xf32, #tpu.memory_space<vmem>>, %arg3: memref<1x128xf32, #tpu.memory_space<vmem>>, %arg4: memref<288x1xf32, #tpu.memory_space<vmem>>, %arg5: memref<1x288x128xf32, #tpu.memory_space<vmem>>, %arg6: memref<1x2x128xf32, #tpu.memory_space<vmem>>) attributes {dimension_semantics = [#tpu.dimension_semantics<parallel>], iteration_bounds = array<i64: 2>, scalar_prefetch = 0 : i64, scratch_operands = 0 : i64, tpu.core_type = #tpu.core_type<tc>, window_params = [{transform_indices = @transform_0, window_bounds = array<i64: 1, 342, 4>}, {pipeline_mode = #tpu.pipeline_mode<synchronous>, transform_indices = @transform_1, window_bounds = array<i64: 9, 4, 128>}, {pipeline_mode = #tpu.pipeline_mode<synchronous>, transform_indices = @transform_2, window_bounds = array<i64: 1, 128>}, {pipeline_mode = #tpu.pipeline_mode<synchronous>, transform_indices = @transform_3, window_bounds = array<i64: 288, 1>}, {transform_indices = @transform_4, window_bounds = array<i64: 1, 288, 128>}, {transform_indices = @transform_5, window_bounds = array<i64: 1, 2, 128>}]} {
    %c0 = arith.constant 0 : index
    %c0_0 = arith.constant 0 : index
    %c0_1 = arith.constant 0 : index
    %0 = vector.load %arg1[%c0, %c0_0, %c0_1] : memref<1x342x4xf32, #tpu.memory_space<vmem>>, vector<1x288x4xf32>
    %1 = vector.shape_cast %0 : vector<1x288x4xf32> to vector<288x4xf32>
    %c0_2 = arith.constant 0 : index
    %c0_3 = arith.constant 0 : index
    %c0_4 = arith.constant 0 : index
    %2 = vector.load %arg2[%c0_2, %c0_3, %c0_4] : memref<9x4x128xf32, #tpu.memory_space<vmem>>, vector<1x4x128xf32>
    %3 = vector.shape_cast %2 : vector<1x4x128xf32> to vector<4x128xf32>
    %cst = arith.constant dense<0.000000e+00> : vector<288x128xf32>
    %4 = tpu.matmul %1, %3, %cst {dimension_numbers = #tpu.dot_dimension_numbers<[1], [0], [0], [1], [0, 0, 1, 1], [], []>} : vector<288x4xf32>, vector<4x128xf32>, vector<288x128xf32> -> vector<288x128xf32>
    %c0_5 = arith.constant 0 : index
    %c1 = arith.constant 1 : index
    %c0_6 = arith.constant 0 : index
    %5 = vector.load %arg1[%c0_5, %c1, %c0_6] : memref<1x342x4xf32, #tpu.memory_space<vmem>>, vector<1x288x4xf32>
    %6 = vector.shape_cast %5 : vector<1x288x4xf32> to vector<288x4xf32>
    %c1_7 = arith.constant 1 : index
    %c0_8 = arith.constant 0 : index
    %c0_9 = arith.constant 0 : index
    %7 = vector.load %arg2[%c1_7, %c0_8, %c0_9] : memref<9x4x128xf32, #tpu.memory_space<vmem>>, vector<1x4x128xf32>
    %8 = vector.shape_cast %7 : vector<1x4x128xf32> to vector<4x128xf32>
    %cst_10 = arith.constant dense<0.000000e+00> : vector<288x128xf32>
    %9 = tpu.matmul %6, %8, %cst_10 {dimension_numbers = #tpu.dot_dimension_numbers<[1], [0], [0], [1], [0, 0, 1, 1], [], []>} : vector<288x4xf32>, vector<4x128xf32>, vector<288x128xf32> -> vector<288x128xf32>
    %10 = arith.addf %4, %9 : vector<288x128xf32>
    %c0_11 = arith.constant 0 : index
    %c2 = arith.constant 2 : index
    %c0_12 = arith.constant 0 : index
    %11 = vector.load %arg1[%c0_11, %c2, %c0_12] : memref<1x342x4xf32, #tpu.memory_space<vmem>>, vector<1x288x4xf32>
    %12 = vector.shape_cast %11 : vector<1x288x4xf32> to vector<288x4xf32>
    %c2_13 = arith.constant 2 : index
    %c0_14 = arith.constant 0 : index
    %c0_15 = arith.constant 0 : index
    %13 = vector.load %arg2[%c2_13, %c0_14, %c0_15] : memref<9x4x128xf32, #tpu.memory_space<vmem>>, vector<1x4x128xf32>
    %14 = vector.shape_cast %13 : vector<1x4x128xf32> to vector<4x128xf32>
    %cst_16 = arith.constant dense<0.000000e+00> : vector<288x128xf32>
    %15 = tpu.matmul %12, %14, %cst_16 {dimension_numbers = #tpu.dot_dimension_numbers<[1], [0], [0], [1], [0, 0, 1, 1], [], []>} : vector<288x4xf32>, vector<4x128xf32>, vector<288x128xf32> -> vector<288x128xf32>
    %16 = arith.addf %10, %15 : vector<288x128xf32>
    %c0_17 = arith.constant 0 : index
    %c18 = arith.constant 18 : index
    %c0_18 = arith.constant 0 : index
    %17 = vector.load %arg1[%c0_17, %c18, %c0_18] : memref<1x342x4xf32, #tpu.memory_space<vmem>>, vector<1x288x4xf32>
    %18 = vector.shape_cast %17 : vector<1x288x4xf32> to vector<288x4xf32>
    %c3 = arith.constant 3 : index
    %c0_19 = arith.constant 0 : index
    %c0_20 = arith.constant 0 : index
    %19 = vector.load %arg2[%c3, %c0_19, %c0_20] : memref<9x4x128xf32, #tpu.memory_space<vmem>>, vector<1x4x128xf32>
    %20 = vector.shape_cast %19 : vector<1x4x128xf32> to vector<4x128xf32>
    %cst_21 = arith.constant dense<0.000000e+00> : vector<288x128xf32>
    %21 = tpu.matmul %18, %20, %cst_21 {dimension_numbers = #tpu.dot_dimension_numbers<[1], [0], [0], [1], [0, 0, 1, 1], [], []>} : vector<288x4xf32>, vector<4x128xf32>, vector<288x128xf32> -> vector<288x128xf32>
    %22 = arith.addf %16, %21 : vector<288x128xf32>
    %c0_22 = arith.constant 0 : index
    %c19 = arith.constant 19 : index
    %c0_23 = arith.constant 0 : index
    %23 = vector.load %arg1[%c0_22, %c19, %c0_23] : memref<1x342x4xf32, #tpu.memory_space<vmem>>, vector<1x288x4xf32>
    %24 = vector.shape_cast %23 : vector<1x288x4xf32> to vector<288x4xf32>
    %c4 = arith.constant 4 : index
    %c0_24 = arith.constant 0 : index
    %c0_25 = arith.constant 0 : index
    %25 = vector.load %arg2[%c4, %c0_24, %c0_25] : memref<9x4x128xf32, #tpu.memory_space<vmem>>, vector<1x4x128xf32>
    %26 = vector.shape_cast %25 : vector<1x4x128xf32> to vector<4x128xf32>
    %cst_26 = arith.constant dense<0.000000e+00> : vector<288x128xf32>
    %27 = tpu.matmul %24, %26, %cst_26 {dimension_numbers = #tpu.dot_dimension_numbers<[1], [0], [0], [1], [0, 0, 1, 1], [], []>} : vector<288x4xf32>, vector<4x128xf32>, vector<288x128xf32> -> vector<288x128xf32>
    %28 = arith.addf %22, %27 : vector<288x128xf32>
    %c0_27 = arith.constant 0 : index
    %c20 = arith.constant 20 : index
    %c0_28 = arith.constant 0 : index
    %29 = vector.load %arg1[%c0_27, %c20, %c0_28] : memref<1x342x4xf32, #tpu.memory_space<vmem>>, vector<1x288x4xf32>
    %30 = vector.shape_cast %29 : vector<1x288x4xf32> to vector<288x4xf32>
    %c5 = arith.constant 5 : index
    %c0_29 = arith.constant 0 : index
    %c0_30 = arith.constant 0 : index
    %31 = vector.load %arg2[%c5, %c0_29, %c0_30] : memref<9x4x128xf32, #tpu.memory_space<vmem>>, vector<1x4x128xf32>
    %32 = vector.shape_cast %31 : vector<1x4x128xf32> to vector<4x128xf32>
    %cst_31 = arith.constant dense<0.000000e+00> : vector<288x128xf32>
    %33 = tpu.matmul %30, %32, %cst_31 {dimension_numbers = #tpu.dot_dimension_numbers<[1], [0], [0], [1], [0, 0, 1, 1], [], []>} : vector<288x4xf32>, vector<4x128xf32>, vector<288x128xf32> -> vector<288x128xf32>
    %34 = arith.addf %28, %33 : vector<288x128xf32>
    %c0_32 = arith.constant 0 : index
    %c36 = arith.constant 36 : index
    %c0_33 = arith.constant 0 : index
    %35 = vector.load %arg1[%c0_32, %c36, %c0_33] : memref<1x342x4xf32, #tpu.memory_space<vmem>>, vector<1x288x4xf32>
    %36 = vector.shape_cast %35 : vector<1x288x4xf32> to vector<288x4xf32>
    %c6 = arith.constant 6 : index
    %c0_34 = arith.constant 0 : index
    %c0_35 = arith.constant 0 : index
    %37 = vector.load %arg2[%c6, %c0_34, %c0_35] : memref<9x4x128xf32, #tpu.memory_space<vmem>>, vector<1x4x128xf32>
    %38 = vector.shape_cast %37 : vector<1x4x128xf32> to vector<4x128xf32>
    %cst_36 = arith.constant dense<0.000000e+00> : vector<288x128xf32>
    %39 = tpu.matmul %36, %38, %cst_36 {dimension_numbers = #tpu.dot_dimension_numbers<[1], [0], [0], [1], [0, 0, 1, 1], [], []>} : vector<288x4xf32>, vector<4x128xf32>, vector<288x128xf32> -> vector<288x128xf32>
    %40 = arith.addf %34, %39 : vector<288x128xf32>
    %c0_37 = arith.constant 0 : index
    %c37 = arith.constant 37 : index
    %c0_38 = arith.constant 0 : index
    %41 = vector.load %arg1[%c0_37, %c37, %c0_38] : memref<1x342x4xf32, #tpu.memory_space<vmem>>, vector<1x288x4xf32>
    %42 = vector.shape_cast %41 : vector<1x288x4xf32> to vector<288x4xf32>
    %c7 = arith.constant 7 : index
    %c0_39 = arith.constant 0 : index
    %c0_40 = arith.constant 0 : index
    %43 = vector.load %arg2[%c7, %c0_39, %c0_40] : memref<9x4x128xf32, #tpu.memory_space<vmem>>, vector<1x4x128xf32>
    %44 = vector.shape_cast %43 : vector<1x4x128xf32> to vector<4x128xf32>
    %cst_41 = arith.constant dense<0.000000e+00> : vector<288x128xf32>
    %45 = tpu.matmul %42, %44, %cst_41 {dimension_numbers = #tpu.dot_dimension_numbers<[1], [0], [0], [1], [0, 0, 1, 1], [], []>} : vector<288x4xf32>, vector<4x128xf32>, vector<288x128xf32> -> vector<288x128xf32>
    %46 = arith.addf %40, %45 : vector<288x128xf32>
    %c0_42 = arith.constant 0 : index
    %c38 = arith.constant 38 : index
    %c0_43 = arith.constant 0 : index
    %47 = vector.load %arg1[%c0_42, %c38, %c0_43] : memref<1x342x4xf32, #tpu.memory_space<vmem>>, vector<1x288x4xf32>
    %48 = vector.shape_cast %47 : vector<1x288x4xf32> to vector<288x4xf32>
    %c8 = arith.constant 8 : index
    %c0_44 = arith.constant 0 : index
    %c0_45 = arith.constant 0 : index
    %49 = vector.load %arg2[%c8, %c0_44, %c0_45] : memref<9x4x128xf32, #tpu.memory_space<vmem>>, vector<1x4x128xf32>
    %50 = vector.shape_cast %49 : vector<1x4x128xf32> to vector<4x128xf32>
    %cst_46 = arith.constant dense<0.000000e+00> : vector<288x128xf32>
    %51 = tpu.matmul %48, %50, %cst_46 {dimension_numbers = #tpu.dot_dimension_numbers<[1], [0], [0], [1], [0, 0, 1, 1], [], []>} : vector<288x4xf32>, vector<4x128xf32>, vector<288x128xf32> -> vector<288x128xf32>
    %52 = arith.addf %46, %51 : vector<288x128xf32>
    %c0_47 = arith.constant 0 : index
    %c0_48 = arith.constant 0 : index
    %53 = vector.load %arg3[%c0_47, %c0_48] : memref<1x128xf32, #tpu.memory_space<vmem>>, vector<1x128xf32>
    %54 = vector.broadcast %53 : vector<1x128xf32> to vector<288x128xf32>
    %55 = arith.addf %52, %54 : vector<288x128xf32>
    %c0_49 = arith.constant 0 : index
    %c0_50 = arith.constant 0 : index
    %c0_51 = arith.constant 0 : index
    %56 = vector.load %arg5[%c0_49, %c0_50, %c0_51] : memref<1x288x128xf32, #tpu.memory_space<vmem>>, vector<1x288x128xf32>
    %57 = vector.shape_cast %56 : vector<1x288x128xf32> to vector<288x128xf32>
    %58 = vector.shape_cast %55 : vector<288x128xf32> to vector<1x288x128xf32>
    tpu.vector_store %arg5[%c0_49, %c0_50, %c0_51], %58 {strides = array<i32>} : memref<1x288x128xf32, #tpu.memory_space<vmem>>, vector<1x288x128xf32>,
    %c0_52 = arith.constant 0 : index
    %c0_53 = arith.constant 0 : index
    %59 = vector.load %arg4[%c0_52, %c0_53] : memref<288x1xf32, #tpu.memory_space<vmem>>, vector<288x1xf32>
    %60 = vector.broadcast %59 : vector<288x1xf32> to vector<288x128xf32>
    %61 = arith.mulf %55, %60 : vector<288x128xf32>
    %cst_54 = arith.constant dense<0.000000e+00> : vector<128xf32>
    %62 = vector.multi_reduction <add>, %61, %cst_54 [0] : vector<288x128xf32> to vector<128xf32>
    %63 = vector.shape_cast %62 : vector<128xf32> to vector<1x128xf32>
    %c0_55 = arith.constant 0 : index
    %c0_56 = arith.constant 0 : index
    %c0_57 = arith.constant 0 : index
    %64 = vector.load %arg6[%c0_55, %c0_56, %c0_57] : memref<1x2x128xf32, #tpu.memory_space<vmem>>, vector<1x1x128xf32>
    %65 = vector.shape_cast %64 : vector<1x1x128xf32> to vector<1x128xf32>
    %66 = vector.shape_cast %63 : vector<1x128xf32> to vector<1x1x128xf32>
    tpu.vector_store %arg6[%c0_55, %c0_56, %c0_57], %66 {strides = array<i32>} : memref<1x2x128xf32, #tpu.memory_space<vmem>>, vector<1x1x128xf32>,
    %67 = arith.mulf %61, %55 : vector<288x128xf32>
    %cst_58 = arith.constant dense<0.000000e+00> : vector<128xf32>
    %68 = vector.multi_reduction <add>, %67, %cst_58 [0] : vector<288x128xf32> to vector<128xf32>
    %69 = vector.shape_cast %68 : vector<128xf32> to vector<1x128xf32>
    %c0_59 = arith.constant 0 : index
    %c1_60 = arith.constant 1 : index
    %c0_61 = arith.constant 0 : index
    %70 = vector.load %arg6[%c0_59, %c1_60, %c0_61] : memref<1x2x128xf32, #tpu.memory_space<vmem>>, vector<1x1x128xf32>
    %71 = vector.shape_cast %70 : vector<1x1x128xf32> to vector<1x128xf32>
    %72 = vector.shape_cast %69 : vector<1x128xf32> to vector<1x1x128xf32>
    tpu.vector_store %arg6[%c0_59, %c1_60, %c0_61], %72 {strides = array<i32>} : memref<1x2x128xf32, #tpu.memory_space<vmem>>, vector<1x1x128xf32>,
    return
  }
  func.func @transform_0(%arg0: i32) -> (i32, i32, i32) {
    %c0_i32 = arith.constant 0 : i32
    %c0_i32_0 = arith.constant 0 : i32
    %c0_i32_1 = arith.constant 0 : i32
    return %arg0, %c0_i32, %c0_i32_0 : i32, i32, i32
  }
  func.func @transform_1(%arg0: i32) -> (i32, i32, i32) {
    %c0_i32 = arith.constant 0 : i32
    %c0_i32_0 = arith.constant 0 : i32
    %c0_i32_1 = arith.constant 0 : i32
    %c0_i32_2 = arith.constant 0 : i32
    return %c0_i32, %c0_i32_0, %c0_i32_1 : i32, i32, i32
  }
  func.func @transform_2(%arg0: i32) -> (i32, i32) {
    %c0_i32 = arith.constant 0 : i32
    %c0_i32_0 = arith.constant 0 : i32
    %c0_i32_1 = arith.constant 0 : i32
    return %c0_i32, %c0_i32_0 : i32, i32
  }
  func.func @transform_3(%arg0: i32) -> (i32, i32) {
    %c0_i32 = arith.constant 0 : i32
    %c0_i32_0 = arith.constant 0 : i32
    %c0_i32_1 = arith.constant 0 : i32
    return %c0_i32, %c0_i32_0 : i32, i32
  }
  func.func @transform_4(%arg0: i32) -> (i32, i32, i32) {
    %c0_i32 = arith.constant 0 : i32
    %c0_i32_0 = arith.constant 0 : i32
    %c0_i32_1 = arith.constant 0 : i32
    return %arg0, %c0_i32, %c0_i32_0 : i32, i32, i32
  }
  func.func @transform_5(%arg0: i32) -> (i32, i32, i32) {
    %c0_i32 = arith.constant 0 : i32
    %c0_i32_0 = arith.constant 0 : i32
    %c0_i32_1 = arith.constant 0 : i32
    return %arg0, %c0_i32, %c0_i32_0 : i32, i32, i32
  }
}

module attributes {stable_mosaic.version = 11 : i64} {
  func.func @_affine_add_kernel(%arg0: i32, %arg1: memref<1x288x128xf32, #tpu.memory_space<vmem>>, %arg2: memref<1x4xf32, #tpu.memory_space<vmem>>, %arg3: memref<1x4xf32, #tpu.memory_space<vmem>>, %arg4: memref<1x342x4xf32, #tpu.memory_space<vmem>>, %arg5: memref<1x288x4xf32, #tpu.memory_space<vmem>>) attributes {dimension_semantics = [#tpu.dimension_semantics<parallel>], iteration_bounds = array<i64: 2>, scalar_prefetch = 0 : i64, scratch_operands = 0 : i64, tpu.core_type = #tpu.core_type<tc>, window_params = [{transform_indices = @transform_0, window_bounds = array<i64: 1, 288, 128>}, {pipeline_mode = #tpu.pipeline_mode<synchronous>, transform_indices = @transform_1, window_bounds = array<i64: 1, 4>}, {pipeline_mode = #tpu.pipeline_mode<synchronous>, transform_indices = @transform_2, window_bounds = array<i64: 1, 4>}, {transform_indices = @transform_3, window_bounds = array<i64: 1, 342, 4>}, {transform_indices = @transform_4, window_bounds = array<i64: 1, 288, 4>}]} {
    %c0 = arith.constant 0 : index
    %c0_0 = arith.constant 0 : index
    %c0_1 = arith.constant 0 : index
    %0 = vector.load %arg1[%c0, %c0_0, %c0_1] : memref<1x288x128xf32, #tpu.memory_space<vmem>>, vector<1x288x4xf32>
    %1 = vector.shape_cast %0 : vector<1x288x4xf32> to vector<288x4xf32>
    %c0_2 = arith.constant 0 : index
    %c0_3 = arith.constant 0 : index
    %2 = vector.load %arg2[%c0_2, %c0_3] : memref<1x4xf32, #tpu.memory_space<vmem>>, vector<1x4xf32>
    %3 = vector.broadcast %2 : vector<1x4xf32> to vector<288x4xf32>
    %4 = arith.mulf %1, %3 : vector<288x4xf32>
    %c0_4 = arith.constant 0 : index
    %c0_5 = arith.constant 0 : index
    %5 = vector.load %arg3[%c0_4, %c0_5] : memref<1x4xf32, #tpu.memory_space<vmem>>, vector<1x4xf32>
    %6 = vector.broadcast %5 : vector<1x4xf32> to vector<288x4xf32>
    %7 = arith.addf %4, %6 : vector<288x4xf32>
    %c0_6 = arith.constant 0 : index
    %c19 = arith.constant 19 : index
    %c0_7 = arith.constant 0 : index
    %8 = vector.load %arg4[%c0_6, %c19, %c0_7] : memref<1x342x4xf32, #tpu.memory_space<vmem>>, vector<1x288x4xf32>
    %9 = vector.shape_cast %8 : vector<1x288x4xf32> to vector<288x4xf32>
    %10 = arith.addf %9, %7 : vector<288x4xf32>
    %c0_8 = arith.constant 0 : index
    %c0_9 = arith.constant 0 : index
    %c0_10 = arith.constant 0 : index
    %11 = vector.load %arg5[%c0_8, %c0_9, %c0_10] : memref<1x288x4xf32, #tpu.memory_space<vmem>>, vector<1x288x4xf32>
    %12 = vector.shape_cast %11 : vector<1x288x4xf32> to vector<288x4xf32>
    %13 = vector.shape_cast %10 : vector<288x4xf32> to vector<1x288x4xf32>
    tpu.vector_store %arg5[%c0_8, %c0_9, %c0_10], %13 {strides = array<i32>} : memref<1x288x4xf32, #tpu.memory_space<vmem>>, vector<1x288x4xf32>,
    return
  }
  func.func @transform_0(%arg0: i32) -> (i32, i32, i32) {
    %c0_i32 = arith.constant 0 : i32
    %c0_i32_0 = arith.constant 0 : i32
    %c0_i32_1 = arith.constant 0 : i32
    return %arg0, %c0_i32, %c0_i32_0 : i32, i32, i32
  }
  func.func @transform_1(%arg0: i32) -> (i32, i32) {
    %c0_i32 = arith.constant 0 : i32
    %c0_i32_0 = arith.constant 0 : i32
    %c0_i32_1 = arith.constant 0 : i32
    return %c0_i32, %c0_i32_0 : i32, i32
  }
  func.func @transform_2(%arg0: i32) -> (i32, i32) {
    %c0_i32 = arith.constant 0 : i32
    %c0_i32_0 = arith.constant 0 : i32
    %c0_i32_1 = arith.constant 0 : i32
    return %c0_i32, %c0_i32_0 : i32, i32
  }
  func.func @transform_3(%arg0: i32) -> (i32, i32, i32) {
    %c0_i32 = arith.constant 0 : i32
    %c0_i32_0 = arith.constant 0 : i32
    %c0_i32_1 = arith.constant 0 : i32
    return %arg0, %c0_i32, %c0_i32_0 : i32, i32, i32
  }
  func.func @transform_4(%arg0: i32) -> (i32, i32, i32) {
    %c0_i32 = arith.constant 0 : i32
    %c0_i32_0 = arith.constant 0 : i32
    %c0_i32_1 = arith.constant 0 : i32
    return %arg0, %c0_i32, %c0_i32_0 : i32, i32, i32
  }
}

module attributes {stable_mosaic.version = 11 : i64} {
  func.func @_conv2_kernel(%arg0: i32, %arg1: memref<1x288x128xf32, #tpu.memory_space<vmem>>, %arg2: memref<9x4x128xf32, #tpu.memory_space<vmem>>, %arg3: memref<1x128xf32, #tpu.memory_space<vmem>>, %arg4: memref<288x1xf32, #tpu.memory_space<vmem>>, %arg5: memref<1x4xf32, #tpu.memory_space<vmem>>, %arg6: memref<1x4xf32, #tpu.memory_space<vmem>>, %arg7: memref<1xf32, #tpu.memory_space<smem>>, %arg8: memref<1x288x128xf32, #tpu.memory_space<vmem>>, %arg9: memref<1x2x128xf32, #tpu.memory_space<vmem>>, %arg10: memref<342x4xf32, #tpu.memory_space<vmem>>) attributes {dimension_semantics = [#tpu.dimension_semantics<parallel>], iteration_bounds = array<i64: 2>, scalar_prefetch = 0 : i64, scratch_operands = 1 : i64, tpu.core_type = #tpu.core_type<tc>, window_params = [{transform_indices = @transform_0, window_bounds = array<i64: 1, 288, 128>}, {pipeline_mode = #tpu.pipeline_mode<synchronous>, transform_indices = @transform_1, window_bounds = array<i64: 9, 4, 128>}, {pipeline_mode = #tpu.pipeline_mode<synchronous>, transform_indices = @transform_2, window_bounds = array<i64: 1, 128>}, {pipeline_mode = #tpu.pipeline_mode<synchronous>, transform_indices = @transform_3, window_bounds = array<i64: 288, 1>}, {pipeline_mode = #tpu.pipeline_mode<synchronous>, transform_indices = @transform_4, window_bounds = array<i64: 1, 4>}, {pipeline_mode = #tpu.pipeline_mode<synchronous>, transform_indices = @transform_5, window_bounds = array<i64: 1, 4>}, {transform_indices = @transform_6, window_bounds = array<i64: 1>}, {transform_indices = @transform_7, window_bounds = array<i64: 1, 288, 128>}, {transform_indices = @transform_8, window_bounds = array<i64: 1, 2, 128>}]} {
    %cst = arith.constant 0.000000e+00 : f32
    %0 = vector.broadcast %cst : f32 to vector<19x4xf32>
    %c0 = arith.constant 0 : index
    %c0_0 = arith.constant 0 : index
    %1 = vector.load %arg10[%c0, %c0_0] : memref<342x4xf32, #tpu.memory_space<vmem>>, vector<19x4xf32>
    tpu.vector_store %arg10[%c0, %c0_0], %0 {strides = array<i32>} : memref<342x4xf32, #tpu.memory_space<vmem>>, vector<19x4xf32>,
    %cst_1 = arith.constant 0.000000e+00 : f32
    %2 = vector.broadcast %cst_1 : f32 to vector<35x4xf32>
    %c307 = arith.constant 307 : index
    %c0_2 = arith.constant 0 : index
    %3 = vector.load %arg10[%c307, %c0_2] : memref<342x4xf32, #tpu.memory_space<vmem>>, vector<35x4xf32>
    tpu.vector_store %arg10[%c307, %c0_2], %2 {strides = array<i32>} : memref<342x4xf32, #tpu.memory_space<vmem>>, vector<35x4xf32>,
    %c0_3 = arith.constant 0 : index
    %c0_4 = arith.constant 0 : index
    %c0_5 = arith.constant 0 : index
    %4 = vector.load %arg1[%c0_3, %c0_4, %c0_5] : memref<1x288x128xf32, #tpu.memory_space<vmem>>, vector<1x288x4xf32>
    %5 = vector.shape_cast %4 : vector<1x288x4xf32> to vector<288x4xf32>
    %c0_6 = arith.constant 0 : index
    %c0_7 = arith.constant 0 : index
    %6 = vector.load %arg5[%c0_6, %c0_7] : memref<1x4xf32, #tpu.memory_space<vmem>>, vector<1x4xf32>
    %7 = vector.broadcast %6 : vector<1x4xf32> to vector<288x4xf32>
    %8 = arith.mulf %5, %7 : vector<288x4xf32>
    %c0_8 = arith.constant 0 : index
    %c0_9 = arith.constant 0 : index
    %9 = vector.load %arg6[%c0_8, %c0_9] : memref<1x4xf32, #tpu.memory_space<vmem>>, vector<1x4xf32>
    %10 = vector.broadcast %9 : vector<1x4xf32> to vector<288x4xf32>
    %11 = arith.addf %8, %10 : vector<288x4xf32>
    %cst_10 = arith.constant 0.000000e+00 : f32
    %12 = vector.broadcast %cst_10 : f32 to vector<288x4xf32>
    %13 = arith.cmpf ogt, %11, %12 : vector<288x4xf32>
    %c0_11 = arith.constant 0 : index
    %14 = memref.load %arg7[%c0_11] : memref<1xf32, #tpu.memory_space<smem>>
    %15 = vector.broadcast %14 : f32 to vector<288x4xf32>
    %16 = arith.mulf %15, %11 : vector<288x4xf32>
    %17 = arith.select %13, %11, %16 : vector<288x4xi1>, vector<288x4xf32>
    %c0_12 = arith.constant 0 : index
    %c0_13 = arith.constant 0 : index
    %18 = vector.load %arg4[%c0_12, %c0_13] : memref<288x1xf32, #tpu.memory_space<vmem>>, vector<288x1xf32>
    %19 = vector.broadcast %18 : vector<288x1xf32> to vector<288x4xf32>
    %20 = arith.mulf %17, %19 : vector<288x4xf32>
    %c19 = arith.constant 19 : index
    %c0_14 = arith.constant 0 : index
    %21 = vector.load %arg10[%c19, %c0_14] : memref<342x4xf32, #tpu.memory_space<vmem>>, vector<288x4xf32>
    tpu.vector_store %arg10[%c19, %c0_14], %20 {strides = array<i32>} : memref<342x4xf32, #tpu.memory_space<vmem>>, vector<288x4xf32>,
    %c0_15 = arith.constant 0 : index
    %c0_16 = arith.constant 0 : index
    %22 = vector.load %arg10[%c0_15, %c0_16] : memref<342x4xf32, #tpu.memory_space<vmem>>, vector<288x4xf32>
    %c0_17 = arith.constant 0 : index
    %c0_18 = arith.constant 0 : index
    %c0_19 = arith.constant 0 : index
    %23 = vector.load %arg2[%c0_17, %c0_18, %c0_19] : memref<9x4x128xf32, #tpu.memory_space<vmem>>, vector<1x4x128xf32>
    %24 = vector.shape_cast %23 : vector<1x4x128xf32> to vector<4x128xf32>
    %cst_20 = arith.constant dense<0.000000e+00> : vector<288x128xf32>
    %25 = tpu.matmul %22, %24, %cst_20 {dimension_numbers = #tpu.dot_dimension_numbers<[1], [0], [0], [1], [0, 0, 1, 1], [], []>} : vector<288x4xf32>, vector<4x128xf32>, vector<288x128xf32> -> vector<288x128xf32>
    %c1 = arith.constant 1 : index
    %c0_21 = arith.constant 0 : index
    %26 = vector.load %arg10[%c1, %c0_21] : memref<342x4xf32, #tpu.memory_space<vmem>>, vector<288x4xf32>
    %c1_22 = arith.constant 1 : index
    %c0_23 = arith.constant 0 : index
    %c0_24 = arith.constant 0 : index
    %27 = vector.load %arg2[%c1_22, %c0_23, %c0_24] : memref<9x4x128xf32, #tpu.memory_space<vmem>>, vector<1x4x128xf32>
    %28 = vector.shape_cast %27 : vector<1x4x128xf32> to vector<4x128xf32>
    %cst_25 = arith.constant dense<0.000000e+00> : vector<288x128xf32>
    %29 = tpu.matmul %26, %28, %cst_25 {dimension_numbers = #tpu.dot_dimension_numbers<[1], [0], [0], [1], [0, 0, 1, 1], [], []>} : vector<288x4xf32>, vector<4x128xf32>, vector<288x128xf32> -> vector<288x128xf32>
    %30 = arith.addf %25, %29 : vector<288x128xf32>
    %c2 = arith.constant 2 : index
    %c0_26 = arith.constant 0 : index
    %31 = vector.load %arg10[%c2, %c0_26] : memref<342x4xf32, #tpu.memory_space<vmem>>, vector<288x4xf32>
    %c2_27 = arith.constant 2 : index
    %c0_28 = arith.constant 0 : index
    %c0_29 = arith.constant 0 : index
    %32 = vector.load %arg2[%c2_27, %c0_28, %c0_29] : memref<9x4x128xf32, #tpu.memory_space<vmem>>, vector<1x4x128xf32>
    %33 = vector.shape_cast %32 : vector<1x4x128xf32> to vector<4x128xf32>
    %cst_30 = arith.constant dense<0.000000e+00> : vector<288x128xf32>
    %34 = tpu.matmul %31, %33, %cst_30 {dimension_numbers = #tpu.dot_dimension_numbers<[1], [0], [0], [1], [0, 0, 1, 1], [], []>} : vector<288x4xf32>, vector<4x128xf32>, vector<288x128xf32> -> vector<288x128xf32>
    %35 = arith.addf %30, %34 : vector<288x128xf32>
    %c18 = arith.constant 18 : index
    %c0_31 = arith.constant 0 : index
    %36 = vector.load %arg10[%c18, %c0_31] : memref<342x4xf32, #tpu.memory_space<vmem>>, vector<288x4xf32>
    %c3 = arith.constant 3 : index
    %c0_32 = arith.constant 0 : index
    %c0_33 = arith.constant 0 : index
    %37 = vector.load %arg2[%c3, %c0_32, %c0_33] : memref<9x4x128xf32, #tpu.memory_space<vmem>>, vector<1x4x128xf32>
    %38 = vector.shape_cast %37 : vector<1x4x128xf32> to vector<4x128xf32>
    %cst_34 = arith.constant dense<0.000000e+00> : vector<288x128xf32>
    %39 = tpu.matmul %36, %38, %cst_34 {dimension_numbers = #tpu.dot_dimension_numbers<[1], [0], [0], [1], [0, 0, 1, 1], [], []>} : vector<288x4xf32>, vector<4x128xf32>, vector<288x128xf32> -> vector<288x128xf32>
    %40 = arith.addf %35, %39 : vector<288x128xf32>
    %c19_35 = arith.constant 19 : index
    %c0_36 = arith.constant 0 : index
    %41 = vector.load %arg10[%c19_35, %c0_36] : memref<342x4xf32, #tpu.memory_space<vmem>>, vector<288x4xf32>
    %c4 = arith.constant 4 : index
    %c0_37 = arith.constant 0 : index
    %c0_38 = arith.constant 0 : index
    %42 = vector.load %arg2[%c4, %c0_37, %c0_38] : memref<9x4x128xf32, #tpu.memory_space<vmem>>, vector<1x4x128xf32>
    %43 = vector.shape_cast %42 : vector<1x4x128xf32> to vector<4x128xf32>
    %cst_39 = arith.constant dense<0.000000e+00> : vector<288x128xf32>
    %44 = tpu.matmul %41, %43, %cst_39 {dimension_numbers = #tpu.dot_dimension_numbers<[1], [0], [0], [1], [0, 0, 1, 1], [], []>} : vector<288x4xf32>, vector<4x128xf32>, vector<288x128xf32> -> vector<288x128xf32>
    %45 = arith.addf %40, %44 : vector<288x128xf32>
    %c20 = arith.constant 20 : index
    %c0_40 = arith.constant 0 : index
    %46 = vector.load %arg10[%c20, %c0_40] : memref<342x4xf32, #tpu.memory_space<vmem>>, vector<288x4xf32>
    %c5 = arith.constant 5 : index
    %c0_41 = arith.constant 0 : index
    %c0_42 = arith.constant 0 : index
    %47 = vector.load %arg2[%c5, %c0_41, %c0_42] : memref<9x4x128xf32, #tpu.memory_space<vmem>>, vector<1x4x128xf32>
    %48 = vector.shape_cast %47 : vector<1x4x128xf32> to vector<4x128xf32>
    %cst_43 = arith.constant dense<0.000000e+00> : vector<288x128xf32>
    %49 = tpu.matmul %46, %48, %cst_43 {dimension_numbers = #tpu.dot_dimension_numbers<[1], [0], [0], [1], [0, 0, 1, 1], [], []>} : vector<288x4xf32>, vector<4x128xf32>, vector<288x128xf32> -> vector<288x128xf32>
    %50 = arith.addf %45, %49 : vector<288x128xf32>
    %c36 = arith.constant 36 : index
    %c0_44 = arith.constant 0 : index
    %51 = vector.load %arg10[%c36, %c0_44] : memref<342x4xf32, #tpu.memory_space<vmem>>, vector<288x4xf32>
    %c6 = arith.constant 6 : index
    %c0_45 = arith.constant 0 : index
    %c0_46 = arith.constant 0 : index
    %52 = vector.load %arg2[%c6, %c0_45, %c0_46] : memref<9x4x128xf32, #tpu.memory_space<vmem>>, vector<1x4x128xf32>
    %53 = vector.shape_cast %52 : vector<1x4x128xf32> to vector<4x128xf32>
    %cst_47 = arith.constant dense<0.000000e+00> : vector<288x128xf32>
    %54 = tpu.matmul %51, %53, %cst_47 {dimension_numbers = #tpu.dot_dimension_numbers<[1], [0], [0], [1], [0, 0, 1, 1], [], []>} : vector<288x4xf32>, vector<4x128xf32>, vector<288x128xf32> -> vector<288x128xf32>
    %55 = arith.addf %50, %54 : vector<288x128xf32>
    %c37 = arith.constant 37 : index
    %c0_48 = arith.constant 0 : index
    %56 = vector.load %arg10[%c37, %c0_48] : memref<342x4xf32, #tpu.memory_space<vmem>>, vector<288x4xf32>
    %c7 = arith.constant 7 : index
    %c0_49 = arith.constant 0 : index
    %c0_50 = arith.constant 0 : index
    %57 = vector.load %arg2[%c7, %c0_49, %c0_50] : memref<9x4x128xf32, #tpu.memory_space<vmem>>, vector<1x4x128xf32>
    %58 = vector.shape_cast %57 : vector<1x4x128xf32> to vector<4x128xf32>
    %cst_51 = arith.constant dense<0.000000e+00> : vector<288x128xf32>
    %59 = tpu.matmul %56, %58, %cst_51 {dimension_numbers = #tpu.dot_dimension_numbers<[1], [0], [0], [1], [0, 0, 1, 1], [], []>} : vector<288x4xf32>, vector<4x128xf32>, vector<288x128xf32> -> vector<288x128xf32>
    %60 = arith.addf %55, %59 : vector<288x128xf32>
    %c38 = arith.constant 38 : index
    %c0_52 = arith.constant 0 : index
    %61 = vector.load %arg10[%c38, %c0_52] : memref<342x4xf32, #tpu.memory_space<vmem>>, vector<288x4xf32>
    %c8 = arith.constant 8 : index
    %c0_53 = arith.constant 0 : index
    %c0_54 = arith.constant 0 : index
    %62 = vector.load %arg2[%c8, %c0_53, %c0_54] : memref<9x4x128xf32, #tpu.memory_space<vmem>>, vector<1x4x128xf32>
    %63 = vector.shape_cast %62 : vector<1x4x128xf32> to vector<4x128xf32>
    %cst_55 = arith.constant dense<0.000000e+00> : vector<288x128xf32>
    %64 = tpu.matmul %61, %63, %cst_55 {dimension_numbers = #tpu.dot_dimension_numbers<[1], [0], [0], [1], [0, 0, 1, 1], [], []>} : vector<288x4xf32>, vector<4x128xf32>, vector<288x128xf32> -> vector<288x128xf32>
    %65 = arith.addf %60, %64 : vector<288x128xf32>
    %c0_56 = arith.constant 0 : index
    %c0_57 = arith.constant 0 : index
    %66 = vector.load %arg3[%c0_56, %c0_57] : memref<1x128xf32, #tpu.memory_space<vmem>>, vector<1x128xf32>
    %67 = vector.broadcast %66 : vector<1x128xf32> to vector<288x128xf32>
    %68 = arith.addf %65, %67 : vector<288x128xf32>
    %c0_58 = arith.constant 0 : index
    %c0_59 = arith.constant 0 : index
    %c0_60 = arith.constant 0 : index
    %69 = vector.load %arg8[%c0_58, %c0_59, %c0_60] : memref<1x288x128xf32, #tpu.memory_space<vmem>>, vector<1x288x128xf32>
    %70 = vector.shape_cast %69 : vector<1x288x128xf32> to vector<288x128xf32>
    %71 = vector.shape_cast %68 : vector<288x128xf32> to vector<1x288x128xf32>
    tpu.vector_store %arg8[%c0_58, %c0_59, %c0_60], %71 {strides = array<i32>} : memref<1x288x128xf32, #tpu.memory_space<vmem>>, vector<1x288x128xf32>,
    %c0_61 = arith.constant 0 : index
    %c0_62 = arith.constant 0 : index
    %72 = vector.load %arg4[%c0_61, %c0_62] : memref<288x1xf32, #tpu.memory_space<vmem>>, vector<288x1xf32>
    %73 = vector.broadcast %72 : vector<288x1xf32> to vector<288x128xf32>
    %74 = arith.mulf %68, %73 : vector<288x128xf32>
    %cst_63 = arith.constant dense<0.000000e+00> : vector<128xf32>
    %75 = vector.multi_reduction <add>, %74, %cst_63 [0] : vector<288x128xf32> to vector<128xf32>
    %76 = vector.shape_cast %75 : vector<128xf32> to vector<1x128xf32>
    %c0_64 = arith.constant 0 : index
    %c0_65 = arith.constant 0 : index
    %c0_66 = arith.constant 0 : index
    %77 = vector.load %arg9[%c0_64, %c0_65, %c0_66] : memref<1x2x128xf32, #tpu.memory_space<vmem>>, vector<1x1x128xf32>
    %78 = vector.shape_cast %77 : vector<1x1x128xf32> to vector<1x128xf32>
    %79 = vector.shape_cast %76 : vector<1x128xf32> to vector<1x1x128xf32>
    tpu.vector_store %arg9[%c0_64, %c0_65, %c0_66], %79 {strides = array<i32>} : memref<1x2x128xf32, #tpu.memory_space<vmem>>, vector<1x1x128xf32>,
    %80 = arith.mulf %74, %68 : vector<288x128xf32>
    %cst_67 = arith.constant dense<0.000000e+00> : vector<128xf32>
    %81 = vector.multi_reduction <add>, %80, %cst_67 [0] : vector<288x128xf32> to vector<128xf32>
    %82 = vector.shape_cast %81 : vector<128xf32> to vector<1x128xf32>
    %c0_68 = arith.constant 0 : index
    %c1_69 = arith.constant 1 : index
    %c0_70 = arith.constant 0 : index
    %83 = vector.load %arg9[%c0_68, %c1_69, %c0_70] : memref<1x2x128xf32, #tpu.memory_space<vmem>>, vector<1x1x128xf32>
    %84 = vector.shape_cast %83 : vector<1x1x128xf32> to vector<1x128xf32>
    %85 = vector.shape_cast %82 : vector<1x128xf32> to vector<1x1x128xf32>
    tpu.vector_store %arg9[%c0_68, %c1_69, %c0_70], %85 {strides = array<i32>} : memref<1x2x128xf32, #tpu.memory_space<vmem>>, vector<1x1x128xf32>,
    return
  }
  func.func @transform_0(%arg0: i32) -> (i32, i32, i32) {
    %c0_i32 = arith.constant 0 : i32
    %c0_i32_0 = arith.constant 0 : i32
    %c0_i32_1 = arith.constant 0 : i32
    return %arg0, %c0_i32, %c0_i32_0 : i32, i32, i32
  }
  func.func @transform_1(%arg0: i32) -> (i32, i32, i32) {
    %c0_i32 = arith.constant 0 : i32
    %c0_i32_0 = arith.constant 0 : i32
    %c0_i32_1 = arith.constant 0 : i32
    %c0_i32_2 = arith.constant 0 : i32
    return %c0_i32, %c0_i32_0, %c0_i32_1 : i32, i32, i32
  }
  func.func @transform_2(%arg0: i32) -> (i32, i32) {
    %c0_i32 = arith.constant 0 : i32
    %c0_i32_0 = arith.constant 0 : i32
    %c0_i32_1 = arith.constant 0 : i32
    return %c0_i32, %c0_i32_0 : i32, i32
  }
  func.func @transform_3(%arg0: i32) -> (i32, i32) {
    %c0_i32 = arith.constant 0 : i32
    %c0_i32_0 = arith.constant 0 : i32
    %c0_i32_1 = arith.constant 0 : i32
    return %c0_i32, %c0_i32_0 : i32, i32
  }
  func.func @transform_4(%arg0: i32) -> (i32, i32) {
    %c0_i32 = arith.constant 0 : i32
    %c0_i32_0 = arith.constant 0 : i32
    %c0_i32_1 = arith.constant 0 : i32
    return %c0_i32, %c0_i32_0 : i32, i32
  }
  func.func @transform_5(%arg0: i32) -> (i32, i32) {
    %c0_i32 = arith.constant 0 : i32
    %c0_i32_0 = arith.constant 0 : i32
    %c0_i32_1 = arith.constant 0 : i32
    return %c0_i32, %c0_i32_0 : i32, i32
  }
  func.func @transform_6(%arg0: i32) -> i32 {
    %c0_i32 = arith.constant 0 : i32
    %c0_i32_0 = arith.constant 0 : i32
    return %c0_i32 : i32
  }
  func.func @transform_7(%arg0: i32) -> (i32, i32, i32) {
    %c0_i32 = arith.constant 0 : i32
    %c0_i32_0 = arith.constant 0 : i32
    %c0_i32_1 = arith.constant 0 : i32
    return %arg0, %c0_i32, %c0_i32_0 : i32, i32, i32
  }
  func.func @transform_8(%arg0: i32) -> (i32, i32, i32) {
    %c0_i32 = arith.constant 0 : i32
    %c0_i32_0 = arith.constant 0 : i32
    %c0_i32_1 = arith.constant 0 : i32
    return %arg0, %c0_i32, %c0_i32_0 : i32, i32, i32
  }
}

</mosaic_0001>

<llo_original>
// kernel: _residual_block_impl.5
$region0: #{_residual_block_impl.5}
  #allocation0 [shape = 'u32[]', space=smem, size = 0x4, offset = 0x4, fixed_abs, tag = 'smem constant byte address 0x4 - core index']
  #allocation1 [shape = 'u32[144,128]{1,0:T(1,128)}', space=vmem, size = 0x12000, scoped, tag = 'internal scratch']
  %s0 = inlined_call_operand.hbm [shape: f32[2,288,128], index: 0, kind: input, shape index: {}]
  %s1 = inlined_call_operand.hbm [shape: f32[1,4], index: 1, kind: input, shape index: {}]
  %s2 = inlined_call_operand.hbm [shape: f32[1,4], index: 2, kind: input, shape index: {}]
  %s3 = inlined_call_operand.hbm [shape: f32[2,342,4], index: 3, kind: input, shape index: {}]
  %s4 = inlined_call_operand.hbm [shape: f32[2,288,4], index: 4, kind: output, shape index: {}]
  %s5 = sld [smem:[#allocation0]]
  $region65: #{_residual_block_impl.5} parent=0
    _
  %s7 = ssub.s32 1, %s5
  %s8 = scalar_select 0, %s7, %s5
  $region1: #{_residual_block_impl.5} parent=0
    #allocation2 [shape = 'u8[294912]{0}', space=vmem, size = 0x48000, scoped, tag = 'input window, operand 0']
    #allocation3 [shape = 's32[2]{0}', space=sflag, size = 0x8, scoped, tag = 'scoped memory for _residual_block_impl.5']
    #allocation4 [shape = 's32[2]{0}', space=sflag, size = 0x8, scoped, tag = 'scoped memory for _residual_block_impl.5']
    #allocation5 [shape = 'u8[512]{0}', space=vmem, size = 0x400, scoped, tag = 'input window, operand 1, single buffered']
    #allocation6 [shape = 's32[1]{0}', space=sflag, size = 0x4, scoped, tag = 'scoped memory for _residual_block_impl.5']
    #allocation7 [shape = 'u8[512]{0}', space=vmem, size = 0x400, scoped, tag = 'input window, operand 2, single buffered']
    #allocation8 [shape = 'u8[352256]{0}', space=vmem, size = 0x56000, scoped, tag = 'input window, operand 3']
    #allocation9 [shape = 's32[2]{0}', space=sflag, size = 0x8, scoped, tag = 'scoped memory for _residual_block_impl.5']
    #allocation10 [shape = 'u8[294912]{0}', space=vmem, size = 0x48000, scoped, tag = 'output window, operand 0']
    %9 = vsyncpa [#allocation3], 0
    %s10 = scalar_lea.sflag [#allocation3], 1
    %11 = vsyncpa %s10, 0
    %12 = vsyncpa [#allocation6], 0
    %13 = vsyncpa [#allocation9], 0
    %s14 = scalar_lea.sflag [#allocation9], 1
    %15 = vsyncpa %s14, 0
    %16 = vsyncpa [#allocation4], 0
    %s17 = scalar_lea.sflag [#allocation4], 1
    %18 = vsyncpa %s17, 0
    loop: start=0, step=1, limit=4
    $region2: #{_residual_block_impl.5} parent=1 // loop_pre_header
      _
    $region3: #{_residual_block_impl.5} parent=1 // loop_header
      %s20 = sphi 0, %s24
      %p21 = scmp.ge.s32.totalorder %s20, 4
      %s30 = sphi 0, %s32
      %s33 = sphi 0, %s30
      %s34 = sphi 0, %s33
      %s50 = sphi 0, %s34
      %s54 = sphi 0, %s54
      %s56 = sphi 0, %s54
      %s57 = sphi 0, %s56
      %s71 = sphi 0, %s57
      %s75 = sphi 0, %s75
      %s77 = sphi 0, %s75
      %s78 = sphi 0, %s77
      %s92 = sphi 0, %s78
      %s98 = sphi 0, %s100
      %s101 = sphi 0, %s98
      %s102 = sphi 0, %s101
      %s118 = sphi 0, %s102
      %s124 = sphi 0, %s126
      %s127 = sphi 0, %s124
      %s128 = sphi 0, %s127
      %s144 = sphi 0, %s128
    $region4: #{_residual_block_impl.5} parent=1 // loop_header_branch
      %23 = sbr.rel (%p21) target = $region8
    $region5: #{_residual_block_impl.5} parent=1 // loop_body
      %s25 = ssub.s32 %s20, 1
      %s26 = ssub.s32 %s20, 2
      %s27 = sadd.s32 %s20, 1
      %s28 = ssub.s32 %s20, %s27
      %p29 = scmp.eq.s32.totalorder %s28, 0
      %s31 = sadd.s32 %s30, 1
      %s32 = scalar_select %p29, %s30, %s31
      %p35 = pneg %p29
      %p36 = scmp.eq.s32.totalorder %s20, 1
      %p37 = por %p35, %p36
      %p38 = scmp.ne.s32.totalorder %s30, %s33
      %p39 = scmp.eq.s32.totalorder %s20, 0
      %p40 = por %p38, %p39
      %p41 = scmp.ne.s32.totalorder %s30, %s33
      %p42 = scmp.eq.s32.totalorder %s25, 1
      %p43 = por %p41, %p42
      %p44 = scmp.ne.s32.totalorder %s33, %s34
      %p45 = scmp.eq.s32.totalorder %s25, 0
      %p46 = por %p44, %p45
      %p47 = scmp.ne.s32.totalorder %s33, %s34
      %p48 = scmp.eq.s32.totalorder %s26, 1
      %p49 = por %p47, %p48
      %p51 = scmp.ne.s32.totalorder %s34, %s50
      %p52 = scmp.eq.s32.totalorder %s26, 0
      %p53 = por %p51, %p52
      %s55 = sadd.s32 %s54, 1
      %p58 = scmp.eq.s32.totalorder %s20, 1
      %p59 = scmp.ne.s32.totalorder %s54, %s56
      %p60 = scmp.eq.s32.totalorder %s20, 0
      %p61 = por %p59, %p60
      %p62 = scmp.ne.s32.totalorder %s54, %s56
      %p63 = scmp.eq.s32.totalorder %s25, 1
      %p64 = por %p62, %p63
      %p65 = scmp.ne.s32.totalorder %s56, %s57
      %p66 = scmp.eq.s32.totalorder %s25, 0
      %p67 = por %p65, %p66
      %p68 = scmp.ne.s32.totalorder %s56, %s57
      %p69 = scmp.eq.s32.totalorder %s26, 1
      %p70 = por %p68, %p69
      %p72 = scmp.ne.s32.totalorder %s57, %s71
      %p73 = scmp.eq.s32.totalorder %s26, 0
      %p74 = por %p72, %p73
      %s76 = sadd.s32 %s75, 1
      %p79 = scmp.eq.s32.totalorder %s20, 1
      %p80 = scmp.ne.s32.totalorder %s75, %s77
      %p81 = scmp.eq.s32.totalorder %s20, 0
      %p82 = por %p80, %p81
      %p83 = scmp.ne.s32.totalorder %s75, %s77
      %p84 = scmp.eq.s32.totalorder %s25, 1
      %p85 = por %p83, %p84
      %p86 = scmp.ne.s32.totalorder %s77, %s78
      %p87 = scmp.eq.s32.totalorder %s25, 0
      %p88 = por %p86, %p87
      %p89 = scmp.ne.s32.totalorder %s77, %s78
      %p90 = scmp.eq.s32.totalorder %s26, 1
      %p91 = por %p89, %p90
      %p93 = scmp.ne.s32.totalorder %s78, %s92
      %p94 = scmp.eq.s32.totalorder %s26, 0
      %p95 = por %p93, %p94
      %s96 = ssub.s32 %s20, %s27
      %p97 = scmp.eq.s32.totalorder %s96, 0
      %s99 = sadd.s32 %s98, 1
      %s100 = scalar_select %p97, %s98, %s99
      %p103 = pneg %p97
      %p104 = scmp.eq.s32.totalorder %s20, 1
      %p105 = por %p103, %p104
      %p106 = scmp.ne.s32.totalorder %s98, %s101
      %p107 = scmp.eq.s32.totalorder %s20, 0
      %p108 = por %p106, %p107
      %p109 = scmp.ne.s32.totalorder %s98, %s101
      %p110 = scmp.eq.s32.totalorder %s25, 1
      %p111 = por %p109, %p110
      %p112 = scmp.ne.s32.totalorder %s101, %s102
      %p113 = scmp.eq.s32.totalorder %s25, 0
      %p114 = por %p112, %p113
      %p115 = scmp.ne.s32.totalorder %s101, %s102
      %p116 = scmp.eq.s32.totalorder %s26, 1
      %p117 = por %p115, %p116
      %p119 = scmp.ne.s32.totalorder %s102, %s118
      %p120 = scmp.eq.s32.totalorder %s26, 0
      %p121 = por %p119, %p120
      %s122 = ssub.s32 %s20, %s27
      %p123 = scmp.eq.s32.totalorder %s122, 0
      %s125 = sadd.s32 %s124, 1
      %s126 = scalar_select %p123, %s124, %s125
      %p129 = pneg %p123
      %p130 = scmp.eq.s32.totalorder %s20, 1
      %p131 = por %p129, %p130
      %p132 = scmp.ne.s32.totalorder %s124, %s127
      %p133 = scmp.eq.s32.totalorder %s20, 0
      %p134 = por %p132, %p133
      %p135 = scmp.ne.s32.totalorder %s124, %s127
      %p136 = scmp.eq.s32.totalorder %s25, 1
      %p137 = por %p135, %p136
      %p138 = scmp.ne.s32.totalorder %s127, %s128
      %p139 = scmp.eq.s32.totalorder %s25, 0
      %p140 = por %p138, %p139
      %p141 = scmp.ne.s32.totalorder %s127, %s128
      %p142 = scmp.eq.s32.totalorder %s26, 1
      %p143 = por %p141, %p142
      %p145 = scmp.ne.s32.totalorder %s128, %s144
      %p146 = scmp.eq.s32.totalorder %s26, 0
      %p147 = por %p145, %p146
      %p148 = scmp.le.s32.totalorder 1, %s20
      %p149 = scmp.lt.s32.totalorder %s20, 3
      %p150 = pnand %p148, %p149
      %p151 = pneg %p150
      // Predicated region
      $region9: #{_residual_block_impl.5} parent=5 // pred_check
        _
      $region10: #{_residual_block_impl.5} parent=5 // pred_check_branch
        %153 = sbr.rel (%p150) target = $region12
      $region11: #{_residual_block_impl.5} parent=5 // pred_region
        %s154 = ssub.s32 %s20, 1
        // Predicated region
        $region13: #{_residual_block_impl.5} parent=11 // pred_check
          %p155 = pneg %p67
        $region14: #{_residual_block_impl.5} parent=11 // pred_check_branch
          %157 = sbr.rel (%p155) target = $region16
        $region15: #{_residual_block_impl.5} parent=11 // pred_region
          %s159 = ssub.s32 16, 16
          %160 = vsyncadd [#allocation6], %s159
          %s162 = sshll.u32 [#allocation5], 4
          %s163 = int_to_ptr.vmem [resolvable:$true] %s162
          %165 = dma.hbm_to_vmem [thread:$0]  %s1, 16, %s163, [#allocation6]
        $region16: #{_residual_block_impl.5} parent=11 // pred_fallthru
          _
        // Predicated region
        $region17: #{_residual_block_impl.5} parent=11 // pred_check
          %p166 = pneg %p88
        $region18: #{_residual_block_impl.5} parent=11 // pred_check_branch
          %168 = sbr.rel (%p166) target = $region20
        $region19: #{_residual_block_impl.5} parent=11 // pred_region
          %s170 = ssub.s32 16, 16
          %171 = vsyncadd [#allocation6], %s170
          %s173 = sshll.u32 [#allocation7], 4
          %s174 = int_to_ptr.vmem [resolvable:$true] %s173
          %176 = dma.hbm_to_vmem [thread:$0]  %s2, 16, %s174, [#allocation6]
        $region20: #{_residual_block_impl.5} parent=11 // pred_fallthru
          _
      $region12: #{_residual_block_impl.5} parent=5 // pred_fallthru
        _
      %p177 = scmp.lt.s32.totalorder %s20, 2
      // Predicated region
      $region21: #{_residual_block_impl.5} parent=5 // pred_check
        %p178 = pneg %p177
      $region22: #{_residual_block_impl.5} parent=5 // pred_check_branch
        %180 = sbr.rel (%p178) target = $region24
      $region23: #{_residual_block_impl.5} parent=5 // pred_region
        // Predicated region
        $region25: #{_residual_block_impl.5} parent=23 // pred_check
          %p181 = pneg %p40
        $region26: #{_residual_block_impl.5} parent=23 // pred_check_branch
          %183 = sbr.rel (%p181) target = $region28
        $region27: #{_residual_block_impl.5} parent=23 // pred_region
          %s184 = sand.u32 %s30, 1
          %s185 = scalar_lea.sflag [#allocation3], %s184
          %s186 = sand.u32 %s30, 1
          %s187 = smul.addr %s186, 288
          %s188 = scalar_lea.vmem [#allocation2], %s187
          %s190 = ssub.s32 4608, 4608
          %191 = vsyncadd %s185, %s190
          %s192 = smul.addr %s20, 36
          %s193 = smul.addr %s192, 128
          %s194 = scalar_lea.hbm %s0, %s193
          %s195 = sshll.u32 %s188, 4
          %s196 = int_to_ptr.vmem [resolvable:$true] %s195
          %201 = dma.hbm_to_vmem [thread:$0]  %s194, 4608, %s196, %s185, 128, 128, 8
        $region28: #{_residual_block_impl.5} parent=23 // pred_fallthru
          _
        // Predicated region
        $region29: #{_residual_block_impl.5} parent=23 // pred_check
          %p202 = pneg %p108
        $region30: #{_residual_block_impl.5} parent=23 // pred_check_branch
          %204 = sbr.rel (%p202) target = $region32
        $region31: #{_residual_block_impl.5} parent=23 // pred_region
          %s205 = sand.u32 %s98, 1
          %s206 = scalar_lea.sflag [#allocation9], %s205
          %s207 = sand.u32 %s98, 1
          %s208 = smul.addr %s207, 344
          %s209 = scalar_lea.vmem [#allocation8], %s208
          %s211 = ssub.s32 5504, 5504
          %212 = vsyncadd %s206, %s211
          %s213 = smul.addr %s20, 43
          %s214 = smul.addr %s213, 128
          %s215 = scalar_lea.hbm %s3, %s214
          %s216 = sshll.u32 %s209, 4
          %s217 = int_to_ptr.vmem [resolvable:$true] %s216
          %222 = dma.hbm_to_vmem [thread:$0]  %s215, 5504, %s217, %s206, 128, 128, 8
        $region32: #{_residual_block_impl.5} parent=23 // pred_fallthru
          _
      $region24: #{_residual_block_impl.5} parent=5 // pred_fallthru
        _
      %p223 = scmp.le.s32.totalorder 1, %s20
      %p224 = scmp.lt.s32.totalorder %s20, 3
      %p225 = pnand %p223, %p224
      %p226 = pneg %p225
      // Predicated region
      $region33: #{_residual_block_impl.5} parent=5 // pred_check
        _
      $region34: #{_residual_block_impl.5} parent=5 // pred_check_branch
        %228 = sbr.rel (%p225) target = $region36
      $region35: #{_residual_block_impl.5} parent=5 // pred_region
        %s229 = ssub.s32 %s20, 1
        %s230 = sand.u32 %s33, 1
        %s231 = scalar_lea.sflag [#allocation3], %s230
        %s232 = sand.u32 %s33, 1
        %s233 = smul.addr %s232, 288
        %s234 = scalar_lea.vmem [#allocation2], %s233
        // Predicated region
        $region37: #{_residual_block_impl.5} parent=35 // pred_check
          %p235 = pneg %p46
        $region38: #{_residual_block_impl.5} parent=35 // pred_check_branch
          %237 = sbr.rel (%p235) target = $region40
        $region39: #{_residual_block_impl.5} parent=35 // pred_region
          %238 = dma.done %s231, 4608
        $region40: #{_residual_block_impl.5} parent=35 // pred_fallthru
          _
        // Predicated region
        $region41: #{_residual_block_impl.5} parent=35 // pred_check
          %p239 = pneg %p67
        $region42: #{_residual_block_impl.5} parent=35 // pred_check_branch
          %241 = sbr.rel (%p239) target = $region44
        $region43: #{_residual_block_impl.5} parent=35 // pred_region
          %242 = dma.done [#allocation6], 16
        $region44: #{_residual_block_impl.5} parent=35 // pred_fallthru
          _
        // Predicated region
        $region45: #{_residual_block_impl.5} parent=35 // pred_check
          %p243 = pneg %p88
        $region46: #{_residual_block_impl.5} parent=35 // pred_check_branch
          %245 = sbr.rel (%p243) target = $region48
        $region47: #{_residual_block_impl.5} parent=35 // pred_region
          %246 = dma.done [#allocation6], 16
        $region48: #{_residual_block_impl.5} parent=35 // pred_fallthru
          _
        %s247 = sand.u32 %s101, 1
        %s248 = scalar_lea.sflag [#allocation9], %s247
        %s249 = sand.u32 %s101, 1
        %s250 = smul.addr %s249, 344
        %s251 = scalar_lea.vmem [#allocation8], %s250
        // Predicated region
        $region49: #{_residual_block_impl.5} parent=35 // pred_check
          %p252 = pneg %p114
        $region50: #{_residual_block_impl.5} parent=35 // pred_check_branch
          %254 = sbr.rel (%p252) target = $region52
        $region51: #{_residual_block_impl.5} parent=35 // pred_region
          %255 = dma.done %s248, 5504
        $region52: #{_residual_block_impl.5} parent=35 // pred_fallthru
          _
        %s256 = sand.u32 %s33, 1
        %s257 = scalar_lea.sflag [#allocation3], %s256
        %s258 = sand.u32 %s33, 1
        %s259 = smul.addr %s258, 288
        %s260 = scalar_lea.vmem [#allocation2], %s259
        %p261 = pneg %p46
        %p262 = pneg %p43
        %p263 = pneg %p67
        %p264 = pneg %p64
        %p265 = pneg %p88
        %p266 = pneg %p85
        %s267 = sand.u32 %s101, 1
        %s268 = scalar_lea.sflag [#allocation9], %s267
        %s269 = sand.u32 %s101, 1
        %s270 = smul.addr %s269, 344
        %s271 = scalar_lea.vmem [#allocation8], %s270
        %p272 = pneg %p114
        %p273 = pneg %p111
        %p274 = pneg %p140
        %p275 = pneg %p137
        %s276 = sand.u32 %s127, 1
        %s277 = scalar_lea.sflag [#allocation4], %s276
        %s278 = sand.u32 %s127, 1
        %s279 = smul.addr %s278, 288
        %s280 = scalar_lea.vmem [#allocation10], %s279
        %v281 = vld [vmem:[%s234] sm:$0xff]
        %v282 = vld [vmem:[%s234 + $0x8] sm:$0xff]
        %v283 = vld [vmem:[%s234 + $0x10] sm:$0xff]
        %v284 = vld [vmem:[%s234 + $0x18] sm:$0xff]
        %v285 = vld [vmem:[%s234 + $0x20] sm:$0xff]
        %v286 = vld [vmem:[%s234 + $0x28] sm:$0xff]
        %v287 = vld [vmem:[%s234 + $0x30] sm:$0xff]
        %v288 = vld [vmem:[%s234 + $0x38] sm:$0xff]
        %v289 = vld [vmem:[%s234 + $0x40] sm:$0xff]
        %v290 = vld [vmem:[%s234 + $0x48] sm:$0xff]
        %v291 = vld [vmem:[%s234 + $0x50] sm:$0xff]
        %v292 = vld [vmem:[%s234 + $0x58] sm:$0xff]
        %v293 = vld [vmem:[%s234 + $0x60] sm:$0xff]
        %v294 = vld [vmem:[%s234 + $0x68] sm:$0xff]
        %v295 = vld [vmem:[%s234 + $0x70] sm:$0xff]
        %v296 = vld [vmem:[%s234 + $0x78] sm:$0xff]
        %v297 = vld [vmem:[%s234 + $0x80] sm:$0xff]
        %v298 = vld [vmem:[%s234 + $0x88] sm:$0xff]
        %v299 = vld [vmem:[%s234 + $0x90] sm:$0xff]
        %v300 = vld [vmem:[%s234 + $0x98] sm:$0xff]
        %v301 = vld [vmem:[%s234 + $0xa0] sm:$0xff]
        %v302 = vld [vmem:[%s234 + $0xa8] sm:$0xff]
        %v303 = vld [vmem:[%s234 + $0xb0] sm:$0xff]
        %v304 = vld [vmem:[%s234 + $0xb8] sm:$0xff]
        %v305 = vld [vmem:[%s234 + $0xc0] sm:$0xff]
        %v306 = vld [vmem:[%s234 + $0xc8] sm:$0xff]
        %v307 = vld [vmem:[%s234 + $0xd0] sm:$0xff]
        %v308 = vld [vmem:[%s234 + $0xd8] sm:$0xff]
        %v309 = vld [vmem:[%s234 + $0xe0] sm:$0xff]
        %v310 = vld [vmem:[%s234 + $0xe8] sm:$0xff]
        %v311 = vld [vmem:[%s234 + $0xf0] sm:$0xff]
        %v312 = vld [vmem:[%s234 + $0xf8] sm:$0xff]
        %v313 = vld [vmem:[%s234 + $0x100] sm:$0xff]
        %v314 = vld [vmem:[%s234 + $0x108] sm:$0xff]
        %v315 = vld [vmem:[%s234 + $0x110] sm:$0xff]
        %v316 = vld [vmem:[%s234 + $0x118] sm:$0xff]
        %v317 = vld [vmem:[#allocation5] sm:$0x1]
        %v319 = vlaneseq
        %v320 = vshrl.u32 %v319, 7
        %v321 = vsub.s32 0, %v320
        %v322 = vrot.slane %v317, %v321
        %v324 = vmul.f32 %v281, %v322
        %v325 = vmul.f32 %v282, %v322
        %v326 = vmul.f32 %v283, %v322
        %v327 = vmul.f32 %v284, %v322
        %v328 = vmul.f32 %v285, %v322
        %v329 = vmul.f32 %v286, %v322
        %v330 = vmul.f32 %v287, %v322
        %v331 = vmul.f32 %v288, %v322
        %v332 = vmul.f32 %v289, %v322
        %v333 = vmul.f32 %v290, %v322
        %v334 = vmul.f32 %v291, %v322
        %v335 = vmul.f32 %v292, %v322
        %v336 = vmul.f32 %v293, %v322
        %v337 = vmul.f32 %v294, %v322
        %v338 = vmul.f32 %v295, %v322
        %v339 = vmul.f32 %v296, %v322
        %v340 = vmul.f32 %v297, %v322
        %v341 = vmul.f32 %v298, %v322
        %v342 = vmul.f32 %v299, %v322
        %v343 = vmul.f32 %v300, %v322
        %v344 = vmul.f32 %v301, %v322
        %v345 = vmul.f32 %v302, %v322
        %v346 = vmul.f32 %v303, %v322
        %v347 = vmul.f32 %v304, %v322
        %v348 = vmul.f32 %v305, %v322
        %v349 = vmul.f32 %v306, %v322
        %v350 = vmul.f32 %v307, %v322
        %v351 = vmul.f32 %v308, %v322
        %v352 = vmul.f32 %v309, %v322
        %v353 = vmul.f32 %v310, %v322
        %v354 = vmul.f32 %v311, %v322
        %v355 = vmul.f32 %v312, %v322
        %v356 = vmul.f32 %v313, %v322
        %v357 = vmul.f32 %v314, %v322
        %v358 = vmul.f32 %v315, %v322
        %v359 = vmul.f32 %v316, %v322
        %v360 = vld [vmem:[#allocation7] sm:$0x1]
        %v362 = vlaneseq
        %v363 = vshrl.u32 %v362, 7
        %v364 = vsub.s32 0, %v363
        %v365 = vrot.slane %v360, %v364
        %v367 = vadd.f32 %v324, %v365
        %v368 = vadd.f32 %v325, %v365
        %v369 = vadd.f32 %v326, %v365
        %v370 = vadd.f32 %v327, %v365
        %v371 = vadd.f32 %v328, %v365
        %v372 = vadd.f32 %v329, %v365
        %v373 = vadd.f32 %v330, %v365
        %v374 = vadd.f32 %v331, %v365
        %v375 = vadd.f32 %v332, %v365
        %v376 = vadd.f32 %v333, %v365
        %v377 = vadd.f32 %v334, %v365
        %v378 = vadd.f32 %v335, %v365
        %v379 = vadd.f32 %v336, %v365
        %v380 = vadd.f32 %v337, %v365
        %v381 = vadd.f32 %v338, %v365
        %v382 = vadd.f32 %v339, %v365
        %v383 = vadd.f32 %v340, %v365
        %v384 = vadd.f32 %v341, %v365
        %v385 = vadd.f32 %v342, %v365
        %v386 = vadd.f32 %v343, %v365
        %v387 = vadd.f32 %v344, %v365
        %v388 = vadd.f32 %v345, %v365
        %v389 = vadd.f32 %v346, %v365
        %v390 = vadd.f32 %v347, %v365
        %v391 = vadd.f32 %v348, %v365
        %v392 = vadd.f32 %v349, %v365
        %v393 = vadd.f32 %v350, %v365
        %v394 = vadd.f32 %v351, %v365
        %v395 = vadd.f32 %v352, %v365
        %v396 = vadd.f32 %v353, %v365
        %v397 = vadd.f32 %v354, %v365
        %v398 = vadd.f32 %v355, %v365
        %v399 = vadd.f32 %v356, %v365
        %v400 = vadd.f32 %v357, %v365
        %v401 = vadd.f32 %v358, %v365
        %v402 = vadd.f32 %v359, %v365
        %v403 = vld [vmem:[%s251 + $0x13] sm:$0xff]
        %v404 = vld [vmem:[%s251 + $0x1b] sm:$0xff]
        %v405 = vld [vmem:[%s251 + $0x23] sm:$0xff]
        %v406 = vld [vmem:[%s251 + $0x2b] sm:$0xff]
        %v407 = vld [vmem:[%s251 + $0x33] sm:$0xff]
        %v408 = vld [vmem:[%s251 + $0x3b] sm:$0xff]
        %v409 = vld [vmem:[%s251 + $0x43] sm:$0xff]
        %v410 = vld [vmem:[%s251 + $0x4b] sm:$0xff]
        %v411 = vld [vmem:[%s251 + $0x53] sm:$0xff]
        %v412 = vld [vmem:[%s251 + $0x5b] sm:$0xff]
        %v413 = vld [vmem:[%s251 + $0x63] sm:$0xff]
        %v414 = vld [vmem:[%s251 + $0x6b] sm:$0xff]
        %v415 = vld [vmem:[%s251 + $0x73] sm:$0xff]
        %v416 = vld [vmem:[%s251 + $0x7b] sm:$0xff]
        %v417 = vld [vmem:[%s251 + $0x83] sm:$0xff]
        %v418 = vld [vmem:[%s251 + $0x8b] sm:$0xff]
        %v419 = vld [vmem:[%s251 + $0x93] sm:$0xff]
        %v420 = vld [vmem:[%s251 + $0x9b] sm:$0xff]
        %v421 = vld [vmem:[%s251 + $0xa3] sm:$0xff]
        %v422 = vld [vmem:[%s251 + $0xab] sm:$0xff]
        %v423 = vld [vmem:[%s251 + $0xb3] sm:$0xff]
        %v424 = vld [vmem:[%s251 + $0xbb] sm:$0xff]
        %v425 = vld [vmem:[%s251 + $0xc3] sm:$0xff]
        %v426 = vld [vmem:[%s251 + $0xcb] sm:$0xff]
        %v427 = vld [vmem:[%s251 + $0xd3] sm:$0xff]
        %v428 = vld [vmem:[%s251 + $0xdb] sm:$0xff]
        %v429 = vld [vmem:[%s251 + $0xe3] sm:$0xff]
        %v430 = vld [vmem:[%s251 + $0xeb] sm:$0xff]
        %v431 = vld [vmem:[%s251 + $0xf3] sm:$0xff]
        %v432 = vld [vmem:[%s251 + $0xfb] sm:$0xff]
        %v433 = vld [vmem:[%s251 + $0x103] sm:$0xff]
        %v434 = vld [vmem:[%s251 + $0x10b] sm:$0xff]
        %v435 = vld [vmem:[%s251 + $0x113] sm:$0xff]
        %v436 = vld [vmem:[%s251 + $0x11b] sm:$0xff]
        %v437 = vld [vmem:[%s251 + $0x123] sm:$0xff]
        %v438 = vld [vmem:[%s251 + $0x12b] sm:$0xff]
        %v439 = vadd.f32 %v403, %v367
        %v440 = vadd.f32 %v404, %v368
        %v441 = vadd.f32 %v405, %v369
        %v442 = vadd.f32 %v406, %v370
        %v443 = vadd.f32 %v407, %v371
        %v444 = vadd.f32 %v408, %v372
        %v445 = vadd.f32 %v409, %v373
        %v446 = vadd.f32 %v410, %v374
        %v447 = vadd.f32 %v411, %v375
        %v448 = vadd.f32 %v412, %v376
        %v449 = vadd.f32 %v413, %v377
        %v450 = vadd.f32 %v414, %v378
        %v451 = vadd.f32 %v415, %v379
        %v452 = vadd.f32 %v416, %v380
        %v453 = vadd.f32 %v417, %v381
        %v454 = vadd.f32 %v418, %v382
        %v455 = vadd.f32 %v419, %v383
        %v456 = vadd.f32 %v420, %v384
        %v457 = vadd.f32 %v421, %v385
        %v458 = vadd.f32 %v422, %v386
        %v459 = vadd.f32 %v423, %v387
        %v460 = vadd.f32 %v424, %v388
        %v461 = vadd.f32 %v425, %v389
        %v462 = vadd.f32 %v426, %v390
        %v463 = vadd.f32 %v427, %v391
        %v464 = vadd.f32 %v428, %v392
        %v465 = vadd.f32 %v429, %v393
        %v466 = vadd.f32 %v430, %v394
        %v467 = vadd.f32 %v431, %v395
        %v468 = vadd.f32 %v432, %v396
        %v469 = vadd.f32 %v433, %v397
        %v470 = vadd.f32 %v434, %v398
        %v471 = vadd.f32 %v435, %v399
        %v472 = vadd.f32 %v436, %v400
        %v473 = vadd.f32 %v437, %v401
        %v474 = vadd.f32 %v438, %v402
        %vm475 = vcmask 31744
        %476 = vst.msk [vmem:[%s280] sm:$0xff] %vm475, %v439
        %477 = vst.msk [vmem:[%s280 + $0x8] sm:$0xff] %vm475, %v440
        %478 = vst.msk [vmem:[%s280 + $0x10] sm:$0xff] %vm475, %v441
        %479 = vst.msk [vmem:[%s280 + $0x18] sm:$0xff] %vm475, %v442
        %480 = vst.msk [vmem:[%s280 + $0x20] sm:$0xff] %vm475, %v443
        %481 = vst.msk [vmem:[%s280 + $0x28] sm:$0xff] %vm475, %v444
        %482 = vst.msk [vmem:[%s280 + $0x30] sm:$0xff] %vm475, %v445
        %483 = vst.msk [vmem:[%s280 + $0x38] sm:$0xff] %vm475, %v446
        %484 = vst.msk [vmem:[%s280 + $0x40] sm:$0xff] %vm475, %v447
        %485 = vst.msk [vmem:[%s280 + $0x48] sm:$0xff] %vm475, %v448
        %486 = vst.msk [vmem:[%s280 + $0x50] sm:$0xff] %vm475, %v449
        %487 = vst.msk [vmem:[%s280 + $0x58] sm:$0xff] %vm475, %v450
        %488 = vst.msk [vmem:[%s280 + $0x60] sm:$0xff] %vm475, %v451
        %489 = vst.msk [vmem:[%s280 + $0x68] sm:$0xff] %vm475, %v452
        %490 = vst.msk [vmem:[%s280 + $0x70] sm:$0xff] %vm475, %v453
        %491 = vst.msk [vmem:[%s280 + $0x78] sm:$0xff] %vm475, %v454
        %492 = vst.msk [vmem:[%s280 + $0x80] sm:$0xff] %vm475, %v455
        %493 = vst.msk [vmem:[%s280 + $0x88] sm:$0xff] %vm475, %v456
        %494 = vst.msk [vmem:[%s280 + $0x90] sm:$0xff] %vm475, %v457
        %495 = vst.msk [vmem:[%s280 + $0x98] sm:$0xff] %vm475, %v458
        %496 = vst.msk [vmem:[%s280 + $0xa0] sm:$0xff] %vm475, %v459
        %497 = vst.msk [vmem:[%s280 + $0xa8] sm:$0xff] %vm475, %v460
        %498 = vst.msk [vmem:[%s280 + $0xb0] sm:$0xff] %vm475, %v461
        %499 = vst.msk [vmem:[%s280 + $0xb8] sm:$0xff] %vm475, %v462
        %500 = vst.msk [vmem:[%s280 + $0xc0] sm:$0xff] %vm475, %v463
        %501 = vst.msk [vmem:[%s280 + $0xc8] sm:$0xff] %vm475, %v464
        %502 = vst.msk [vmem:[%s280 + $0xd0] sm:$0xff] %vm475, %v465
        %503 = vst.msk [vmem:[%s280 + $0xd8] sm:$0xff] %vm475, %v466
        %504 = vst.msk [vmem:[%s280 + $0xe0] sm:$0xff] %vm475, %v467
        %505 = vst.msk [vmem:[%s280 + $0xe8] sm:$0xff] %vm475, %v468
        %506 = vst.msk [vmem:[%s280 + $0xf0] sm:$0xff] %vm475, %v469
        %507 = vst.msk [vmem:[%s280 + $0xf8] sm:$0xff] %vm475, %v470
        %508 = vst.msk [vmem:[%s280 + $0x100] sm:$0xff] %vm475, %v471
        %509 = vst.msk [vmem:[%s280 + $0x108] sm:$0xff] %vm475, %v472
        %510 = vst.msk [vmem:[%s280 + $0x110] sm:$0xff] %vm475, %v473
        %511 = vst.msk [vmem:[%s280 + $0x118] sm:$0xff] %vm475, %v474
        %s512 = sand.u32 %s127, 1
        %s513 = scalar_lea.sflag [#allocation4], %s512
        %s514 = sand.u32 %s127, 1
        %s515 = smul.addr %s514, 288
        %s516 = scalar_lea.vmem [#allocation10], %s515
        // Predicated region
        $region53: #{_residual_block_impl.5} parent=35 // pred_check
          %p517 = pneg %p137
        $region54: #{_residual_block_impl.5} parent=35 // pred_check_branch
          %519 = sbr.rel (%p517) target = $region56
        $region55: #{_residual_block_impl.5} parent=35 // pred_region
          %s521 = ssub.s32 4608, 4608
          %522 = vsyncadd %s513, %s521
          %s523 = smul.addr %s25, 36
          %s524 = smul.addr %s523, 128
          %s525 = scalar_lea.hbm %s4, %s524
          %s526 = sshll.u32 %s516, 4
          %s527 = int_to_ptr.vmem [resolvable:$true] %s526
          %532 = dma.vmem_to_hbm [thread:$0]  %s527, 4608, %s525, %s513, 128, 128, 8
        $region56: #{_residual_block_impl.5} parent=35 // pred_fallthru
          _
      $region36: #{_residual_block_impl.5} parent=5 // pred_fallthru
        _
      %p533 = scmp.le.s32.totalorder 2, %s20
      // Predicated region
      $region57: #{_residual_block_impl.5} parent=5 // pred_check
        %p534 = pneg %p533
      $region58: #{_residual_block_impl.5} parent=5 // pred_check_branch
        %536 = sbr.rel (%p534) target = $region60
      $region59: #{_residual_block_impl.5} parent=5 // pred_region
        %s537 = ssub.s32 %s20, 2
        // Predicated region
        $region61: #{_residual_block_impl.5} parent=59 // pred_check
          %p538 = pneg %p143
        $region62: #{_residual_block_impl.5} parent=59 // pred_check_branch
          %540 = sbr.rel (%p538) target = $region64
        $region63: #{_residual_block_impl.5} parent=59 // pred_region
          %s541 = sand.u32 %s128, 1
          %s542 = scalar_lea.sflag [#allocation4], %s541
          %s543 = sand.u32 %s128, 1
          %s544 = smul.addr %s543, 288
          %s545 = scalar_lea.vmem [#allocation10], %s544
          %546 = dma.done %s542, 4608
        $region64: #{_residual_block_impl.5} parent=59 // pred_fallthru
          _
      $region60: #{_residual_block_impl.5} parent=5 // pred_fallthru
        _
    $region6: #{_residual_block_impl.5} parent=1 // loop_footer
      %s24 = sadd.s32 1, %s20
    $region7: #{_residual_block_impl.5} parent=1 // loop_footer_branch
      %19 = sbr.rel target = $region3
    $region8: #{_residual_block_impl.5} parent=1 // loop_exit
      _
    %547 = vsyncpa [#allocation3], 1
    %s548 = scalar_lea.sflag [#allocation3], 1
    %549 = vsyncpa %s548, 1
    %550 = vsyncpa [#allocation6], 1
    %551 = vsyncpa [#allocation9], 1
    %s552 = scalar_lea.sflag [#allocation9], 1
    %553 = vsyncpa %s552, 1
    %554 = vsyncpa [#allocation4], 1
    %s555 = scalar_lea.sflag [#allocation4], 1
    %556 = vsyncpa %s555, 1

// kernel: _residual_block_impl.4
$region0: #{_residual_block_impl.4}
  #allocation0 [shape = 'u32[]', space=smem, size = 0x4, offset = 0x4, fixed_abs, tag = 'smem constant byte address 0x4 - core index']
  #allocation1 [shape = 'u32[144,128]{1,0:T(1,128)}', space=vmem, size = 0x12000, scoped, tag = 'internal scratch']
  #allocation2 [shape = 'f32[342,4]{1,0:T(8,128)}', space=vmem, size = 0x2b000, scoped, tag = 'scratch operand']
  #allocation3 [shape = 'f32[1]{0:T(128)S(6)}', space=smem, size = 0x200, scoped, tag = 'scoped memory for _residual_block_impl.4']
  %s0 = inlined_call_operand.hbm [shape: f32[2,288,128], index: 0, kind: input, shape index: {}]
  %s1 = inlined_call_operand.hbm [shape: f32[9,4,128], index: 1, kind: input, shape index: {}]
  %s2 = inlined_call_operand.hbm [shape: f32[1,128], index: 2, kind: input, shape index: {}]
  %s3 = inlined_call_operand.hbm [shape: f32[288,1], index: 3, kind: input, shape index: {}]
  %s4 = inlined_call_operand.hbm [shape: f32[1,4], index: 4, kind: input, shape index: {}]
  %s5 = inlined_call_operand.hbm [shape: f32[1,4], index: 5, kind: input, shape index: {}]
  %s6 = inlined_call_operand.<no memory space> [shape: f32[1], index: 6, kind: input, shape index: {}]
  %s7 = inlined_call_operand.hbm [shape: f32[2,288,128], index: 7, kind: output, shape index: {0}]
  %s8 = inlined_call_operand.hbm [shape: f32[2,2,128], index: 8, kind: output, shape index: {1}]
  %9 = xla_tuple %s7, %s8
  %s10 = sld [smem:[#allocation0]]
  $region93: #{_residual_block_impl.4} parent=0
    _
  %s12 = ssub.s32 1, %s10
  %s13 = scalar_select 0, %s12, %s10
  %14 = sst [smem:[#allocation3]] %s6
  $region1: #{_residual_block_impl.4} parent=0
    #allocation4 [shape = 'u8[294912]{0}', space=vmem, size = 0x48000, scoped, tag = 'input window, operand 0']
    #allocation5 [shape = 's32[2]{0}', space=sflag, size = 0x8, scoped, tag = 'scoped memory for _residual_block_impl.4']
    #allocation6 [shape = 's32[2]{0}', space=sflag, size = 0x8, scoped, tag = 'scoped memory for _residual_block_impl.4']
    #allocation7 [shape = 'u8[18432]{0}', space=vmem, size = 0x4800, scoped, tag = 'input window, operand 1, single buffered']
    #allocation8 [shape = 's32[1]{0}', space=sflag, size = 0x4, scoped, tag = 'scoped memory for _residual_block_impl.4']
    #allocation9 [shape = 'u8[512]{0}', space=vmem, size = 0x400, scoped, tag = 'input window, operand 2, single buffered']
    #allocation10 [shape = 'u8[147456]{0}', space=vmem, size = 0x24000, scoped, tag = 'input window, operand 3, single buffered']
    #allocation11 [shape = 's32[1]{0}', space=sflag, size = 0x4, scoped, tag = 'scoped memory for _residual_block_impl.4']
    #allocation12 [shape = 'u8[512]{0}', space=vmem, size = 0x400, scoped, tag = 'input window, operand 4, single buffered']
    #allocation13 [shape = 'u8[512]{0}', space=vmem, size = 0x400, scoped, tag = 'input window, operand 5, single buffered']
    #allocation14 [shape = 's32[1]{0}', space=sflag, size = 0x4, scoped, tag = 'scoped memory for _residual_block_impl.4']
    #allocation15 [shape = 'u8[294912]{0}', space=vmem, size = 0x48000, scoped, tag = 'output window, operand 0']
    #allocation16 [shape = 'u8[2048]{0}', space=vmem, size = 0x800, scoped, tag = 'output window, operand 1']
    #allocation17 [shape = 's32[2]{0}', space=sflag, size = 0x8, scoped, tag = 'scoped memory for _residual_block_impl.4']
    %15 = vsyncpa [#allocation5], 0
    %s16 = scalar_lea.sflag [#allocation5], 1
    %17 = vsyncpa %s16, 0
    %18 = vsyncpa [#allocation8], 0
    %19 = vsyncpa [#allocation11], 0
    %20 = vsyncpa [#allocation14], 0
    %21 = vsyncpa [#allocation6], 0
    %s22 = scalar_lea.sflag [#allocation6], 1
    %23 = vsyncpa %s22, 0
    %24 = vsyncpa [#allocation17], 0
    %s25 = scalar_lea.sflag [#allocation17], 1
    %26 = vsyncpa %s25, 0
    loop: start=0, step=1, limit=4
    $region2: #{_residual_block_impl.4} parent=1 // loop_pre_header
      _
    $region3: #{_residual_block_impl.4} parent=1 // loop_header
      %s28 = sphi 0, %s32
      %p29 = scmp.ge.s32.totalorder %s28, 4
      %s38 = sphi 0, %s40
      %s41 = sphi 0, %s38
      %s42 = sphi 0, %s41
      %s58 = sphi 0, %s42
      %s62 = sphi 0, %s62
      %s64 = sphi 0, %s62
      %s65 = sphi 0, %s64
      %s79 = sphi 0, %s65
      %s83 = sphi 0, %s83
      %s85 = sphi 0, %s83
      %s86 = sphi 0, %s85
      %s100 = sphi 0, %s86
      %s104 = sphi 0, %s104
      %s106 = sphi 0, %s104
      %s107 = sphi 0, %s106
      %s121 = sphi 0, %s107
      %s125 = sphi 0, %s125
      %s127 = sphi 0, %s125
      %s128 = sphi 0, %s127
      %s142 = sphi 0, %s128
      %s146 = sphi 0, %s146
      %s148 = sphi 0, %s146
      %s149 = sphi 0, %s148
      %s163 = sphi 0, %s149
      %s167 = sphi 0, %s167
      %s169 = sphi 0, %s167
      %s170 = sphi 0, %s169
      %s184 = sphi 0, %s170
      %s190 = sphi 0, %s192
      %s193 = sphi 0, %s190
      %s194 = sphi 0, %s193
      %s210 = sphi 0, %s194
      %s216 = sphi 0, %s218
      %s219 = sphi 0, %s216
      %s220 = sphi 0, %s219
      %s236 = sphi 0, %s220
    $region4: #{_residual_block_impl.4} parent=1 // loop_header_branch
      %31 = sbr.rel (%p29) target = $region8
    $region5: #{_residual_block_impl.4} parent=1 // loop_body
      %s33 = ssub.s32 %s28, 1
      %s34 = ssub.s32 %s28, 2
      %s35 = sadd.s32 %s28, 1
      %s36 = ssub.s32 %s28, %s35
      %p37 = scmp.eq.s32.totalorder %s36, 0
      %s39 = sadd.s32 %s38, 1
      %s40 = scalar_select %p37, %s38, %s39
      %p43 = pneg %p37
      %p44 = scmp.eq.s32.totalorder %s28, 1
      %p45 = por %p43, %p44
      %p46 = scmp.ne.s32.totalorder %s38, %s41
      %p47 = scmp.eq.s32.totalorder %s28, 0
      %p48 = por %p46, %p47
      %p49 = scmp.ne.s32.totalorder %s38, %s41
      %p50 = scmp.eq.s32.totalorder %s33, 1
      %p51 = por %p49, %p50
      %p52 = scmp.ne.s32.totalorder %s41, %s42
      %p53 = scmp.eq.s32.totalorder %s33, 0
      %p54 = por %p52, %p53
      %p55 = scmp.ne.s32.totalorder %s41, %s42
      %p56 = scmp.eq.s32.totalorder %s34, 1
      %p57 = por %p55, %p56
      %p59 = scmp.ne.s32.totalorder %s42, %s58
      %p60 = scmp.eq.s32.totalorder %s34, 0
      %p61 = por %p59, %p60
      %s63 = sadd.s32 %s62, 1
      %p66 = scmp.eq.s32.totalorder %s28, 1
      %p67 = scmp.ne.s32.totalorder %s62, %s64
      %p68 = scmp.eq.s32.totalorder %s28, 0
      %p69 = por %p67, %p68
      %p70 = scmp.ne.s32.totalorder %s62, %s64
      %p71 = scmp.eq.s32.totalorder %s33, 1
      %p72 = por %p70, %p71
      %p73 = scmp.ne.s32.totalorder %s64, %s65
      %p74 = scmp.eq.s32.totalorder %s33, 0
      %p75 = por %p73, %p74
      %p76 = scmp.ne.s32.totalorder %s64, %s65
      %p77 = scmp.eq.s32.totalorder %s34, 1
      %p78 = por %p76, %p77
      %p80 = scmp.ne.s32.totalorder %s65, %s79
      %p81 = scmp.eq.s32.totalorder %s34, 0
      %p82 = por %p80, %p81
      %s84 = sadd.s32 %s83, 1
      %p87 = scmp.eq.s32.totalorder %s28, 1
      %p88 = scmp.ne.s32.totalorder %s83, %s85
      %p89 = scmp.eq.s32.totalorder %s28, 0
      %p90 = por %p88, %p89
      %p91 = scmp.ne.s32.totalorder %s83, %s85
      %p92 = scmp.eq.s32.totalorder %s33, 1
      %p93 = por %p91, %p92
      %p94 = scmp.ne.s32.totalorder %s85, %s86
      %p95 = scmp.eq.s32.totalorder %s33, 0
      %p96 = por %p94, %p95
      %p97 = scmp.ne.s32.totalorder %s85, %s86
      %p98 = scmp.eq.s32.totalorder %s34, 1
      %p99 = por %p97, %p98
      %p101 = scmp.ne.s32.totalorder %s86, %s100
      %p102 = scmp.eq.s32.totalorder %s34, 0
      %p103 = por %p101, %p102
      %s105 = sadd.s32 %s104, 1
      %p108 = scmp.eq.s32.totalorder %s28, 1
      %p109 = scmp.ne.s32.totalorder %s104, %s106
      %p110 = scmp.eq.s32.totalorder %s28, 0
      %p111 = por %p109, %p110
      %p112 = scmp.ne.s32.totalorder %s104, %s106
      %p113 = scmp.eq.s32.totalorder %s33, 1
      %p114 = por %p112, %p113
      %p115 = scmp.ne.s32.totalorder %s106, %s107
      %p116 = scmp.eq.s32.totalorder %s33, 0
      %p117 = por %p115, %p116
      %p118 = scmp.ne.s32.totalorder %s106, %s107
      %p119 = scmp.eq.s32.totalorder %s34, 1
      %p120 = por %p118, %p119
      %p122 = scmp.ne.s32.totalorder %s107, %s121
      %p123 = scmp.eq.s32.totalorder %s34, 0
      %p124 = por %p122, %p123
      %s126 = sadd.s32 %s125, 1
      %p129 = scmp.eq.s32.totalorder %s28, 1
      %p130 = scmp.ne.s32.totalorder %s125, %s127
      %p131 = scmp.eq.s32.totalorder %s28, 0
      %p132 = por %p130, %p131
      %p133 = scmp.ne.s32.totalorder %s125, %s127
      %p134 = scmp.eq.s32.totalorder %s33, 1
      %p135 = por %p133, %p134
      %p136 = scmp.ne.s32.totalorder %s127, %s128
      %p137 = scmp.eq.s32.totalorder %s33, 0
      %p138 = por %p136, %p137
      %p139 = scmp.ne.s32.totalorder %s127, %s128
      %p140 = scmp.eq.s32.totalorder %s34, 1
      %p141 = por %p139, %p140
      %p143 = scmp.ne.s32.totalorder %s128, %s142
      %p144 = scmp.eq.s32.totalorder %s34, 0
      %p145 = por %p143, %p144
      %s147 = sadd.s32 %s146, 1
      %p150 = scmp.eq.s32.totalorder %s28, 1
      %p151 = scmp.ne.s32.totalorder %s146, %s148
      %p152 = scmp.eq.s32.totalorder %s28, 0
      %p153 = por %p151, %p152
      %p154 = scmp.ne.s32.totalorder %s146, %s148
      %p155 = scmp.eq.s32.totalorder %s33, 1
      %p156 = por %p154, %p155
      %p157 = scmp.ne.s32.totalorder %s148, %s149
      %p158 = scmp.eq.s32.totalorder %s33, 0
      %p159 = por %p157, %p158
      %p160 = scmp.ne.s32.totalorder %s148, %s149
      %p161 = scmp.eq.s32.totalorder %s34, 1
      %p162 = por %p160, %p161
      %p164 = scmp.ne.s32.totalorder %s149, %s163
      %p165 = scmp.eq.s32.totalorder %s34, 0
      %p166 = por %p164, %p165
      %s168 = sadd.s32 %s167, 1
      %p171 = scmp.eq.s32.totalorder %s28, 1
      %p172 = scmp.ne.s32.totalorder %s167, %s169
      %p173 = scmp.eq.s32.totalorder %s28, 0
      %p174 = por %p172, %p173
      %p175 = scmp.ne.s32.totalorder %s167, %s169
      %p176 = scmp.eq.s32.totalorder %s33, 1
      %p177 = por %p175, %p176
      %p178 = scmp.ne.s32.totalorder %s169, %s170
      %p179 = scmp.eq.s32.totalorder %s33, 0
      %p180 = por %p178, %p179
      %p181 = scmp.ne.s32.totalorder %s169, %s170
      %p182 = scmp.eq.s32.totalorder %s34, 1
      %p183 = por %p181, %p182
      %p185 = scmp.ne.s32.totalorder %s170, %s184
      %p186 = scmp.eq.s32.totalorder %s34, 0
      %p187 = por %p185, %p186
      %s188 = ssub.s32 %s28, %s35
      %p189 = scmp.eq.s32.totalorder %s188, 0
      %s191 = sadd.s32 %s190, 1
      %s192 = scalar_select %p189, %s190, %s191
      %p195 = pneg %p189
      %p196 = scmp.eq.s32.totalorder %s28, 1
      %p197 = por %p195, %p196
      %p198 = scmp.ne.s32.totalorder %s190, %s193
      %p199 = scmp.eq.s32.totalorder %s28, 0
      %p200 = por %p198, %p199
      %p201 = scmp.ne.s32.totalorder %s190, %s193
      %p202 = scmp.eq.s32.totalorder %s33, 1
      %p203 = por %p201, %p202
      %p204 = scmp.ne.s32.totalorder %s193, %s194
      %p205 = scmp.eq.s32.totalorder %s33, 0
      %p206 = por %p204, %p205
      %p207 = scmp.ne.s32.totalorder %s193, %s194
      %p208 = scmp.eq.s32.totalorder %s34, 1
      %p209 = por %p207, %p208
      %p211 = scmp.ne.s32.totalorder %s194, %s210
      %p212 = scmp.eq.s32.totalorder %s34, 0
      %p213 = por %p211, %p212
      %s214 = ssub.s32 %s28, %s35
      %p215 = scmp.eq.s32.totalorder %s214, 0
      %s217 = sadd.s32 %s216, 1
      %s218 = scalar_select %p215, %s216, %s217
      %p221 = pneg %p215
      %p222 = scmp.eq.s32.totalorder %s28, 1
      %p223 = por %p221, %p222
      %p224 = scmp.ne.s32.totalorder %s216, %s219
      %p225 = scmp.eq.s32.totalorder %s28, 0
      %p226 = por %p224, %p225
      %p227 = scmp.ne.s32.totalorder %s216, %s219
      %p228 = scmp.eq.s32.totalorder %s33, 1
      %p229 = por %p227, %p228
      %p230 = scmp.ne.s32.totalorder %s219, %s220
      %p231 = scmp.eq.s32.totalorder %s33, 0
      %p232 = por %p230, %p231
      %p233 = scmp.ne.s32.totalorder %s219, %s220
      %p234 = scmp.eq.s32.totalorder %s34, 1
      %p235 = por %p233, %p234
      %p237 = scmp.ne.s32.totalorder %s220, %s236
      %p238 = scmp.eq.s32.totalorder %s34, 0
      %p239 = por %p237, %p238
      %p240 = scmp.le.s32.totalorder 1, %s28
      %p241 = scmp.lt.s32.totalorder %s28, 3
      %p242 = pnand %p240, %p241
      %p243 = pneg %p242
      // Predicated region
      $region9: #{_residual_block_impl.4} parent=5 // pred_check
        _
      $region10: #{_residual_block_impl.4} parent=5 // pred_check_branch
        %245 = sbr.rel (%p242) target = $region12
      $region11: #{_residual_block_impl.4} parent=5 // pred_region
        %s246 = ssub.s32 %s28, 1
        // Predicated region
        $region13: #{_residual_block_impl.4} parent=11 // pred_check
          %p247 = pneg %p75
        $region14: #{_residual_block_impl.4} parent=11 // pred_check_branch
          %249 = sbr.rel (%p247) target = $region16
        $region15: #{_residual_block_impl.4} parent=11 // pred_region
          %s251 = ssub.s32 576, 576
          %252 = vsyncadd [#allocation8], %s251
          %s253 = sshll.u32 [#allocation7], 4
          %s254 = int_to_ptr.vmem [resolvable:$true] %s253
          %259 = dma.hbm_to_vmem [thread:$0]  %s1, 576, %s254, [#allocation8], 64, 64, 4
        $region16: #{_residual_block_impl.4} parent=11 // pred_fallthru
          _
        // Predicated region
        $region17: #{_residual_block_impl.4} parent=11 // pred_check
          %p260 = pneg %p96
        $region18: #{_residual_block_impl.4} parent=11 // pred_check_branch
          %262 = sbr.rel (%p260) target = $region20
        $region19: #{_residual_block_impl.4} parent=11 // pred_region
          %s264 = ssub.s32 16, 16
          %265 = vsyncadd [#allocation8], %s264
          %s267 = sshll.u32 [#allocation9], 4
          %s268 = int_to_ptr.vmem [resolvable:$true] %s267
          %270 = dma.hbm_to_vmem [thread:$0]  %s2, 16, %s268, [#allocation8]
        $region20: #{_residual_block_impl.4} parent=11 // pred_fallthru
          _
        // Predicated region
        $region21: #{_residual_block_impl.4} parent=11 // pred_check
          %p271 = pneg %p117
        $region22: #{_residual_block_impl.4} parent=11 // pred_check_branch
          %273 = sbr.rel (%p271) target = $region24
        $region23: #{_residual_block_impl.4} parent=11 // pred_region
          %s275 = ssub.s32 4608, 4608
          %276 = vsyncadd [#allocation11], %s275
          %s277 = sshll.u32 [#allocation10], 4
          %s278 = int_to_ptr.vmem [resolvable:$true] %s277
          %283 = dma.hbm_to_vmem [thread:$0]  %s3, 4608, %s278, [#allocation11], 128, 128, 8
        $region24: #{_residual_block_impl.4} parent=11 // pred_fallthru
          _
        // Predicated region
        $region25: #{_residual_block_impl.4} parent=11 // pred_check
          %p284 = pneg %p138
        $region26: #{_residual_block_impl.4} parent=11 // pred_check_branch
          %286 = sbr.rel (%p284) target = $region28
        $region27: #{_residual_block_impl.4} parent=11 // pred_region
          %s288 = ssub.s32 16, 16
          %289 = vsyncadd [#allocation11], %s288
          %s291 = sshll.u32 [#allocation12], 4
          %s292 = int_to_ptr.vmem [resolvable:$true] %s291
          %294 = dma.hbm_to_vmem [thread:$0]  %s4, 16, %s292, [#allocation11]
        $region28: #{_residual_block_impl.4} parent=11 // pred_fallthru
          _
        // Predicated region
        $region29: #{_residual_block_impl.4} parent=11 // pred_check
          %p295 = pneg %p159
        $region30: #{_residual_block_impl.4} parent=11 // pred_check_branch
          %297 = sbr.rel (%p295) target = $region32
        $region31: #{_residual_block_impl.4} parent=11 // pred_region
          %s299 = ssub.s32 16, 16
          %300 = vsyncadd [#allocation14], %s299
          %s302 = sshll.u32 [#allocation13], 4
          %s303 = int_to_ptr.vmem [resolvable:$true] %s302
          %305 = dma.hbm_to_vmem [thread:$0]  %s5, 16, %s303, [#allocation14]
        $region32: #{_residual_block_impl.4} parent=11 // pred_fallthru
          _
        // Predicated region
        $region33: #{_residual_block_impl.4} parent=11 // pred_check
          %p306 = pneg %p180
        $region34: #{_residual_block_impl.4} parent=11 // pred_check_branch
          %308 = sbr.rel (%p306) target = $region36
        $region35: #{_residual_block_impl.4} parent=11 // pred_region
          _
        $region36: #{_residual_block_impl.4} parent=11 // pred_fallthru
          _
      $region12: #{_residual_block_impl.4} parent=5 // pred_fallthru
        _
      %p309 = scmp.lt.s32.totalorder %s28, 2
      // Predicated region
      $region37: #{_residual_block_impl.4} parent=5 // pred_check
        %p310 = pneg %p309
      $region38: #{_residual_block_impl.4} parent=5 // pred_check_branch
        %312 = sbr.rel (%p310) target = $region40
      $region39: #{_residual_block_impl.4} parent=5 // pred_region
        // Predicated region
        $region41: #{_residual_block_impl.4} parent=39 // pred_check
          %p313 = pneg %p48
        $region42: #{_residual_block_impl.4} parent=39 // pred_check_branch
          %315 = sbr.rel (%p313) target = $region44
        $region43: #{_residual_block_impl.4} parent=39 // pred_region
          %s316 = sand.u32 %s38, 1
          %s317 = scalar_lea.sflag [#allocation5], %s316
          %s318 = sand.u32 %s38, 1
          %s319 = smul.addr %s318, 288
          %s320 = scalar_lea.vmem [#allocation4], %s319
          %s322 = ssub.s32 4608, 4608
          %323 = vsyncadd %s317, %s322
          %s324 = smul.addr %s28, 36
          %s325 = smul.addr %s324, 128
          %s326 = scalar_lea.hbm %s0, %s325
          %s327 = sshll.u32 %s320, 4
          %s328 = int_to_ptr.vmem [resolvable:$true] %s327
          %333 = dma.hbm_to_vmem [thread:$0]  %s326, 4608, %s328, %s317, 128, 128, 8
        $region44: #{_residual_block_impl.4} parent=39 // pred_fallthru
          _
      $region40: #{_residual_block_impl.4} parent=5 // pred_fallthru
        _
      %p334 = scmp.le.s32.totalorder 1, %s28
      %p335 = scmp.lt.s32.totalorder %s28, 3
      %p336 = pnand %p334, %p335
      %p337 = pneg %p336
      // Predicated region
      $region45: #{_residual_block_impl.4} parent=5 // pred_check
        _
      $region46: #{_residual_block_impl.4} parent=5 // pred_check_branch
        %339 = sbr.rel (%p336) target = $region48
      $region47: #{_residual_block_impl.4} parent=5 // pred_region
        %s340 = ssub.s32 %s28, 1
        %s341 = sand.u32 %s41, 1
        %s342 = scalar_lea.sflag [#allocation5], %s341
        %s343 = sand.u32 %s41, 1
        %s344 = smul.addr %s343, 288
        %s345 = scalar_lea.vmem [#allocation4], %s344
        // Predicated region
        $region49: #{_residual_block_impl.4} parent=47 // pred_check
          %p346 = pneg %p54
        $region50: #{_residual_block_impl.4} parent=47 // pred_check_branch
          %348 = sbr.rel (%p346) target = $region52
        $region51: #{_residual_block_impl.4} parent=47 // pred_region
          %349 = dma.done %s342, 4608
        $region52: #{_residual_block_impl.4} parent=47 // pred_fallthru
          _
        // Predicated region
        $region53: #{_residual_block_impl.4} parent=47 // pred_check
          %p350 = pneg %p75
        $region54: #{_residual_block_impl.4} parent=47 // pred_check_branch
          %352 = sbr.rel (%p350) target = $region56
        $region55: #{_residual_block_impl.4} parent=47 // pred_region
          %353 = dma.done [#allocation8], 576
        $region56: #{_residual_block_impl.4} parent=47 // pred_fallthru
          _
        // Predicated region
        $region57: #{_residual_block_impl.4} parent=47 // pred_check
          %p354 = pneg %p96
        $region58: #{_residual_block_impl.4} parent=47 // pred_check_branch
          %356 = sbr.rel (%p354) target = $region60
        $region59: #{_residual_block_impl.4} parent=47 // pred_region
          %357 = dma.done [#allocation8], 16
        $region60: #{_residual_block_impl.4} parent=47 // pred_fallthru
          _
        // Predicated region
        $region61: #{_residual_block_impl.4} parent=47 // pred_check
          %p358 = pneg %p117
        $region62: #{_residual_block_impl.4} parent=47 // pred_check_branch
          %360 = sbr.rel (%p358) target = $region64
        $region63: #{_residual_block_impl.4} parent=47 // pred_region
          %361 = dma.done [#allocation11], 4608
        $region64: #{_residual_block_impl.4} parent=47 // pred_fallthru
          _
        // Predicated region
        $region65: #{_residual_block_impl.4} parent=47 // pred_check
          %p362 = pneg %p138
        $region66: #{_residual_block_impl.4} parent=47 // pred_check_branch
          %364 = sbr.rel (%p362) target = $region68
        $region67: #{_residual_block_impl.4} parent=47 // pred_region
          %365 = dma.done [#allocation11], 16
        $region68: #{_residual_block_impl.4} parent=47 // pred_fallthru
          _
        // Predicated region
        $region69: #{_residual_block_impl.4} parent=47 // pred_check
          %p366 = pneg %p159
        $region70: #{_residual_block_impl.4} parent=47 // pred_check_branch
          %368 = sbr.rel (%p366) target = $region72
        $region71: #{_residual_block_impl.4} parent=47 // pred_region
          %369 = dma.done [#allocation14], 16
        $region72: #{_residual_block_impl.4} parent=47 // pred_fallthru
          _
        %s370 = sand.u32 %s41, 1
        %s371 = scalar_lea.sflag [#allocation5], %s370
        %s372 = sand.u32 %s41, 1
        %s373 = smul.addr %s372, 288
        %s374 = scalar_lea.vmem [#allocation4], %s373
        %p375 = pneg %p54
        %p376 = pneg %p51
        %p377 = pneg %p75
        %p378 = pneg %p72
        %p379 = pneg %p96
        %p380 = pneg %p93
        %p381 = pneg %p117
        %p382 = pneg %p114
        %p383 = pneg %p138
        %p384 = pneg %p135
        %p385 = pneg %p159
        %p386 = pneg %p156
        %p387 = pneg %p180
        %p388 = pneg %p177
        %p389 = pneg %p206
        %p390 = pneg %p203
        %s391 = sand.u32 %s193, 1
        %s392 = scalar_lea.sflag [#allocation6], %s391
        %s393 = sand.u32 %s193, 1
        %s394 = smul.addr %s393, 288
        %s395 = scalar_lea.vmem [#allocation15], %s394
        %p396 = pneg %p232
        %p397 = pneg %p229
        %s398 = sand.u32 %s219, 1
        %s399 = scalar_lea.sflag [#allocation17], %s398
        %s400 = sand.u32 %s219, 1
        %s401 = smul.addr %s400, 2
        %s402 = scalar_lea.vmem [#allocation16], %s401
        %vm403 = vcmask 31744
        %404 = vst.msk [vmem:[#allocation2] sm:$0xff] %vm403, 0.0
        %405 = vst.msk [vmem:[#allocation2 + $0x8] sm:$0xff] %vm403, 0.0
        %vm406 = vcmask 26624
        %407 = vst.msk [vmem:[#allocation2 + $0x10] sm:$0x7] %vm406, 0.0
        %408 = vst.msk [vmem:[#allocation2 + $0x133] sm:$0xff] %vm403, 0.0
        %409 = vst.msk [vmem:[#allocation2 + $0x13b] sm:$0xff] %vm403, 0.0
        %410 = vst.msk [vmem:[#allocation2 + $0x143] sm:$0xff] %vm403, 0.0
        %411 = vst.msk [vmem:[#allocation2 + $0x14b] sm:$0xff] %vm403, 0.0
        %412 = vst.msk [vmem:[#allocation2 + $0x153] sm:$0x7] %vm406, 0.0
        %v413 = vld [vmem:[%s345] sm:$0xff]
        %v414 = vld [vmem:[%s345 + $0x8] sm:$0xff]
        %v415 = vld [vmem:[%s345 + $0x10] sm:$0xff]
        %v416 = vld [vmem:[%s345 + $0x18] sm:$0xff]
        %v417 = vld [vmem:[%s345 + $0x20] sm:$0xff]
        %v418 = vld [vmem:[%s345 + $0x28] sm:$0xff]
        %v419 = vld [vmem:[%s345 + $0x30] sm:$0xff]
        %v420 = vld [vmem:[%s345 + $0x38] sm:$0xff]
        %v421 = vld [vmem:[%s345 + $0x40] sm:$0xff]
        %v422 = vld [vmem:[%s345 + $0x48] sm:$0xff]
        %v423 = vld [vmem:[%s345 + $0x50] sm:$0xff]
        %v424 = vld [vmem:[%s345 + $0x58] sm:$0xff]
        %v425 = vld [vmem:[%s345 + $0x60] sm:$0xff]
        %v426 = vld [vmem:[%s345 + $0x68] sm:$0xff]
        %v427 = vld [vmem:[%s345 + $0x70] sm:$0xff]
        %v428 = vld [vmem:[%s345 + $0x78] sm:$0xff]
        %v429 = vld [vmem:[%s345 + $0x80] sm:$0xff]
        %v430 = vld [vmem:[%s345 + $0x88] sm:$0xff]
        %v431 = vld [vmem:[%s345 + $0x90] sm:$0xff]
        %v432 = vld [vmem:[%s345 + $0x98] sm:$0xff]
        %v433 = vld [vmem:[%s345 + $0xa0] sm:$0xff]
        %v434 = vld [vmem:[%s345 + $0xa8] sm:$0xff]
        %v435 = vld [vmem:[%s345 + $0xb0] sm:$0xff]
        %v436 = vld [vmem:[%s345 + $0xb8] sm:$0xff]
        %v437 = vld [vmem:[%s345 + $0xc0] sm:$0xff]
        %v438 = vld [vmem:[%s345 + $0xc8] sm:$0xff]
        %v439 = vld [vmem:[%s345 + $0xd0] sm:$0xff]
        %v440 = vld [vmem:[%s345 + $0xd8] sm:$0xff]
        %v441 = vld [vmem:[%s345 + $0xe0] sm:$0xff]
        %v442 = vld [vmem:[%s345 + $0xe8] sm:$0xff]
        %v443 = vld [vmem:[%s345 + $0xf0] sm:$0xff]
        %v444 = vld [vmem:[%s345 + $0xf8] sm:$0xff]
        %v445 = vld [vmem:[%s345 + $0x100] sm:$0xff]
        %v446 = vld [vmem:[%s345 + $0x108] sm:$0xff]
        %v447 = vld [vmem:[%s345 + $0x110] sm:$0xff]
        %v448 = vld [vmem:[%s345 + $0x118] sm:$0xff]
        %v449 = vld [vmem:[#allocation12] sm:$0x1]
        %v451 = vlaneseq
        %v452 = vshrl.u32 %v451, 7
        %v453 = vsub.s32 0, %v452
        %v454 = vrot.slane %v449, %v453
        %v456 = vmul.f32 %v413, %v454
        %v457 = vmul.f32 %v414, %v454
        %v458 = vmul.f32 %v415, %v454
        %v459 = vmul.f32 %v416, %v454
        %v460 = vmul.f32 %v417, %v454
        %v461 = vmul.f32 %v418, %v454
        %v462 = vmul.f32 %v419, %v454
        %v463 = vmul.f32 %v420, %v454
        %v464 = vmul.f32 %v421, %v454
        %v465 = vmul.f32 %v422, %v454
        %v466 = vmul.f32 %v423, %v454
        %v467 = vmul.f32 %v424, %v454
        %v468 = vmul.f32 %v425, %v454
        %v469 = vmul.f32 %v426, %v454
        %v470 = vmul.f32 %v427, %v454
        %v471 = vmul.f32 %v428, %v454
        %v472 = vmul.f32 %v429, %v454
        %v473 = vmul.f32 %v430, %v454
        %v474 = vmul.f32 %v431, %v454
        %v475 = vmul.f32 %v432, %v454
        %v476 = vmul.f32 %v433, %v454
        %v477 = vmul.f32 %v434, %v454
        %v478 = vmul.f32 %v435, %v454
        %v479 = vmul.f32 %v436, %v454
        %v480 = vmul.f32 %v437, %v454
        %v481 = vmul.f32 %v438, %v454
        %v482 = vmul.f32 %v439, %v454
        %v483 = vmul.f32 %v440, %v454
        %v484 = vmul.f32 %v441, %v454
        %v485 = vmul.f32 %v442, %v454
        %v486 = vmul.f32 %v443, %v454
        %v487 = vmul.f32 %v444, %v454
        %v488 = vmul.f32 %v445, %v454
        %v489 = vmul.f32 %v446, %v454
        %v490 = vmul.f32 %v447, %v454
        %v491 = vmul.f32 %v448, %v454
        %v492 = vld [vmem:[#allocation13] sm:$0x1]
        %v494 = vlaneseq
        %v495 = vshrl.u32 %v494, 7
        %v496 = vsub.s32 0, %v495
        %v497 = vrot.slane %v492, %v496
        %v499 = vadd.f32 %v456, %v497
        %v500 = vadd.f32 %v457, %v497
        %v501 = vadd.f32 %v458, %v497
        %v502 = vadd.f32 %v459, %v497
        %v503 = vadd.f32 %v460, %v497
        %v504 = vadd.f32 %v461, %v497
        %v505 = vadd.f32 %v462, %v497
        %v506 = vadd.f32 %v463, %v497
        %v507 = vadd.f32 %v464, %v497
        %v508 = vadd.f32 %v465, %v497
        %v509 = vadd.f32 %v466, %v497
        %v510 = vadd.f32 %v467, %v497
        %v511 = vadd.f32 %v468, %v497
        %v512 = vadd.f32 %v469, %v497
        %v513 = vadd.f32 %v470, %v497
        %v514 = vadd.f32 %v471, %v497
        %v515 = vadd.f32 %v472, %v497
        %v516 = vadd.f32 %v473, %v497
        %v517 = vadd.f32 %v474, %v497
        %v518 = vadd.f32 %v475, %v497
        %v519 = vadd.f32 %v476, %v497
        %v520 = vadd.f32 %v477, %v497
        %v521 = vadd.f32 %v478, %v497
        %v522 = vadd.f32 %v479, %v497
        %v523 = vadd.f32 %v480, %v497
        %v524 = vadd.f32 %v481, %v497
        %v525 = vadd.f32 %v482, %v497
        %v526 = vadd.f32 %v483, %v497
        %v527 = vadd.f32 %v484, %v497
        %v528 = vadd.f32 %v485, %v497
        %v529 = vadd.f32 %v486, %v497
        %v530 = vadd.f32 %v487, %v497
        %v531 = vadd.f32 %v488, %v497
        %v532 = vadd.f32 %v489, %v497
        %v533 = vadd.f32 %v490, %v497
        %v534 = vadd.f32 %v491, %v497
        %vm535 = vcmp.gt.f32.partialorder %v499, 0.0
        %vm536 = vcmp.gt.f32.partialorder %v500, 0.0
        %vm537 = vcmp.gt.f32.partialorder %v501, 0.0
        %vm538 = vcmp.gt.f32.partialorder %v502, 0.0
        %vm539 = vcmp.gt.f32.partialorder %v503, 0.0
        %vm540 = vcmp.gt.f32.partialorder %v504, 0.0
        %vm541 = vcmp.gt.f32.partialorder %v505, 0.0
        %vm542 = vcmp.gt.f32.partialorder %v506, 0.0
        %vm543 = vcmp.gt.f32.partialorder %v507, 0.0
        %vm544 = vcmp.gt.f32.partialorder %v508, 0.0
        %vm545 = vcmp.gt.f32.partialorder %v509, 0.0
        %vm546 = vcmp.gt.f32.partialorder %v510, 0.0
        %vm547 = vcmp.gt.f32.partialorder %v511, 0.0
        %vm548 = vcmp.gt.f32.partialorder %v512, 0.0
        %vm549 = vcmp.gt.f32.partialorder %v513, 0.0
        %vm550 = vcmp.gt.f32.partialorder %v514, 0.0
        %vm551 = vcmp.gt.f32.partialorder %v515, 0.0
        %vm552 = vcmp.gt.f32.partialorder %v516, 0.0
        %vm553 = vcmp.gt.f32.partialorder %v517, 0.0
        %vm554 = vcmp.gt.f32.partialorder %v518, 0.0
        %vm555 = vcmp.gt.f32.partialorder %v519, 0.0
        %vm556 = vcmp.gt.f32.partialorder %v520, 0.0
        %vm557 = vcmp.gt.f32.partialorder %v521, 0.0
        %vm558 = vcmp.gt.f32.partialorder %v522, 0.0
        %vm559 = vcmp.gt.f32.partialorder %v523, 0.0
        %vm560 = vcmp.gt.f32.partialorder %v524, 0.0
        %vm561 = vcmp.gt.f32.partialorder %v525, 0.0
        %vm562 = vcmp.gt.f32.partialorder %v526, 0.0
        %vm563 = vcmp.gt.f32.partialorder %v527, 0.0
        %vm564 = vcmp.gt.f32.partialorder %v528, 0.0
        %vm565 = vcmp.gt.f32.partialorder %v529, 0.0
        %vm566 = vcmp.gt.f32.partialorder %v530, 0.0
        %vm567 = vcmp.gt.f32.partialorder %v531, 0.0
        %vm568 = vcmp.gt.f32.partialorder %v532, 0.0
        %vm569 = vcmp.gt.f32.partialorder %v533, 0.0
        %vm570 = vcmp.gt.f32.partialorder %v534, 0.0
        %s571 = sld [smem:[#allocation3]]
        %v572 = vstv %s571
        %v573 = vmul.f32 %v572, %v499
        %v574 = vmul.f32 %v572, %v500
        %v575 = vmul.f32 %v572, %v501
        %v576 = vmul.f32 %v572, %v502
        %v577 = vmul.f32 %v572, %v503
        %v578 = vmul.f32 %v572, %v504
        %v579 = vmul.f32 %v572, %v505
        %v580 = vmul.f32 %v572, %v506
        %v581 = vmul.f32 %v572, %v507
        %v582 = vmul.f32 %v572, %v508
        %v583 = vmul.f32 %v572, %v509
        %v584 = vmul.f32 %v572, %v510
        %v585 = vmul.f32 %v572, %v511
        %v586 = vmul.f32 %v572, %v512
        %v587 = vmul.f32 %v572, %v513
        %v588 = vmul.f32 %v572, %v514
        %v589 = vmul.f32 %v572, %v515
        %v590 = vmul.f32 %v572, %v516
        %v591 = vmul.f32 %v572, %v517
        %v592 = vmul.f32 %v572, %v518
        %v593 = vmul.f32 %v572, %v519
        %v594 = vmul.f32 %v572, %v520
        %v595 = vmul.f32 %v572, %v521
        %v596 = vmul.f32 %v572, %v522
        %v597 = vmul.f32 %v572, %v523
        %v598 = vmul.f32 %v572, %v524
        %v599 = vmul.f32 %v572, %v525
        %v600 = vmul.f32 %v572, %v526
        %v601 = vmul.f32 %v572, %v527
        %v602 = vmul.f32 %v572, %v528
        %v603 = vmul.f32 %v572, %v529
        %v604 = vmul.f32 %v572, %v530
        %v605 = vmul.f32 %v572, %v531
        %v606 = vmul.f32 %v572, %v532
        %v607 = vmul.f32 %v572, %v533
        %v608 = vmul.f32 %v572, %v534
        %v609 = vsel %vm535, %v499, %v573
        %v610 = vsel %vm536, %v500, %v574
        %v611 = vsel %vm537, %v501, %v575
        %v612 = vsel %vm538, %v502, %v576
        %v613 = vsel %vm539, %v503, %v577
        %v614 = vsel %vm540, %v504, %v578
        %v615 = vsel %vm541, %v505, %v579
        %v616 = vsel %vm542, %v506, %v580
        %v617 = vsel %vm543, %v507, %v581
        %v618 = vsel %vm544, %v508, %v582
        %v619 = vsel %vm545, %v509, %v583
        %v620 = vsel %vm546, %v510, %v584
        %v621 = vsel %vm547, %v511, %v585
        %v622 = vsel %vm548, %v512, %v586
        %v623 = vsel %vm549, %v513, %v587
        %v624 = vsel %vm550, %v514, %v588
        %v625 = vsel %vm551, %v515, %v589
        %v626 = vsel %vm552, %v516, %v590
        %v627 = vsel %vm553, %v517, %v591
        %v628 = vsel %vm554, %v518, %v592
        %v629 = vsel %vm555, %v519, %v593
        %v630 = vsel %vm556, %v520, %v594
        %v631 = vsel %vm557, %v521, %v595
        %v632 = vsel %vm558, %v522, %v596
        %v633 = vsel %vm559, %v523, %v597
        %v634 = vsel %vm560, %v524, %v598
        %v635 = vsel %vm561, %v525, %v599
        %v636 = vsel %vm562, %v526, %v600
        %v637 = vsel %vm563, %v527, %v601
        %v638 = vsel %vm564, %v528, %v602
        %v639 = vsel %vm565, %v529, %v603
        %v640 = vsel %vm566, %v530, %v604
        %v641 = vsel %vm567, %v531, %v605
        %v642 = vsel %vm568, %v532, %v606
        %v643 = vsel %vm569, %v533, %v607
        %v644 = vsel %vm570, %v534, %v608
        %v645 = vld [vmem:[#allocation10] sm:$0xff]
        %v646 = vld [vmem:[#allocation10 + $0x8] sm:$0xff]
        %v647 = vld [vmem:[#allocation10 + $0x10] sm:$0xff]
        %v648 = vld [vmem:[#allocation10 + $0x18] sm:$0xff]
        %v649 = vld [vmem:[#allocation10 + $0x20] sm:$0xff]
        %v650 = vld [vmem:[#allocation10 + $0x28] sm:$0xff]
        %v651 = vld [vmem:[#allocation10 + $0x30] sm:$0xff]
        %v652 = vld [vmem:[#allocation10 + $0x38] sm:$0xff]
        %v653 = vld [vmem:[#allocation10 + $0x40] sm:$0xff]
        %v654 = vld [vmem:[#allocation10 + $0x48] sm:$0xff]
        %v655 = vld [vmem:[#allocation10 + $0x50] sm:$0xff]
        %v656 = vld [vmem:[#allocation10 + $0x58] sm:$0xff]
        %v657 = vld [vmem:[#allocation10 + $0x60] sm:$0xff]
        %v658 = vld [vmem:[#allocation10 + $0x68] sm:$0xff]
        %v659 = vld [vmem:[#allocation10 + $0x70] sm:$0xff]
        %v660 = vld [vmem:[#allocation10 + $0x78] sm:$0xff]
        %v661 = vld [vmem:[#allocation10 + $0x80] sm:$0xff]
        %v662 = vld [vmem:[#allocation10 + $0x88] sm:$0xff]
        %v663 = vld [vmem:[#allocation10 + $0x90] sm:$0xff]
        %v664 = vld [vmem:[#allocation10 + $0x98] sm:$0xff]
        %v665 = vld [vmem:[#allocation10 + $0xa0] sm:$0xff]
        %v666 = vld [vmem:[#allocation10 + $0xa8] sm:$0xff]
        %v667 = vld [vmem:[#allocation10 + $0xb0] sm:$0xff]
        %v668 = vld [vmem:[#allocation10 + $0xb8] sm:$0xff]
        %v669 = vld [vmem:[#allocation10 + $0xc0] sm:$0xff]
        %v670 = vld [vmem:[#allocation10 + $0xc8] sm:$0xff]
        %v671 = vld [vmem:[#allocation10 + $0xd0] sm:$0xff]
        %v672 = vld [vmem:[#allocation10 + $0xd8] sm:$0xff]
        %v673 = vld [vmem:[#allocation10 + $0xe0] sm:$0xff]
        %v674 = vld [vmem:[#allocation10 + $0xe8] sm:$0xff]
        %v675 = vld [vmem:[#allocation10 + $0xf0] sm:$0xff]
        %v676 = vld [vmem:[#allocation10 + $0xf8] sm:$0xff]
        %v677 = vld [vmem:[#allocation10 + $0x100] sm:$0xff]
        %v678 = vld [vmem:[#allocation10 + $0x108] sm:$0xff]
        %v679 = vld [vmem:[#allocation10 + $0x110] sm:$0xff]
        %v680 = vld [vmem:[#allocation10 + $0x118] sm:$0xff]
        %682 = vset.pattern.permute.xlu0 0
        %683 = vperm.xlu0 %682, %v645
        %v684 = vpop.permute.xlu0 %683
        %687 = vset.pattern.permute.xlu0 0
        %688 = vperm.xlu0 %687, %v646
        %v689 = vpop.permute.xlu0 %688
        %692 = vset.pattern.permute.xlu0 0
        %693 = vperm.xlu0 %692, %v647
        %v694 = vpop.permute.xlu0 %693
        %697 = vset.pattern.permute.xlu0 0
        %698 = vperm.xlu0 %697, %v648
        %v699 = vpop.permute.xlu0 %698
        %702 = vset.pattern.permute.xlu0 0
        %703 = vperm.xlu0 %702, %v649
        %v704 = vpop.permute.xlu0 %703
        %707 = vset.pattern.permute.xlu0 0
        %708 = vperm.xlu0 %707, %v650
        %v709 = vpop.permute.xlu0 %708
        %712 = vset.pattern.permute.xlu0 0
        %713 = vperm.xlu0 %712, %v651
        %v714 = vpop.permute.xlu0 %713
        %717 = vset.pattern.permute.xlu0 0
        %718 = vperm.xlu0 %717, %v652
        %v719 = vpop.permute.xlu0 %718
        %722 = vset.pattern.permute.xlu0 0
        %723 = vperm.xlu0 %722, %v653
        %v724 = vpop.permute.xlu0 %723
        %727 = vset.pattern.permute.xlu0 0
        %728 = vperm.xlu0 %727, %v654
        %v729 = vpop.permute.xlu0 %728
        %732 = vset.pattern.permute.xlu0 0
        %733 = vperm.xlu0 %732, %v655
        %v734 = vpop.permute.xlu0 %733
        %737 = vset.pattern.permute.xlu0 0
        %738 = vperm.xlu0 %737, %v656
        %v739 = vpop.permute.xlu0 %738
        %742 = vset.pattern.permute.xlu0 0
        %743 = vperm.xlu0 %742, %v657
        %v744 = vpop.permute.xlu0 %743
        %747 = vset.pattern.permute.xlu0 0
        %748 = vperm.xlu0 %747, %v658
        %v749 = vpop.permute.xlu0 %748
        %752 = vset.pattern.permute.xlu0 0
        %753 = vperm.xlu0 %752, %v659
        %v754 = vpop.permute.xlu0 %753
        %757 = vset.pattern.permute.xlu0 0
        %758 = vperm.xlu0 %757, %v660
        %v759 = vpop.permute.xlu0 %758
        %762 = vset.pattern.permute.xlu0 0
        %763 = vperm.xlu0 %762, %v661
        %v764 = vpop.permute.xlu0 %763
        %767 = vset.pattern.permute.xlu0 0
        %768 = vperm.xlu0 %767, %v662
        %v769 = vpop.permute.xlu0 %768
        %772 = vset.pattern.permute.xlu0 0
        %773 = vperm.xlu0 %772, %v663
        %v774 = vpop.permute.xlu0 %773
        %777 = vset.pattern.permute.xlu0 0
        %778 = vperm.xlu0 %777, %v664
        %v779 = vpop.permute.xlu0 %778
        %782 = vset.pattern.permute.xlu0 0
        %783 = vperm.xlu0 %782, %v665
        %v784 = vpop.permute.xlu0 %783
        %787 = vset.pattern.permute.xlu0 0
        %788 = vperm.xlu0 %787, %v666
        %v789 = vpop.permute.xlu0 %788
        %792 = vset.pattern.permute.xlu0 0
        %793 = vperm.xlu0 %792, %v667
        %v794 = vpop.permute.xlu0 %793
        %797 = vset.pattern.permute.xlu0 0
        %798 = vperm.xlu0 %797, %v668
        %v799 = vpop.permute.xlu0 %798
        %802 = vset.pattern.permute.xlu0 0
        %803 = vperm.xlu0 %802, %v669
        %v804 = vpop.permute.xlu0 %803
        %807 = vset.pattern.permute.xlu0 0
        %808 = vperm.xlu0 %807, %v670
        %v809 = vpop.permute.xlu0 %808
        %812 = vset.pattern.permute.xlu0 0
        %813 = vperm.xlu0 %812, %v671
        %v814 = vpop.permute.xlu0 %813
        %817 = vset.pattern.permute.xlu0 0
        %818 = vperm.xlu0 %817, %v672
        %v819 = vpop.permute.xlu0 %818
        %822 = vset.pattern.permute.xlu0 0
        %823 = vperm.xlu0 %822, %v673
        %v824 = vpop.permute.xlu0 %823
        %827 = vset.pattern.permute.xlu0 0
        %828 = vperm.xlu0 %827, %v674
        %v829 = vpop.permute.xlu0 %828
        %832 = vset.pattern.permute.xlu0 0
        %833 = vperm.xlu0 %832, %v675
        %v834 = vpop.permute.xlu0 %833
        %837 = vset.pattern.permute.xlu0 0
        %838 = vperm.xlu0 %837, %v676
        %v839 = vpop.permute.xlu0 %838
        %842 = vset.pattern.permute.xlu0 0
        %843 = vperm.xlu0 %842, %v677
        %v844 = vpop.permute.xlu0 %843
        %847 = vset.pattern.permute.xlu0 0
        %848 = vperm.xlu0 %847, %v678
        %v849 = vpop.permute.xlu0 %848
        %852 = vset.pattern.permute.xlu0 0
        %853 = vperm.xlu0 %852, %v679
        %v854 = vpop.permute.xlu0 %853
        %857 = vset.pattern.permute.xlu0 0
        %858 = vperm.xlu0 %857, %v680
        %v859 = vpop.permute.xlu0 %858
        %v861 = vmul.f32 %v609, %v684
        %v862 = vmul.f32 %v610, %v689
        %v863 = vmul.f32 %v611, %v694
        %v864 = vmul.f32 %v612, %v699
        %v865 = vmul.f32 %v613, %v704
        %v866 = vmul.f32 %v614, %v709
        %v867 = vmul.f32 %v615, %v714
        %v868 = vmul.f32 %v616, %v719
        %v869 = vmul.f32 %v617, %v724
        %v870 = vmul.f32 %v618, %v729
        %v871 = vmul.f32 %v619, %v734
        %v872 = vmul.f32 %v620, %v739
        %v873 = vmul.f32 %v621, %v744
        %v874 = vmul.f32 %v622, %v749
        %v875 = vmul.f32 %v623, %v754
        %v876 = vmul.f32 %v624, %v759
        %v877 = vmul.f32 %v625, %v764
        %v878 = vmul.f32 %v626, %v769
        %v879 = vmul.f32 %v627, %v774
        %v880 = vmul.f32 %v628, %v779
        %v881 = vmul.f32 %v629, %v784
        %v882 = vmul.f32 %v630, %v789
        %v883 = vmul.f32 %v631, %v794
        %v884 = vmul.f32 %v632, %v799
        %v885 = vmul.f32 %v633, %v804
        %v886 = vmul.f32 %v634, %v809
        %v887 = vmul.f32 %v635, %v814
        %v888 = vmul.f32 %v636, %v819
        %v889 = vmul.f32 %v637, %v824
        %v890 = vmul.f32 %v638, %v829
        %v891 = vmul.f32 %v639, %v834
        %v892 = vmul.f32 %v640, %v839
        %v893 = vmul.f32 %v641, %v844
        %v894 = vmul.f32 %v642, %v849
        %v895 = vmul.f32 %v643, %v854
        %v896 = vmul.f32 %v644, %v859
        %897 = vst.msk [vmem:[#allocation2 + $0x13] sm:$0xff] %vm403, %v861
        %898 = vst.msk [vmem:[#allocation2 + $0x1b] sm:$0xff] %vm403, %v862
        %899 = vst.msk [vmem:[#allocation2 + $0x23] sm:$0xff] %vm403, %v863
        %900 = vst.msk [vmem:[#allocation2 + $0x2b] sm:$0xff] %vm403, %v864
        %901 = vst.msk [vmem:[#allocation2 + $0x33] sm:$0xff] %vm403, %v865
        %902 = vst.msk [vmem:[#allocation2 + $0x3b] sm:$0xff] %vm403, %v866
        %903 = vst.msk [vmem:[#allocation2 + $0x43] sm:$0xff] %vm403, %v867
        %904 = vst.msk [vmem:[#allocation2 + $0x4b] sm:$0xff] %vm403, %v868
        %905 = vst.msk [vmem:[#allocation2 + $0x53] sm:$0xff] %vm403, %v869
        %906 = vst.msk [vmem:[#allocation2 + $0x5b] sm:$0xff] %vm403, %v870
        %907 = vst.msk [vmem:[#allocation2 + $0x63] sm:$0xff] %vm403, %v871
        %908 = vst.msk [vmem:[#allocation2 + $0x6b] sm:$0xff] %vm403, %v872
        %909 = vst.msk [vmem:[#allocation2 + $0x73] sm:$0xff] %vm403, %v873
        %910 = vst.msk [vmem:[#allocation2 + $0x7b] sm:$0xff] %vm403, %v874
        %911 = vst.msk [vmem:[#allocation2 + $0x83] sm:$0xff] %vm403, %v875
        %912 = vst.msk [vmem:[#allocation2 + $0x8b] sm:$0xff] %vm403, %v876
        %913 = vst.msk [vmem:[#allocation2 + $0x93] sm:$0xff] %vm403, %v877
        %914 = vst.msk [vmem:[#allocation2 + $0x9b] sm:$0xff] %vm403, %v878
        %915 = vst.msk [vmem:[#allocation2 + $0xa3] sm:$0xff] %vm403, %v879
        %916 = vst.msk [vmem:[#allocation2 + $0xab] sm:$0xff] %vm403, %v880
        %917 = vst.msk [vmem:[#allocation2 + $0xb3] sm:$0xff] %vm403, %v881
        %918 = vst.msk [vmem:[#allocation2 + $0xbb] sm:$0xff] %vm403, %v882
        %919 = vst.msk [vmem:[#allocation2 + $0xc3] sm:$0xff] %vm403, %v883
        %920 = vst.msk [vmem:[#allocation2 + $0xcb] sm:$0xff] %vm403, %v884
        %921 = vst.msk [vmem:[#allocation2 + $0xd3] sm:$0xff] %vm403, %v885
        %922 = vst.msk [vmem:[#allocation2 + $0xdb] sm:$0xff] %vm403, %v886
        %923 = vst.msk [vmem:[#allocation2 + $0xe3] sm:$0xff] %vm403, %v887
        %924 = vst.msk [vmem:[#allocation2 + $0xeb] sm:$0xff] %vm403, %v888
        %925 = vst.msk [vmem:[#allocation2 + $0xf3] sm:$0xff] %vm403, %v889
        %926 = vst.msk [vmem:[#allocation2 + $0xfb] sm:$0xff] %vm403, %v890
        %927 = vst.msk [vmem:[#allocation2 + $0x103] sm:$0xff] %vm403, %v891
        %928 = vst.msk [vmem:[#allocation2 + $0x10b] sm:$0xff] %vm403, %v892
        %929 = vst.msk [vmem:[#allocation2 + $0x113] sm:$0xff] %vm403, %v893
        %930 = vst.msk [vmem:[#allocation2 + $0x11b] sm:$0xff] %vm403, %v894
        %931 = vst.msk [vmem:[#allocation2 + $0x123] sm:$0xff] %vm403, %v895
        %932 = vst.msk [vmem:[#allocation2 + $0x12b] sm:$0xff] %vm403, %v896
        %v933 = vld [vmem:[#allocation2] sm:$0xff]
        %v934 = vld [vmem:[#allocation2 + $0x8] sm:$0xff]
        %v935 = vld [vmem:[#allocation2 + $0x10] sm:$0xff]
        %v936 = vld [vmem:[#allocation2 + $0x18] sm:$0xff]
        %v937 = vld [vmem:[#allocation2 + $0x20] sm:$0xff]
        %v938 = vld [vmem:[#allocation2 + $0x28] sm:$0xff]
        %v939 = vld [vmem:[#allocation2 + $0x30] sm:$0xff]
        %v940 = vld [vmem:[#allocation2 + $0x38] sm:$0xff]
        %v941 = vld [vmem:[#allocation2 + $0x40] sm:$0xff]
        %v942 = vld [vmem:[#allocation2 + $0x48] sm:$0xff]
        %v943 = vld [vmem:[#allocation2 + $0x50] sm:$0xff]
        %v944 = vld [vmem:[#allocation2 + $0x58] sm:$0xff]
        %v945 = vld [vmem:[#allocation2 + $0x60] sm:$0xff]
        %v946 = vld [vmem:[#allocation2 + $0x68] sm:$0xff]
        %v947 = vld [vmem:[#allocation2 + $0x70] sm:$0xff]
        %v948 = vld [vmem:[#allocation2 + $0x78] sm:$0xff]
        %v949 = vld [vmem:[#allocation2 + $0x80] sm:$0xff]
        %v950 = vld [vmem:[#allocation2 + $0x88] sm:$0xff]
        %v951 = vld [vmem:[#allocation2 + $0x90] sm:$0xff]
        %v952 = vld [vmem:[#allocation2 + $0x98] sm:$0xff]
        %v953 = vld [vmem:[#allocation2 + $0xa0] sm:$0xff]
        %v954 = vld [vmem:[#allocation2 + $0xa8] sm:$0xff]
        %v955 = vld [vmem:[#allocation2 + $0xb0] sm:$0xff]
        %v956 = vld [vmem:[#allocation2 + $0xb8] sm:$0xff]
        %v957 = vld [vmem:[#allocation2 + $0xc0] sm:$0xff]
        %v958 = vld [vmem:[#allocation2 + $0xc8] sm:$0xff]
        %v959 = vld [vmem:[#allocation2 + $0xd0] sm:$0xff]
        %v960 = vld [vmem:[#allocation2 + $0xd8] sm:$0xff]
        %v961 = vld [vmem:[#allocation2 + $0xe0] sm:$0xff]
        %v962 = vld [vmem:[#allocation2 + $0xe8] sm:$0xff]
        %v963 = vld [vmem:[#allocation2 + $0xf0] sm:$0xff]
        %v964 = vld [vmem:[#allocation2 + $0xf8] sm:$0xff]
        %v965 = vld [vmem:[#allocation2 + $0x100] sm:$0xff]
        %v966 = vld [vmem:[#allocation2 + $0x108] sm:$0xff]
        %v967 = vld [vmem:[#allocation2 + $0x110] sm:$0xff]
        %v968 = vld [vmem:[#allocation2 + $0x118] sm:$0xff]
        %v969 = vld [vmem:[#allocation7] sm:$0xf]
        %v970 = vld [vmem:[#allocation2 + $0x1] sm:$0xff]
        %v971 = vld [vmem:[#allocation2 + $0x9] sm:$0xff]
        %v972 = vld [vmem:[#allocation2 + $0x11] sm:$0xff]
        %v973 = vld [vmem:[#allocation2 + $0x19] sm:$0xff]
        %v974 = vld [vmem:[#allocation2 + $0x21] sm:$0xff]
        %v975 = vld [vmem:[#allocation2 + $0x29] sm:$0xff]
        %v976 = vld [vmem:[#allocation2 + $0x31] sm:$0xff]
        %v977 = vld [vmem:[#allocation2 + $0x39] sm:$0xff]
        %v978 = vld [vmem:[#allocation2 + $0x41] sm:$0xff]
        %v979 = vld [vmem:[#allocation2 + $0x49] sm:$0xff]
        %v980 = vld [vmem:[#allocation2 + $0x51] sm:$0xff]
        %v981 = vld [vmem:[#allocation2 + $0x59] sm:$0xff]
        %v982 = vld [vmem:[#allocation2 + $0x61] sm:$0xff]
        %v983 = vld [vmem:[#allocation2 + $0x69] sm:$0xff]
        %v984 = vld [vmem:[#allocation2 + $0x71] sm:$0xff]
        %v985 = vld [vmem:[#allocation2 + $0x79] sm:$0xff]
        %v986 = vld [vmem:[#allocation2 + $0x81] sm:$0xff]
        %v987 = vld [vmem:[#allocation2 + $0x89] sm:$0xff]
        %v988 = vld [vmem:[#allocation2 + $0x91] sm:$0xff]
        %v989 = vld [vmem:[#allocation2 + $0x99] sm:$0xff]
        %v990 = vld [vmem:[#allocation2 + $0xa1] sm:$0xff]
        %v991 = vld [vmem:[#allocation2 + $0xa9] sm:$0xff]
        %v992 = vld [vmem:[#allocation2 + $0xb1] sm:$0xff]
        %v993 = vld [vmem:[#allocation2 + $0xb9] sm:$0xff]
        %v994 = vld [vmem:[#allocation2 + $0xc1] sm:$0xff]
        %v995 = vld [vmem:[#allocation2 + $0xc9] sm:$0xff]
        %v996 = vld [vmem:[#allocation2 + $0xd1] sm:$0xff]
        %v997 = vld [vmem:[#allocation2 + $0xd9] sm:$0xff]
        %v998 = vld [vmem:[#allocation2 + $0xe1] sm:$0xff]
        %v999 = vld [vmem:[#allocation2 + $0xe9] sm:$0xff]
        %v1000 = vld [vmem:[#allocation2 + $0xf1] sm:$0xff]
        %v1001 = vld [vmem:[#allocation2 + $0xf9] sm:$0xff]
        %v1002 = vld [vmem:[#allocation2 + $0x101] sm:$0xff]
        %v1003 = vld [vmem:[#allocation2 + $0x109] sm:$0xff]
        %v1004 = vld [vmem:[#allocation2 + $0x111] sm:$0xff]
        %v1005 = vld [vmem:[#allocation2 + $0x119] sm:$0xff]
        %s1006 = scalar_lea.vmem [#allocation7], 4
        %v1007 = vld [vmem:[%s1006] sm:$0xf]
        %v1009 = vsel %vm403, %v970, 0
        %v1012 = vsel %vm403, %v971, 0
        %v1015 = vsel %vm403, %v972, 0
        %v1018 = vsel %vm403, %v973, 0
        %v1021 = vsel %vm403, %v974, 0
        %v1024 = vsel %vm403, %v975, 0
        %v1027 = vsel %vm403, %v976, 0
        %v1030 = vsel %vm403, %v977, 0
        %v1033 = vsel %vm403, %v978, 0
        %v1036 = vsel %vm403, %v979, 0
        %v1039 = vsel %vm403, %v980, 0
        %v1042 = vsel %vm403, %v981, 0
        %v1045 = vsel %vm403, %v982, 0
        %v1048 = vsel %vm403, %v983, 0
        %v1051 = vsel %vm403, %v984, 0
        %v1054 = vsel %vm403, %v985, 0
        %v1057 = vsel %vm403, %v986, 0
        %v1060 = vsel %vm403, %v987, 0
        %v1063 = vsel %vm403, %v988, 0
        %v1066 = vsel %vm403, %v989, 0
        %v1069 = vsel %vm403, %v990, 0
        %v1072 = vsel %vm403, %v991, 0
        %v1075 = vsel %vm403, %v992, 0
        %v1078 = vsel %vm403, %v993, 0
        %v1081 = vsel %vm403, %v994, 0
        %v1084 = vsel %vm403, %v995, 0
        %v1087 = vsel %vm403, %v996, 0
        %v1090 = vsel %vm403, %v997, 0
        %v1093 = vsel %vm403, %v998, 0
        %v1096 = vsel %vm403, %v999, 0
        %v1099 = vsel %vm403, %v1000, 0
        %v1102 = vsel %vm403, %v1001, 0
        %v1105 = vsel %vm403, %v1002, 0
        %v1108 = vsel %vm403, %v1003, 0
        %v1111 = vsel %vm403, %v1004, 0
        %v1114 = vsel %vm403, %v1005, 0
        %vm1116 = vcmask 1043456
        %v1118 = vsel %vm1116, %v1007, 0
        %1120 = vmatprep.subr.mxu0 0.0
        %1121 = vmatpush1.msra.mxu0 %v1118
        %1122 = vmatprep.subr.mxu0 0.0
        %1123 = vmatpush1.msra.mxu0 0.0
        %1124 = vmatprep.subr.mxu0 0.0
        %1125 = vmatpush1.msra.mxu0 0.0
        %1126 = vmatprep.subr.mxu0 0.0
        %1127 = vmatpush1.msra.mxu0 0.0
        %1128 = vmatprep.subr.mxu0 0.0
        %1129 = vmatpush1.msra.mxu0 0.0
        %1130 = vmatprep.subr.mxu0 0.0
        %1131 = vmatpush1.msra.mxu0 0.0
        %1132 = vmatprep.subr.mxu0 0.0
        %1133 = vmatpush1.msra.mxu0 0.0
        %1134 = vmatprep.subr.mxu0 0.0
        %1135 = vmatpush1.msra.mxu0 0.0
        %1136 = vmatprep.subr.mxu0 0.0
        %1137 = vmatpush1.msra.mxu0 0.0
        %1138 = vmatprep.subr.mxu0 0.0
        %1139 = vmatpush1.msra.mxu0 0.0
        %1140 = vmatprep.subr.mxu0 0.0
        %1141 = vmatpush1.msra.mxu0 0.0
        %1142 = vmatprep.subr.mxu0 0.0
        %1143 = vmatpush1.msra.mxu0 0.0
        %1144 = vmatprep.subr.mxu0 0.0
        %1145 = vmatpush1.msra.mxu0 0.0
        %1146 = vmatprep.subr.mxu0 0.0
        %1147 = vmatpush1.msra.mxu0 0.0
        %1148 = vmatprep.subr.mxu0 0.0
        %1149 = vmatpush1.msra.mxu0 0.0
        %1150 = vmatprep.subr.mxu0 0.0
        %1151 = vmatpush1.msra.mxu0 0.0
        %1152 = vmatprep.subr.mxu0 0.0
        %1153 = vmatpush1.msra.mxu0 0.0
        %1154 = vmatprep.subr.mxu0 0.0
        %1155 = vmatpush1.msra.mxu0 0.0
        %1156 = vmatprep.subr.mxu0 0.0
        %1157 = vmatpush1.msra.mxu0 0.0
        %1158 = vmatprep.subr.mxu0 0.0
        %1159 = vmatpush1.msra.mxu0 0.0
        %1160 = vmatprep.subr.mxu0 0.0
        %1161 = vmatpush1.msra.mxu0 0.0
        %1162 = vmatprep.subr.mxu0 0.0
        %1163 = vmatpush1.msra.mxu0 0.0
        %1164 = vmatprep.subr.mxu0 0.0
        %1165 = vmatpush1.msra.mxu0 0.0
        %1166 = vmatprep.subr.mxu0 0.0
        %1167 = vmatpush1.msra.mxu0 0.0
        %1168 = vmatprep.subr.mxu0 0.0
        %1169 = vmatpush1.msra.mxu0 0.0
        %1170 = vmatprep.subr.mxu0 0.0
        %1171 = vmatpush1.msra.mxu0 0.0
        %1172 = vmatprep.subr.mxu0 0.0
        %1173 = vmatpush1.msra.mxu0 0.0
        %1174 = vmatprep.subr.mxu0 0.0
        %1175 = vmatpush1.msra.mxu0 0.0
        %1176 = vmatprep.subr.mxu0 0.0
        %1177 = vmatpush1.msra.mxu0 0.0
        %1178 = vmatprep.subr.mxu0 0.0
        %1179 = vmatpush1.msra.mxu0 0.0
        %1180 = vmatprep.subr.mxu0 0.0
        %1181 = vmatpush1.msra.mxu0 0.0
        %1182 = vmatprep.subr.mxu0 0.0
        %1183 = vmatpush1.msra.mxu0 0.0
        %1184 = vmatprep.mubr.f32.mxu0 0.0
        %1185 = vmatmul.mubr.f32.gmra.mrb[0].mxu0 %v1009
        %v1186 = vpop.f32.mrb[0].mxu0
        %v1187 = vadd.f32 0.0, %v1186
        %v1188 = vpop.f32.mrb[0].mxu0
        %1189 = vmatprep.mubr.f32.mxu0 0.0
        %1190 = vmatmul.mubr.f32.gmra.mrb[0].mxu0 %v1012
        %v1191 = vpop.f32.mrb[0].mxu0
        %v1192 = vadd.f32 0.0, %v1191
        %v1193 = vpop.f32.mrb[0].mxu0
        %1194 = vmatprep.mubr.f32.mxu0 0.0
        %1195 = vmatmul.mubr.f32.gmra.mrb[0].mxu0 %v1015
        %v1196 = vpop.f32.mrb[0].mxu0
        %v1197 = vadd.f32 0.0, %v1196
        %v1198 = vpop.f32.mrb[0].mxu0
        %1199 = vmatprep.mubr.f32.mxu0 0.0
        %1200 = vmatmul.mubr.f32.gmra.mrb[0].mxu0 %v1018
        %v1201 = vpop.f32.mrb[0].mxu0
        %v1202 = vadd.f32 0.0, %v1201
        %v1203 = vpop.f32.mrb[0].mxu0
        %1204 = vmatprep.mubr.f32.mxu0 0.0
        %1205 = vmatmul.mubr.f32.gmra.mrb[0].mxu0 %v1021
        %v1206 = vpop.f32.mrb[0].mxu0
        %v1207 = vadd.f32 0.0, %v1206
        %v1208 = vpop.f32.mrb[0].mxu0
        %1209 = vmatprep.mubr.f32.mxu0 0.0
        %1210 = vmatmul.mubr.f32.gmra.mrb[0].mxu0 %v1024
        %v1211 = vpop.f32.mrb[0].mxu0
        %v1212 = vadd.f32 0.0, %v1211
        %v1213 = vpop.f32.mrb[0].mxu0
        %1214 = vmatprep.mubr.f32.mxu0 0.0
        %1215 = vmatmul.mubr.f32.gmra.mrb[0].mxu0 %v1027
        %v1216 = vpop.f32.mrb[0].mxu0
        %v1217 = vadd.f32 0.0, %v1216
        %v1218 = vpop.f32.mrb[0].mxu0
        %1219 = vmatprep.mubr.f32.mxu0 0.0
        %1220 = vmatmul.mubr.f32.gmra.mrb[0].mxu0 %v1030
        %v1221 = vpop.f32.mrb[0].mxu0
        %v1222 = vadd.f32 0.0, %v1221
        %v1223 = vpop.f32.mrb[0].mxu0
        %1224 = vmatprep.mubr.f32.mxu0 0.0
        %1225 = vmatmul.mubr.f32.gmra.mrb[0].mxu0 %v1033
        %v1226 = vpop.f32.mrb[0].mxu0
        %v1227 = vadd.f32 0.0, %v1226
        %v1228 = vpop.f32.mrb[0].mxu0
        %1229 = vmatprep.mubr.f32.mxu0 0.0
        %1230 = vmatmul.mubr.f32.gmra.mrb[0].mxu0 %v1036
        %v1231 = vpop.f32.mrb[0].mxu0
        %v1232 = vadd.f32 0.0, %v1231
        %v1233 = vpop.f32.mrb[0].mxu0
        %1234 = vmatprep.mubr.f32.mxu0 0.0
        %1235 = vmatmul.mubr.f32.gmra.mrb[0].mxu0 %v1039
        %v1236 = vpop.f32.mrb[0].mxu0
        %v1237 = vadd.f32 0.0, %v1236
        %v1238 = vpop.f32.mrb[0].mxu0
        %1239 = vmatprep.mubr.f32.mxu0 0.0
        %1240 = vmatmul.mubr.f32.gmra.mrb[0].mxu0 %v1042
        %v1241 = vpop.f32.mrb[0].mxu0
        %v1242 = vadd.f32 0.0, %v1241
        %v1243 = vpop.f32.mrb[0].mxu0
        %1244 = vmatprep.mubr.f32.mxu0 0.0
        %1245 = vmatmul.mubr.f32.gmra.mrb[0].mxu0 %v1045
        %v1246 = vpop.f32.mrb[0].mxu0
        %v1247 = vadd.f32 0.0, %v1246
        %v1248 = vpop.f32.mrb[0].mxu0
        %1249 = vmatprep.mubr.f32.mxu0 0.0
        %1250 = vmatmul.mubr.f32.gmra.mrb[0].mxu0 %v1048
        %v1251 = vpop.f32.mrb[0].mxu0
        %v1252 = vadd.f32 0.0, %v1251
        %v1253 = vpop.f32.mrb[0].mxu0
        %1254 = vmatprep.mubr.f32.mxu0 0.0
        %1255 = vmatmul.mubr.f32.gmra.mrb[0].mxu0 %v1051
        %v1256 = vpop.f32.mrb[0].mxu0
        %v1257 = vadd.f32 0.0, %v1256
        %v1258 = vpop.f32.mrb[0].mxu0
        %1259 = vmatprep.mubr.f32.mxu0 0.0
        %1260 = vmatmul.mubr.f32.gmra.mrb[0].mxu0 %v1054
        %v1261 = vpop.f32.mrb[0].mxu0
        %v1262 = vadd.f32 0.0, %v1261
        %v1263 = vpop.f32.mrb[0].mxu0
        %1264 = vmatprep.mubr.f32.mxu0 0.0
        %1265 = vmatmul.mubr.f32.gmra.mrb[0].mxu0 %v1057
        %v1266 = vpop.f32.mrb[0].mxu0
        %v1267 = vadd.f32 0.0, %v1266
        %v1268 = vpop.f32.mrb[0].mxu0
        %1269 = vmatprep.mubr.f32.mxu0 0.0
        %1270 = vmatmul.mubr.f32.gmra.mrb[0].mxu0 %v1060
        %v1271 = vpop.f32.mrb[0].mxu0
        %v1272 = vadd.f32 0.0, %v1271
        %v1273 = vpop.f32.mrb[0].mxu0
        %1274 = vmatprep.mubr.f32.mxu0 0.0
        %1275 = vmatmul.mubr.f32.gmra.mrb[0].mxu0 %v1063
        %v1276 = vpop.f32.mrb[0].mxu0
        %v1277 = vadd.f32 0.0, %v1276
        %v1278 = vpop.f32.mrb[0].mxu0
        %1279 = vmatprep.mubr.f32.mxu0 0.0
        %1280 = vmatmul.mubr.f32.gmra.mrb[0].mxu0 %v1066
        %v1281 = vpop.f32.mrb[0].mxu0
        %v1282 = vadd.f32 0.0, %v1281
        %v1283 = vpop.f32.mrb[0].mxu0
        %1284 = vmatprep.mubr.f32.mxu0 0.0
        %1285 = vmatmul.mubr.f32.gmra.mrb[0].mxu0 %v1069
        %v1286 = vpop.f32.mrb[0].mxu0
        %v1287 = vadd.f32 0.0, %v1286
        %v1288 = vpop.f32.mrb[0].mxu0
        %1289 = vmatprep.mubr.f32.mxu0 0.0
        %1290 = vmatmul.mubr.f32.gmra.mrb[0].mxu0 %v1072
        %v1291 = vpop.f32.mrb[0].mxu0
        %v1292 = vadd.f32 0.0, %v1291
        %v1293 = vpop.f32.mrb[0].mxu0
        %1294 = vmatprep.mubr.f32.mxu0 0.0
        %1295 = vmatmul.mubr.f32.gmra.mrb[0].mxu0 %v1075
        %v1296 = vpop.f32.mrb[0].mxu0
        %v1297 = vadd.f32 0.0, %v1296
        %v1298 = vpop.f32.mrb[0].mxu0
        %1299 = vmatprep.mubr.f32.mxu0 0.0
        %1300 = vmatmul.mubr.f32.gmra.mrb[0].mxu0 %v1078
        %v1301 = vpop.f32.mrb[0].mxu0
        %v1302 = vadd.f32 0.0, %v1301
        %v1303 = vpop.f32.mrb[0].mxu0
        %1304 = vmatprep.mubr.f32.mxu0 0.0
        %1305 = vmatmul.mubr.f32.gmra.mrb[0].mxu0 %v1081
        %v1306 = vpop.f32.mrb[0].mxu0
        %v1307 = vadd.f32 0.0, %v1306
        %v1308 = vpop.f32.mrb[0].mxu0
        %1309 = vmatprep.mubr.f32.mxu0 0.0
        %1310 = vmatmul.mubr.f32.gmra.mrb[0].mxu0 %v1084
        %v1311 = vpop.f32.mrb[0].mxu0
        %v1312 = vadd.f32 0.0, %v1311
        %v1313 = vpop.f32.mrb[0].mxu0
        %1314 = vmatprep.mubr.f32.mxu0 0.0
        %1315 = vmatmul.mubr.f32.gmra.mrb[0].mxu0 %v1087
        %v1316 = vpop.f32.mrb[0].mxu0
        %v1317 = vadd.f32 0.0, %v1316
        %v1318 = vpop.f32.mrb[0].mxu0
        %1319 = vmatprep.mubr.f32.mxu0 0.0
        %1320 = vmatmul.mubr.f32.gmra.mrb[0].mxu0 %v1090
        %v1321 = vpop.f32.mrb[0].mxu0
        %v1322 = vadd.f32 0.0, %v1321
        %v1323 = vpop.f32.mrb[0].mxu0
        %1324 = vmatprep.mubr.f32.mxu0 0.0
        %1325 = vmatmul.mubr.f32.gmra.mrb[0].mxu0 %v1093
        %v1326 = vpop.f32.mrb[0].mxu0
        %v1327 = vadd.f32 0.0, %v1326
        %v1328 = vpop.f32.mrb[0].mxu0
        %1329 = vmatprep.mubr.f32.mxu0 0.0
        %1330 = vmatmul.mubr.f32.gmra.mrb[0].mxu0 %v1096
        %v1331 = vpop.f32.mrb[0].mxu0
        %v1332 = vadd.f32 0.0, %v1331
        %v1333 = vpop.f32.mrb[0].mxu0
        %1334 = vmatprep.mubr.f32.mxu0 0.0
        %1335 = vmatmul.mubr.f32.gmra.mrb[0].mxu0 %v1099
        %v1336 = vpop.f32.mrb[0].mxu0
        %v1337 = vadd.f32 0.0, %v1336
        %v1338 = vpop.f32.mrb[0].mxu0
        %1339 = vmatprep.mubr.f32.mxu0 0.0
        %1340 = vmatmul.mubr.f32.gmra.mrb[0].mxu0 %v1102
        %v1341 = vpop.f32.mrb[0].mxu0
        %v1342 = vadd.f32 0.0, %v1341
        %v1343 = vpop.f32.mrb[0].mxu0
        %1344 = vmatprep.mubr.f32.mxu0 0.0
        %1345 = vmatmul.mubr.f32.gmra.mrb[0].mxu0 %v1105
        %v1346 = vpop.f32.mrb[0].mxu0
        %v1347 = vadd.f32 0.0, %v1346
        %v1348 = vpop.f32.mrb[0].mxu0
        %1349 = vmatprep.mubr.f32.mxu0 0.0
        %1350 = vmatmul.mubr.f32.gmra.mrb[0].mxu0 %v1108
        %v1351 = vpop.f32.mrb[0].mxu0
        %v1352 = vadd.f32 0.0, %v1351
        %v1353 = vpop.f32.mrb[0].mxu0
        %1354 = vmatprep.mubr.f32.mxu0 0.0
        %1355 = vmatmul.mubr.f32.gmra.mrb[0].mxu0 %v1111
        %v1356 = vpop.f32.mrb[0].mxu0
        %v1357 = vadd.f32 0.0, %v1356
        %v1358 = vpop.f32.mrb[0].mxu0
        %1359 = vmatprep.mubr.f32.mxu0 0.0
        %1360 = vmatmul.mubr.f32.gmra.mrb[0].mxu0 %v1114
        %v1361 = vpop.f32.mrb[0].mxu0
        %v1362 = vadd.f32 0.0, %v1361
        %v1363 = vpop.f32.mrb[0].mxu0
        %1364 = vdwg.mxu0
        %v1366 = vsel %vm403, %v933, 0
        %v1369 = vsel %vm403, %v934, 0
        %v1372 = vsel %vm403, %v935, 0
        %v1375 = vsel %vm403, %v936, 0
        %v1378 = vsel %vm403, %v937, 0
        %v1381 = vsel %vm403, %v938, 0
        %v1384 = vsel %vm403, %v939, 0
        %v1387 = vsel %vm403, %v940, 0
        %v1390 = vsel %vm403, %v941, 0
        %v1393 = vsel %vm403, %v942, 0
        %v1396 = vsel %vm403, %v943, 0
        %v1399 = vsel %vm403, %v944, 0
        %v1402 = vsel %vm403, %v945, 0
        %v1405 = vsel %vm403, %v946, 0
        %v1408 = vsel %vm403, %v947, 0
        %v1411 = vsel %vm403, %v948, 0
        %v1414 = vsel %vm403, %v949, 0
        %v1417 = vsel %vm403, %v950, 0
        %v1420 = vsel %vm403, %v951, 0
        %v1423 = vsel %vm403, %v952, 0
        %v1426 = vsel %vm403, %v953, 0
        %v1429 = vsel %vm403, %v954, 0
        %v1432 = vsel %vm403, %v955, 0
        %v1435 = vsel %vm403, %v956, 0
        %v1438 = vsel %vm403, %v957, 0
        %v1441 = vsel %vm403, %v958, 0
        %v1444 = vsel %vm403, %v959, 0
        %v1447 = vsel %vm403, %v960, 0
        %v1450 = vsel %vm403, %v961, 0
        %v1453 = vsel %vm403, %v962, 0
        %v1456 = vsel %vm403, %v963, 0
        %v1459 = vsel %vm403, %v964, 0
        %v1462 = vsel %vm403, %v965, 0
        %v1465 = vsel %vm403, %v966, 0
        %v1468 = vsel %vm403, %v967, 0
        %v1471 = vsel %vm403, %v968, 0
        %v1474 = vsel %vm1116, %v969, 0
        %1476 = vmatprep.subr.mxu0 0.0
        %1477 = vmatpush1.msra.mxu0 %v1474
        %1478 = vmatprep.subr.mxu0 0.0
        %1479 = vmatpush1.msra.mxu0 0.0
        %1480 = vmatprep.subr.mxu0 0.0
        %1481 = vmatpush1.msra.mxu0 0.0
        %1482 = vmatprep.subr.mxu0 0.0
        %1483 = vmatpush1.msra.mxu0 0.0
        %1484 = vmatprep.subr.mxu0 0.0
        %1485 = vmatpush1.msra.mxu0 0.0
        %1486 = vmatprep.subr.mxu0 0.0
        %1487 = vmatpush1.msra.mxu0 0.0
        %1488 = vmatprep.subr.mxu0 0.0
        %1489 = vmatpush1.msra.mxu0 0.0
        %1490 = vmatprep.subr.mxu0 0.0
        %1491 = vmatpush1.msra.mxu0 0.0
        %1492 = vmatprep.subr.mxu0 0.0
        %1493 = vmatpush1.msra.mxu0 0.0
        %1494 = vmatprep.subr.mxu0 0.0
        %1495 = vmatpush1.msra.mxu0 0.0
        %1496 = vmatprep.subr.mxu0 0.0
        %1497 = vmatpush1.msra.mxu0 0.0
        %1498 = vmatprep.subr.mxu0 0.0
        %1499 = vmatpush1.msra.mxu0 0.0
        %1500 = vmatprep.subr.mxu0 0.0
        %1501 = vmatpush1.msra.mxu0 0.0
        %1502 = vmatprep.subr.mxu0 0.0
        %1503 = vmatpush1.msra.mxu0 0.0
        %1504 = vmatprep.subr.mxu0 0.0
        %1505 = vmatpush1.msra.mxu0 0.0
        %1506 = vmatprep.subr.mxu0 0.0
        %1507 = vmatpush1.msra.mxu0 0.0
        %1508 = vmatprep.subr.mxu0 0.0
        %1509 = vmatpush1.msra.mxu0 0.0
        %1510 = vmatprep.subr.mxu0 0.0
        %1511 = vmatpush1.msra.mxu0 0.0
        %1512 = vmatprep.subr.mxu0 0.0
        %1513 = vmatpush1.msra.mxu0 0.0
        %1514 = vmatprep.subr.mxu0 0.0
        %1515 = vmatpush1.msra.mxu0 0.0
        %1516 = vmatprep.subr.mxu0 0.0
        %1517 = vmatpush1.msra.mxu0 0.0
        %1518 = vmatprep.subr.mxu0 0.0
        %1519 = vmatpush1.msra.mxu0 0.0
        %1520 = vmatprep.subr.mxu0 0.0
        %1521 = vmatpush1.msra.mxu0 0.0
        %1522 = vmatprep.subr.mxu0 0.0
        %1523 = vmatpush1.msra.mxu0 0.0
        %1524 = vmatprep.subr.mxu0 0.0
        %1525 = vmatpush1.msra.mxu0 0.0
        %1526 = vmatprep.subr.mxu0 0.0
        %1527 = vmatpush1.msra.mxu0 0.0
        %1528 = vmatprep.subr.mxu0 0.0
        %1529 = vmatpush1.msra.mxu0 0.0
        %1530 = vmatprep.subr.mxu0 0.0
        %1531 = vmatpush1.msra.mxu0 0.0
        %1532 = vmatprep.subr.mxu0 0.0
        %1533 = vmatpush1.msra.mxu0 0.0
        %1534 = vmatprep.subr.mxu0 0.0
        %1535 = vmatpush1.msra.mxu0 0.0
        %1536 = vmatprep.subr.mxu0 0.0
        %1537 = vmatpush1.msra.mxu0 0.0
        %1538 = vmatprep.subr.mxu0 0.0
        %1539 = vmatpush1.msra.mxu0 0.0
        %1540 = vmatprep.mubr.f32.mxu0 0.0
        %1541 = vmatmul.mubr.f32.gmra.mrb[0].mxu0 %v1366
        %v1542 = vpop.f32.mrb[0].mxu0
        %v1543 = vadd.f32 %v1187, %v1542
        %v1544 = vpop.f32.mrb[0].mxu0
        %1545 = vmatprep.mubr.f32.mxu0 0.0
        %1546 = vmatmul.mubr.f32.gmra.mrb[0].mxu0 %v1369
        %v1547 = vpop.f32.mrb[0].mxu0
        %v1548 = vadd.f32 %v1192, %v1547
        %v1549 = vpop.f32.mrb[0].mxu0
        %1550 = vmatprep.mubr.f32.mxu0 0.0
        %1551 = vmatmul.mubr.f32.gmra.mrb[0].mxu0 %v1372
        %v1552 = vpop.f32.mrb[0].mxu0
        %v1553 = vadd.f32 %v1197, %v1552
        %v1554 = vpop.f32.mrb[0].mxu0
        %1555 = vmatprep.mubr.f32.mxu0 0.0
        %1556 = vmatmul.mubr.f32.gmra.mrb[0].mxu0 %v1375
        %v1557 = vpop.f32.mrb[0].mxu0
        %v1558 = vadd.f32 %v1202, %v1557
        %v1559 = vpop.f32.mrb[0].mxu0
        %1560 = vmatprep.mubr.f32.mxu0 0.0
        %1561 = vmatmul.mubr.f32.gmra.mrb[0].mxu0 %v1378
        %v1562 = vpop.f32.mrb[0].mxu0
        %v1563 = vadd.f32 %v1207, %v1562
        %v1564 = vpop.f32.mrb[0].mxu0
        %1565 = vmatprep.mubr.f32.mxu0 0.0
        %1566 = vmatmul.mubr.f32.gmra.mrb[0].mxu0 %v1381
        %v1567 = vpop.f32.mrb[0].mxu0
        %v1568 = vadd.f32 %v1212, %v1567
        %v1569 = vpop.f32.mrb[0].mxu0
        %1570 = vmatprep.mubr.f32.mxu0 0.0
        %1571 = vmatmul.mubr.f32.gmra.mrb[0].mxu0 %v1384
        %v1572 = vpop.f32.mrb[0].mxu0
        %v1573 = vadd.f32 %v1217, %v1572
        %v1574 = vpop.f32.mrb[0].mxu0
        %1575 = vmatprep.mubr.f32.mxu0 0.0
        %1576 = vmatmul.mubr.f32.gmra.mrb[0].mxu0 %v1387
        %v1577 = vpop.f32.mrb[0].mxu0
        %v1578 = vadd.f32 %v1222, %v1577
        %v1579 = vpop.f32.mrb[0].mxu0
        %1580 = vmatprep.mubr.f32.mxu0 0.0
        %1581 = vmatmul.mubr.f32.gmra.mrb[0].mxu0 %v1390
        %v1582 = vpop.f32.mrb[0].mxu0
        %v1583 = vadd.f32 %v1227, %v1582
        %v1584 = vpop.f32.mrb[0].mxu0
        %1585 = vmatprep.mubr.f32.mxu0 0.0
        %1586 = vmatmul.mubr.f32.gmra.mrb[0].mxu0 %v1393
        %v1587 = vpop.f32.mrb[0].mxu0
        %v1588 = vadd.f32 %v1232, %v1587
        %v1589 = vpop.f32.mrb[0].mxu0
        %1590 = vmatprep.mubr.f32.mxu0 0.0
        %1591 = vmatmul.mubr.f32.gmra.mrb[0].mxu0 %v1396
        %v1592 = vpop.f32.mrb[0].mxu0
        %v1593 = vadd.f32 %v1237, %v1592
        %v1594 = vpop.f32.mrb[0].mxu0
        %1595 = vmatprep.mubr.f32.mxu0 0.0
        %1596 = vmatmul.mubr.f32.gmra.mrb[0].mxu0 %v1399
        %v1597 = vpop.f32.mrb[0].mxu0
        %v1598 = vadd.f32 %v1242, %v1597
        %v1599 = vpop.f32.mrb[0].mxu0
        %1600 = vmatprep.mubr.f32.mxu0 0.0
        %1601 = vmatmul.mubr.f32.gmra.mrb[0].mxu0 %v1402
        %v1602 = vpop.f32.mrb[0].mxu0
        %v1603 = vadd.f32 %v1247, %v1602
        %v1604 = vpop.f32.mrb[0].mxu0
        %1605 = vmatprep.mubr.f32.mxu0 0.0
        %1606 = vmatmul.mubr.f32.gmra.mrb[0].mxu0 %v1405
        %v1607 = vpop.f32.mrb[0].mxu0
        %v1608 = vadd.f32 %v1252, %v1607
        %v1609 = vpop.f32.mrb[0].mxu0
        %1610 = vmatprep.mubr.f32.mxu0 0.0
        %1611 = vmatmul.mubr.f32.gmra.mrb[0].mxu0 %v1408
        %v1612 = vpop.f32.mrb[0].mxu0
        %v1613 = vadd.f32 %v1257, %v1612
        %v1614 = vpop.f32.mrb[0].mxu0
        %1615 = vmatprep.mubr.f32.mxu0 0.0
        %1616 = vmatmul.mubr.f32.gmra.mrb[0].mxu0 %v1411
        %v1617 = vpop.f32.mrb[0].mxu0
        %v1618 = vadd.f32 %v1262, %v1617
        %v1619 = vpop.f32.mrb[0].mxu0
        %1620 = vmatprep.mubr.f32.mxu0 0.0
        %1621 = vmatmul.mubr.f32.gmra.mrb[0].mxu0 %v1414
        %v1622 = vpop.f32.mrb[0].mxu0
        %v1623 = vadd.f32 %v1267, %v1622
        %v1624 = vpop.f32.mrb[0].mxu0
        %1625 = vmatprep.mubr.f32.mxu0 0.0
        %1626 = vmatmul.mubr.f32.gmra.mrb[0].mxu0 %v1417
        %v1627 = vpop.f32.mrb[0].mxu0
        %v1628 = vadd.f32 %v1272, %v1627
        %v1629 = vpop.f32.mrb[0].mxu0
        %1630 = vmatprep.mubr.f32.mxu0 0.0
        %1631 = vmatmul.mubr.f32.gmra.mrb[0].mxu0 %v1420
        %v1632 = vpop.f32.mrb[0].mxu0
        %v1633 = vadd.f32 %v1277, %v1632
        %v1634 = vpop.f32.mrb[0].mxu0
        %1635 = vmatprep.mubr.f32.mxu0 0.0
        %1636 = vmatmul.mubr.f32.gmra.mrb[0].mxu0 %v1423
        %v1637 = vpop.f32.mrb[0].mxu0
        %v1638 = vadd.f32 %v1282, %v1637
        %v1639 = vpop.f32.mrb[0].mxu0
        %1640 = vmatprep.mubr.f32.mxu0 0.0
        %1641 = vmatmul.mubr.f32.gmra.mrb[0].mxu0 %v1426
        %v1642 = vpop.f32.mrb[0].mxu0
        %v1643 = vadd.f32 %v1287, %v1642
        %v1644 = vpop.f32.mrb[0].mxu0
        %1645 = vmatprep.mubr.f32.mxu0 0.0
        %1646 = vmatmul.mubr.f32.gmra.mrb[0].mxu0 %v1429
        %v1647 = vpop.f32.mrb[0].mxu0
        %v1648 = vadd.f32 %v1292, %v1647
        %v1649 = vpop.f32.mrb[0].mxu0
        %1650 = vmatprep.mubr.f32.mxu0 0.0
        %1651 = vmatmul.mubr.f32.gmra.mrb[0].mxu0 %v1432
        %v1652 = vpop.f32.mrb[0].mxu0
        %v1653 = vadd.f32 %v1297, %v1652
        %v1654 = vpop.f32.mrb[0].mxu0
        %1655 = vmatprep.mubr.f32.mxu0 0.0
        %1656 = vmatmul.mubr.f32.gmra.mrb[0].mxu0 %v1435
        %v1657 = vpop.f32.mrb[0].mxu0
        %v1658 = vadd.f32 %v1302, %v1657
        %v1659 = vpop.f32.mrb[0].mxu0
        %1660 = vmatprep.mubr.f32.mxu0 0.0
        %1661 = vmatmul.mubr.f32.gmra.mrb[0].mxu0 %v1438
        %v1662 = vpop.f32.mrb[0].mxu0
        %v1663 = vadd.f32 %v1307, %v1662
        %v1664 = vpop.f32.mrb[0].mxu0
        %1665 = vmatprep.mubr.f32.mxu0 0.0
        %1666 = vmatmul.mubr.f32.gmra.mrb[0].mxu0 %v1441
        %v1667 = vpop.f32.mrb[0].mxu0
        %v1668 = vadd.f32 %v1312, %v1667
        %v1669 = vpop.f32.mrb[0].mxu0
        %1670 = vmatprep.mubr.f32.mxu0 0.0
        %1671 = vmatmul.mubr.f32.gmra.mrb[0].mxu0 %v1444
        %v1672 = vpop.f32.mrb[0].mxu0
        %v1673 = vadd.f32 %v1317, %v1672
        %v1674 = vpop.f32.mrb[0].mxu0
        %1675 = vmatprep.mubr.f32.mxu0 0.0
        %1676 = vmatmul.mubr.f32.gmra.mrb[0].mxu0 %v1447
        %v1677 = vpop.f32.mrb[0].mxu0
        %v1678 = vadd.f32 %v1322, %v1677
        %v1679 = vpop.f32.mrb[0].mxu0
        %1680 = vmatprep.mubr.f32.mxu0 0.0
        %1681 = vmatmul.mubr.f32.gmra.mrb[0].mxu0 %v1450
        %v1682 = vpop.f32.mrb[0].mxu0
        %v1683 = vadd.f32 %v1327, %v1682
        %v1684 = vpop.f32.mrb[0].mxu0
        %1685 = vmatprep.mubr.f32.mxu0 0.0
        %1686 = vmatmul.mubr.f32.gmra.mrb[0].mxu0 %v1453
        %v1687 = vpop.f32.mrb[0].mxu0
        %v1688 = vadd.f32 %v1332, %v1687
        %v1689 = vpop.f32.mrb[0].mxu0
        %1690 = vmatprep.mubr.f32.mxu0 0.0
        %1691 = vmatmul.mubr.f32.gmra.mrb[0].mxu0 %v1456
        %v1692 = vpop.f32.mrb[0].mxu0
        %v1693 = vadd.f32 %v1337, %v1692
        %v1694 = vpop.f32.mrb[0].mxu0
        %1695 = vmatprep.mubr.f32.mxu0 0.0
        %1696 = vmatmul.mubr.f32.gmra.mrb[0].mxu0 %v1459
        %v1697 = vpop.f32.mrb[0].mxu0
        %v1698 = vadd.f32 %v1342, %v1697
        %v1699 = vpop.f32.mrb[0].mxu0
        %1700 = vmatprep.mubr.f32.mxu0 0.0
        %1701 = vmatmul.mubr.f32.gmra.mrb[0].mxu0 %v1462
        %v1702 = vpop.f32.mrb[0].mxu0
        %v1703 = vadd.f32 %v1347, %v1702
        %v1704 = vpop.f32.mrb[0].mxu0
        %1705 = vmatprep.mubr.f32.mxu0 0.0
        %1706 = vmatmul.mubr.f32.gmra.mrb[0].mxu0 %v1465
        %v1707 = vpop.f32.mrb[0].mxu0
        %v1708 = vadd.f32 %v1352, %v1707
        %v1709 = vpop.f32.mrb[0].mxu0
        %1710 = vmatprep.mubr.f32.mxu0 0.0
        %1711 = vmatmul.mubr.f32.gmra.mrb[0].mxu0 %v1468
        %v1712 = vpop.f32.mrb[0].mxu0
        %v1713 = vadd.f32 %v1357, %v1712
        %v1714 = vpop.f32.mrb[0].mxu0
        %1715 = vmatprep.mubr.f32.mxu0 0.0
        %1716 = vmatmul.mubr.f32.gmra.mrb[0].mxu0 %v1471
        %v1717 = vpop.f32.mrb[0].mxu0
        %v1718 = vadd.f32 %v1362, %v1717
        %v1719 = vpop.f32.mrb[0].mxu0
        %1720 = vdwg.mxu0
        %v1721 = vld [vmem:[#allocation2 + $0x2] sm:$0xff]
        %v1722 = vld [vmem:[#allocation2 + $0xa] sm:$0xff]
        %v1723 = vld [vmem:[#allocation2 + $0x12] sm:$0xff]
        %v1724 = vld [vmem:[#allocation2 + $0x1a] sm:$0xff]
        %v1725 = vld [vmem:[#allocation2 + $0x22] sm:$0xff]
        %v1726 = vld [vmem:[#allocation2 + $0x2a] sm:$0xff]
        %v1727 = vld [vmem:[#allocation2 + $0x32] sm:$0xff]
        %v1728 = vld [vmem:[#allocation2 + $0x3a] sm:$0xff]
        %v1729 = vld [vmem:[#allocation2 + $0x42] sm:$0xff]
        %v1730 = vld [vmem:[#allocation2 + $0x4a] sm:$0xff]
        %v1731 = vld [vmem:[#allocation2 + $0x52] sm:$0xff]
        %v1732 = vld [vmem:[#allocation2 + $0x5a] sm:$0xff]
        %v1733 = vld [vmem:[#allocation2 + $0x62] sm:$0xff]
        %v1734 = vld [vmem:[#allocation2 + $0x6a] sm:$0xff]
        %v1735 = vld [vmem:[#allocation2 + $0x72] sm:$0xff]
        %v1736 = vld [vmem:[#allocation2 + $0x7a] sm:$0xff]
        %v1737 = vld [vmem:[#allocation2 + $0x82] sm:$0xff]
        %v1738 = vld [vmem:[#allocation2 + $0x8a] sm:$0xff]
        %v1739 = vld [vmem:[#allocation2 + $0x92] sm:$0xff]
        %v1740 = vld [vmem:[#allocation2 + $0x9a] sm:$0xff]
        %v1741 = vld [vmem:[#allocation2 + $0xa2] sm:$0xff]
        %v1742 = vld [vmem:[#allocation2 + $0xaa] sm:$0xff]
        %v1743 = vld [vmem:[#allocation2 + $0xb2] sm:$0xff]
        %v1744 = vld [vmem:[#allocation2 + $0xba] sm:$0xff]
        %v1745 = vld [vmem:[#allocation2 + $0xc2] sm:$0xff]
        %v1746 = vld [vmem:[#allocation2 + $0xca] sm:$0xff]
        %v1747 = vld [vmem:[#allocation2 + $0xd2] sm:$0xff]
        %v1748 = vld [vmem:[#allocation2 + $0xda] sm:$0xff]
        %v1749 = vld [vmem:[#allocation2 + $0xe2] sm:$0xff]
        %v1750 = vld [vmem:[#allocation2 + $0xea] sm:$0xff]
        %v1751 = vld [vmem:[#allocation2 + $0xf2] sm:$0xff]
        %v1752 = vld [vmem:[#allocation2 + $0xfa] sm:$0xff]
        %v1753 = vld [vmem:[#allocation2 + $0x102] sm:$0xff]
        %v1754 = vld [vmem:[#allocation2 + $0x10a] sm:$0xff]
        %v1755 = vld [vmem:[#allocation2 + $0x112] sm:$0xff]
        %v1756 = vld [vmem:[#allocation2 + $0x11a] sm:$0xff]
        %s1757 = scalar_lea.vmem [#allocation7], 8
        %v1758 = vld [vmem:[%s1757] sm:$0xf]
        %v1760 = vsel %vm403, %v1721, 0
        %v1763 = vsel %vm403, %v1722, 0
        %v1766 = vsel %vm403, %v1723, 0
        %v1769 = vsel %vm403, %v1724, 0
        %v1772 = vsel %vm403, %v1725, 0
        %v1775 = vsel %vm403, %v1726, 0
        %v1778 = vsel %vm403, %v1727, 0
        %v1781 = vsel %vm403, %v1728, 0
        %v1784 = vsel %vm403, %v1729, 0
        %v1787 = vsel %vm403, %v1730, 0
        %v1790 = vsel %vm403, %v1731, 0
        %v1793 = vsel %vm403, %v1732, 0
        %v1796 = vsel %vm403, %v1733, 0
        %v1799 = vsel %vm403, %v1734, 0
        %v1802 = vsel %vm403, %v1735, 0
        %v1805 = vsel %vm403, %v1736, 0
        %v1808 = vsel %vm403, %v1737, 0
        %v1811 = vsel %vm403, %v1738, 0
        %v1814 = vsel %vm403, %v1739, 0
        %v1817 = vsel %vm403, %v1740, 0
        %v1820 = vsel %vm403, %v1741, 0
        %v1823 = vsel %vm403, %v1742, 0
        %v1826 = vsel %vm403, %v1743, 0
        %v1829 = vsel %vm403, %v1744, 0
        %v1832 = vsel %vm403, %v1745, 0
        %v1835 = vsel %vm403, %v1746, 0
        %v1838 = vsel %vm403, %v1747, 0
        %v1841 = vsel %vm403, %v1748, 0
        %v1844 = vsel %vm403, %v1749, 0
        %v1847 = vsel %vm403, %v1750, 0
        %v1850 = vsel %vm403, %v1751, 0
        %v1853 = vsel %vm403, %v1752, 0
        %v1856 = vsel %vm403, %v1753, 0
        %v1859 = vsel %vm403, %v1754, 0
        %v1862 = vsel %vm403, %v1755, 0
        %v1865 = vsel %vm403, %v1756, 0
        %v1868 = vsel %vm1116, %v1758, 0
        %1870 = vmatprep.subr.mxu0 0.0
        %1871 = vmatpush1.msra.mxu0 %v1868
        %1872 = vmatprep.subr.mxu0 0.0
        %1873 = vmatpush1.msra.mxu0 0.0
        %1874 = vmatprep.subr.mxu0 0.0
        %1875 = vmatpush1.msra.mxu0 0.0
        %1876 = vmatprep.subr.mxu0 0.0
        %1877 = vmatpush1.msra.mxu0 0.0
        %1878 = vmatprep.subr.mxu0 0.0
        %1879 = vmatpush1.msra.mxu0 0.0
        %1880 = vmatprep.subr.mxu0 0.0
        %1881 = vmatpush1.msra.mxu0 0.0
        %1882 = vmatprep.subr.mxu0 0.0
        %1883 = vmatpush1.msra.mxu0 0.0
        %1884 = vmatprep.subr.mxu0 0.0
        %1885 = vmatpush1.msra.mxu0 0.0
        %1886 = vmatprep.subr.mxu0 0.0
        %1887 = vmatpush1.msra.mxu0 0.0
        %1888 = vmatprep.subr.mxu0 0.0
        %1889 = vmatpush1.msra.mxu0 0.0
        %1890 = vmatprep.subr.mxu0 0.0
        %1891 = vmatpush1.msra.mxu0 0.0
        %1892 = vmatprep.subr.mxu0 0.0
        %1893 = vmatpush1.msra.mxu0 0.0
        %1894 = vmatprep.subr.mxu0 0.0
        %1895 = vmatpush1.msra.mxu0 0.0
        %1896 = vmatprep.subr.mxu0 0.0
        %1897 = vmatpush1.msra.mxu0 0.0
        %1898 = vmatprep.subr.mxu0 0.0
        %1899 = vmatpush1.msra.mxu0 0.0
        %1900 = vmatprep.subr.mxu0 0.0
        %1901 = vmatpush1.msra.mxu0 0.0
        %1902 = vmatprep.subr.mxu0 0.0
        %1903 = vmatpush1.msra.mxu0 0.0
        %1904 = vmatprep.subr.mxu0 0.0
        %1905 = vmatpush1.msra.mxu0 0.0
        %1906 = vmatprep.subr.mxu0 0.0
        %1907 = vmatpush1.msra.mxu0 0.0
        %1908 = vmatprep.subr.mxu0 0.0
        %1909 = vmatpush1.msra.mxu0 0.0
        %1910 = vmatprep.subr.mxu0 0.0
        %1911 = vmatpush1.msra.mxu0 0.0
        %1912 = vmatprep.subr.mxu0 0.0
        %1913 = vmatpush1.msra.mxu0 0.0
        %1914 = vmatprep.subr.mxu0 0.0
        %1915 = vmatpush1.msra.mxu0 0.0
        %1916 = vmatprep.subr.mxu0 0.0
        %1917 = vmatpush1.msra.mxu0 0.0
        %1918 = vmatprep.subr.mxu0 0.0
        %1919 = vmatpush1.msra.mxu0 0.0
        %1920 = vmatprep.subr.mxu0 0.0
        %1921 = vmatpush1.msra.mxu0 0.0
        %1922 = vmatprep.subr.mxu0 0.0
        %1923 = vmatpush1.msra.mxu0 0.0
        %1924 = vmatprep.subr.mxu0 0.0
        %1925 = vmatpush1.msra.mxu0 0.0
        %1926 = vmatprep.subr.mxu0 0.0
        %1927 = vmatpush1.msra.mxu0 0.0
        %1928 = vmatprep.subr.mxu0 0.0
        %1929 = vmatpush1.msra.mxu0 0.0
        %1930 = vmatprep.subr.mxu0 0.0
        %1931 = vmatpush1.msra.mxu0 0.0
        %1932 = vmatprep.subr.mxu0 0.0
        %1933 = vmatpush1.msra.mxu0 0.0
        %1934 = vmatprep.mubr.f32.mxu0 0.0
        %1935 = vmatmul.mubr.f32.gmra.mrb[0].mxu0 %v1760
        %v1936 = vpop.f32.mrb[0].mxu0
        %v1937 = vadd.f32 0.0, %v1936
        %v1938 = vpop.f32.mrb[0].mxu0
        %1939 = vmatprep.mubr.f32.mxu0 0.0
        %1940 = vmatmul.mubr.f32.gmra.mrb[0].mxu0 %v1763
        %v1941 = vpop.f32.mrb[0].mxu0
        %v1942 = vadd.f32 0.0, %v1941
        %v1943 = vpop.f32.mrb[0].mxu0
        %1944 = vmatprep.mubr.f32.mxu0 0.0
        %1945 = vmatmul.mubr.f32.gmra.mrb[0].mxu0 %v1766
        %v1946 = vpop.f32.mrb[0].mxu0
        %v1947 = vadd.f32 0.0, %v1946
        %v1948 = vpop.f32.mrb[0].mxu0
        %1949 = vmatprep.mubr.f32.mxu0 0.0
        %1950 = vmatmul.mubr.f32.gmra.mrb[0].mxu0 %v1769
        %v1951 = vpop.f32.mrb[0].mxu0
        %v1952 = vadd.f32 0.0, %v1951
        %v1953 = vpop.f32.mrb[0].mxu0
        %1954 = vmatprep.mubr.f32.mxu0 0.0
        %1955 = vmatmul.mubr.f32.gmra.mrb[0].mxu0 %v1772
        %v1956 = vpop.f32.mrb[0].mxu0
        %v1957 = vadd.f32 0.0, %v1956
        %v1958 = vpop.f32.mrb[0].mxu0
        %1959 = vmatprep.mubr.f32.mxu0 0.0
        %1960 = vmatmul.mubr.f32.gmra.mrb[0].mxu0 %v1775
        %v1961 = vpop.f32.mrb[0].mxu0
        %v1962 = vadd.f32 0.0, %v1961
        %v1963 = vpop.f32.mrb[0].mxu0
        %1964 = vmatprep.mubr.f32.mxu0 0.0
        %1965 = vmatmul.mubr.f32.gmra.mrb[0].mxu0 %v1778
        %v1966 = vpop.f32.mrb[0].mxu0
        %v1967 = vadd.f32 0.0, %v1966
        %v1968 = vpop.f32.mrb[0].mxu0
        %1969 = vmatprep.mubr.f32.mxu0 0.0
        %1970 = vmatmul.mubr.f32.gmra.mrb[0].mxu0 %v1781
        %v1971 = vpop.f32.mrb[0].mxu0
        %v1972 = vadd.f32 0.0, %v1971
        %v1973 = vpop.f32.mrb[0].mxu0
        %1974 = vmatprep.mubr.f32.mxu0 0.0
        %1975 = vmatmul.mubr.f32.gmra.mrb[0].mxu0 %v1784
        %v1976 = vpop.f32.mrb[0].mxu0
        %v1977 = vadd.f32 0.0, %v1976
        %v1978 = vpop.f32.mrb[0].mxu0
        %1979 = vmatprep.mubr.f32.mxu0 0.0
        %1980 = vmatmul.mubr.f32.gmra.mrb[0].mxu0 %v1787
        %v1981 = vpop.f32.mrb[0].mxu0
        %v1982 = vadd.f32 0.0, %v1981
        %v1983 = vpop.f32.mrb[0].mxu0
        %1984 = vmatprep.mubr.f32.mxu0 0.0
        %1985 = vmatmul.mubr.f32.gmra.mrb[0].mxu0 %v1790
        %v1986 = vpop.f32.mrb[0].mxu0
        %v1987 = vadd.f32 0.0, %v1986
        %v1988 = vpop.f32.mrb[0].mxu0
        %1989 = vmatprep.mubr.f32.mxu0 0.0
        %1990 = vmatmul.mubr.f32.gmra.mrb[0].mxu0 %v1793
        %v1991 = vpop.f32.mrb[0].mxu0
        %v1992 = vadd.f32 0.0, %v1991
        %v1993 = vpop.f32.mrb[0].mxu0
        %1994 = vmatprep.mubr.f32.mxu0 0.0
        %1995 = vmatmul.mubr.f32.gmra.mrb[0].mxu0 %v1796
        %v1996 = vpop.f32.mrb[0].mxu0
        %v1997 = vadd.f32 0.0, %v1996
        %v1998 = vpop.f32.mrb[0].mxu0
        %1999 = vmatprep.mubr.f32.mxu0 0.0
        %2000 = vmatmul.mubr.f32.gmra.mrb[0].mxu0 %v1799
        %v2001 = vpop.f32.mrb[0].mxu0
        %v2002 = vadd.f32 0.0, %v2001
        %v2003 = vpop.f32.mrb[0].mxu0
        %2004 = vmatprep.mubr.f32.mxu0 0.0
        %2005 = vmatmul.mubr.f32.gmra.mrb[0].mxu0 %v1802
        %v2006 = vpop.f32.mrb[0].mxu0
        %v2007 = vadd.f32 0.0, %v2006
        %v2008 = vpop.f32.mrb[0].mxu0
        %2009 = vmatprep.mubr.f32.mxu0 0.0
        %2010 = vmatmul.mubr.f32.gmra.mrb[0].mxu0 %v1805
        %v2011 = vpop.f32.mrb[0].mxu0
        %v2012 = vadd.f32 0.0, %v2011
        %v2013 = vpop.f32.mrb[0].mxu0
        %2014 = vmatprep.mubr.f32.mxu0 0.0
        %2015 = vmatmul.mubr.f32.gmra.mrb[0].mxu0 %v1808
        %v2016 = vpop.f32.mrb[0].mxu0
        %v2017 = vadd.f32 0.0, %v2016
        %v2018 = vpop.f32.mrb[0].mxu0
        %2019 = vmatprep.mubr.f32.mxu0 0.0
        %2020 = vmatmul.mubr.f32.gmra.mrb[0].mxu0 %v1811
        %v2021 = vpop.f32.mrb[0].mxu0
        %v2022 = vadd.f32 0.0, %v2021
        %v2023 = vpop.f32.mrb[0].mxu0
        %2024 = vmatprep.mubr.f32.mxu0 0.0
        %2025 = vmatmul.mubr.f32.gmra.mrb[0].mxu0 %v1814
        %v2026 = vpop.f32.mrb[0].mxu0
        %v2027 = vadd.f32 0.0, %v2026
        %v2028 = vpop.f32.mrb[0].mxu0
        %2029 = vmatprep.mubr.f32.mxu0 0.0
        %2030 = vmatmul.mubr.f32.gmra.mrb[0].mxu0 %v1817
        %v2031 = vpop.f32.mrb[0].mxu0
        %v2032 = vadd.f32 0.0, %v2031
        %v2033 = vpop.f32.mrb[0].mxu0
        %2034 = vmatprep.mubr.f32.mxu0 0.0
        %2035 = vmatmul.mubr.f32.gmra.mrb[0].mxu0 %v1820
        %v2036 = vpop.f32.mrb[0].mxu0
        %v2037 = vadd.f32 0.0, %v2036
        %v2038 = vpop.f32.mrb[0].mxu0
        %2039 = vmatprep.mubr.f32.mxu0 0.0
        %2040 = vmatmul.mubr.f32.gmra.mrb[0].mxu0 %v1823
        %v2041 = vpop.f32.mrb[0].mxu0
        %v2042 = vadd.f32 0.0, %v2041
        %v2043 = vpop.f32.mrb[0].mxu0
        %2044 = vmatprep.mubr.f32.mxu0 0.0
        %2045 = vmatmul.mubr.f32.gmra.mrb[0].mxu0 %v1826
        %v2046 = vpop.f32.mrb[0].mxu0
        %v2047 = vadd.f32 0.0, %v2046
        %v2048 = vpop.f32.mrb[0].mxu0
        %2049 = vmatprep.mubr.f32.mxu0 0.0
        %2050 = vmatmul.mubr.f32.gmra.mrb[0].mxu0 %v1829
        %v2051 = vpop.f32.mrb[0].mxu0
        %v2052 = vadd.f32 0.0, %v2051
        %v2053 = vpop.f32.mrb[0].mxu0
        %2054 = vmatprep.mubr.f32.mxu0 0.0
        %2055 = vmatmul.mubr.f32.gmra.mrb[0].mxu0 %v1832
        %v2056 = vpop.f32.mrb[0].mxu0
        %v2057 = vadd.f32 0.0, %v2056
        %v2058 = vpop.f32.mrb[0].mxu0
        %2059 = vmatprep.mubr.f32.mxu0 0.0
        %2060 = vmatmul.mubr.f32.gmra.mrb[0].mxu0 %v1835
        %v2061 = vpop.f32.mrb[0].mxu0
        %v2062 = vadd.f32 0.0, %v2061
        %v2063 = vpop.f32.mrb[0].mxu0
        %2064 = vmatprep.mubr.f32.mxu0 0.0
        %2065 = vmatmul.mubr.f32.gmra.mrb[0].mxu0 %v1838
        %v2066 = vpop.f32.mrb[0].mxu0
        %v2067 = vadd.f32 0.0, %v2066
        %v2068 = vpop.f32.mrb[0].mxu0
        %2069 = vmatprep.mubr.f32.mxu0 0.0
        %2070 = vmatmul.mubr.f32.gmra.mrb[0].mxu0 %v1841
        %v2071 = vpop.f32.mrb[0].mxu0
        %v2072 = vadd.f32 0.0, %v2071
        %v2073 = vpop.f32.mrb[0].mxu0
        %2074 = vmatprep.mubr.f32.mxu0 0.0
        %2075 = vmatmul.mubr.f32.gmra.mrb[0].mxu0 %v1844
        %v2076 = vpop.f32.mrb[0].mxu0
        %v2077 = vadd.f32 0.0, %v2076
        %v2078 = vpop.f32.mrb[0].mxu0
        %2079 = vmatprep.mubr.f32.mxu0 0.0
        %2080 = vmatmul.mubr.f32.gmra.mrb[0].mxu0 %v1847
        %v2081 = vpop.f32.mrb[0].mxu0
        %v2082 = vadd.f32 0.0, %v2081
        %v2083 = vpop.f32.mrb[0].mxu0
        %2084 = vmatprep.mubr.f32.mxu0 0.0
        %2085 = vmatmul.mubr.f32.gmra.mrb[0].mxu0 %v1850
        %v2086 = vpop.f32.mrb[0].mxu0
        %v2087 = vadd.f32 0.0, %v2086
        %v2088 = vpop.f32.mrb[0].mxu0
        %2089 = vmatprep.mubr.f32.mxu0 0.0
        %2090 = vmatmul.mubr.f32.gmra.mrb[0].mxu0 %v1853
        %v2091 = vpop.f32.mrb[0].mxu0
        %v2092 = vadd.f32 0.0, %v2091
        %v2093 = vpop.f32.mrb[0].mxu0
        %2094 = vmatprep.mubr.f32.mxu0 0.0
        %2095 = vmatmul.mubr.f32.gmra.mrb[0].mxu0 %v1856
        %v2096 = vpop.f32.mrb[0].mxu0
        %v2097 = vadd.f32 0.0, %v2096
        %v2098 = vpop.f32.mrb[0].mxu0
        %2099 = vmatprep.mubr.f32.mxu0 0.0
        %2100 = vmatmul.mubr.f32.gmra.mrb[0].mxu0 %v1859
        %v2101 = vpop.f32.mrb[0].mxu0
        %v2102 = vadd.f32 0.0, %v2101
        %v2103 = vpop.f32.mrb[0].mxu0
        %2104 = vmatprep.mubr.f32.mxu0 0.0
        %2105 = vmatmul.mubr.f32.gmra.mrb[0].mxu0 %v1862
        %v2106 = vpop.f32.mrb[0].mxu0
        %v2107 = vadd.f32 0.0, %v2106
        %v2108 = vpop.f32.mrb[0].mxu0
        %2109 = vmatprep.mubr.f32.mxu0 0.0
        %2110 = vmatmul.mubr.f32.gmra.mrb[0].mxu0 %v1865
        %v2111 = vpop.f32.mrb[0].mxu0
        %v2112 = vadd.f32 0.0, %v2111
        %v2113 = vpop.f32.mrb[0].mxu0
        %2114 = vdwg.mxu0
        %v2115 = vadd.f32 %v1543, %v1937
        %v2116 = vadd.f32 %v1548, %v1942
        %v2117 = vadd.f32 %v1553, %v1947
        %v2118 = vadd.f32 %v1558, %v1952
        %v2119 = vadd.f32 %v1563, %v1957
        %v2120 = vadd.f32 %v1568, %v1962
        %v2121 = vadd.f32 %v1573, %v1967
        %v2122 = vadd.f32 %v1578, %v1972
        %v2123 = vadd.f32 %v1583, %v1977
        %v2124 = vadd.f32 %v1588, %v1982
        %v2125 = vadd.f32 %v1593, %v1987
        %v2126 = vadd.f32 %v1598, %v1992
        %v2127 = vadd.f32 %v1603, %v1997
        %v2128 = vadd.f32 %v1608, %v2002
        %v2129 = vadd.f32 %v1613, %v2007
        %v2130 = vadd.f32 %v1618, %v2012
        %v2131 = vadd.f32 %v1623, %v2017
        %v2132 = vadd.f32 %v1628, %v2022
        %v2133 = vadd.f32 %v1633, %v2027
        %v2134 = vadd.f32 %v1638, %v2032
        %v2135 = vadd.f32 %v1643, %v2037
        %v2136 = vadd.f32 %v1648, %v2042
        %v2137 = vadd.f32 %v1653, %v2047
        %v2138 = vadd.f32 %v1658, %v2052
        %v2139 = vadd.f32 %v1663, %v2057
        %v2140 = vadd.f32 %v1668, %v2062
        %v2141 = vadd.f32 %v1673, %v2067
        %v2142 = vadd.f32 %v1678, %v2072
        %v2143 = vadd.f32 %v1683, %v2077
        %v2144 = vadd.f32 %v1688, %v2082
        %v2145 = vadd.f32 %v1693, %v2087
        %v2146 = vadd.f32 %v1698, %v2092
        %v2147 = vadd.f32 %v1703, %v2097
        %v2148 = vadd.f32 %v1708, %v2102
        %v2149 = vadd.f32 %v1713, %v2107
        %v2150 = vadd.f32 %v1718, %v2112
        %v2151 = vld [vmem:[#allocation2 + $0x12] sm:$0xff]
        %v2152 = vld [vmem:[#allocation2 + $0x1a] sm:$0xff]
        %v2153 = vld [vmem:[#allocation2 + $0x22] sm:$0xff]
        %v2154 = vld [vmem:[#allocation2 + $0x2a] sm:$0xff]
        %v2155 = vld [vmem:[#allocation2 + $0x32] sm:$0xff]
        %v2156 = vld [vmem:[#allocation2 + $0x3a] sm:$0xff]
        %v2157 = vld [vmem:[#allocation2 + $0x42] sm:$0xff]
        %v2158 = vld [vmem:[#allocation2 + $0x4a] sm:$0xff]
        %v2159 = vld [vmem:[#allocation2 + $0x52] sm:$0xff]
        %v2160 = vld [vmem:[#allocation2 + $0x5a] sm:$0xff]
        %v2161 = vld [vmem:[#allocation2 + $0x62] sm:$0xff]
        %v2162 = vld [vmem:[#allocation2 + $0x6a] sm:$0xff]
        %v2163 = vld [vmem:[#allocation2 + $0x72] sm:$0xff]
        %v2164 = vld [vmem:[#allocation2 + $0x7a] sm:$0xff]
        %v2165 = vld [vmem:[#allocation2 + $0x82] sm:$0xff]
        %v2166 = vld [vmem:[#allocation2 + $0x8a] sm:$0xff]
        %v2167 = vld [vmem:[#allocation2 + $0x92] sm:$0xff]
        %v2168 = vld [vmem:[#allocation2 + $0x9a] sm:$0xff]
        %v2169 = vld [vmem:[#allocation2 + $0xa2] sm:$0xff]
        %v2170 = vld [vmem:[#allocation2 + $0xaa] sm:$0xff]
        %v2171 = vld [vmem:[#allocation2 + $0xb2] sm:$0xff]
        %v2172 = vld [vmem:[#allocation2 + $0xba] sm:$0xff]
        %v2173 = vld [vmem:[#allocation2 + $0xc2] sm:$0xff]
        %v2174 = vld [vmem:[#allocation2 + $0xca] sm:$0xff]
        %v2175 = vld [vmem:[#allocation2 + $0xd2] sm:$0xff]
        %v2176 = vld [vmem:[#allocation2 + $0xda] sm:$0xff]
        %v2177 = vld [vmem:[#allocation2 + $0xe2] sm:$0xff]
        %v2178 = vld [vmem:[#allocation2 + $0xea] sm:$0xff]
        %v2179 = vld [vmem:[#allocation2 + $0xf2] sm:$0xff]
        %v2180 = vld [vmem:[#allocation2 + $0xfa] sm:$0xff]
        %v2181 = vld [vmem:[#allocation2 + $0x102] sm:$0xff]
        %v2182 = vld [vmem:[#allocation2 + $0x10a] sm:$0xff]
        %v2183 = vld [vmem:[#allocation2 + $0x112] sm:$0xff]
        %v2184 = vld [vmem:[#allocation2 + $0x11a] sm:$0xff]
        %v2185 = vld [vmem:[#allocation2 + $0x122] sm:$0xff]
        %v2186 = vld [vmem:[#allocation2 + $0x12a] sm:$0xff]
        %s2187 = scalar_lea.vmem [#allocation7], 12
        %v2188 = vld [vmem:[%s2187] sm:$0xf]
        %v2190 = vsel %vm403, %v2151, 0
        %v2193 = vsel %vm403, %v2152, 0
        %v2196 = vsel %vm403, %v2153, 0
        %v2199 = vsel %vm403, %v2154, 0
        %v2202 = vsel %vm403, %v2155, 0
        %v2205 = vsel %vm403, %v2156, 0
        %v2208 = vsel %vm403, %v2157, 0
        %v2211 = vsel %vm403, %v2158, 0
        %v2214 = vsel %vm403, %v2159, 0
        %v2217 = vsel %vm403, %v2160, 0
        %v2220 = vsel %vm403, %v2161, 0
        %v2223 = vsel %vm403, %v2162, 0
        %v2226 = vsel %vm403, %v2163, 0
        %v2229 = vsel %vm403, %v2164, 0
        %v2232 = vsel %vm403, %v2165, 0
        %v2235 = vsel %vm403, %v2166, 0
        %v2238 = vsel %vm403, %v2167, 0
        %v2241 = vsel %vm403, %v2168, 0
        %v2244 = vsel %vm403, %v2169, 0
        %v2247 = vsel %vm403, %v2170, 0
        %v2250 = vsel %vm403, %v2171, 0
        %v2253 = vsel %vm403, %v2172, 0
        %v2256 = vsel %vm403, %v2173, 0
        %v2259 = vsel %vm403, %v2174, 0
        %v2262 = vsel %vm403, %v2175, 0
        %v2265 = vsel %vm403, %v2176, 0
        %v2268 = vsel %vm403, %v2177, 0
        %v2271 = vsel %vm403, %v2178, 0
        %v2274 = vsel %vm403, %v2179, 0
        %v2277 = vsel %vm403, %v2180, 0
        %v2280 = vsel %vm403, %v2181, 0
        %v2283 = vsel %vm403, %v2182, 0
        %v2286 = vsel %vm403, %v2183, 0
        %v2289 = vsel %vm403, %v2184, 0
        %v2292 = vsel %vm403, %v2185, 0
        %v2295 = vsel %vm403, %v2186, 0
        %v2298 = vsel %vm1116, %v2188, 0
        %2300 = vmatprep.subr.mxu0 0.0
        %2301 = vmatpush1.msra.mxu0 %v2298
        %2302 = vmatprep.subr.mxu0 0.0
        %2303 = vmatpush1.msra.mxu0 0.0
        %2304 = vmatprep.subr.mxu0 0.0
        %2305 = vmatpush1.msra.mxu0 0.0
        %2306 = vmatprep.subr.mxu0 0.0
        %2307 = vmatpush1.msra.mxu0 0.0
        %2308 = vmatprep.subr.mxu0 0.0
        %2309 = vmatpush1.msra.mxu0 0.0
        %2310 = vmatprep.subr.mxu0 0.0
        %2311 = vmatpush1.msra.mxu0 0.0
        %2312 = vmatprep.subr.mxu0 0.0
        %2313 = vmatpush1.msra.mxu0 0.0
        %2314 = vmatprep.subr.mxu0 0.0
        %2315 = vmatpush1.msra.mxu0 0.0
        %2316 = vmatprep.subr.mxu0 0.0
        %2317 = vmatpush1.msra.mxu0 0.0
        %2318 = vmatprep.subr.mxu0 0.0
        %2319 = vmatpush1.msra.mxu0 0.0
        %2320 = vmatprep.subr.mxu0 0.0
        %2321 = vmatpush1.msra.mxu0 0.0
        %2322 = vmatprep.subr.mxu0 0.0
        %2323 = vmatpush1.msra.mxu0 0.0
        %2324 = vmatprep.subr.mxu0 0.0
        %2325 = vmatpush1.msra.mxu0 0.0
        %2326 = vmatprep.subr.mxu0 0.0
        %2327 = vmatpush1.msra.mxu0 0.0
        %2328 = vmatprep.subr.mxu0 0.0
        %2329 = vmatpush1.msra.mxu0 0.0
        %2330 = vmatprep.subr.mxu0 0.0
        %2331 = vmatpush1.msra.mxu0 0.0
        %2332 = vmatprep.subr.mxu0 0.0
        %2333 = vmatpush1.msra.mxu0 0.0
        %2334 = vmatprep.subr.mxu0 0.0
        %2335 = vmatpush1.msra.mxu0 0.0
        %2336 = vmatprep.subr.mxu0 0.0
        %2337 = vmatpush1.msra.mxu0 0.0
        %2338 = vmatprep.subr.mxu0 0.0
        %2339 = vmatpush1.msra.mxu0 0.0
        %2340 = vmatprep.subr.mxu0 0.0
        %2341 = vmatpush1.msra.mxu0 0.0
        %2342 = vmatprep.subr.mxu0 0.0
        %2343 = vmatpush1.msra.mxu0 0.0
        %2344 = vmatprep.subr.mxu0 0.0
        %2345 = vmatpush1.msra.mxu0 0.0
        %2346 = vmatprep.subr.mxu0 0.0
        %2347 = vmatpush1.msra.mxu0 0.0
        %2348 = vmatprep.subr.mxu0 0.0
        %2349 = vmatpush1.msra.mxu0 0.0
        %2350 = vmatprep.subr.mxu0 0.0
        %2351 = vmatpush1.msra.mxu0 0.0
        %2352 = vmatprep.subr.mxu0 0.0
        %2353 = vmatpush1.msra.mxu0 0.0
        %2354 = vmatprep.subr.mxu0 0.0
        %2355 = vmatpush1.msra.mxu0 0.0
        %2356 = vmatprep.subr.mxu0 0.0
        %2357 = vmatpush1.msra.mxu0 0.0
        %2358 = vmatprep.subr.mxu0 0.0
        %2359 = vmatpush1.msra.mxu0 0.0
        %2360 = vmatprep.subr.mxu0 0.0
        %2361 = vmatpush1.msra.mxu0 0.0
        %2362 = vmatprep.subr.mxu0 0.0
        %2363 = vmatpush1.msra.mxu0 0.0
        %2364 = vmatprep.mubr.f32.mxu0 0.0
        %2365 = vmatmul.mubr.f32.gmra.mrb[0].mxu0 %v2190
        %v2366 = vpop.f32.mrb[0].mxu0
        %v2367 = vadd.f32 0.0, %v2366
        %v2368 = vpop.f32.mrb[0].mxu0
        %2369 = vmatprep.mubr.f32.mxu0 0.0
        %2370 = vmatmul.mubr.f32.gmra.mrb[0].mxu0 %v2193
        %v2371 = vpop.f32.mrb[0].mxu0
        %v2372 = vadd.f32 0.0, %v2371
        %v2373 = vpop.f32.mrb[0].mxu0
        %2374 = vmatprep.mubr.f32.mxu0 0.0
        %2375 = vmatmul.mubr.f32.gmra.mrb[0].mxu0 %v2196
        %v2376 = vpop.f32.mrb[0].mxu0
        %v2377 = vadd.f32 0.0, %v2376
        %v2378 = vpop.f32.mrb[0].mxu0
        %2379 = vmatprep.mubr.f32.mxu0 0.0
        %2380 = vmatmul.mubr.f32.gmra.mrb[0].mxu0 %v2199
        %v2381 = vpop.f32.mrb[0].mxu0
        %v2382 = vadd.f32 0.0, %v2381
        %v2383 = vpop.f32.mrb[0].mxu0
        %2384 = vmatprep.mubr.f32.mxu0 0.0
        %2385 = vmatmul.mubr.f32.gmra.mrb[0].mxu0 %v2202
        %v2386 = vpop.f32.mrb[0].mxu0
        %v2387 = vadd.f32 0.0, %v2386
        %v2388 = vpop.f32.mrb[0].mxu0
        %2389 = vmatprep.mubr.f32.mxu0 0.0
        %2390 = vmatmul.mubr.f32.gmra.mrb[0].mxu0 %v2205
        %v2391 = vpop.f32.mrb[0].mxu0
        %v2392 = vadd.f32 0.0, %v2391
        %v2393 = vpop.f32.mrb[0].mxu0
        %2394 = vmatprep.mubr.f32.mxu0 0.0
        %2395 = vmatmul.mubr.f32.gmra.mrb[0].mxu0 %v2208
        %v2396 = vpop.f32.mrb[0].mxu0
        %v2397 = vadd.f32 0.0, %v2396
        %v2398 = vpop.f32.mrb[0].mxu0
        %2399 = vmatprep.mubr.f32.mxu0 0.0
        %2400 = vmatmul.mubr.f32.gmra.mrb[0].mxu0 %v2211
        %v2401 = vpop.f32.mrb[0].mxu0
        %v2402 = vadd.f32 0.0, %v2401
        %v2403 = vpop.f32.mrb[0].mxu0
        %2404 = vmatprep.mubr.f32.mxu0 0.0
        %2405 = vmatmul.mubr.f32.gmra.mrb[0].mxu0 %v2214
        %v2406 = vpop.f32.mrb[0].mxu0
        %v2407 = vadd.f32 0.0, %v2406
        %v2408 = vpop.f32.mrb[0].mxu0
        %2409 = vmatprep.mubr.f32.mxu0 0.0
        %2410 = vmatmul.mubr.f32.gmra.mrb[0].mxu0 %v2217
        %v2411 = vpop.f32.mrb[0].mxu0
        %v2412 = vadd.f32 0.0, %v2411
        %v2413 = vpop.f32.mrb[0].mxu0
        %2414 = vmatprep.mubr.f32.mxu0 0.0
        %2415 = vmatmul.mubr.f32.gmra.mrb[0].mxu0 %v2220
        %v2416 = vpop.f32.mrb[0].mxu0
        %v2417 = vadd.f32 0.0, %v2416
        %v2418 = vpop.f32.mrb[0].mxu0
        %2419 = vmatprep.mubr.f32.mxu0 0.0
        %2420 = vmatmul.mubr.f32.gmra.mrb[0].mxu0 %v2223
        %v2421 = vpop.f32.mrb[0].mxu0
        %v2422 = vadd.f32 0.0, %v2421
        %v2423 = vpop.f32.mrb[0].mxu0
        %2424 = vmatprep.mubr.f32.mxu0 0.0
        %2425 = vmatmul.mubr.f32.gmra.mrb[0].mxu0 %v2226
        %v2426 = vpop.f32.mrb[0].mxu0
        %v2427 = vadd.f32 0.0, %v2426
        %v2428 = vpop.f32.mrb[0].mxu0
        %2429 = vmatprep.mubr.f32.mxu0 0.0
        %2430 = vmatmul.mubr.f32.gmra.mrb[0].mxu0 %v2229
        %v2431 = vpop.f32.mrb[0].mxu0
        %v2432 = vadd.f32 0.0, %v2431
        %v2433 = vpop.f32.mrb[0].mxu0
        %2434 = vmatprep.mubr.f32.mxu0 0.0
        %2435 = vmatmul.mubr.f32.gmra.mrb[0].mxu0 %v2232
        %v2436 = vpop.f32.mrb[0].mxu0
        %v2437 = vadd.f32 0.0, %v2436
        %v2438 = vpop.f32.mrb[0].mxu0
        %2439 = vmatprep.mubr.f32.mxu0 0.0
        %2440 = vmatmul.mubr.f32.gmra.mrb[0].mxu0 %v2235
        %v2441 = vpop.f32.mrb[0].mxu0
        %v2442 = vadd.f32 0.0, %v2441
        %v2443 = vpop.f32.mrb[0].mxu0
        %2444 = vmatprep.mubr.f32.mxu0 0.0
        %2445 = vmatmul.mubr.f32.gmra.mrb[0].mxu0 %v2238
        %v2446 = vpop.f32.mrb[0].mxu0
        %v2447 = vadd.f32 0.0, %v2446
        %v2448 = vpop.f32.mrb[0].mxu0
        %2449 = vmatprep.mubr.f32.mxu0 0.0
        %2450 = vmatmul.mubr.f32.gmra.mrb[0].mxu0 %v2241
        %v2451 = vpop.f32.mrb[0].mxu0
        %v2452 = vadd.f32 0.0, %v2451
        %v2453 = vpop.f32.mrb[0].mxu0
        %2454 = vmatprep.mubr.f32.mxu0 0.0
        %2455 = vmatmul.mubr.f32.gmra.mrb[0].mxu0 %v2244
        %v2456 = vpop.f32.mrb[0].mxu0
        %v2457 = vadd.f32 0.0, %v2456
        %v2458 = vpop.f32.mrb[0].mxu0
        %2459 = vmatprep.mubr.f32.mxu0 0.0
        %2460 = vmatmul.mubr.f32.gmra.mrb[0].mxu0 %v2247
        %v2461 = vpop.f32.mrb[0].mxu0
        %v2462 = vadd.f32 0.0, %v2461
        %v2463 = vpop.f32.mrb[0].mxu0
        %2464 = vmatprep.mubr.f32.mxu0 0.0
        %2465 = vmatmul.mubr.f32.gmra.mrb[0].mxu0 %v2250
        %v2466 = vpop.f32.mrb[0].mxu0
        %v2467 = vadd.f32 0.0, %v2466
        %v2468 = vpop.f32.mrb[0].mxu0
        %2469 = vmatprep.mubr.f32.mxu0 0.0
        %2470 = vmatmul.mubr.f32.gmra.mrb[0].mxu0 %v2253
        %v2471 = vpop.f32.mrb[0].mxu0
        %v2472 = vadd.f32 0.0, %v2471
        %v2473 = vpop.f32.mrb[0].mxu0
        %2474 = vmatprep.mubr.f32.mxu0 0.0
        %2475 = vmatmul.mubr.f32.gmra.mrb[0].mxu0 %v2256
        %v2476 = vpop.f32.mrb[0].mxu0
        %v2477 = vadd.f32 0.0, %v2476
        %v2478 = vpop.f32.mrb[0].mxu0
        %2479 = vmatprep.mubr.f32.mxu0 0.0
        %2480 = vmatmul.mubr.f32.gmra.mrb[0].mxu0 %v2259
        %v2481 = vpop.f32.mrb[0].mxu0
        %v2482 = vadd.f32 0.0, %v2481
        %v2483 = vpop.f32.mrb[0].mxu0
        %2484 = vmatprep.mubr.f32.mxu0 0.0
        %2485 = vmatmul.mubr.f32.gmra.mrb[0].mxu0 %v2262
        %v2486 = vpop.f32.mrb[0].mxu0
        %v2487 = vadd.f32 0.0, %v2486
        %v2488 = vpop.f32.mrb[0].mxu0
        %2489 = vmatprep.mubr.f32.mxu0 0.0
        %2490 = vmatmul.mubr.f32.gmra.mrb[0].mxu0 %v2265
        %v2491 = vpop.f32.mrb[0].mxu0
        %v2492 = vadd.f32 0.0, %v2491
        %v2493 = vpop.f32.mrb[0].mxu0
        %2494 = vmatprep.mubr.f32.mxu0 0.0
        %2495 = vmatmul.mubr.f32.gmra.mrb[0].mxu0 %v2268
        %v2496 = vpop.f32.mrb[0].mxu0
        %v2497 = vadd.f32 0.0, %v2496
        %v2498 = vpop.f32.mrb[0].mxu0
        %2499 = vmatprep.mubr.f32.mxu0 0.0
        %2500 = vmatmul.mubr.f32.gmra.mrb[0].mxu0 %v2271
        %v2501 = vpop.f32.mrb[0].mxu0
        %v2502 = vadd.f32 0.0, %v2501
        %v2503 = vpop.f32.mrb[0].mxu0
        %2504 = vmatprep.mubr.f32.mxu0 0.0
        %2505 = vmatmul.mubr.f32.gmra.mrb[0].mxu0 %v2274
        %v2506 = vpop.f32.mrb[0].mxu0
        %v2507 = vadd.f32 0.0, %v2506
        %v2508 = vpop.f32.mrb[0].mxu0
        %2509 = vmatprep.mubr.f32.mxu0 0.0
        %2510 = vmatmul.mubr.f32.gmra.mrb[0].mxu0 %v2277
        %v2511 = vpop.f32.mrb[0].mxu0
        %v2512 = vadd.f32 0.0, %v2511
        %v2513 = vpop.f32.mrb[0].mxu0
        %2514 = vmatprep.mubr.f32.mxu0 0.0
        %2515 = vmatmul.mubr.f32.gmra.mrb[0].mxu0 %v2280
        %v2516 = vpop.f32.mrb[0].mxu0
        %v2517 = vadd.f32 0.0, %v2516
        %v2518 = vpop.f32.mrb[0].mxu0
        %2519 = vmatprep.mubr.f32.mxu0 0.0
        %2520 = vmatmul.mubr.f32.gmra.mrb[0].mxu0 %v2283
        %v2521 = vpop.f32.mrb[0].mxu0
        %v2522 = vadd.f32 0.0, %v2521
        %v2523 = vpop.f32.mrb[0].mxu0
        %2524 = vmatprep.mubr.f32.mxu0 0.0
        %2525 = vmatmul.mubr.f32.gmra.mrb[0].mxu0 %v2286
        %v2526 = vpop.f32.mrb[0].mxu0
        %v2527 = vadd.f32 0.0, %v2526
        %v2528 = vpop.f32.mrb[0].mxu0
        %2529 = vmatprep.mubr.f32.mxu0 0.0
        %2530 = vmatmul.mubr.f32.gmra.mrb[0].mxu0 %v2289
        %v2531 = vpop.f32.mrb[0].mxu0
        %v2532 = vadd.f32 0.0, %v2531
        %v2533 = vpop.f32.mrb[0].mxu0
        %2534 = vmatprep.mubr.f32.mxu0 0.0
        %2535 = vmatmul.mubr.f32.gmra.mrb[0].mxu0 %v2292
        %v2536 = vpop.f32.mrb[0].mxu0
        %v2537 = vadd.f32 0.0, %v2536
        %v2538 = vpop.f32.mrb[0].mxu0
        %2539 = vmatprep.mubr.f32.mxu0 0.0
        %2540 = vmatmul.mubr.f32.gmra.mrb[0].mxu0 %v2295
        %v2541 = vpop.f32.mrb[0].mxu0
        %v2542 = vadd.f32 0.0, %v2541
        %v2543 = vpop.f32.mrb[0].mxu0
        %2544 = vdwg.mxu0
        %v2545 = vadd.f32 %v2115, %v2367
        %v2546 = vadd.f32 %v2116, %v2372
        %v2547 = vadd.f32 %v2117, %v2377
        %v2548 = vadd.f32 %v2118, %v2382
        %v2549 = vadd.f32 %v2119, %v2387
        %v2550 = vadd.f32 %v2120, %v2392
        %v2551 = vadd.f32 %v2121, %v2397
        %v2552 = vadd.f32 %v2122, %v2402
        %v2553 = vadd.f32 %v2123, %v2407
        %v2554 = vadd.f32 %v2124, %v2412
        %v2555 = vadd.f32 %v2125, %v2417
        %v2556 = vadd.f32 %v2126, %v2422
        %v2557 = vadd.f32 %v2127, %v2427
        %v2558 = vadd.f32 %v2128, %v2432
        %v2559 = vadd.f32 %v2129, %v2437
        %v2560 = vadd.f32 %v2130, %v2442
        %v2561 = vadd.f32 %v2131, %v2447
        %v2562 = vadd.f32 %v2132, %v2452
        %v2563 = vadd.f32 %v2133, %v2457
        %v2564 = vadd.f32 %v2134, %v2462
        %v2565 = vadd.f32 %v2135, %v2467
        %v2566 = vadd.f32 %v2136, %v2472
        %v2567 = vadd.f32 %v2137, %v2477
        %v2568 = vadd.f32 %v2138, %v2482
        %v2569 = vadd.f32 %v2139, %v2487
        %v2570 = vadd.f32 %v2140, %v2492
        %v2571 = vadd.f32 %v2141, %v2497
        %v2572 = vadd.f32 %v2142, %v2502
        %v2573 = vadd.f32 %v2143, %v2507
        %v2574 = vadd.f32 %v2144, %v2512
        %v2575 = vadd.f32 %v2145, %v2517
        %v2576 = vadd.f32 %v2146, %v2522
        %v2577 = vadd.f32 %v2147, %v2527
        %v2578 = vadd.f32 %v2148, %v2532
        %v2579 = vadd.f32 %v2149, %v2537
        %v2580 = vadd.f32 %v2150, %v2542
        %v2581 = vld [vmem:[#allocation2 + $0x13] sm:$0xff]
        %v2582 = vld [vmem:[#allocation2 + $0x1b] sm:$0xff]
        %v2583 = vld [vmem:[#allocation2 + $0x23] sm:$0xff]
        %v2584 = vld [vmem:[#allocation2 + $0x2b] sm:$0xff]
        %v2585 = vld [vmem:[#allocation2 + $0x33] sm:$0xff]
        %v2586 = vld [vmem:[#allocation2 + $0x3b] sm:$0xff]
        %v2587 = vld [vmem:[#allocation2 + $0x43] sm:$0xff]
        %v2588 = vld [vmem:[#allocation2 + $0x4b] sm:$0xff]
        %v2589 = vld [vmem:[#allocation2 + $0x53] sm:$0xff]
        %v2590 = vld [vmem:[#allocation2 + $0x5b] sm:$0xff]
        %v2591 = vld [vmem:[#allocation2 + $0x63] sm:$0xff]
        %v2592 = vld [vmem:[#allocation2 + $0x6b] sm:$0xff]
        %v2593 = vld [vmem:[#allocation2 + $0x73] sm:$0xff]
        %v2594 = vld [vmem:[#allocation2 + $0x7b] sm:$0xff]
        %v2595 = vld [vmem:[#allocation2 + $0x83] sm:$0xff]
        %v2596 = vld [vmem:[#allocation2 + $0x8b] sm:$0xff]
        %v2597 = vld [vmem:[#allocation2 + $0x93] sm:$0xff]
        %v2598 = vld [vmem:[#allocation2 + $0x9b] sm:$0xff]
        %v2599 = vld [vmem:[#allocation2 + $0xa3] sm:$0xff]
        %v2600 = vld [vmem:[#allocation2 + $0xab] sm:$0xff]
        %v2601 = vld [vmem:[#allocation2 + $0xb3] sm:$0xff]
        %v2602 = vld [vmem:[#allocation2 + $0xbb] sm:$0xff]
        %v2603 = vld [vmem:[#allocation2 + $0xc3] sm:$0xff]
        %v2604 = vld [vmem:[#allocation2 + $0xcb] sm:$0xff]
        %v2605 = vld [vmem:[#allocation2 + $0xd3] sm:$0xff]
        %v2606 = vld [vmem:[#allocation2 + $0xdb] sm:$0xff]
        %v2607 = vld [vmem:[#allocation2 + $0xe3] sm:$0xff]
        %v2608 = vld [vmem:[#allocation2 + $0xeb] sm:$0xff]
        %v2609 = vld [vmem:[#allocation2 + $0xf3] sm:$0xff]
        %v2610 = vld [vmem:[#allocation2 + $0xfb] sm:$0xff]
        %v2611 = vld [vmem:[#allocation2 + $0x103] sm:$0xff]
        %v2612 = vld [vmem:[#allocation2 + $0x10b] sm:$0xff]
        %v2613 = vld [vmem:[#allocation2 + $0x113] sm:$0xff]
        %v2614 = vld [vmem:[#allocation2 + $0x11b] sm:$0xff]
        %v2615 = vld [vmem:[#allocation2 + $0x123] sm:$0xff]
        %v2616 = vld [vmem:[#allocation2 + $0x12b] sm:$0xff]
        %s2617 = scalar_lea.vmem [#allocation7], 16
        %v2618 = vld [vmem:[%s2617] sm:$0xf]
        %v2620 = vsel %vm403, %v2581, 0
        %v2623 = vsel %vm403, %v2582, 0
        %v2626 = vsel %vm403, %v2583, 0
        %v2629 = vsel %vm403, %v2584, 0
        %v2632 = vsel %vm403, %v2585, 0
        %v2635 = vsel %vm403, %v2586, 0
        %v2638 = vsel %vm403, %v2587, 0
        %v2641 = vsel %vm403, %v2588, 0
        %v2644 = vsel %vm403, %v2589, 0
        %v2647 = vsel %vm403, %v2590, 0
        %v2650 = vsel %vm403, %v2591, 0
        %v2653 = vsel %vm403, %v2592, 0
        %v2656 = vsel %vm403, %v2593, 0
        %v2659 = vsel %vm403, %v2594, 0
        %v2662 = vsel %vm403, %v2595, 0
        %v2665 = vsel %vm403, %v2596, 0
        %v2668 = vsel %vm403, %v2597, 0
        %v2671 = vsel %vm403, %v2598, 0
        %v2674 = vsel %vm403, %v2599, 0
        %v2677 = vsel %vm403, %v2600, 0
        %v2680 = vsel %vm403, %v2601, 0
        %v2683 = vsel %vm403, %v2602, 0
        %v2686 = vsel %vm403, %v2603, 0
        %v2689 = vsel %vm403, %v2604, 0
        %v2692 = vsel %vm403, %v2605, 0
        %v2695 = vsel %vm403, %v2606, 0
        %v2698 = vsel %vm403, %v2607, 0
        %v2701 = vsel %vm403, %v2608, 0
        %v2704 = vsel %vm403, %v2609, 0
        %v2707 = vsel %vm403, %v2610, 0
        %v2710 = vsel %vm403, %v2611, 0
        %v2713 = vsel %vm403, %v2612, 0
        %v2716 = vsel %vm403, %v2613, 0
        %v2719 = vsel %vm403, %v2614, 0
        %v2722 = vsel %vm403, %v2615, 0
        %v2725 = vsel %vm403, %v2616, 0
        %v2728 = vsel %vm1116, %v2618, 0
        %2730 = vmatprep.subr.mxu0 0.0
        %2731 = vmatpush1.msra.mxu0 %v2728
        %2732 = vmatprep.subr.mxu0 0.0
        %2733 = vmatpush1.msra.mxu0 0.0
        %2734 = vmatprep.subr.mxu0 0.0
        %2735 = vmatpush1.msra.mxu0 0.0
        %2736 = vmatprep.subr.mxu0 0.0
        %2737 = vmatpush1.msra.mxu0 0.0
        %2738 = vmatprep.subr.mxu0 0.0
        %2739 = vmatpush1.msra.mxu0 0.0
        %2740 = vmatprep.subr.mxu0 0.0
        %2741 = vmatpush1.msra.mxu0 0.0
        %2742 = vmatprep.subr.mxu0 0.0
        %2743 = vmatpush1.msra.mxu0 0.0
        %2744 = vmatprep.subr.mxu0 0.0
        %2745 = vmatpush1.msra.mxu0 0.0
        %2746 = vmatprep.subr.mxu0 0.0
        %2747 = vmatpush1.msra.mxu0 0.0
        %2748 = vmatprep.subr.mxu0 0.0
        %2749 = vmatpush1.msra.mxu0 0.0
        %2750 = vmatprep.subr.mxu0 0.0
        %2751 = vmatpush1.msra.mxu0 0.0
        %2752 = vmatprep.subr.mxu0 0.0
        %2753 = vmatpush1.msra.mxu0 0.0
        %2754 = vmatprep.subr.mxu0 0.0
        %2755 = vmatpush1.msra.mxu0 0.0
        %2756 = vmatprep.subr.mxu0 0.0
        %2757 = vmatpush1.msra.mxu0 0.0
        %2758 = vmatprep.subr.mxu0 0.0
        %2759 = vmatpush1.msra.mxu0 0.0
        %2760 = vmatprep.subr.mxu0 0.0
        %2761 = vmatpush1.msra.mxu0 0.0
        %2762 = vmatprep.subr.mxu0 0.0
        %2763 = vmatpush1.msra.mxu0 0.0
        %2764 = vmatprep.subr.mxu0 0.0
        %2765 = vmatpush1.msra.mxu0 0.0
        %2766 = vmatprep.subr.mxu0 0.0
        %2767 = vmatpush1.msra.mxu0 0.0
        %2768 = vmatprep.subr.mxu0 0.0
        %2769 = vmatpush1.msra.mxu0 0.0
        %2770 = vmatprep.subr.mxu0 0.0
        %2771 = vmatpush1.msra.mxu0 0.0
        %2772 = vmatprep.subr.mxu0 0.0
        %2773 = vmatpush1.msra.mxu0 0.0
        %2774 = vmatprep.subr.mxu0 0.0
        %2775 = vmatpush1.msra.mxu0 0.0
        %2776 = vmatprep.subr.mxu0 0.0
        %2777 = vmatpush1.msra.mxu0 0.0
        %2778 = vmatprep.subr.mxu0 0.0
        %2779 = vmatpush1.msra.mxu0 0.0
        %2780 = vmatprep.subr.mxu0 0.0
        %2781 = vmatpush1.msra.mxu0 0.0
        %2782 = vmatprep.subr.mxu0 0.0
        %2783 = vmatpush1.msra.mxu0 0.0
        %2784 = vmatprep.subr.mxu0 0.0
        %2785 = vmatpush1.msra.mxu0 0.0
        %2786 = vmatprep.subr.mxu0 0.0
        %2787 = vmatpush1.msra.mxu0 0.0
        %2788 = vmatprep.subr.mxu0 0.0
        %2789 = vmatpush1.msra.mxu0 0.0
        %2790 = vmatprep.subr.mxu0 0.0
        %2791 = vmatpush1.msra.mxu0 0.0
        %2792 = vmatprep.subr.mxu0 0.0
        %2793 = vmatpush1.msra.mxu0 0.0
        %2794 = vmatprep.mubr.f32.mxu0 0.0
        %2795 = vmatmul.mubr.f32.gmra.mrb[0].mxu0 %v2620
        %v2796 = vpop.f32.mrb[0].mxu0
        %v2797 = vadd.f32 0.0, %v2796
        %v2798 = vpop.f32.mrb[0].mxu0
        %2799 = vmatprep.mubr.f32.mxu0 0.0
        %2800 = vmatmul.mubr.f32.gmra.mrb[0].mxu0 %v2623
        %v2801 = vpop.f32.mrb[0].mxu0
        %v2802 = vadd.f32 0.0, %v2801
        %v2803 = vpop.f32.mrb[0].mxu0
        %2804 = vmatprep.mubr.f32.mxu0 0.0
        %2805 = vmatmul.mubr.f32.gmra.mrb[0].mxu0 %v2626
        %v2806 = vpop.f32.mrb[0].mxu0
        %v2807 = vadd.f32 0.0, %v2806
        %v2808 = vpop.f32.mrb[0].mxu0
        %2809 = vmatprep.mubr.f32.mxu0 0.0
        %2810 = vmatmul.mubr.f32.gmra.mrb[0].mxu0 %v2629
        %v2811 = vpop.f32.mrb[0].mxu0
        %v2812 = vadd.f32 0.0, %v2811
        %v2813 = vpop.f32.mrb[0].mxu0
        %2814 = vmatprep.mubr.f32.mxu0 0.0
        %2815 = vmatmul.mubr.f32.gmra.mrb[0].mxu0 %v2632
        %v2816 = vpop.f32.mrb[0].mxu0
        %v2817 = vadd.f32 0.0, %v2816
        %v2818 = vpop.f32.mrb[0].mxu0
        %2819 = vmatprep.mubr.f32.mxu0 0.0
        %2820 = vmatmul.mubr.f32.gmra.mrb[0].mxu0 %v2635
        %v2821 = vpop.f32.mrb[0].mxu0
        %v2822 = vadd.f32 0.0, %v2821
        %v2823 = vpop.f32.mrb[0].mxu0
        %2824 = vmatprep.mubr.f32.mxu0 0.0
        %2825 = vmatmul.mubr.f32.gmra.mrb[0].mxu0 %v2638
        %v2826 = vpop.f32.mrb[0].mxu0
        %v2827 = vadd.f32 0.0, %v2826
        %v2828 = vpop.f32.mrb[0].mxu0
        %2829 = vmatprep.mubr.f32.mxu0 0.0
        %2830 = vmatmul.mubr.f32.gmra.mrb[0].mxu0 %v2641
        %v2831 = vpop.f32.mrb[0].mxu0
        %v2832 = vadd.f32 0.0, %v2831
        %v2833 = vpop.f32.mrb[0].mxu0
        %2834 = vmatprep.mubr.f32.mxu0 0.0
        %2835 = vmatmul.mubr.f32.gmra.mrb[0].mxu0 %v2644
        %v2836 = vpop.f32.mrb[0].mxu0
        %v2837 = vadd.f32 0.0, %v2836
        %v2838 = vpop.f32.mrb[0].mxu0
        %2839 = vmatprep.mubr.f32.mxu0 0.0
        %2840 = vmatmul.mubr.f32.gmra.mrb[0].mxu0 %v2647
        %v2841 = vpop.f32.mrb[0].mxu0
        %v2842 = vadd.f32 0.0, %v2841
        %v2843 = vpop.f32.mrb[0].mxu0
        %2844 = vmatprep.mubr.f32.mxu0 0.0
        %2845 = vmatmul.mubr.f32.gmra.mrb[0].mxu0 %v2650
        %v2846 = vpop.f32.mrb[0].mxu0
        %v2847 = vadd.f32 0.0, %v2846
        %v2848 = vpop.f32.mrb[0].mxu0
        %2849 = vmatprep.mubr.f32.mxu0 0.0
        %2850 = vmatmul.mubr.f32.gmra.mrb[0].mxu0 %v2653
        %v2851 = vpop.f32.mrb[0].mxu0
        %v2852 = vadd.f32 0.0, %v2851
        %v2853 = vpop.f32.mrb[0].mxu0
        %2854 = vmatprep.mubr.f32.mxu0 0.0
        %2855 = vmatmul.mubr.f32.gmra.mrb[0].mxu0 %v2656
        %v2856 = vpop.f32.mrb[0].mxu0
        %v2857 = vadd.f32 0.0, %v2856
        %v2858 = vpop.f32.mrb[0].mxu0
        %2859 = vmatprep.mubr.f32.mxu0 0.0
        %2860 = vmatmul.mubr.f32.gmra.mrb[0].mxu0 %v2659
        %v2861 = vpop.f32.mrb[0].mxu0
        %v2862 = vadd.f32 0.0, %v2861
        %v2863 = vpop.f32.mrb[0].mxu0
        %2864 = vmatprep.mubr.f32.mxu0 0.0
        %2865 = vmatmul.mubr.f32.gmra.mrb[0].mxu0 %v2662
        %v2866 = vpop.f32.mrb[0].mxu0
        %v2867 = vadd.f32 0.0, %v2866
        %v2868 = vpop.f32.mrb[0].mxu0
        %2869 = vmatprep.mubr.f32.mxu0 0.0
        %2870 = vmatmul.mubr.f32.gmra.mrb[0].mxu0 %v2665
        %v2871 = vpop.f32.mrb[0].mxu0
        %v2872 = vadd.f32 0.0, %v2871
        %v2873 = vpop.f32.mrb[0].mxu0
        %2874 = vmatprep.mubr.f32.mxu0 0.0
        %2875 = vmatmul.mubr.f32.gmra.mrb[0].mxu0 %v2668
        %v2876 = vpop.f32.mrb[0].mxu0
        %v2877 = vadd.f32 0.0, %v2876
        %v2878 = vpop.f32.mrb[0].mxu0
        %2879 = vmatprep.mubr.f32.mxu0 0.0
        %2880 = vmatmul.mubr.f32.gmra.mrb[0].mxu0 %v2671
        %v2881 = vpop.f32.mrb[0].mxu0
        %v2882 = vadd.f32 0.0, %v2881
        %v2883 = vpop.f32.mrb[0].mxu0
        %2884 = vmatprep.mubr.f32.mxu0 0.0
        %2885 = vmatmul.mubr.f32.gmra.mrb[0].mxu0 %v2674
        %v2886 = vpop.f32.mrb[0].mxu0
        %v2887 = vadd.f32 0.0, %v2886
        %v2888 = vpop.f32.mrb[0].mxu0
        %2889 = vmatprep.mubr.f32.mxu0 0.0
        %2890 = vmatmul.mubr.f32.gmra.mrb[0].mxu0 %v2677
        %v2891 = vpop.f32.mrb[0].mxu0
        %v2892 = vadd.f32 0.0, %v2891
        %v2893 = vpop.f32.mrb[0].mxu0
        %2894 = vmatprep.mubr.f32.mxu0 0.0
        %2895 = vmatmul.mubr.f32.gmra.mrb[0].mxu0 %v2680
        %v2896 = vpop.f32.mrb[0].mxu0
        %v2897 = vadd.f32 0.0, %v2896
        %v2898 = vpop.f32.mrb[0].mxu0
        %2899 = vmatprep.mubr.f32.mxu0 0.0
        %2900 = vmatmul.mubr.f32.gmra.mrb[0].mxu0 %v2683
        %v2901 = vpop.f32.mrb[0].mxu0
        %v2902 = vadd.f32 0.0, %v2901
        %v2903 = vpop.f32.mrb[0].mxu0
        %2904 = vmatprep.mubr.f32.mxu0 0.0
        %2905 = vmatmul.mubr.f32.gmra.mrb[0].mxu0 %v2686
        %v2906 = vpop.f32.mrb[0].mxu0
        %v2907 = vadd.f32 0.0, %v2906
        %v2908 = vpop.f32.mrb[0].mxu0
        %2909 = vmatprep.mubr.f32.mxu0 0.0
        %2910 = vmatmul.mubr.f32.gmra.mrb[0].mxu0 %v2689
        %v2911 = vpop.f32.mrb[0].mxu0
        %v2912 = vadd.f32 0.0, %v2911
        %v2913 = vpop.f32.mrb[0].mxu0
        %2914 = vmatprep.mubr.f32.mxu0 0.0
        %2915 = vmatmul.mubr.f32.gmra.mrb[0].mxu0 %v2692
        %v2916 = vpop.f32.mrb[0].mxu0
        %v2917 = vadd.f32 0.0, %v2916
        %v2918 = vpop.f32.mrb[0].mxu0
        %2919 = vmatprep.mubr.f32.mxu0 0.0
        %2920 = vmatmul.mubr.f32.gmra.mrb[0].mxu0 %v2695
        %v2921 = vpop.f32.mrb[0].mxu0
        %v2922 = vadd.f32 0.0, %v2921
        %v2923 = vpop.f32.mrb[0].mxu0
        %2924 = vmatprep.mubr.f32.mxu0 0.0
        %2925 = vmatmul.mubr.f32.gmra.mrb[0].mxu0 %v2698
        %v2926 = vpop.f32.mrb[0].mxu0
        %v2927 = vadd.f32 0.0, %v2926
        %v2928 = vpop.f32.mrb[0].mxu0
        %2929 = vmatprep.mubr.f32.mxu0 0.0
        %2930 = vmatmul.mubr.f32.gmra.mrb[0].mxu0 %v2701
        %v2931 = vpop.f32.mrb[0].mxu0
        %v2932 = vadd.f32 0.0, %v2931
        %v2933 = vpop.f32.mrb[0].mxu0
        %2934 = vmatprep.mubr.f32.mxu0 0.0
        %2935 = vmatmul.mubr.f32.gmra.mrb[0].mxu0 %v2704
        %v2936 = vpop.f32.mrb[0].mxu0
        %v2937 = vadd.f32 0.0, %v2936
        %v2938 = vpop.f32.mrb[0].mxu0
        %2939 = vmatprep.mubr.f32.mxu0 0.0
        %2940 = vmatmul.mubr.f32.gmra.mrb[0].mxu0 %v2707
        %v2941 = vpop.f32.mrb[0].mxu0
        %v2942 = vadd.f32 0.0, %v2941
        %v2943 = vpop.f32.mrb[0].mxu0
        %2944 = vmatprep.mubr.f32.mxu0 0.0
        %2945 = vmatmul.mubr.f32.gmra.mrb[0].mxu0 %v2710
        %v2946 = vpop.f32.mrb[0].mxu0
        %v2947 = vadd.f32 0.0, %v2946
        %v2948 = vpop.f32.mrb[0].mxu0
        %2949 = vmatprep.mubr.f32.mxu0 0.0
        %2950 = vmatmul.mubr.f32.gmra.mrb[0].mxu0 %v2713
        %v2951 = vpop.f32.mrb[0].mxu0
        %v2952 = vadd.f32 0.0, %v2951
        %v2953 = vpop.f32.mrb[0].mxu0
        %2954 = vmatprep.mubr.f32.mxu0 0.0
        %2955 = vmatmul.mubr.f32.gmra.mrb[0].mxu0 %v2716
        %v2956 = vpop.f32.mrb[0].mxu0
        %v2957 = vadd.f32 0.0, %v2956
        %v2958 = vpop.f32.mrb[0].mxu0
        %2959 = vmatprep.mubr.f32.mxu0 0.0
        %2960 = vmatmul.mubr.f32.gmra.mrb[0].mxu0 %v2719
        %v2961 = vpop.f32.mrb[0].mxu0
        %v2962 = vadd.f32 0.0, %v2961
        %v2963 = vpop.f32.mrb[0].mxu0
        %2964 = vmatprep.mubr.f32.mxu0 0.0
        %2965 = vmatmul.mubr.f32.gmra.mrb[0].mxu0 %v2722
        %v2966 = vpop.f32.mrb[0].mxu0
        %v2967 = vadd.f32 0.0, %v2966
        %v2968 = vpop.f32.mrb[0].mxu0
        %2969 = vmatprep.mubr.f32.mxu0 0.0
        %2970 = vmatmul.mubr.f32.gmra.mrb[0].mxu0 %v2725
        %v2971 = vpop.f32.mrb[0].mxu0
        %v2972 = vadd.f32 0.0, %v2971
        %v2973 = vpop.f32.mrb[0].mxu0
        %2974 = vdwg.mxu0
        %v2975 = vadd.f32 %v2545, %v2797
        %v2976 = vadd.f32 %v2546, %v2802
        %v2977 = vadd.f32 %v2547, %v2807
        %v2978 = vadd.f32 %v2548, %v2812
        %v2979 = vadd.f32 %v2549, %v2817
        %v2980 = vadd.f32 %v2550, %v2822
        %v2981 = vadd.f32 %v2551, %v2827
        %v2982 = vadd.f32 %v2552, %v2832
        %v2983 = vadd.f32 %v2553, %v2837
        %v2984 = vadd.f32 %v2554, %v2842
        %v2985 = vadd.f32 %v2555, %v2847
        %v2986 = vadd.f32 %v2556, %v2852
        %v2987 = vadd.f32 %v2557, %v2857
        %v2988 = vadd.f32 %v2558, %v2862
        %v2989 = vadd.f32 %v2559, %v2867
        %v2990 = vadd.f32 %v2560, %v2872
        %v2991 = vadd.f32 %v2561, %v2877
        %v2992 = vadd.f32 %v2562, %v2882
        %v2993 = vadd.f32 %v2563, %v2887
        %v2994 = vadd.f32 %v2564, %v2892
        %v2995 = vadd.f32 %v2565, %v2897
        %v2996 = vadd.f32 %v2566, %v2902
        %v2997 = vadd.f32 %v2567, %v2907
        %v2998 = vadd.f32 %v2568, %v2912
        %v2999 = vadd.f32 %v2569, %v2917
        %v3000 = vadd.f32 %v2570, %v2922
        %v3001 = vadd.f32 %v2571, %v2927
        %v3002 = vadd.f32 %v2572, %v2932
        %v3003 = vadd.f32 %v2573, %v2937
        %v3004 = vadd.f32 %v2574, %v2942
        %v3005 = vadd.f32 %v2575, %v2947
        %v3006 = vadd.f32 %v2576, %v2952
        %v3007 = vadd.f32 %v2577, %v2957
        %v3008 = vadd.f32 %v2578, %v2962
        %v3009 = vadd.f32 %v2579, %v2967
        %v3010 = vadd.f32 %v2580, %v2972
        %v3011 = vld [vmem:[#allocation2 + $0x14] sm:$0xff]
        %v3012 = vld [vmem:[#allocation2 + $0x1c] sm:$0xff]
        %v3013 = vld [vmem:[#allocation2 + $0x24] sm:$0xff]
        %v3014 = vld [vmem:[#allocation2 + $0x2c] sm:$0xff]
        %v3015 = vld [vmem:[#allocation2 + $0x34] sm:$0xff]
        %v3016 = vld [vmem:[#allocation2 + $0x3c] sm:$0xff]
        %v3017 = vld [vmem:[#allocation2 + $0x44] sm:$0xff]
        %v3018 = vld [vmem:[#allocation2 + $0x4c] sm:$0xff]
        %v3019 = vld [vmem:[#allocation2 + $0x54] sm:$0xff]
        %v3020 = vld [vmem:[#allocation2 + $0x5c] sm:$0xff]
        %v3021 = vld [vmem:[#allocation2 + $0x64] sm:$0xff]
        %v3022 = vld [vmem:[#allocation2 + $0x6c] sm:$0xff]
        %v3023 = vld [vmem:[#allocation2 + $0x74] sm:$0xff]
        %v3024 = vld [vmem:[#allocation2 + $0x7c] sm:$0xff]
        %v3025 = vld [vmem:[#allocation2 + $0x84] sm:$0xff]
        %v3026 = vld [vmem:[#allocation2 + $0x8c] sm:$0xff]
        %v3027 = vld [vmem:[#allocation2 + $0x94] sm:$0xff]
        %v3028 = vld [vmem:[#allocation2 + $0x9c] sm:$0xff]
        %v3029 = vld [vmem:[#allocation2 + $0xa4] sm:$0xff]
        %v3030 = vld [vmem:[#allocation2 + $0xac] sm:$0xff]
        %v3031 = vld [vmem:[#allocation2 + $0xb4] sm:$0xff]
        %v3032 = vld [vmem:[#allocation2 + $0xbc] sm:$0xff]
        %v3033 = vld [vmem:[#allocation2 + $0xc4] sm:$0xff]
        %v3034 = vld [vmem:[#allocation2 + $0xcc] sm:$0xff]
        %v3035 = vld [vmem:[#allocation2 + $0xd4] sm:$0xff]
        %v3036 = vld [vmem:[#allocation2 + $0xdc] sm:$0xff]
        %v3037 = vld [vmem:[#allocation2 + $0xe4] sm:$0xff]
        %v3038 = vld [vmem:[#allocation2 + $0xec] sm:$0xff]
        %v3039 = vld [vmem:[#allocation2 + $0xf4] sm:$0xff]
        %v3040 = vld [vmem:[#allocation2 + $0xfc] sm:$0xff]
        %v3041 = vld [vmem:[#allocation2 + $0x104] sm:$0xff]
        %v3042 = vld [vmem:[#allocation2 + $0x10c] sm:$0xff]
        %v3043 = vld [vmem:[#allocation2 + $0x114] sm:$0xff]
        %v3044 = vld [vmem:[#allocation2 + $0x11c] sm:$0xff]
        %v3045 = vld [vmem:[#allocation2 + $0x124] sm:$0xff]
        %v3046 = vld [vmem:[#allocation2 + $0x12c] sm:$0xff]
        %s3047 = scalar_lea.vmem [#allocation7], 20
        %v3048 = vld [vmem:[%s3047] sm:$0xf]
        %v3050 = vsel %vm403, %v3011, 0
        %v3053 = vsel %vm403, %v3012, 0
        %v3056 = vsel %vm403, %v3013, 0
        %v3059 = vsel %vm403, %v3014, 0
        %v3062 = vsel %vm403, %v3015, 0
        %v3065 = vsel %vm403, %v3016, 0
        %v3068 = vsel %vm403, %v3017, 0
        %v3071 = vsel %vm403, %v3018, 0
        %v3074 = vsel %vm403, %v3019, 0
        %v3077 = vsel %vm403, %v3020, 0
        %v3080 = vsel %vm403, %v3021, 0
        %v3083 = vsel %vm403, %v3022, 0
        %v3086 = vsel %vm403, %v3023, 0
        %v3089 = vsel %vm403, %v3024, 0
        %v3092 = vsel %vm403, %v3025, 0
        %v3095 = vsel %vm403, %v3026, 0
        %v3098 = vsel %vm403, %v3027, 0
        %v3101 = vsel %vm403, %v3028, 0
        %v3104 = vsel %vm403, %v3029, 0
        %v3107 = vsel %vm403, %v3030, 0
        %v3110 = vsel %vm403, %v3031, 0
        %v3113 = vsel %vm403, %v3032, 0
        %v3116 = vsel %vm403, %v3033, 0
        %v3119 = vsel %vm403, %v3034, 0
        %v3122 = vsel %vm403, %v3035, 0
        %v3125 = vsel %vm403, %v3036, 0
        %v3128 = vsel %vm403, %v3037, 0
        %v3131 = vsel %vm403, %v3038, 0
        %v3134 = vsel %vm403, %v3039, 0
        %v3137 = vsel %vm403, %v3040, 0
        %v3140 = vsel %vm403, %v3041, 0
        %v3143 = vsel %vm403, %v3042, 0
        %v3146 = vsel %vm403, %v3043, 0
        %v3149 = vsel %vm403, %v3044, 0
        %v3152 = vsel %vm403, %v3045, 0
        %v3155 = vsel %vm403, %v3046, 0
        %v3158 = vsel %vm1116, %v3048, 0
        %3160 = vmatprep.subr.mxu0 0.0
        %3161 = vmatpush1.msra.mxu0 %v3158
        %3162 = vmatprep.subr.mxu0 0.0
        %3163 = vmatpush1.msra.mxu0 0.0
        %3164 = vmatprep.subr.mxu0 0.0
        %3165 = vmatpush1.msra.mxu0 0.0
        %3166 = vmatprep.subr.mxu0 0.0
        %3167 = vmatpush1.msra.mxu0 0.0
        %3168 = vmatprep.subr.mxu0 0.0
        %3169 = vmatpush1.msra.mxu0 0.0
        %3170 = vmatprep.subr.mxu0 0.0
        %3171 = vmatpush1.msra.mxu0 0.0
        %3172 = vmatprep.subr.mxu0 0.0
        %3173 = vmatpush1.msra.mxu0 0.0
        %3174 = vmatprep.subr.mxu0 0.0
        %3175 = vmatpush1.msra.mxu0 0.0
        %3176 = vmatprep.subr.mxu0 0.0
        %3177 = vmatpush1.msra.mxu0 0.0
        %3178 = vmatprep.subr.mxu0 0.0
        %3179 = vmatpush1.msra.mxu0 0.0
        %3180 = vmatprep.subr.mxu0 0.0
        %3181 = vmatpush1.msra.mxu0 0.0
        %3182 = vmatprep.subr.mxu0 0.0
        %3183 = vmatpush1.msra.mxu0 0.0
        %3184 = vmatprep.subr.mxu0 0.0
        %3185 = vmatpush1.msra.mxu0 0.0
        %3186 = vmatprep.subr.mxu0 0.0
        %3187 = vmatpush1.msra.mxu0 0.0
        %3188 = vmatprep.subr.mxu0 0.0
        %3189 = vmatpush1.msra.mxu0 0.0
        %3190 = vmatprep.subr.mxu0 0.0
        %3191 = vmatpush1.msra.mxu0 0.0
        %3192 = vmatprep.subr.mxu0 0.0
        %3193 = vmatpush1.msra.mxu0 0.0
        %3194 = vmatprep.subr.mxu0 0.0
        %3195 = vmatpush1.msra.mxu0 0.0
        %3196 = vmatprep.subr.mxu0 0.0
        %3197 = vmatpush1.msra.mxu0 0.0
        %3198 = vmatprep.subr.mxu0 0.0
        %3199 = vmatpush1.msra.mxu0 0.0
        %3200 = vmatprep.subr.mxu0 0.0
        %3201 = vmatpush1.msra.mxu0 0.0
        %3202 = vmatprep.subr.mxu0 0.0
        %3203 = vmatpush1.msra.mxu0 0.0
        %3204 = vmatprep.subr.mxu0 0.0
        %3205 = vmatpush1.msra.mxu0 0.0
        %3206 = vmatprep.subr.mxu0 0.0
        %3207 = vmatpush1.msra.mxu0 0.0
        %3208 = vmatprep.subr.mxu0 0.0
        %3209 = vmatpush1.msra.mxu0 0.0
        %3210 = vmatprep.subr.mxu0 0.0
        %3211 = vmatpush1.msra.mxu0 0.0
        %3212 = vmatprep.subr.mxu0 0.0
        %3213 = vmatpush1.msra.mxu0 0.0
        %3214 = vmatprep.subr.mxu0 0.0
        %3215 = vmatpush1.msra.mxu0 0.0
        %3216 = vmatprep.subr.mxu0 0.0
        %3217 = vmatpush1.msra.mxu0 0.0
        %3218 = vmatprep.subr.mxu0 0.0
        %3219 = vmatpush1.msra.mxu0 0.0
        %3220 = vmatprep.subr.mxu0 0.0
        %3221 = vmatpush1.msra.mxu0 0.0
        %3222 = vmatprep.subr.mxu0 0.0
        %3223 = vmatpush1.msra.mxu0 0.0
        %3224 = vmatprep.mubr.f32.mxu0 0.0
        %3225 = vmatmul.mubr.f32.gmra.mrb[0].mxu0 %v3050
        %v3226 = vpop.f32.mrb[0].mxu0
        %v3227 = vadd.f32 0.0, %v3226
        %v3228 = vpop.f32.mrb[0].mxu0
        %3229 = vmatprep.mubr.f32.mxu0 0.0
        %3230 = vmatmul.mubr.f32.gmra.mrb[0].mxu0 %v3053
        %v3231 = vpop.f32.mrb[0].mxu0
        %v3232 = vadd.f32 0.0, %v3231
        %v3233 = vpop.f32.mrb[0].mxu0
        %3234 = vmatprep.mubr.f32.mxu0 0.0
        %3235 = vmatmul.mubr.f32.gmra.mrb[0].mxu0 %v3056
        %v3236 = vpop.f32.mrb[0].mxu0
        %v3237 = vadd.f32 0.0, %v3236
        %v3238 = vpop.f32.mrb[0].mxu0
        %3239 = vmatprep.mubr.f32.mxu0 0.0
        %3240 = vmatmul.mubr.f32.gmra.mrb[0].mxu0 %v3059
        %v3241 = vpop.f32.mrb[0].mxu0
        %v3242 = vadd.f32 0.0, %v3241
        %v3243 = vpop.f32.mrb[0].mxu0
        %3244 = vmatprep.mubr.f32.mxu0 0.0
        %3245 = vmatmul.mubr.f32.gmra.mrb[0].mxu0 %v3062
        %v3246 = vpop.f32.mrb[0].mxu0
        %v3247 = vadd.f32 0.0, %v3246
        %v3248 = vpop.f32.mrb[0].mxu0
        %3249 = vmatprep.mubr.f32.mxu0 0.0
        %3250 = vmatmul.mubr.f32.gmra.mrb[0].mxu0 %v3065
        %v3251 = vpop.f32.mrb[0].mxu0
        %v3252 = vadd.f32 0.0, %v3251
        %v3253 = vpop.f32.mrb[0].mxu0
        %3254 = vmatprep.mubr.f32.mxu0 0.0
        %3255 = vmatmul.mubr.f32.gmra.mrb[0].mxu0 %v3068
        %v3256 = vpop.f32.mrb[0].mxu0
        %v3257 = vadd.f32 0.0, %v3256
        %v3258 = vpop.f32.mrb[0].mxu0
        %3259 = vmatprep.mubr.f32.mxu0 0.0
        %3260 = vmatmul.mubr.f32.gmra.mrb[0].mxu0 %v3071
        %v3261 = vpop.f32.mrb[0].mxu0
        %v3262 = vadd.f32 0.0, %v3261
        %v3263 = vpop.f32.mrb[0].mxu0
        %3264 = vmatprep.mubr.f32.mxu0 0.0
        %3265 = vmatmul.mubr.f32.gmra.mrb[0].mxu0 %v3074
        %v3266 = vpop.f32.mrb[0].mxu0
        %v3267 = vadd.f32 0.0, %v3266
        %v3268 = vpop.f32.mrb[0].mxu0
        %3269 = vmatprep.mubr.f32.mxu0 0.0
        %3270 = vmatmul.mubr.f32.gmra.mrb[0].mxu0 %v3077
        %v3271 = vpop.f32.mrb[0].mxu0
        %v3272 = vadd.f32 0.0, %v3271
        %v3273 = vpop.f32.mrb[0].mxu0
        %3274 = vmatprep.mubr.f32.mxu0 0.0
        %3275 = vmatmul.mubr.f32.gmra.mrb[0].mxu0 %v3080
        %v3276 = vpop.f32.mrb[0].mxu0
        %v3277 = vadd.f32 0.0, %v3276
        %v3278 = vpop.f32.mrb[0].mxu0
        %3279 = vmatprep.mubr.f32.mxu0 0.0
        %3280 = vmatmul.mubr.f32.gmra.mrb[0].mxu0 %v3083
        %v3281 = vpop.f32.mrb[0].mxu0
        %v3282 = vadd.f32 0.0, %v3281
        %v3283 = vpop.f32.mrb[0].mxu0
        %3284 = vmatprep.mubr.f32.mxu0 0.0
        %3285 = vmatmul.mubr.f32.gmra.mrb[0].mxu0 %v3086
        %v3286 = vpop.f32.mrb[0].mxu0
        %v3287 = vadd.f32 0.0, %v3286
        %v3288 = vpop.f32.mrb[0].mxu0
        %3289 = vmatprep.mubr.f32.mxu0 0.0
        %3290 = vmatmul.mubr.f32.gmra.mrb[0].mxu0 %v3089
        %v3291 = vpop.f32.mrb[0].mxu0
        %v3292 = vadd.f32 0.0, %v3291
        %v3293 = vpop.f32.mrb[0].mxu0
        %3294 = vmatprep.mubr.f32.mxu0 0.0
        %3295 = vmatmul.mubr.f32.gmra.mrb[0].mxu0 %v3092
        %v3296 = vpop.f32.mrb[0].mxu0
        %v3297 = vadd.f32 0.0, %v3296
        %v3298 = vpop.f32.mrb[0].mxu0
        %3299 = vmatprep.mubr.f32.mxu0 0.0
        %3300 = vmatmul.mubr.f32.gmra.mrb[0].mxu0 %v3095
        %v3301 = vpop.f32.mrb[0].mxu0
        %v3302 = vadd.f32 0.0, %v3301
        %v3303 = vpop.f32.mrb[0].mxu0
        %3304 = vmatprep.mubr.f32.mxu0 0.0
        %3305 = vmatmul.mubr.f32.gmra.mrb[0].mxu0 %v3098
        %v3306 = vpop.f32.mrb[0].mxu0
        %v3307 = vadd.f32 0.0, %v3306
        %v3308 = vpop.f32.mrb[0].mxu0
        %3309 = vmatprep.mubr.f32.mxu0 0.0
        %3310 = vmatmul.mubr.f32.gmra.mrb[0].mxu0 %v3101
        %v3311 = vpop.f32.mrb[0].mxu0
        %v3312 = vadd.f32 0.0, %v3311
        %v3313 = vpop.f32.mrb[0].mxu0
        %3314 = vmatprep.mubr.f32.mxu0 0.0
        %3315 = vmatmul.mubr.f32.gmra.mrb[0].mxu0 %v3104
        %v3316 = vpop.f32.mrb[0].mxu0
        %v3317 = vadd.f32 0.0, %v3316
        %v3318 = vpop.f32.mrb[0].mxu0
        %3319 = vmatprep.mubr.f32.mxu0 0.0
        %3320 = vmatmul.mubr.f32.gmra.mrb[0].mxu0 %v3107
        %v3321 = vpop.f32.mrb[0].mxu0
        %v3322 = vadd.f32 0.0, %v3321
        %v3323 = vpop.f32.mrb[0].mxu0
        %3324 = vmatprep.mubr.f32.mxu0 0.0
        %3325 = vmatmul.mubr.f32.gmra.mrb[0].mxu0 %v3110
        %v3326 = vpop.f32.mrb[0].mxu0
        %v3327 = vadd.f32 0.0, %v3326
        %v3328 = vpop.f32.mrb[0].mxu0
        %3329 = vmatprep.mubr.f32.mxu0 0.0
        %3330 = vmatmul.mubr.f32.gmra.mrb[0].mxu0 %v3113
        %v3331 = vpop.f32.mrb[0].mxu0
        %v3332 = vadd.f32 0.0, %v3331
        %v3333 = vpop.f32.mrb[0].mxu0
        %3334 = vmatprep.mubr.f32.mxu0 0.0
        %3335 = vmatmul.mubr.f32.gmra.mrb[0].mxu0 %v3116
        %v3336 = vpop.f32.mrb[0].mxu0
        %v3337 = vadd.f32 0.0, %v3336
        %v3338 = vpop.f32.mrb[0].mxu0
        %3339 = vmatprep.mubr.f32.mxu0 0.0
        %3340 = vmatmul.mubr.f32.gmra.mrb[0].mxu0 %v3119
        %v3341 = vpop.f32.mrb[0].mxu0
        %v3342 = vadd.f32 0.0, %v3341
        %v3343 = vpop.f32.mrb[0].mxu0
        %3344 = vmatprep.mubr.f32.mxu0 0.0
        %3345 = vmatmul.mubr.f32.gmra.mrb[0].mxu0 %v3122
        %v3346 = vpop.f32.mrb[0].mxu0
        %v3347 = vadd.f32 0.0, %v3346
        %v3348 = vpop.f32.mrb[0].mxu0
        %3349 = vmatprep.mubr.f32.mxu0 0.0
        %3350 = vmatmul.mubr.f32.gmra.mrb[0].mxu0 %v3125
        %v3351 = vpop.f32.mrb[0].mxu0
        %v3352 = vadd.f32 0.0, %v3351
        %v3353 = vpop.f32.mrb[0].mxu0
        %3354 = vmatprep.mubr.f32.mxu0 0.0
        %3355 = vmatmul.mubr.f32.gmra.mrb[0].mxu0 %v3128
        %v3356 = vpop.f32.mrb[0].mxu0
        %v3357 = vadd.f32 0.0, %v3356
        %v3358 = vpop.f32.mrb[0].mxu0
        %3359 = vmatprep.mubr.f32.mxu0 0.0
        %3360 = vmatmul.mubr.f32.gmra.mrb[0].mxu0 %v3131
        %v3361 = vpop.f32.mrb[0].mxu0
        %v3362 = vadd.f32 0.0, %v3361
        %v3363 = vpop.f32.mrb[0].mxu0
        %3364 = vmatprep.mubr.f32.mxu0 0.0
        %3365 = vmatmul.mubr.f32.gmra.mrb[0].mxu0 %v3134
        %v3366 = vpop.f32.mrb[0].mxu0
        %v3367 = vadd.f32 0.0, %v3366
        %v3368 = vpop.f32.mrb[0].mxu0
        %3369 = vmatprep.mubr.f32.mxu0 0.0
        %3370 = vmatmul.mubr.f32.gmra.mrb[0].mxu0 %v3137
        %v3371 = vpop.f32.mrb[0].mxu0
        %v3372 = vadd.f32 0.0, %v3371
        %v3373 = vpop.f32.mrb[0].mxu0
        %3374 = vmatprep.mubr.f32.mxu0 0.0
        %3375 = vmatmul.mubr.f32.gmra.mrb[0].mxu0 %v3140
        %v3376 = vpop.f32.mrb[0].mxu0
        %v3377 = vadd.f32 0.0, %v3376
        %v3378 = vpop.f32.mrb[0].mxu0
        %3379 = vmatprep.mubr.f32.mxu0 0.0
        %3380 = vmatmul.mubr.f32.gmra.mrb[0].mxu0 %v3143
        %v3381 = vpop.f32.mrb[0].mxu0
        %v3382 = vadd.f32 0.0, %v3381
        %v3383 = vpop.f32.mrb[0].mxu0
        %3384 = vmatprep.mubr.f32.mxu0 0.0
        %3385 = vmatmul.mubr.f32.gmra.mrb[0].mxu0 %v3146
        %v3386 = vpop.f32.mrb[0].mxu0
        %v3387 = vadd.f32 0.0, %v3386
        %v3388 = vpop.f32.mrb[0].mxu0
        %3389 = vmatprep.mubr.f32.mxu0 0.0
        %3390 = vmatmul.mubr.f32.gmra.mrb[0].mxu0 %v3149
        %v3391 = vpop.f32.mrb[0].mxu0
        %v3392 = vadd.f32 0.0, %v3391
        %v3393 = vpop.f32.mrb[0].mxu0
        %3394 = vmatprep.mubr.f32.mxu0 0.0
        %3395 = vmatmul.mubr.f32.gmra.mrb[0].mxu0 %v3152
        %v3396 = vpop.f32.mrb[0].mxu0
        %v3397 = vadd.f32 0.0, %v3396
        %v3398 = vpop.f32.mrb[0].mxu0
        %3399 = vmatprep.mubr.f32.mxu0 0.0
        %3400 = vmatmul.mubr.f32.gmra.mrb[0].mxu0 %v3155
        %v3401 = vpop.f32.mrb[0].mxu0
        %v3402 = vadd.f32 0.0, %v3401
        %v3403 = vpop.f32.mrb[0].mxu0
        %3404 = vdwg.mxu0
        %v3405 = vadd.f32 %v2975, %v3227
        %v3406 = vadd.f32 %v2976, %v3232
        %v3407 = vadd.f32 %v2977, %v3237
        %v3408 = vadd.f32 %v2978, %v3242
        %v3409 = vadd.f32 %v2979, %v3247
        %v3410 = vadd.f32 %v2980, %v3252
        %v3411 = vadd.f32 %v2981, %v3257
        %v3412 = vadd.f32 %v2982, %v3262
        %v3413 = vadd.f32 %v2983, %v3267
        %v3414 = vadd.f32 %v2984, %v3272
        %v3415 = vadd.f32 %v2985, %v3277
        %v3416 = vadd.f32 %v2986, %v3282
        %v3417 = vadd.f32 %v2987, %v3287
        %v3418 = vadd.f32 %v2988, %v3292
        %v3419 = vadd.f32 %v2989, %v3297
        %v3420 = vadd.f32 %v2990, %v3302
        %v3421 = vadd.f32 %v2991, %v3307
        %v3422 = vadd.f32 %v2992, %v3312
        %v3423 = vadd.f32 %v2993, %v3317
        %v3424 = vadd.f32 %v2994, %v3322
        %v3425 = vadd.f32 %v2995, %v3327
        %v3426 = vadd.f32 %v2996, %v3332
        %v3427 = vadd.f32 %v2997, %v3337
        %v3428 = vadd.f32 %v2998, %v3342
        %v3429 = vadd.f32 %v2999, %v3347
        %v3430 = vadd.f32 %v3000, %v3352
        %v3431 = vadd.f32 %v3001, %v3357
        %v3432 = vadd.f32 %v3002, %v3362
        %v3433 = vadd.f32 %v3003, %v3367
        %v3434 = vadd.f32 %v3004, %v3372
        %v3435 = vadd.f32 %v3005, %v3377
        %v3436 = vadd.f32 %v3006, %v3382
        %v3437 = vadd.f32 %v3007, %v3387
        %v3438 = vadd.f32 %v3008, %v3392
        %v3439 = vadd.f32 %v3009, %v3397
        %v3440 = vadd.f32 %v3010, %v3402
        %v3441 = vld [vmem:[#allocation2 + $0x24] sm:$0xff]
        %v3442 = vld [vmem:[#allocation2 + $0x2c] sm:$0xff]
        %v3443 = vld [vmem:[#allocation2 + $0x34] sm:$0xff]
        %v3444 = vld [vmem:[#allocation2 + $0x3c] sm:$0xff]
        %v3445 = vld [vmem:[#allocation2 + $0x44] sm:$0xff]
        %v3446 = vld [vmem:[#allocation2 + $0x4c] sm:$0xff]
        %v3447 = vld [vmem:[#allocation2 + $0x54] sm:$0xff]
        %v3448 = vld [vmem:[#allocation2 + $0x5c] sm:$0xff]
        %v3449 = vld [vmem:[#allocation2 + $0x64] sm:$0xff]
        %v3450 = vld [vmem:[#allocation2 + $0x6c] sm:$0xff]
        %v3451 = vld [vmem:[#allocation2 + $0x74] sm:$0xff]
        %v3452 = vld [vmem:[#allocation2 + $0x7c] sm:$0xff]
        %v3453 = vld [vmem:[#allocation2 + $0x84] sm:$0xff]
        %v3454 = vld [vmem:[#allocation2 + $0x8c] sm:$0xff]
        %v3455 = vld [vmem:[#allocation2 + $0x94] sm:$0xff]
        %v3456 = vld [vmem:[#allocation2 + $0x9c] sm:$0xff]
        %v3457 = vld [vmem:[#allocation2 + $0xa4] sm:$0xff]
        %v3458 = vld [vmem:[#allocation2 + $0xac] sm:$0xff]
        %v3459 = vld [vmem:[#allocation2 + $0xb4] sm:$0xff]
        %v3460 = vld [vmem:[#allocation2 + $0xbc] sm:$0xff]
        %v3461 = vld [vmem:[#allocation2 + $0xc4] sm:$0xff]
        %v3462 = vld [vmem:[#allocation2 + $0xcc] sm:$0xff]
        %v3463 = vld [vmem:[#allocation2 + $0xd4] sm:$0xff]
        %v3464 = vld [vmem:[#allocation2 + $0xdc] sm:$0xff]
        %v3465 = vld [vmem:[#allocation2 + $0xe4] sm:$0xff]
        %v3466 = vld [vmem:[#allocation2 + $0xec] sm:$0xff]
        %v3467 = vld [vmem:[#allocation2 + $0xf4] sm:$0xff]
        %v3468 = vld [vmem:[#allocation2 + $0xfc] sm:$0xff]
        %v3469 = vld [vmem:[#allocation2 + $0x104] sm:$0xff]
        %v3470 = vld [vmem:[#allocation2 + $0x10c] sm:$0xff]
        %v3471 = vld [vmem:[#allocation2 + $0x114] sm:$0xff]
        %v3472 = vld [vmem:[#allocation2 + $0x11c] sm:$0xff]
        %v3473 = vld [vmem:[#allocation2 + $0x124] sm:$0xff]
        %v3474 = vld [vmem:[#allocation2 + $0x12c] sm:$0xff]
        %v3475 = vld [vmem:[#allocation2 + $0x134] sm:$0xff]
        %v3476 = vld [vmem:[#allocation2 + $0x13c] sm:$0xff]
        %s3477 = scalar_lea.vmem [#allocation7], 24
        %v3478 = vld [vmem:[%s3477] sm:$0xf]
        %v3480 = vsel %vm403, %v3441, 0
        %v3483 = vsel %vm403, %v3442, 0
        %v3486 = vsel %vm403, %v3443, 0
        %v3489 = vsel %vm403, %v3444, 0
        %v3492 = vsel %vm403, %v3445, 0
        %v3495 = vsel %vm403, %v3446, 0
        %v3498 = vsel %vm403, %v3447, 0
        %v3501 = vsel %vm403, %v3448, 0
        %v3504 = vsel %vm403, %v3449, 0
        %v3507 = vsel %vm403, %v3450, 0
        %v3510 = vsel %vm403, %v3451, 0
        %v3513 = vsel %vm403, %v3452, 0
        %v3516 = vsel %vm403, %v3453, 0
        %v3519 = vsel %vm403, %v3454, 0
        %v3522 = vsel %vm403, %v3455, 0
        %v3525 = vsel %vm403, %v3456, 0
        %v3528 = vsel %vm403, %v3457, 0
        %v3531 = vsel %vm403, %v3458, 0
        %v3534 = vsel %vm403, %v3459, 0
        %v3537 = vsel %vm403, %v3460, 0
        %v3540 = vsel %vm403, %v3461, 0
        %v3543 = vsel %vm403, %v3462, 0
        %v3546 = vsel %vm403, %v3463, 0
        %v3549 = vsel %vm403, %v3464, 0
        %v3552 = vsel %vm403, %v3465, 0
        %v3555 = vsel %vm403, %v3466, 0
        %v3558 = vsel %vm403, %v3467, 0
        %v3561 = vsel %vm403, %v3468, 0
        %v3564 = vsel %vm403, %v3469, 0
        %v3567 = vsel %vm403, %v3470, 0
        %v3570 = vsel %vm403, %v3471, 0
        %v3573 = vsel %vm403, %v3472, 0
        %v3576 = vsel %vm403, %v3473, 0
        %v3579 = vsel %vm403, %v3474, 0
        %v3582 = vsel %vm403, %v3475, 0
        %v3585 = vsel %vm403, %v3476, 0
        %v3588 = vsel %vm1116, %v3478, 0
        %3590 = vmatprep.subr.mxu0 0.0
        %3591 = vmatpush1.msra.mxu0 %v3588
        %3592 = vmatprep.subr.mxu0 0.0
        %3593 = vmatpush1.msra.mxu0 0.0
        %3594 = vmatprep.subr.mxu0 0.0
        %3595 = vmatpush1.msra.mxu0 0.0
        %3596 = vmatprep.subr.mxu0 0.0
        %3597 = vmatpush1.msra.mxu0 0.0
        %3598 = vmatprep.subr.mxu0 0.0
        %3599 = vmatpush1.msra.mxu0 0.0
        %3600 = vmatprep.subr.mxu0 0.0
        %3601 = vmatpush1.msra.mxu0 0.0
        %3602 = vmatprep.subr.mxu0 0.0
        %3603 = vmatpush1.msra.mxu0 0.0
        %3604 = vmatprep.subr.mxu0 0.0
        %3605 = vmatpush1.msra.mxu0 0.0
        %3606 = vmatprep.subr.mxu0 0.0
        %3607 = vmatpush1.msra.mxu0 0.0
        %3608 = vmatprep.subr.mxu0 0.0
        %3609 = vmatpush1.msra.mxu0 0.0
        %3610 = vmatprep.subr.mxu0 0.0
        %3611 = vmatpush1.msra.mxu0 0.0
        %3612 = vmatprep.subr.mxu0 0.0
        %3613 = vmatpush1.msra.mxu0 0.0
        %3614 = vmatprep.subr.mxu0 0.0
        %3615 = vmatpush1.msra.mxu0 0.0
        %3616 = vmatprep.subr.mxu0 0.0
        %3617 = vmatpush1.msra.mxu0 0.0
        %3618 = vmatprep.subr.mxu0 0.0
        %3619 = vmatpush1.msra.mxu0 0.0
        %3620 = vmatprep.subr.mxu0 0.0
        %3621 = vmatpush1.msra.mxu0 0.0
        %3622 = vmatprep.subr.mxu0 0.0
        %3623 = vmatpush1.msra.mxu0 0.0
        %3624 = vmatprep.subr.mxu0 0.0
        %3625 = vmatpush1.msra.mxu0 0.0
        %3626 = vmatprep.subr.mxu0 0.0
        %3627 = vmatpush1.msra.mxu0 0.0
        %3628 = vmatprep.subr.mxu0 0.0
        %3629 = vmatpush1.msra.mxu0 0.0
        %3630 = vmatprep.subr.mxu0 0.0
        %3631 = vmatpush1.msra.mxu0 0.0
        %3632 = vmatprep.subr.mxu0 0.0
        %3633 = vmatpush1.msra.mxu0 0.0
        %3634 = vmatprep.subr.mxu0 0.0
        %3635 = vmatpush1.msra.mxu0 0.0
        %3636 = vmatprep.subr.mxu0 0.0
        %3637 = vmatpush1.msra.mxu0 0.0
        %3638 = vmatprep.subr.mxu0 0.0
        %3639 = vmatpush1.msra.mxu0 0.0
        %3640 = vmatprep.subr.mxu0 0.0
        %3641 = vmatpush1.msra.mxu0 0.0
        %3642 = vmatprep.subr.mxu0 0.0
        %3643 = vmatpush1.msra.mxu0 0.0
        %3644 = vmatprep.subr.mxu0 0.0
        %3645 = vmatpush1.msra.mxu0 0.0
        %3646 = vmatprep.subr.mxu0 0.0
        %3647 = vmatpush1.msra.mxu0 0.0
        %3648 = vmatprep.subr.mxu0 0.0
        %3649 = vmatpush1.msra.mxu0 0.0
        %3650 = vmatprep.subr.mxu0 0.0
        %3651 = vmatpush1.msra.mxu0 0.0
        %3652 = vmatprep.subr.mxu0 0.0
        %3653 = vmatpush1.msra.mxu0 0.0
        %3654 = vmatprep.mubr.f32.mxu0 0.0
        %3655 = vmatmul.mubr.f32.gmra.mrb[0].mxu0 %v3480
        %v3656 = vpop.f32.mrb[0].mxu0
        %v3657 = vadd.f32 0.0, %v3656
        %v3658 = vpop.f32.mrb[0].mxu0
        %3659 = vmatprep.mubr.f32.mxu0 0.0
        %3660 = vmatmul.mubr.f32.gmra.mrb[0].mxu0 %v3483
        %v3661 = vpop.f32.mrb[0].mxu0
        %v3662 = vadd.f32 0.0, %v3661
        %v3663 = vpop.f32.mrb[0].mxu0
        %3664 = vmatprep.mubr.f32.mxu0 0.0
        %3665 = vmatmul.mubr.f32.gmra.mrb[0].mxu0 %v3486
        %v3666 = vpop.f32.mrb[0].mxu0
        %v3667 = vadd.f32 0.0, %v3666
        %v3668 = vpop.f32.mrb[0].mxu0
        %3669 = vmatprep.mubr.f32.mxu0 0.0
        %3670 = vmatmul.mubr.f32.gmra.mrb[0].mxu0 %v3489
        %v3671 = vpop.f32.mrb[0].mxu0
        %v3672 = vadd.f32 0.0, %v3671
        %v3673 = vpop.f32.mrb[0].mxu0
        %3674 = vmatprep.mubr.f32.mxu0 0.0
        %3675 = vmatmul.mubr.f32.gmra.mrb[0].mxu0 %v3492
        %v3676 = vpop.f32.mrb[0].mxu0
        %v3677 = vadd.f32 0.0, %v3676
        %v3678 = vpop.f32.mrb[0].mxu0
        %3679 = vmatprep.mubr.f32.mxu0 0.0
        %3680 = vmatmul.mubr.f32.gmra.mrb[0].mxu0 %v3495
        %v3681 = vpop.f32.mrb[0].mxu0
        %v3682 = vadd.f32 0.0, %v3681
        %v3683 = vpop.f32.mrb[0].mxu0
        %3684 = vmatprep.mubr.f32.mxu0 0.0
        %3685 = vmatmul.mubr.f32.gmra.mrb[0].mxu0 %v3498
        %v3686 = vpop.f32.mrb[0].mxu0
        %v3687 = vadd.f32 0.0, %v3686
        %v3688 = vpop.f32.mrb[0].mxu0
        %3689 = vmatprep.mubr.f32.mxu0 0.0
        %3690 = vmatmul.mubr.f32.gmra.mrb[0].mxu0 %v3501
        %v3691 = vpop.f32.mrb[0].mxu0
        %v3692 = vadd.f32 0.0, %v3691
        %v3693 = vpop.f32.mrb[0].mxu0
        %3694 = vmatprep.mubr.f32.mxu0 0.0
        %3695 = vmatmul.mubr.f32.gmra.mrb[0].mxu0 %v3504
        %v3696 = vpop.f32.mrb[0].mxu0
        %v3697 = vadd.f32 0.0, %v3696
        %v3698 = vpop.f32.mrb[0].mxu0
        %3699 = vmatprep.mubr.f32.mxu0 0.0
        %3700 = vmatmul.mubr.f32.gmra.mrb[0].mxu0 %v3507
        %v3701 = vpop.f32.mrb[0].mxu0
        %v3702 = vadd.f32 0.0, %v3701
        %v3703 = vpop.f32.mrb[0].mxu0
        %3704 = vmatprep.mubr.f32.mxu0 0.0
        %3705 = vmatmul.mubr.f32.gmra.mrb[0].mxu0 %v3510
        %v3706 = vpop.f32.mrb[0].mxu0
        %v3707 = vadd.f32 0.0, %v3706
        %v3708 = vpop.f32.mrb[0].mxu0
        %3709 = vmatprep.mubr.f32.mxu0 0.0
        %3710 = vmatmul.mubr.f32.gmra.mrb[0].mxu0 %v3513
        %v3711 = vpop.f32.mrb[0].mxu0
        %v3712 = vadd.f32 0.0, %v3711
        %v3713 = vpop.f32.mrb[0].mxu0
        %3714 = vmatprep.mubr.f32.mxu0 0.0
        %3715 = vmatmul.mubr.f32.gmra.mrb[0].mxu0 %v3516
        %v3716 = vpop.f32.mrb[0].mxu0
        %v3717 = vadd.f32 0.0, %v3716
        %v3718 = vpop.f32.mrb[0].mxu0
        %3719 = vmatprep.mubr.f32.mxu0 0.0
        %3720 = vmatmul.mubr.f32.gmra.mrb[0].mxu0 %v3519
        %v3721 = vpop.f32.mrb[0].mxu0
        %v3722 = vadd.f32 0.0, %v3721
        %v3723 = vpop.f32.mrb[0].mxu0
        %3724 = vmatprep.mubr.f32.mxu0 0.0
        %3725 = vmatmul.mubr.f32.gmra.mrb[0].mxu0 %v3522
        %v3726 = vpop.f32.mrb[0].mxu0
        %v3727 = vadd.f32 0.0, %v3726
        %v3728 = vpop.f32.mrb[0].mxu0
        %3729 = vmatprep.mubr.f32.mxu0 0.0
        %3730 = vmatmul.mubr.f32.gmra.mrb[0].mxu0 %v3525
        %v3731 = vpop.f32.mrb[0].mxu0
        %v3732 = vadd.f32 0.0, %v3731
        %v3733 = vpop.f32.mrb[0].mxu0
        %3734 = vmatprep.mubr.f32.mxu0 0.0
        %3735 = vmatmul.mubr.f32.gmra.mrb[0].mxu0 %v3528
        %v3736 = vpop.f32.mrb[0].mxu0
        %v3737 = vadd.f32 0.0, %v3736
        %v3738 = vpop.f32.mrb[0].mxu0
        %3739 = vmatprep.mubr.f32.mxu0 0.0
        %3740 = vmatmul.mubr.f32.gmra.mrb[0].mxu0 %v3531
        %v3741 = vpop.f32.mrb[0].mxu0
        %v3742 = vadd.f32 0.0, %v3741
        %v3743 = vpop.f32.mrb[0].mxu0
        %3744 = vmatprep.mubr.f32.mxu0 0.0
        %3745 = vmatmul.mubr.f32.gmra.mrb[0].mxu0 %v3534
        %v3746 = vpop.f32.mrb[0].mxu0
        %v3747 = vadd.f32 0.0, %v3746
        %v3748 = vpop.f32.mrb[0].mxu0
        %3749 = vmatprep.mubr.f32.mxu0 0.0
        %3750 = vmatmul.mubr.f32.gmra.mrb[0].mxu0 %v3537
        %v3751 = vpop.f32.mrb[0].mxu0
        %v3752 = vadd.f32 0.0, %v3751
        %v3753 = vpop.f32.mrb[0].mxu0
        %3754 = vmatprep.mubr.f32.mxu0 0.0
        %3755 = vmatmul.mubr.f32.gmra.mrb[0].mxu0 %v3540
        %v3756 = vpop.f32.mrb[0].mxu0
        %v3757 = vadd.f32 0.0, %v3756
        %v3758 = vpop.f32.mrb[0].mxu0
        %3759 = vmatprep.mubr.f32.mxu0 0.0
        %3760 = vmatmul.mubr.f32.gmra.mrb[0].mxu0 %v3543
        %v3761 = vpop.f32.mrb[0].mxu0
        %v3762 = vadd.f32 0.0, %v3761
        %v3763 = vpop.f32.mrb[0].mxu0
        %3764 = vmatprep.mubr.f32.mxu0 0.0
        %3765 = vmatmul.mubr.f32.gmra.mrb[0].mxu0 %v3546
        %v3766 = vpop.f32.mrb[0].mxu0
        %v3767 = vadd.f32 0.0, %v3766
        %v3768 = vpop.f32.mrb[0].mxu0
        %3769 = vmatprep.mubr.f32.mxu0 0.0
        %3770 = vmatmul.mubr.f32.gmra.mrb[0].mxu0 %v3549
        %v3771 = vpop.f32.mrb[0].mxu0
        %v3772 = vadd.f32 0.0, %v3771
        %v3773 = vpop.f32.mrb[0].mxu0
        %3774 = vmatprep.mubr.f32.mxu0 0.0
        %3775 = vmatmul.mubr.f32.gmra.mrb[0].mxu0 %v3552
        %v3776 = vpop.f32.mrb[0].mxu0
        %v3777 = vadd.f32 0.0, %v3776
        %v3778 = vpop.f32.mrb[0].mxu0
        %3779 = vmatprep.mubr.f32.mxu0 0.0
        %3780 = vmatmul.mubr.f32.gmra.mrb[0].mxu0 %v3555
        %v3781 = vpop.f32.mrb[0].mxu0
        %v3782 = vadd.f32 0.0, %v3781
        %v3783 = vpop.f32.mrb[0].mxu0
        %3784 = vmatprep.mubr.f32.mxu0 0.0
        %3785 = vmatmul.mubr.f32.gmra.mrb[0].mxu0 %v3558
        %v3786 = vpop.f32.mrb[0].mxu0
        %v3787 = vadd.f32 0.0, %v3786
        %v3788 = vpop.f32.mrb[0].mxu0
        %3789 = vmatprep.mubr.f32.mxu0 0.0
        %3790 = vmatmul.mubr.f32.gmra.mrb[0].mxu0 %v3561
        %v3791 = vpop.f32.mrb[0].mxu0
        %v3792 = vadd.f32 0.0, %v3791
        %v3793 = vpop.f32.mrb[0].mxu0
        %3794 = vmatprep.mubr.f32.mxu0 0.0
        %3795 = vmatmul.mubr.f32.gmra.mrb[0].mxu0 %v3564
        %v3796 = vpop.f32.mrb[0].mxu0
        %v3797 = vadd.f32 0.0, %v3796
        %v3798 = vpop.f32.mrb[0].mxu0
        %3799 = vmatprep.mubr.f32.mxu0 0.0
        %3800 = vmatmul.mubr.f32.gmra.mrb[0].mxu0 %v3567
        %v3801 = vpop.f32.mrb[0].mxu0
        %v3802 = vadd.f32 0.0, %v3801
        %v3803 = vpop.f32.mrb[0].mxu0
        %3804 = vmatprep.mubr.f32.mxu0 0.0
        %3805 = vmatmul.mubr.f32.gmra.mrb[0].mxu0 %v3570
        %v3806 = vpop.f32.mrb[0].mxu0
        %v3807 = vadd.f32 0.0, %v3806
        %v3808 = vpop.f32.mrb[0].mxu0
        %3809 = vmatprep.mubr.f32.mxu0 0.0
        %3810 = vmatmul.mubr.f32.gmra.mrb[0].mxu0 %v3573
        %v3811 = vpop.f32.mrb[0].mxu0
        %v3812 = vadd.f32 0.0, %v3811
        %v3813 = vpop.f32.mrb[0].mxu0
        %3814 = vmatprep.mubr.f32.mxu0 0.0
        %3815 = vmatmul.mubr.f32.gmra.mrb[0].mxu0 %v3576
        %v3816 = vpop.f32.mrb[0].mxu0
        %v3817 = vadd.f32 0.0, %v3816
        %v3818 = vpop.f32.mrb[0].mxu0
        %3819 = vmatprep.mubr.f32.mxu0 0.0
        %3820 = vmatmul.mubr.f32.gmra.mrb[0].mxu0 %v3579
        %v3821 = vpop.f32.mrb[0].mxu0
        %v3822 = vadd.f32 0.0, %v3821
        %v3823 = vpop.f32.mrb[0].mxu0
        %3824 = vmatprep.mubr.f32.mxu0 0.0
        %3825 = vmatmul.mubr.f32.gmra.mrb[0].mxu0 %v3582
        %v3826 = vpop.f32.mrb[0].mxu0
        %v3827 = vadd.f32 0.0, %v3826
        %v3828 = vpop.f32.mrb[0].mxu0
        %3829 = vmatprep.mubr.f32.mxu0 0.0
        %3830 = vmatmul.mubr.f32.gmra.mrb[0].mxu0 %v3585
        %v3831 = vpop.f32.mrb[0].mxu0
        %v3832 = vadd.f32 0.0, %v3831
        %v3833 = vpop.f32.mrb[0].mxu0
        %3834 = vdwg.mxu0
        %v3835 = vadd.f32 %v3405, %v3657
        %v3836 = vadd.f32 %v3406, %v3662
        %v3837 = vadd.f32 %v3407, %v3667
        %v3838 = vadd.f32 %v3408, %v3672
        %v3839 = vadd.f32 %v3409, %v3677
        %v3840 = vadd.f32 %v3410, %v3682
        %v3841 = vadd.f32 %v3411, %v3687
        %v3842 = vadd.f32 %v3412, %v3692
        %v3843 = vadd.f32 %v3413, %v3697
        %v3844 = vadd.f32 %v3414, %v3702
        %v3845 = vadd.f32 %v3415, %v3707
        %v3846 = vadd.f32 %v3416, %v3712
        %v3847 = vadd.f32 %v3417, %v3717
        %v3848 = vadd.f32 %v3418, %v3722
        %v3849 = vadd.f32 %v3419, %v3727
        %v3850 = vadd.f32 %v3420, %v3732
        %v3851 = vadd.f32 %v3421, %v3737
        %v3852 = vadd.f32 %v3422, %v3742
        %v3853 = vadd.f32 %v3423, %v3747
        %v3854 = vadd.f32 %v3424, %v3752
        %v3855 = vadd.f32 %v3425, %v3757
        %v3856 = vadd.f32 %v3426, %v3762
        %v3857 = vadd.f32 %v3427, %v3767
        %v3858 = vadd.f32 %v3428, %v3772
        %v3859 = vadd.f32 %v3429, %v3777
        %v3860 = vadd.f32 %v3430, %v3782
        %v3861 = vadd.f32 %v3431, %v3787
        %v3862 = vadd.f32 %v3432, %v3792
        %v3863 = vadd.f32 %v3433, %v3797
        %v3864 = vadd.f32 %v3434, %v3802
        %v3865 = vadd.f32 %v3435, %v3807
        %v3866 = vadd.f32 %v3436, %v3812
        %v3867 = vadd.f32 %v3437, %v3817
        %v3868 = vadd.f32 %v3438, %v3822
        %v3869 = vadd.f32 %v3439, %v3827
        %v3870 = vadd.f32 %v3440, %v3832
        %v3871 = vld [vmem:[#allocation2 + $0x25] sm:$0xff]
        %v3872 = vld [vmem:[#allocation2 + $0x2d] sm:$0xff]
        %v3873 = vld [vmem:[#allocation2 + $0x35] sm:$0xff]
        %v3874 = vld [vmem:[#allocation2 + $0x3d] sm:$0xff]
        %v3875 = vld [vmem:[#allocation2 + $0x45] sm:$0xff]
        %v3876 = vld [vmem:[#allocation2 + $0x4d] sm:$0xff]
        %v3877 = vld [vmem:[#allocation2 + $0x55] sm:$0xff]
        %v3878 = vld [vmem:[#allocation2 + $0x5d] sm:$0xff]
        %v3879 = vld [vmem:[#allocation2 + $0x65] sm:$0xff]
        %v3880 = vld [vmem:[#allocation2 + $0x6d] sm:$0xff]
        %v3881 = vld [vmem:[#allocation2 + $0x75] sm:$0xff]
        %v3882 = vld [vmem:[#allocation2 + $0x7d] sm:$0xff]
        %v3883 = vld [vmem:[#allocation2 + $0x85] sm:$0xff]
        %v3884 = vld [vmem:[#allocation2 + $0x8d] sm:$0xff]
        %v3885 = vld [vmem:[#allocation2 + $0x95] sm:$0xff]
        %v3886 = vld [vmem:[#allocation2 + $0x9d] sm:$0xff]
        %v3887 = vld [vmem:[#allocation2 + $0xa5] sm:$0xff]
        %v3888 = vld [vmem:[#allocation2 + $0xad] sm:$0xff]
        %v3889 = vld [vmem:[#allocation2 + $0xb5] sm:$0xff]
        %v3890 = vld [vmem:[#allocation2 + $0xbd] sm:$0xff]
        %v3891 = vld [vmem:[#allocation2 + $0xc5] sm:$0xff]
        %v3892 = vld [vmem:[#allocation2 + $0xcd] sm:$0xff]
        %v3893 = vld [vmem:[#allocation2 + $0xd5] sm:$0xff]
        %v3894 = vld [vmem:[#allocation2 + $0xdd] sm:$0xff]
        %v3895 = vld [vmem:[#allocation2 + $0xe5] sm:$0xff]
        %v3896 = vld [vmem:[#allocation2 + $0xed] sm:$0xff]
        %v3897 = vld [vmem:[#allocation2 + $0xf5] sm:$0xff]
        %v3898 = vld [vmem:[#allocation2 + $0xfd] sm:$0xff]
        %v3899 = vld [vmem:[#allocation2 + $0x105] sm:$0xff]
        %v3900 = vld [vmem:[#allocation2 + $0x10d] sm:$0xff]
        %v3901 = vld [vmem:[#allocation2 + $0x115] sm:$0xff]
        %v3902 = vld [vmem:[#allocation2 + $0x11d] sm:$0xff]
        %v3903 = vld [vmem:[#allocation2 + $0x125] sm:$0xff]
        %v3904 = vld [vmem:[#allocation2 + $0x12d] sm:$0xff]
        %v3905 = vld [vmem:[#allocation2 + $0x135] sm:$0xff]
        %v3906 = vld [vmem:[#allocation2 + $0x13d] sm:$0xff]
        %s3907 = scalar_lea.vmem [#allocation7], 28
        %v3908 = vld [vmem:[%s3907] sm:$0xf]
        %v3910 = vsel %vm403, %v3871, 0
        %v3913 = vsel %vm403, %v3872, 0
        %v3916 = vsel %vm403, %v3873, 0
        %v3919 = vsel %vm403, %v3874, 0
        %v3922 = vsel %vm403, %v3875, 0
        %v3925 = vsel %vm403, %v3876, 0
        %v3928 = vsel %vm403, %v3877, 0
        %v3931 = vsel %vm403, %v3878, 0
        %v3934 = vsel %vm403, %v3879, 0
        %v3937 = vsel %vm403, %v3880, 0
        %v3940 = vsel %vm403, %v3881, 0
        %v3943 = vsel %vm403, %v3882, 0
        %v3946 = vsel %vm403, %v3883, 0
        %v3949 = vsel %vm403, %v3884, 0
        %v3952 = vsel %vm403, %v3885, 0
        %v3955 = vsel %vm403, %v3886, 0
        %v3958 = vsel %vm403, %v3887, 0
        %v3961 = vsel %vm403, %v3888, 0
        %v3964 = vsel %vm403, %v3889, 0
        %v3967 = vsel %vm403, %v3890, 0
        %v3970 = vsel %vm403, %v3891, 0
        %v3973 = vsel %vm403, %v3892, 0
        %v3976 = vsel %vm403, %v3893, 0
        %v3979 = vsel %vm403, %v3894, 0
        %v3982 = vsel %vm403, %v3895, 0
        %v3985 = vsel %vm403, %v3896, 0
        %v3988 = vsel %vm403, %v3897, 0
        %v3991 = vsel %vm403, %v3898, 0
        %v3994 = vsel %vm403, %v3899, 0
        %v3997 = vsel %vm403, %v3900, 0
        %v4000 = vsel %vm403, %v3901, 0
        %v4003 = vsel %vm403, %v3902, 0
        %v4006 = vsel %vm403, %v3903, 0
        %v4009 = vsel %vm403, %v3904, 0
        %v4012 = vsel %vm403, %v3905, 0
        %v4015 = vsel %vm403, %v3906, 0
        %v4018 = vsel %vm1116, %v3908, 0
        %4020 = vmatprep.subr.mxu0 0.0
        %4021 = vmatpush1.msra.mxu0 %v4018
        %4022 = vmatprep.subr.mxu0 0.0
        %4023 = vmatpush1.msra.mxu0 0.0
        %4024 = vmatprep.subr.mxu0 0.0
        %4025 = vmatpush1.msra.mxu0 0.0
        %4026 = vmatprep.subr.mxu0 0.0
        %4027 = vmatpush1.msra.mxu0 0.0
        %4028 = vmatprep.subr.mxu0 0.0
        %4029 = vmatpush1.msra.mxu0 0.0
        %4030 = vmatprep.subr.mxu0 0.0
        %4031 = vmatpush1.msra.mxu0 0.0
        %4032 = vmatprep.subr.mxu0 0.0
        %4033 = vmatpush1.msra.mxu0 0.0
        %4034 = vmatprep.subr.mxu0 0.0
        %4035 = vmatpush1.msra.mxu0 0.0
        %4036 = vmatprep.subr.mxu0 0.0
        %4037 = vmatpush1.msra.mxu0 0.0
        %4038 = vmatprep.subr.mxu0 0.0
        %4039 = vmatpush1.msra.mxu0 0.0
        %4040 = vmatprep.subr.mxu0 0.0
        %4041 = vmatpush1.msra.mxu0 0.0
        %4042 = vmatprep.subr.mxu0 0.0
        %4043 = vmatpush1.msra.mxu0 0.0
        %4044 = vmatprep.subr.mxu0 0.0
        %4045 = vmatpush1.msra.mxu0 0.0
        %4046 = vmatprep.subr.mxu0 0.0
        %4047 = vmatpush1.msra.mxu0 0.0
        %4048 = vmatprep.subr.mxu0 0.0
        %4049 = vmatpush1.msra.mxu0 0.0
        %4050 = vmatprep.subr.mxu0 0.0
        %4051 = vmatpush1.msra.mxu0 0.0
        %4052 = vmatprep.subr.mxu0 0.0
        %4053 = vmatpush1.msra.mxu0 0.0
        %4054 = vmatprep.subr.mxu0 0.0
        %4055 = vmatpush1.msra.mxu0 0.0
        %4056 = vmatprep.subr.mxu0 0.0
        %4057 = vmatpush1.msra.mxu0 0.0
        %4058 = vmatprep.subr.mxu0 0.0
        %4059 = vmatpush1.msra.mxu0 0.0
        %4060 = vmatprep.subr.mxu0 0.0
        %4061 = vmatpush1.msra.mxu0 0.0
        %4062 = vmatprep.subr.mxu0 0.0
        %4063 = vmatpush1.msra.mxu0 0.0
        %4064 = vmatprep.subr.mxu0 0.0
        %4065 = vmatpush1.msra.mxu0 0.0
        %4066 = vmatprep.subr.mxu0 0.0
        %4067 = vmatpush1.msra.mxu0 0.0
        %4068 = vmatprep.subr.mxu0 0.0
        %4069 = vmatpush1.msra.mxu0 0.0
        %4070 = vmatprep.subr.mxu0 0.0
        %4071 = vmatpush1.msra.mxu0 0.0
        %4072 = vmatprep.subr.mxu0 0.0
        %4073 = vmatpush1.msra.mxu0 0.0
        %4074 = vmatprep.subr.mxu0 0.0
        %4075 = vmatpush1.msra.mxu0 0.0
        %4076 = vmatprep.subr.mxu0 0.0
        %4077 = vmatpush1.msra.mxu0 0.0
        %4078 = vmatprep.subr.mxu0 0.0
        %4079 = vmatpush1.msra.mxu0 0.0
        %4080 = vmatprep.subr.mxu0 0.0
        %4081 = vmatpush1.msra.mxu0 0.0
        %4082 = vmatprep.subr.mxu0 0.0
        %4083 = vmatpush1.msra.mxu0 0.0
        %4084 = vmatprep.mubr.f32.mxu0 0.0
        %4085 = vmatmul.mubr.f32.gmra.mrb[0].mxu0 %v3910
        %v4086 = vpop.f32.mrb[0].mxu0
        %v4087 = vadd.f32 0.0, %v4086
        %v4088 = vpop.f32.mrb[0].mxu0
        %4089 = vmatprep.mubr.f32.mxu0 0.0
        %4090 = vmatmul.mubr.f32.gmra.mrb[0].mxu0 %v3913
        %v4091 = vpop.f32.mrb[0].mxu0
        %v4092 = vadd.f32 0.0, %v4091
        %v4093 = vpop.f32.mrb[0].mxu0
        %4094 = vmatprep.mubr.f32.mxu0 0.0
        %4095 = vmatmul.mubr.f32.gmra.mrb[0].mxu0 %v3916
        %v4096 = vpop.f32.mrb[0].mxu0
        %v4097 = vadd.f32 0.0, %v4096
        %v4098 = vpop.f32.mrb[0].mxu0
        %4099 = vmatprep.mubr.f32.mxu0 0.0
        %4100 = vmatmul.mubr.f32.gmra.mrb[0].mxu0 %v3919
        %v4101 = vpop.f32.mrb[0].mxu0
        %v4102 = vadd.f32 0.0, %v4101
        %v4103 = vpop.f32.mrb[0].mxu0
        %4104 = vmatprep.mubr.f32.mxu0 0.0
        %4105 = vmatmul.mubr.f32.gmra.mrb[0].mxu0 %v3922
        %v4106 = vpop.f32.mrb[0].mxu0
        %v4107 = vadd.f32 0.0, %v4106
        %v4108 = vpop.f32.mrb[0].mxu0
        %4109 = vmatprep.mubr.f32.mxu0 0.0
        %4110 = vmatmul.mubr.f32.gmra.mrb[0].mxu0 %v3925
        %v4111 = vpop.f32.mrb[0].mxu0
        %v4112 = vadd.f32 0.0, %v4111
        %v4113 = vpop.f32.mrb[0].mxu0
        %4114 = vmatprep.mubr.f32.mxu0 0.0
        %4115 = vmatmul.mubr.f32.gmra.mrb[0].mxu0 %v3928
        %v4116 = vpop.f32.mrb[0].mxu0
        %v4117 = vadd.f32 0.0, %v4116
        %v4118 = vpop.f32.mrb[0].mxu0
        %4119 = vmatprep.mubr.f32.mxu0 0.0
        %4120 = vmatmul.mubr.f32.gmra.mrb[0].mxu0 %v3931
        %v4121 = vpop.f32.mrb[0].mxu0
        %v4122 = vadd.f32 0.0, %v4121
        %v4123 = vpop.f32.mrb[0].mxu0
        %4124 = vmatprep.mubr.f32.mxu0 0.0
        %4125 = vmatmul.mubr.f32.gmra.mrb[0].mxu0 %v3934
        %v4126 = vpop.f32.mrb[0].mxu0
        %v4127 = vadd.f32 0.0, %v4126
        %v4128 = vpop.f32.mrb[0].mxu0
        %4129 = vmatprep.mubr.f32.mxu0 0.0
        %4130 = vmatmul.mubr.f32.gmra.mrb[0].mxu0 %v3937
        %v4131 = vpop.f32.mrb[0].mxu0
        %v4132 = vadd.f32 0.0, %v4131
        %v4133 = vpop.f32.mrb[0].mxu0
        %4134 = vmatprep.mubr.f32.mxu0 0.0
        %4135 = vmatmul.mubr.f32.gmra.mrb[0].mxu0 %v3940
        %v4136 = vpop.f32.mrb[0].mxu0
        %v4137 = vadd.f32 0.0, %v4136
        %v4138 = vpop.f32.mrb[0].mxu0
        %4139 = vmatprep.mubr.f32.mxu0 0.0
        %4140 = vmatmul.mubr.f32.gmra.mrb[0].mxu0 %v3943
        %v4141 = vpop.f32.mrb[0].mxu0
        %v4142 = vadd.f32 0.0, %v4141
        %v4143 = vpop.f32.mrb[0].mxu0
        %4144 = vmatprep.mubr.f32.mxu0 0.0
        %4145 = vmatmul.mubr.f32.gmra.mrb[0].mxu0 %v3946
        %v4146 = vpop.f32.mrb[0].mxu0
        %v4147 = vadd.f32 0.0, %v4146
        %v4148 = vpop.f32.mrb[0].mxu0
        %4149 = vmatprep.mubr.f32.mxu0 0.0
        %4150 = vmatmul.mubr.f32.gmra.mrb[0].mxu0 %v3949
        %v4151 = vpop.f32.mrb[0].mxu0
        %v4152 = vadd.f32 0.0, %v4151
        %v4153 = vpop.f32.mrb[0].mxu0
        %4154 = vmatprep.mubr.f32.mxu0 0.0
        %4155 = vmatmul.mubr.f32.gmra.mrb[0].mxu0 %v3952
        %v4156 = vpop.f32.mrb[0].mxu0
        %v4157 = vadd.f32 0.0, %v4156
        %v4158 = vpop.f32.mrb[0].mxu0
        %4159 = vmatprep.mubr.f32.mxu0 0.0
        %4160 = vmatmul.mubr.f32.gmra.mrb[0].mxu0 %v3955
        %v4161 = vpop.f32.mrb[0].mxu0
        %v4162 = vadd.f32 0.0, %v4161
        %v4163 = vpop.f32.mrb[0].mxu0
        %4164 = vmatprep.mubr.f32.mxu0 0.0
        %4165 = vmatmul.mubr.f32.gmra.mrb[0].mxu0 %v3958
        %v4166 = vpop.f32.mrb[0].mxu0
        %v4167 = vadd.f32 0.0, %v4166
        %v4168 = vpop.f32.mrb[0].mxu0
        %4169 = vmatprep.mubr.f32.mxu0 0.0
        %4170 = vmatmul.mubr.f32.gmra.mrb[0].mxu0 %v3961
        %v4171 = vpop.f32.mrb[0].mxu0
        %v4172 = vadd.f32 0.0, %v4171
        %v4173 = vpop.f32.mrb[0].mxu0
        %4174 = vmatprep.mubr.f32.mxu0 0.0
        %4175 = vmatmul.mubr.f32.gmra.mrb[0].mxu0 %v3964
        %v4176 = vpop.f32.mrb[0].mxu0
        %v4177 = vadd.f32 0.0, %v4176
        %v4178 = vpop.f32.mrb[0].mxu0
        %4179 = vmatprep.mubr.f32.mxu0 0.0
        %4180 = vmatmul.mubr.f32.gmra.mrb[0].mxu0 %v3967
        %v4181 = vpop.f32.mrb[0].mxu0
        %v4182 = vadd.f32 0.0, %v4181
        %v4183 = vpop.f32.mrb[0].mxu0
        %4184 = vmatprep.mubr.f32.mxu0 0.0
        %4185 = vmatmul.mubr.f32.gmra.mrb[0].mxu0 %v3970
        %v4186 = vpop.f32.mrb[0].mxu0
        %v4187 = vadd.f32 0.0, %v4186
        %v4188 = vpop.f32.mrb[0].mxu0
        %4189 = vmatprep.mubr.f32.mxu0 0.0
        %4190 = vmatmul.mubr.f32.gmra.mrb[0].mxu0 %v3973
        %v4191 = vpop.f32.mrb[0].mxu0
        %v4192 = vadd.f32 0.0, %v4191
        %v4193 = vpop.f32.mrb[0].mxu0
        %4194 = vmatprep.mubr.f32.mxu0 0.0
        %4195 = vmatmul.mubr.f32.gmra.mrb[0].mxu0 %v3976
        %v4196 = vpop.f32.mrb[0].mxu0
        %v4197 = vadd.f32 0.0, %v4196
        %v4198 = vpop.f32.mrb[0].mxu0
        %4199 = vmatprep.mubr.f32.mxu0 0.0
        %4200 = vmatmul.mubr.f32.gmra.mrb[0].mxu0 %v3979
        %v4201 = vpop.f32.mrb[0].mxu0
        %v4202 = vadd.f32 0.0, %v4201
        %v4203 = vpop.f32.mrb[0].mxu0
        %4204 = vmatprep.mubr.f32.mxu0 0.0
        %4205 = vmatmul.mubr.f32.gmra.mrb[0].mxu0 %v3982
        %v4206 = vpop.f32.mrb[0].mxu0
        %v4207 = vadd.f32 0.0, %v4206
        %v4208 = vpop.f32.mrb[0].mxu0
        %4209 = vmatprep.mubr.f32.mxu0 0.0
        %4210 = vmatmul.mubr.f32.gmra.mrb[0].mxu0 %v3985
        %v4211 = vpop.f32.mrb[0].mxu0
        %v4212 = vadd.f32 0.0, %v4211
        %v4213 = vpop.f32.mrb[0].mxu0
        %4214 = vmatprep.mubr.f32.mxu0 0.0
        %4215 = vmatmul.mubr.f32.gmra.mrb[0].mxu0 %v3988
        %v4216 = vpop.f32.mrb[0].mxu0
        %v4217 = vadd.f32 0.0, %v4216
        %v4218 = vpop.f32.mrb[0].mxu0
        %4219 = vmatprep.mubr.f32.mxu0 0.0
        %4220 = vmatmul.mubr.f32.gmra.mrb[0].mxu0 %v3991
        %v4221 = vpop.f32.mrb[0].mxu0
        %v4222 = vadd.f32 0.0, %v4221
        %v4223 = vpop.f32.mrb[0].mxu0
        %4224 = vmatprep.mubr.f32.mxu0 0.0
        %4225 = vmatmul.mubr.f32.gmra.mrb[0].mxu0 %v3994
        %v4226 = vpop.f32.mrb[0].mxu0
        %v4227 = vadd.f32 0.0, %v4226
        %v4228 = vpop.f32.mrb[0].mxu0
        %4229 = vmatprep.mubr.f32.mxu0 0.0
        %4230 = vmatmul.mubr.f32.gmra.mrb[0].mxu0 %v3997
        %v4231 = vpop.f32.mrb[0].mxu0
        %v4232 = vadd.f32 0.0, %v4231
        %v4233 = vpop.f32.mrb[0].mxu0
        %4234 = vmatprep.mubr.f32.mxu0 0.0
        %4235 = vmatmul.mubr.f32.gmra.mrb[0].mxu0 %v4000
        %v4236 = vpop.f32.mrb[0].mxu0
        %v4237 = vadd.f32 0.0, %v4236
        %v4238 = vpop.f32.mrb[0].mxu0
        %4239 = vmatprep.mubr.f32.mxu0 0.0
        %4240 = vmatmul.mubr.f32.gmra.mrb[0].mxu0 %v4003
        %v4241 = vpop.f32.mrb[0].mxu0
        %v4242 = vadd.f32 0.0, %v4241
        %v4243 = vpop.f32.mrb[0].mxu0
        %4244 = vmatprep.mubr.f32.mxu0 0.0
        %4245 = vmatmul.mubr.f32.gmra.mrb[0].mxu0 %v4006
        %v4246 = vpop.f32.mrb[0].mxu0
        %v4247 = vadd.f32 0.0, %v4246
        %v4248 = vpop.f32.mrb[0].mxu0
        %4249 = vmatprep.mubr.f32.mxu0 0.0
        %4250 = vmatmul.mubr.f32.gmra.mrb[0].mxu0 %v4009
        %v4251 = vpop.f32.mrb[0].mxu0
        %v4252 = vadd.f32 0.0, %v4251
        %v4253 = vpop.f32.mrb[0].mxu0
        %4254 = vmatprep.mubr.f32.mxu0 0.0
        %4255 = vmatmul.mubr.f32.gmra.mrb[0].mxu0 %v4012
        %v4256 = vpop.f32.mrb[0].mxu0
        %v4257 = vadd.f32 0.0, %v4256
        %v4258 = vpop.f32.mrb[0].mxu0
        %4259 = vmatprep.mubr.f32.mxu0 0.0
        %4260 = vmatmul.mubr.f32.gmra.mrb[0].mxu0 %v4015
        %v4261 = vpop.f32.mrb[0].mxu0
        %v4262 = vadd.f32 0.0, %v4261
        %v4263 = vpop.f32.mrb[0].mxu0
        %4264 = vdwg.mxu0
        %v4265 = vadd.f32 %v3835, %v4087
        %v4266 = vadd.f32 %v3836, %v4092
        %v4267 = vadd.f32 %v3837, %v4097
        %v4268 = vadd.f32 %v3838, %v4102
        %v4269 = vadd.f32 %v3839, %v4107
        %v4270 = vadd.f32 %v3840, %v4112
        %v4271 = vadd.f32 %v3841, %v4117
        %v4272 = vadd.f32 %v3842, %v4122
        %v4273 = vadd.f32 %v3843, %v4127
        %v4274 = vadd.f32 %v3844, %v4132
        %v4275 = vadd.f32 %v3845, %v4137
        %v4276 = vadd.f32 %v3846, %v4142
        %v4277 = vadd.f32 %v3847, %v4147
        %v4278 = vadd.f32 %v3848, %v4152
        %v4279 = vadd.f32 %v3849, %v4157
        %v4280 = vadd.f32 %v3850, %v4162
        %v4281 = vadd.f32 %v3851, %v4167
        %v4282 = vadd.f32 %v3852, %v4172
        %v4283 = vadd.f32 %v3853, %v4177
        %v4284 = vadd.f32 %v3854, %v4182
        %v4285 = vadd.f32 %v3855, %v4187
        %v4286 = vadd.f32 %v3856, %v4192
        %v4287 = vadd.f32 %v3857, %v4197
        %v4288 = vadd.f32 %v3858, %v4202
        %v4289 = vadd.f32 %v3859, %v4207
        %v4290 = vadd.f32 %v3860, %v4212
        %v4291 = vadd.f32 %v3861, %v4217
        %v4292 = vadd.f32 %v3862, %v4222
        %v4293 = vadd.f32 %v3863, %v4227
        %v4294 = vadd.f32 %v3864, %v4232
        %v4295 = vadd.f32 %v3865, %v4237
        %v4296 = vadd.f32 %v3866, %v4242
        %v4297 = vadd.f32 %v3867, %v4247
        %v4298 = vadd.f32 %v3868, %v4252
        %v4299 = vadd.f32 %v3869, %v4257
        %v4300 = vadd.f32 %v3870, %v4262
        %v4301 = vld [vmem:[#allocation2 + $0x26] sm:$0xff]
        %v4302 = vld [vmem:[#allocation2 + $0x2e] sm:$0xff]
        %v4303 = vld [vmem:[#allocation2 + $0x36] sm:$0xff]
        %v4304 = vld [vmem:[#allocation2 + $0x3e] sm:$0xff]
        %v4305 = vld [vmem:[#allocation2 + $0x46] sm:$0xff]
        %v4306 = vld [vmem:[#allocation2 + $0x4e] sm:$0xff]
        %v4307 = vld [vmem:[#allocation2 + $0x56] sm:$0xff]
        %v4308 = vld [vmem:[#allocation2 + $0x5e] sm:$0xff]
        %v4309 = vld [vmem:[#allocation2 + $0x66] sm:$0xff]
        %v4310 = vld [vmem:[#allocation2 + $0x6e] sm:$0xff]
        %v4311 = vld [vmem:[#allocation2 + $0x76] sm:$0xff]
        %v4312 = vld [vmem:[#allocation2 + $0x7e] sm:$0xff]
        %v4313 = vld [vmem:[#allocation2 + $0x86] sm:$0xff]
        %v4314 = vld [vmem:[#allocation2 + $0x8e] sm:$0xff]
        %v4315 = vld [vmem:[#allocation2 + $0x96] sm:$0xff]
        %v4316 = vld [vmem:[#allocation2 + $0x9e] sm:$0xff]
        %v4317 = vld [vmem:[#allocation2 + $0xa6] sm:$0xff]
        %v4318 = vld [vmem:[#allocation2 + $0xae] sm:$0xff]
        %v4319 = vld [vmem:[#allocation2 + $0xb6] sm:$0xff]
        %v4320 = vld [vmem:[#allocation2 + $0xbe] sm:$0xff]
        %v4321 = vld [vmem:[#allocation2 + $0xc6] sm:$0xff]
        %v4322 = vld [vmem:[#allocation2 + $0xce] sm:$0xff]
        %v4323 = vld [vmem:[#allocation2 + $0xd6] sm:$0xff]
        %v4324 = vld [vmem:[#allocation2 + $0xde] sm:$0xff]
        %v4325 = vld [vmem:[#allocation2 + $0xe6] sm:$0xff]
        %v4326 = vld [vmem:[#allocation2 + $0xee] sm:$0xff]
        %v4327 = vld [vmem:[#allocation2 + $0xf6] sm:$0xff]
        %v4328 = vld [vmem:[#allocation2 + $0xfe] sm:$0xff]
        %v4329 = vld [vmem:[#allocation2 + $0x106] sm:$0xff]
        %v4330 = vld [vmem:[#allocation2 + $0x10e] sm:$0xff]
        %v4331 = vld [vmem:[#allocation2 + $0x116] sm:$0xff]
        %v4332 = vld [vmem:[#allocation2 + $0x11e] sm:$0xff]
        %v4333 = vld [vmem:[#allocation2 + $0x126] sm:$0xff]
        %v4334 = vld [vmem:[#allocation2 + $0x12e] sm:$0xff]
        %v4335 = vld [vmem:[#allocation2 + $0x136] sm:$0xff]
        %v4336 = vld [vmem:[#allocation2 + $0x13e] sm:$0xff]
        %s4337 = scalar_lea.vmem [#allocation7], 32
        %v4338 = vld [vmem:[%s4337] sm:$0xf]
        %v4340 = vsel %vm403, %v4301, 0
        %v4343 = vsel %vm403, %v4302, 0
        %v4346 = vsel %vm403, %v4303, 0
        %v4349 = vsel %vm403, %v4304, 0
        %v4352 = vsel %vm403, %v4305, 0
        %v4355 = vsel %vm403, %v4306, 0
        %v4358 = vsel %vm403, %v4307, 0
        %v4361 = vsel %vm403, %v4308, 0
        %v4364 = vsel %vm403, %v4309, 0
        %v4367 = vsel %vm403, %v4310, 0
        %v4370 = vsel %vm403, %v4311, 0
        %v4373 = vsel %vm403, %v4312, 0
        %v4376 = vsel %vm403, %v4313, 0
        %v4379 = vsel %vm403, %v4314, 0
        %v4382 = vsel %vm403, %v4315, 0
        %v4385 = vsel %vm403, %v4316, 0
        %v4388 = vsel %vm403, %v4317, 0
        %v4391 = vsel %vm403, %v4318, 0
        %v4394 = vsel %vm403, %v4319, 0
        %v4397 = vsel %vm403, %v4320, 0
        %v4400 = vsel %vm403, %v4321, 0
        %v4403 = vsel %vm403, %v4322, 0
        %v4406 = vsel %vm403, %v4323, 0
        %v4409 = vsel %vm403, %v4324, 0
        %v4412 = vsel %vm403, %v4325, 0
        %v4415 = vsel %vm403, %v4326, 0
        %v4418 = vsel %vm403, %v4327, 0
        %v4421 = vsel %vm403, %v4328, 0
        %v4424 = vsel %vm403, %v4329, 0
        %v4427 = vsel %vm403, %v4330, 0
        %v4430 = vsel %vm403, %v4331, 0
        %v4433 = vsel %vm403, %v4332, 0
        %v4436 = vsel %vm403, %v4333, 0
        %v4439 = vsel %vm403, %v4334, 0
        %v4442 = vsel %vm403, %v4335, 0
        %v4445 = vsel %vm403, %v4336, 0
        %v4448 = vsel %vm1116, %v4338, 0
        %4450 = vmatprep.subr.mxu0 0.0
        %4451 = vmatpush1.msra.mxu0 %v4448
        %4452 = vmatprep.subr.mxu0 0.0
        %4453 = vmatpush1.msra.mxu0 0.0
        %4454 = vmatprep.subr.mxu0 0.0
        %4455 = vmatpush1.msra.mxu0 0.0
        %4456 = vmatprep.subr.mxu0 0.0
        %4457 = vmatpush1.msra.mxu0 0.0
        %4458 = vmatprep.subr.mxu0 0.0
        %4459 = vmatpush1.msra.mxu0 0.0
        %4460 = vmatprep.subr.mxu0 0.0
        %4461 = vmatpush1.msra.mxu0 0.0
        %4462 = vmatprep.subr.mxu0 0.0
        %4463 = vmatpush1.msra.mxu0 0.0
        %4464 = vmatprep.subr.mxu0 0.0
        %4465 = vmatpush1.msra.mxu0 0.0
        %4466 = vmatprep.subr.mxu0 0.0
        %4467 = vmatpush1.msra.mxu0 0.0
        %4468 = vmatprep.subr.mxu0 0.0
        %4469 = vmatpush1.msra.mxu0 0.0
        %4470 = vmatprep.subr.mxu0 0.0
        %4471 = vmatpush1.msra.mxu0 0.0
        %4472 = vmatprep.subr.mxu0 0.0
        %4473 = vmatpush1.msra.mxu0 0.0
        %4474 = vmatprep.subr.mxu0 0.0
        %4475 = vmatpush1.msra.mxu0 0.0
        %4476 = vmatprep.subr.mxu0 0.0
        %4477 = vmatpush1.msra.mxu0 0.0
        %4478 = vmatprep.subr.mxu0 0.0
        %4479 = vmatpush1.msra.mxu0 0.0
        %4480 = vmatprep.subr.mxu0 0.0
        %4481 = vmatpush1.msra.mxu0 0.0
        %4482 = vmatprep.subr.mxu0 0.0
        %4483 = vmatpush1.msra.mxu0 0.0
        %4484 = vmatprep.subr.mxu0 0.0
        %4485 = vmatpush1.msra.mxu0 0.0
        %4486 = vmatprep.subr.mxu0 0.0
        %4487 = vmatpush1.msra.mxu0 0.0
        %4488 = vmatprep.subr.mxu0 0.0
        %4489 = vmatpush1.msra.mxu0 0.0
        %4490 = vmatprep.subr.mxu0 0.0
        %4491 = vmatpush1.msra.mxu0 0.0
        %4492 = vmatprep.subr.mxu0 0.0
        %4493 = vmatpush1.msra.mxu0 0.0
        %4494 = vmatprep.subr.mxu0 0.0
        %4495 = vmatpush1.msra.mxu0 0.0
        %4496 = vmatprep.subr.mxu0 0.0
        %4497 = vmatpush1.msra.mxu0 0.0
        %4498 = vmatprep.subr.mxu0 0.0
        %4499 = vmatpush1.msra.mxu0 0.0
        %4500 = vmatprep.subr.mxu0 0.0
        %4501 = vmatpush1.msra.mxu0 0.0
        %4502 = vmatprep.subr.mxu0 0.0
        %4503 = vmatpush1.msra.mxu0 0.0
        %4504 = vmatprep.subr.mxu0 0.0
        %4505 = vmatpush1.msra.mxu0 0.0
        %4506 = vmatprep.subr.mxu0 0.0
        %4507 = vmatpush1.msra.mxu0 0.0
        %4508 = vmatprep.subr.mxu0 0.0
        %4509 = vmatpush1.msra.mxu0 0.0
        %4510 = vmatprep.subr.mxu0 0.0
        %4511 = vmatpush1.msra.mxu0 0.0
        %4512 = vmatprep.subr.mxu0 0.0
        %4513 = vmatpush1.msra.mxu0 0.0
        %4514 = vmatprep.mubr.f32.mxu0 0.0
        %4515 = vmatmul.mubr.f32.gmra.mrb[0].mxu0 %v4340
        %v4516 = vpop.f32.mrb[0].mxu0
        %v4517 = vadd.f32 0.0, %v4516
        %v4518 = vpop.f32.mrb[0].mxu0
        %4519 = vmatprep.mubr.f32.mxu0 0.0
        %4520 = vmatmul.mubr.f32.gmra.mrb[0].mxu0 %v4343
        %v4521 = vpop.f32.mrb[0].mxu0
        %v4522 = vadd.f32 0.0, %v4521
        %v4523 = vpop.f32.mrb[0].mxu0
        %4524 = vmatprep.mubr.f32.mxu0 0.0
        %4525 = vmatmul.mubr.f32.gmra.mrb[0].mxu0 %v4346
        %v4526 = vpop.f32.mrb[0].mxu0
        %v4527 = vadd.f32 0.0, %v4526
        %v4528 = vpop.f32.mrb[0].mxu0
        %4529 = vmatprep.mubr.f32.mxu0 0.0
        %4530 = vmatmul.mubr.f32.gmra.mrb[0].mxu0 %v4349
        %v4531 = vpop.f32.mrb[0].mxu0
        %v4532 = vadd.f32 0.0, %v4531
        %v4533 = vpop.f32.mrb[0].mxu0
        %4534 = vmatprep.mubr.f32.mxu0 0.0
        %4535 = vmatmul.mubr.f32.gmra.mrb[0].mxu0 %v4352
        %v4536 = vpop.f32.mrb[0].mxu0
        %v4537 = vadd.f32 0.0, %v4536
        %v4538 = vpop.f32.mrb[0].mxu0
        %4539 = vmatprep.mubr.f32.mxu0 0.0
        %4540 = vmatmul.mubr.f32.gmra.mrb[0].mxu0 %v4355
        %v4541 = vpop.f32.mrb[0].mxu0
        %v4542 = vadd.f32 0.0, %v4541
        %v4543 = vpop.f32.mrb[0].mxu0
        %4544 = vmatprep.mubr.f32.mxu0 0.0
        %4545 = vmatmul.mubr.f32.gmra.mrb[0].mxu0 %v4358
        %v4546 = vpop.f32.mrb[0].mxu0
        %v4547 = vadd.f32 0.0, %v4546
        %v4548 = vpop.f32.mrb[0].mxu0
        %4549 = vmatprep.mubr.f32.mxu0 0.0
        %4550 = vmatmul.mubr.f32.gmra.mrb[0].mxu0 %v4361
        %v4551 = vpop.f32.mrb[0].mxu0
        %v4552 = vadd.f32 0.0, %v4551
        %v4553 = vpop.f32.mrb[0].mxu0
        %4554 = vmatprep.mubr.f32.mxu0 0.0
        %4555 = vmatmul.mubr.f32.gmra.mrb[0].mxu0 %v4364
        %v4556 = vpop.f32.mrb[0].mxu0
        %v4557 = vadd.f32 0.0, %v4556
        %v4558 = vpop.f32.mrb[0].mxu0
        %4559 = vmatprep.mubr.f32.mxu0 0.0
        %4560 = vmatmul.mubr.f32.gmra.mrb[0].mxu0 %v4367
        %v4561 = vpop.f32.mrb[0].mxu0
        %v4562 = vadd.f32 0.0, %v4561
        %v4563 = vpop.f32.mrb[0].mxu0
        %4564 = vmatprep.mubr.f32.mxu0 0.0
        %4565 = vmatmul.mubr.f32.gmra.mrb[0].mxu0 %v4370
        %v4566 = vpop.f32.mrb[0].mxu0
        %v4567 = vadd.f32 0.0, %v4566
        %v4568 = vpop.f32.mrb[0].mxu0
        %4569 = vmatprep.mubr.f32.mxu0 0.0
        %4570 = vmatmul.mubr.f32.gmra.mrb[0].mxu0 %v4373
        %v4571 = vpop.f32.mrb[0].mxu0
        %v4572 = vadd.f32 0.0, %v4571
        %v4573 = vpop.f32.mrb[0].mxu0
        %4574 = vmatprep.mubr.f32.mxu0 0.0
        %4575 = vmatmul.mubr.f32.gmra.mrb[0].mxu0 %v4376
        %v4576 = vpop.f32.mrb[0].mxu0
        %v4577 = vadd.f32 0.0, %v4576
        %v4578 = vpop.f32.mrb[0].mxu0
        %4579 = vmatprep.mubr.f32.mxu0 0.0
        %4580 = vmatmul.mubr.f32.gmra.mrb[0].mxu0 %v4379
        %v4581 = vpop.f32.mrb[0].mxu0
        %v4582 = vadd.f32 0.0, %v4581
        %v4583 = vpop.f32.mrb[0].mxu0
        %4584 = vmatprep.mubr.f32.mxu0 0.0
        %4585 = vmatmul.mubr.f32.gmra.mrb[0].mxu0 %v4382
        %v4586 = vpop.f32.mrb[0].mxu0
        %v4587 = vadd.f32 0.0, %v4586
        %v4588 = vpop.f32.mrb[0].mxu0
        %4589 = vmatprep.mubr.f32.mxu0 0.0
        %4590 = vmatmul.mubr.f32.gmra.mrb[0].mxu0 %v4385
        %v4591 = vpop.f32.mrb[0].mxu0
        %v4592 = vadd.f32 0.0, %v4591
        %v4593 = vpop.f32.mrb[0].mxu0
        %4594 = vmatprep.mubr.f32.mxu0 0.0
        %4595 = vmatmul.mubr.f32.gmra.mrb[0].mxu0 %v4388
        %v4596 = vpop.f32.mrb[0].mxu0
        %v4597 = vadd.f32 0.0, %v4596
        %v4598 = vpop.f32.mrb[0].mxu0
        %4599 = vmatprep.mubr.f32.mxu0 0.0
        %4600 = vmatmul.mubr.f32.gmra.mrb[0].mxu0 %v4391
        %v4601 = vpop.f32.mrb[0].mxu0
        %v4602 = vadd.f32 0.0, %v4601
        %v4603 = vpop.f32.mrb[0].mxu0
        %4604 = vmatprep.mubr.f32.mxu0 0.0
        %4605 = vmatmul.mubr.f32.gmra.mrb[0].mxu0 %v4394
        %v4606 = vpop.f32.mrb[0].mxu0
        %v4607 = vadd.f32 0.0, %v4606
        %v4608 = vpop.f32.mrb[0].mxu0
        %4609 = vmatprep.mubr.f32.mxu0 0.0
        %4610 = vmatmul.mubr.f32.gmra.mrb[0].mxu0 %v4397
        %v4611 = vpop.f32.mrb[0].mxu0
        %v4612 = vadd.f32 0.0, %v4611
        %v4613 = vpop.f32.mrb[0].mxu0
        %4614 = vmatprep.mubr.f32.mxu0 0.0
        %4615 = vmatmul.mubr.f32.gmra.mrb[0].mxu0 %v4400
        %v4616 = vpop.f32.mrb[0].mxu0
        %v4617 = vadd.f32 0.0, %v4616
        %v4618 = vpop.f32.mrb[0].mxu0
        %4619 = vmatprep.mubr.f32.mxu0 0.0
        %4620 = vmatmul.mubr.f32.gmra.mrb[0].mxu0 %v4403
        %v4621 = vpop.f32.mrb[0].mxu0
        %v4622 = vadd.f32 0.0, %v4621
        %v4623 = vpop.f32.mrb[0].mxu0
        %4624 = vmatprep.mubr.f32.mxu0 0.0
        %4625 = vmatmul.mubr.f32.gmra.mrb[0].mxu0 %v4406
        %v4626 = vpop.f32.mrb[0].mxu0
        %v4627 = vadd.f32 0.0, %v4626
        %v4628 = vpop.f32.mrb[0].mxu0
        %4629 = vmatprep.mubr.f32.mxu0 0.0
        %4630 = vmatmul.mubr.f32.gmra.mrb[0].mxu0 %v4409
        %v4631 = vpop.f32.mrb[0].mxu0
        %v4632 = vadd.f32 0.0, %v4631
        %v4633 = vpop.f32.mrb[0].mxu0
        %4634 = vmatprep.mubr.f32.mxu0 0.0
        %4635 = vmatmul.mubr.f32.gmra.mrb[0].mxu0 %v4412
        %v4636 = vpop.f32.mrb[0].mxu0
        %v4637 = vadd.f32 0.0, %v4636
        %v4638 = vpop.f32.mrb[0].mxu0
        %4639 = vmatprep.mubr.f32.mxu0 0.0
        %4640 = vmatmul.mubr.f32.gmra.mrb[0].mxu0 %v4415
        %v4641 = vpop.f32.mrb[0].mxu0
        %v4642 = vadd.f32 0.0, %v4641
        %v4643 = vpop.f32.mrb[0].mxu0
        %4644 = vmatprep.mubr.f32.mxu0 0.0
        %4645 = vmatmul.mubr.f32.gmra.mrb[0].mxu0 %v4418
        %v4646 = vpop.f32.mrb[0].mxu0
        %v4647 = vadd.f32 0.0, %v4646
        %v4648 = vpop.f32.mrb[0].mxu0
        %4649 = vmatprep.mubr.f32.mxu0 0.0
        %4650 = vmatmul.mubr.f32.gmra.mrb[0].mxu0 %v4421
        %v4651 = vpop.f32.mrb[0].mxu0
        %v4652 = vadd.f32 0.0, %v4651
        %v4653 = vpop.f32.mrb[0].mxu0
        %4654 = vmatprep.mubr.f32.mxu0 0.0
        %4655 = vmatmul.mubr.f32.gmra.mrb[0].mxu0 %v4424
        %v4656 = vpop.f32.mrb[0].mxu0
        %v4657 = vadd.f32 0.0, %v4656
        %v4658 = vpop.f32.mrb[0].mxu0
        %4659 = vmatprep.mubr.f32.mxu0 0.0
        %4660 = vmatmul.mubr.f32.gmra.mrb[0].mxu0 %v4427
        %v4661 = vpop.f32.mrb[0].mxu0
        %v4662 = vadd.f32 0.0, %v4661
        %v4663 = vpop.f32.mrb[0].mxu0
        %4664 = vmatprep.mubr.f32.mxu0 0.0
        %4665 = vmatmul.mubr.f32.gmra.mrb[0].mxu0 %v4430
        %v4666 = vpop.f32.mrb[0].mxu0
        %v4667 = vadd.f32 0.0, %v4666
        %v4668 = vpop.f32.mrb[0].mxu0
        %4669 = vmatprep.mubr.f32.mxu0 0.0
        %4670 = vmatmul.mubr.f32.gmra.mrb[0].mxu0 %v4433
        %v4671 = vpop.f32.mrb[0].mxu0
        %v4672 = vadd.f32 0.0, %v4671
        %v4673 = vpop.f32.mrb[0].mxu0
        %4674 = vmatprep.mubr.f32.mxu0 0.0
        %4675 = vmatmul.mubr.f32.gmra.mrb[0].mxu0 %v4436
        %v4676 = vpop.f32.mrb[0].mxu0
        %v4677 = vadd.f32 0.0, %v4676
        %v4678 = vpop.f32.mrb[0].mxu0
        %4679 = vmatprep.mubr.f32.mxu0 0.0
        %4680 = vmatmul.mubr.f32.gmra.mrb[0].mxu0 %v4439
        %v4681 = vpop.f32.mrb[0].mxu0
        %v4682 = vadd.f32 0.0, %v4681
        %v4683 = vpop.f32.mrb[0].mxu0
        %4684 = vmatprep.mubr.f32.mxu0 0.0
        %4685 = vmatmul.mubr.f32.gmra.mrb[0].mxu0 %v4442
        %v4686 = vpop.f32.mrb[0].mxu0
        %v4687 = vadd.f32 0.0, %v4686
        %v4688 = vpop.f32.mrb[0].mxu0
        %4689 = vmatprep.mubr.f32.mxu0 0.0
        %4690 = vmatmul.mubr.f32.gmra.mrb[0].mxu0 %v4445
        %v4691 = vpop.f32.mrb[0].mxu0
        %v4692 = vadd.f32 0.0, %v4691
        %v4693 = vpop.f32.mrb[0].mxu0
        %4694 = vdwg.mxu0
        %v4695 = vadd.f32 %v4265, %v4517
        %v4696 = vadd.f32 %v4266, %v4522
        %v4697 = vadd.f32 %v4267, %v4527
        %v4698 = vadd.f32 %v4268, %v4532
        %v4699 = vadd.f32 %v4269, %v4537
        %v4700 = vadd.f32 %v4270, %v4542
        %v4701 = vadd.f32 %v4271, %v4547
        %v4702 = vadd.f32 %v4272, %v4552
        %v4703 = vadd.f32 %v4273, %v4557
        %v4704 = vadd.f32 %v4274, %v4562
        %v4705 = vadd.f32 %v4275, %v4567
        %v4706 = vadd.f32 %v4276, %v4572
        %v4707 = vadd.f32 %v4277, %v4577
        %v4708 = vadd.f32 %v4278, %v4582
        %v4709 = vadd.f32 %v4279, %v4587
        %v4710 = vadd.f32 %v4280, %v4592
        %v4711 = vadd.f32 %v4281, %v4597
        %v4712 = vadd.f32 %v4282, %v4602
        %v4713 = vadd.f32 %v4283, %v4607
        %v4714 = vadd.f32 %v4284, %v4612
        %v4715 = vadd.f32 %v4285, %v4617
        %v4716 = vadd.f32 %v4286, %v4622
        %v4717 = vadd.f32 %v4287, %v4627
        %v4718 = vadd.f32 %v4288, %v4632
        %v4719 = vadd.f32 %v4289, %v4637
        %v4720 = vadd.f32 %v4290, %v4642
        %v4721 = vadd.f32 %v4291, %v4647
        %v4722 = vadd.f32 %v4292, %v4652
        %v4723 = vadd.f32 %v4293, %v4657
        %v4724 = vadd.f32 %v4294, %v4662
        %v4725 = vadd.f32 %v4295, %v4667
        %v4726 = vadd.f32 %v4296, %v4672
        %v4727 = vadd.f32 %v4297, %v4677
        %v4728 = vadd.f32 %v4298, %v4682
        %v4729 = vadd.f32 %v4299, %v4687
        %v4730 = vadd.f32 %v4300, %v4692
        %v4731 = vld [vmem:[#allocation9] sm:$0x1]
        %v4733 = vlaneseq
        %v4734 = vshrl.u32 %v4733, 7
        %v4735 = vsub.s32 0, %v4734
        %v4736 = vrot.slane %v4731, %v4735
        %v4738 = vadd.f32 %v4695, %v4736
        %v4739 = vadd.f32 %v4696, %v4736
        %v4740 = vadd.f32 %v4697, %v4736
        %v4741 = vadd.f32 %v4698, %v4736
        %v4742 = vadd.f32 %v4699, %v4736
        %v4743 = vadd.f32 %v4700, %v4736
        %v4744 = vadd.f32 %v4701, %v4736
        %v4745 = vadd.f32 %v4702, %v4736
        %v4746 = vadd.f32 %v4703, %v4736
        %v4747 = vadd.f32 %v4704, %v4736
        %v4748 = vadd.f32 %v4705, %v4736
        %v4749 = vadd.f32 %v4706, %v4736
        %v4750 = vadd.f32 %v4707, %v4736
        %v4751 = vadd.f32 %v4708, %v4736
        %v4752 = vadd.f32 %v4709, %v4736
        %v4753 = vadd.f32 %v4710, %v4736
        %v4754 = vadd.f32 %v4711, %v4736
        %v4755 = vadd.f32 %v4712, %v4736
        %v4756 = vadd.f32 %v4713, %v4736
        %v4757 = vadd.f32 %v4714, %v4736
        %v4758 = vadd.f32 %v4715, %v4736
        %v4759 = vadd.f32 %v4716, %v4736
        %v4760 = vadd.f32 %v4717, %v4736
        %v4761 = vadd.f32 %v4718, %v4736
        %v4762 = vadd.f32 %v4719, %v4736
        %v4763 = vadd.f32 %v4720, %v4736
        %v4764 = vadd.f32 %v4721, %v4736
        %v4765 = vadd.f32 %v4722, %v4736
        %v4766 = vadd.f32 %v4723, %v4736
        %v4767 = vadd.f32 %v4724, %v4736
        %v4768 = vadd.f32 %v4725, %v4736
        %v4769 = vadd.f32 %v4726, %v4736
        %v4770 = vadd.f32 %v4727, %v4736
        %v4771 = vadd.f32 %v4728, %v4736
        %v4772 = vadd.f32 %v4729, %v4736
        %v4773 = vadd.f32 %v4730, %v4736
        %4774 = vst [vmem:[%s395] sm:$0xff] %v4738
        %4775 = vst [vmem:[%s395 + $0x8] sm:$0xff] %v4739
        %4776 = vst [vmem:[%s395 + $0x10] sm:$0xff] %v4740
        %4777 = vst [vmem:[%s395 + $0x18] sm:$0xff] %v4741
        %4778 = vst [vmem:[%s395 + $0x20] sm:$0xff] %v4742
        %4779 = vst [vmem:[%s395 + $0x28] sm:$0xff] %v4743
        %4780 = vst [vmem:[%s395 + $0x30] sm:$0xff] %v4744
        %4781 = vst [vmem:[%s395 + $0x38] sm:$0xff] %v4745
        %4782 = vst [vmem:[%s395 + $0x40] sm:$0xff] %v4746
        %4783 = vst [vmem:[%s395 + $0x48] sm:$0xff] %v4747
        %4784 = vst [vmem:[%s395 + $0x50] sm:$0xff] %v4748
        %4785 = vst [vmem:[%s395 + $0x58] sm:$0xff] %v4749
        %4786 = vst [vmem:[%s395 + $0x60] sm:$0xff] %v4750
        %4787 = vst [vmem:[%s395 + $0x68] sm:$0xff] %v4751
        %4788 = vst [vmem:[%s395 + $0x70] sm:$0xff] %v4752
        %4789 = vst [vmem:[%s395 + $0x78] sm:$0xff] %v4753
        %4790 = vst [vmem:[%s395 + $0x80] sm:$0xff] %v4754
        %4791 = vst [vmem:[%s395 + $0x88] sm:$0xff] %v4755
        %4792 = vst [vmem:[%s395 + $0x90] sm:$0xff] %v4756
        %4793 = vst [vmem:[%s395 + $0x98] sm:$0xff] %v4757
        %4794 = vst [vmem:[%s395 + $0xa0] sm:$0xff] %v4758
        %4795 = vst [vmem:[%s395 + $0xa8] sm:$0xff] %v4759
        %4796 = vst [vmem:[%s395 + $0xb0] sm:$0xff] %v4760
        %4797 = vst [vmem:[%s395 + $0xb8] sm:$0xff] %v4761
        %4798 = vst [vmem:[%s395 + $0xc0] sm:$0xff] %v4762
        %4799 = vst [vmem:[%s395 + $0xc8] sm:$0xff] %v4763
        %4800 = vst [vmem:[%s395 + $0xd0] sm:$0xff] %v4764
        %4801 = vst [vmem:[%s395 + $0xd8] sm:$0xff] %v4765
        %4802 = vst [vmem:[%s395 + $0xe0] sm:$0xff] %v4766
        %4803 = vst [vmem:[%s395 + $0xe8] sm:$0xff] %v4767
        %4804 = vst [vmem:[%s395 + $0xf0] sm:$0xff] %v4768
        %4805 = vst [vmem:[%s395 + $0xf8] sm:$0xff] %v4769
        %4806 = vst [vmem:[%s395 + $0x100] sm:$0xff] %v4770
        %4807 = vst [vmem:[%s395 + $0x108] sm:$0xff] %v4771
        %4808 = vst [vmem:[%s395 + $0x110] sm:$0xff] %v4772
        %4809 = vst [vmem:[%s395 + $0x118] sm:$0xff] %v4773
        %v4810 = vld [vmem:[#allocation10] sm:$0xff]
        %v4811 = vld [vmem:[#allocation10 + $0x8] sm:$0xff]
        %v4812 = vld [vmem:[#allocation10 + $0x10] sm:$0xff]
        %v4813 = vld [vmem:[#allocation10 + $0x18] sm:$0xff]
        %v4814 = vld [vmem:[#allocation10 + $0x20] sm:$0xff]
        %v4815 = vld [vmem:[#allocation10 + $0x28] sm:$0xff]
        %v4816 = vld [vmem:[#allocation10 + $0x30] sm:$0xff]
        %v4817 = vld [vmem:[#allocation10 + $0x38] sm:$0xff]
        %v4818 = vld [vmem:[#allocation10 + $0x40] sm:$0xff]
        %v4819 = vld [vmem:[#allocation10 + $0x48] sm:$0xff]
        %v4820 = vld [vmem:[#allocation10 + $0x50] sm:$0xff]
        %v4821 = vld [vmem:[#allocation10 + $0x58] sm:$0xff]
        %v4822 = vld [vmem:[#allocation10 + $0x60] sm:$0xff]
        %v4823 = vld [vmem:[#allocation10 + $0x68] sm:$0xff]
        %v4824 = vld [vmem:[#allocation10 + $0x70] sm:$0xff]
        %v4825 = vld [vmem:[#allocation10 + $0x78] sm:$0xff]
        %v4826 = vld [vmem:[#allocation10 + $0x80] sm:$0xff]
        %v4827 = vld [vmem:[#allocation10 + $0x88] sm:$0xff]
        %v4828 = vld [vmem:[#allocation10 + $0x90] sm:$0xff]
        %v4829 = vld [vmem:[#allocation10 + $0x98] sm:$0xff]
        %v4830 = vld [vmem:[#allocation10 + $0xa0] sm:$0xff]
        %v4831 = vld [vmem:[#allocation10 + $0xa8] sm:$0xff]
        %v4832 = vld [vmem:[#allocation10 + $0xb0] sm:$0xff]
        %v4833 = vld [vmem:[#allocation10 + $0xb8] sm:$0xff]
        %v4834 = vld [vmem:[#allocation10 + $0xc0] sm:$0xff]
        %v4835 = vld [vmem:[#allocation10 + $0xc8] sm:$0xff]
        %v4836 = vld [vmem:[#allocation10 + $0xd0] sm:$0xff]
        %v4837 = vld [vmem:[#allocation10 + $0xd8] sm:$0xff]
        %v4838 = vld [vmem:[#allocation10 + $0xe0] sm:$0xff]
        %v4839 = vld [vmem:[#allocation10 + $0xe8] sm:$0xff]
        %v4840 = vld [vmem:[#allocation10 + $0xf0] sm:$0xff]
        %v4841 = vld [vmem:[#allocation10 + $0xf8] sm:$0xff]
        %v4842 = vld [vmem:[#allocation10 + $0x100] sm:$0xff]
        %v4843 = vld [vmem:[#allocation10 + $0x108] sm:$0xff]
        %v4844 = vld [vmem:[#allocation10 + $0x110] sm:$0xff]
        %v4845 = vld [vmem:[#allocation10 + $0x118] sm:$0xff]
        %4847 = vset.pattern.permute.xlu0 0
        %4848 = vperm.xlu0 %4847, %v4810
        %v4849 = vpop.permute.xlu0 %4848
        %4852 = vset.pattern.permute.xlu0 0
        %4853 = vperm.xlu0 %4852, %v4811
        %v4854 = vpop.permute.xlu0 %4853
        %4857 = vset.pattern.permute.xlu0 0
        %4858 = vperm.xlu0 %4857, %v4812
        %v4859 = vpop.permute.xlu0 %4858
        %4862 = vset.pattern.permute.xlu0 0
        %4863 = vperm.xlu0 %4862, %v4813
        %v4864 = vpop.permute.xlu0 %4863
        %4867 = vset.pattern.permute.xlu0 0
        %4868 = vperm.xlu0 %4867, %v4814
        %v4869 = vpop.permute.xlu0 %4868
        %4872 = vset.pattern.permute.xlu0 0
        %4873 = vperm.xlu0 %4872, %v4815
        %v4874 = vpop.permute.xlu0 %4873
        %4877 = vset.pattern.permute.xlu0 0
        %4878 = vperm.xlu0 %4877, %v4816
        %v4879 = vpop.permute.xlu0 %4878
        %4882 = vset.pattern.permute.xlu0 0
        %4883 = vperm.xlu0 %4882, %v4817
        %v4884 = vpop.permute.xlu0 %4883
        %4887 = vset.pattern.permute.xlu0 0
        %4888 = vperm.xlu0 %4887, %v4818
        %v4889 = vpop.permute.xlu0 %4888
        %4892 = vset.pattern.permute.xlu0 0
        %4893 = vperm.xlu0 %4892, %v4819
        %v4894 = vpop.permute.xlu0 %4893
        %4897 = vset.pattern.permute.xlu0 0
        %4898 = vperm.xlu0 %4897, %v4820
        %v4899 = vpop.permute.xlu0 %4898
        %4902 = vset.pattern.permute.xlu0 0
        %4903 = vperm.xlu0 %4902, %v4821
        %v4904 = vpop.permute.xlu0 %4903
        %4907 = vset.pattern.permute.xlu0 0
        %4908 = vperm.xlu0 %4907, %v4822
        %v4909 = vpop.permute.xlu0 %4908
        %4912 = vset.pattern.permute.xlu0 0
        %4913 = vperm.xlu0 %4912, %v4823
        %v4914 = vpop.permute.xlu0 %4913
        %4917 = vset.pattern.permute.xlu0 0
        %4918 = vperm.xlu0 %4917, %v4824
        %v4919 = vpop.permute.xlu0 %4918
        %4922 = vset.pattern.permute.xlu0 0
        %4923 = vperm.xlu0 %4922, %v4825
        %v4924 = vpop.permute.xlu0 %4923
        %4927 = vset.pattern.permute.xlu0 0
        %4928 = vperm.xlu0 %4927, %v4826
        %v4929 = vpop.permute.xlu0 %4928
        %4932 = vset.pattern.permute.xlu0 0
        %4933 = vperm.xlu0 %4932, %v4827
        %v4934 = vpop.permute.xlu0 %4933
        %4937 = vset.pattern.permute.xlu0 0
        %4938 = vperm.xlu0 %4937, %v4828
        %v4939 = vpop.permute.xlu0 %4938
        %4942 = vset.pattern.permute.xlu0 0
        %4943 = vperm.xlu0 %4942, %v4829
        %v4944 = vpop.permute.xlu0 %4943
        %4947 = vset.pattern.permute.xlu0 0
        %4948 = vperm.xlu0 %4947, %v4830
        %v4949 = vpop.permute.xlu0 %4948
        %4952 = vset.pattern.permute.xlu0 0
        %4953 = vperm.xlu0 %4952, %v4831
        %v4954 = vpop.permute.xlu0 %4953
        %4957 = vset.pattern.permute.xlu0 0
        %4958 = vperm.xlu0 %4957, %v4832
        %v4959 = vpop.permute.xlu0 %4958
        %4962 = vset.pattern.permute.xlu0 0
        %4963 = vperm.xlu0 %4962, %v4833
        %v4964 = vpop.permute.xlu0 %4963
        %4967 = vset.pattern.permute.xlu0 0
        %4968 = vperm.xlu0 %4967, %v4834
        %v4969 = vpop.permute.xlu0 %4968
        %4972 = vset.pattern.permute.xlu0 0
        %4973 = vperm.xlu0 %4972, %v4835
        %v4974 = vpop.permute.xlu0 %4973
        %4977 = vset.pattern.permute.xlu0 0
        %4978 = vperm.xlu0 %4977, %v4836
        %v4979 = vpop.permute.xlu0 %4978
        %4982 = vset.pattern.permute.xlu0 0
        %4983 = vperm.xlu0 %4982, %v4837
        %v4984 = vpop.permute.xlu0 %4983
        %4987 = vset.pattern.permute.xlu0 0
        %4988 = vperm.xlu0 %4987, %v4838
        %v4989 = vpop.permute.xlu0 %4988
        %4992 = vset.pattern.permute.xlu0 0
        %4993 = vperm.xlu0 %4992, %v4839
        %v4994 = vpop.permute.xlu0 %4993
        %4997 = vset.pattern.permute.xlu0 0
        %4998 = vperm.xlu0 %4997, %v4840
        %v4999 = vpop.permute.xlu0 %4998
        %5002 = vset.pattern.permute.xlu0 0
        %5003 = vperm.xlu0 %5002, %v4841
        %v5004 = vpop.permute.xlu0 %5003
        %5007 = vset.pattern.permute.xlu0 0
        %5008 = vperm.xlu0 %5007, %v4842
        %v5009 = vpop.permute.xlu0 %5008
        %5012 = vset.pattern.permute.xlu0 0
        %5013 = vperm.xlu0 %5012, %v4843
        %v5014 = vpop.permute.xlu0 %5013
        %5017 = vset.pattern.permute.xlu0 0
        %5018 = vperm.xlu0 %5017, %v4844
        %v5019 = vpop.permute.xlu0 %5018
        %5022 = vset.pattern.permute.xlu0 0
        %5023 = vperm.xlu0 %5022, %v4845
        %v5024 = vpop.permute.xlu0 %5023
        %v5026 = vmul.f32 %v4738, %v4849
        %v5027 = vmul.f32 %v4739, %v4854
        %v5028 = vmul.f32 %v4740, %v4859
        %v5029 = vmul.f32 %v4741, %v4864
        %v5030 = vmul.f32 %v4742, %v4869
        %v5031 = vmul.f32 %v4743, %v4874
        %v5032 = vmul.f32 %v4744, %v4879
        %v5033 = vmul.f32 %v4745, %v4884
        %v5034 = vmul.f32 %v4746, %v4889
        %v5035 = vmul.f32 %v4747, %v4894
        %v5036 = vmul.f32 %v4748, %v4899
        %v5037 = vmul.f32 %v4749, %v4904
        %v5038 = vmul.f32 %v4750, %v4909
        %v5039 = vmul.f32 %v4751, %v4914
        %v5040 = vmul.f32 %v4752, %v4919
        %v5041 = vmul.f32 %v4753, %v4924
        %v5042 = vmul.f32 %v4754, %v4929
        %v5043 = vmul.f32 %v4755, %v4934
        %v5044 = vmul.f32 %v4756, %v4939
        %v5045 = vmul.f32 %v4757, %v4944
        %v5046 = vmul.f32 %v4758, %v4949
        %v5047 = vmul.f32 %v4759, %v4954
        %v5048 = vmul.f32 %v4760, %v4959
        %v5049 = vmul.f32 %v4761, %v4964
        %v5050 = vmul.f32 %v4762, %v4969
        %v5051 = vmul.f32 %v4763, %v4974
        %v5052 = vmul.f32 %v4764, %v4979
        %v5053 = vmul.f32 %v4765, %v4984
        %v5054 = vmul.f32 %v4766, %v4989
        %v5055 = vmul.f32 %v4767, %v4994
        %v5056 = vmul.f32 %v4768, %v4999
        %v5057 = vmul.f32 %v4769, %v5004
        %v5058 = vmul.f32 %v4770, %v5009
        %v5059 = vmul.f32 %v4771, %v5014
        %v5060 = vmul.f32 %v4772, %v5019
        %v5061 = vmul.f32 %v4773, %v5024
        %v5062 = vadd.f32 %v5026, %v5027
        %v5063 = vadd.f32 %v5062, %v5028
        %v5064 = vadd.f32 %v5063, %v5029
        %v5065 = vadd.f32 %v5064, %v5030
        %v5066 = vadd.f32 %v5065, %v5031
        %v5067 = vadd.f32 %v5066, %v5032
        %v5068 = vadd.f32 %v5067, %v5033
        %v5069 = vadd.f32 %v5068, %v5034
        %v5070 = vadd.f32 %v5069, %v5035
        %v5071 = vadd.f32 %v5070, %v5036
        %v5072 = vadd.f32 %v5071, %v5037
        %v5073 = vadd.f32 %v5072, %v5038
        %v5074 = vadd.f32 %v5073, %v5039
        %v5075 = vadd.f32 %v5074, %v5040
        %v5076 = vadd.f32 %v5075, %v5041
        %v5077 = vadd.f32 %v5076, %v5042
        %v5078 = vadd.f32 %v5077, %v5043
        %v5079 = vadd.f32 %v5078, %v5044
        %v5080 = vadd.f32 %v5079, %v5045
        %v5081 = vadd.f32 %v5080, %v5046
        %v5082 = vadd.f32 %v5081, %v5047
        %v5083 = vadd.f32 %v5082, %v5048
        %v5084 = vadd.f32 %v5083, %v5049
        %v5085 = vadd.f32 %v5084, %v5050
        %v5086 = vadd.f32 %v5085, %v5051
        %v5087 = vadd.f32 %v5086, %v5052
        %v5088 = vadd.f32 %v5087, %v5053
        %v5089 = vadd.f32 %v5088, %v5054
        %v5090 = vadd.f32 %v5089, %v5055
        %v5091 = vadd.f32 %v5090, %v5056
        %v5092 = vadd.f32 %v5091, %v5057
        %v5093 = vadd.f32 %v5092, %v5058
        %v5094 = vadd.f32 %v5093, %v5059
        %v5095 = vadd.f32 %v5094, %v5060
        %v5096 = vadd.f32 %v5095, %v5061
        %v5097 = vrot.slane %v5096, 4
        %v5098 = vadd.f32 %v5096, %v5097
        %v5099 = vrot.slane %v5098, 2
        %v5100 = vadd.f32 %v5098, %v5099
        %v5101 = vrot.slane %v5100, 1
        %v5102 = vadd.f32 %v5100, %v5101
        %5103 = vst [vmem:[%s402] sm:$0x1] %v5102
        %v5104 = vmul.f32 %v5026, %v4738
        %v5105 = vmul.f32 %v5027, %v4739
        %v5106 = vmul.f32 %v5028, %v4740
        %v5107 = vmul.f32 %v5029, %v4741
        %v5108 = vmul.f32 %v5030, %v4742
        %v5109 = vmul.f32 %v5031, %v4743
        %v5110 = vmul.f32 %v5032, %v4744
        %v5111 = vmul.f32 %v5033, %v4745
        %v5112 = vmul.f32 %v5034, %v4746
        %v5113 = vmul.f32 %v5035, %v4747
        %v5114 = vmul.f32 %v5036, %v4748
        %v5115 = vmul.f32 %v5037, %v4749
        %v5116 = vmul.f32 %v5038, %v4750
        %v5117 = vmul.f32 %v5039, %v4751
        %v5118 = vmul.f32 %v5040, %v4752
        %v5119 = vmul.f32 %v5041, %v4753
        %v5120 = vmul.f32 %v5042, %v4754
        %v5121 = vmul.f32 %v5043, %v4755
        %v5122 = vmul.f32 %v5044, %v4756
        %v5123 = vmul.f32 %v5045, %v4757
        %v5124 = vmul.f32 %v5046, %v4758
        %v5125 = vmul.f32 %v5047, %v4759
        %v5126 = vmul.f32 %v5048, %v4760
        %v5127 = vmul.f32 %v5049, %v4761
        %v5128 = vmul.f32 %v5050, %v4762
        %v5129 = vmul.f32 %v5051, %v4763
        %v5130 = vmul.f32 %v5052, %v4764
        %v5131 = vmul.f32 %v5053, %v4765
        %v5132 = vmul.f32 %v5054, %v4766
        %v5133 = vmul.f32 %v5055, %v4767
        %v5134 = vmul.f32 %v5056, %v4768
        %v5135 = vmul.f32 %v5057, %v4769
        %v5136 = vmul.f32 %v5058, %v4770
        %v5137 = vmul.f32 %v5059, %v4771
        %v5138 = vmul.f32 %v5060, %v4772
        %v5139 = vmul.f32 %v5061, %v4773
        %v5140 = vadd.f32 %v5104, %v5105
        %v5141 = vadd.f32 %v5140, %v5106
        %v5142 = vadd.f32 %v5141, %v5107
        %v5143 = vadd.f32 %v5142, %v5108
        %v5144 = vadd.f32 %v5143, %v5109
        %v5145 = vadd.f32 %v5144, %v5110
        %v5146 = vadd.f32 %v5145, %v5111
        %v5147 = vadd.f32 %v5146, %v5112
        %v5148 = vadd.f32 %v5147, %v5113
        %v5149 = vadd.f32 %v5148, %v5114
        %v5150 = vadd.f32 %v5149, %v5115
        %v5151 = vadd.f32 %v5150, %v5116
        %v5152 = vadd.f32 %v5151, %v5117
        %v5153 = vadd.f32 %v5152, %v5118
        %v5154 = vadd.f32 %v5153, %v5119
        %v5155 = vadd.f32 %v5154, %v5120
        %v5156 = vadd.f32 %v5155, %v5121
        %v5157 = vadd.f32 %v5156, %v5122
        %v5158 = vadd.f32 %v5157, %v5123
        %v5159 = vadd.f32 %v5158, %v5124
        %v5160 = vadd.f32 %v5159, %v5125
        %v5161 = vadd.f32 %v5160, %v5126
        %v5162 = vadd.f32 %v5161, %v5127
        %v5163 = vadd.f32 %v5162, %v5128
        %v5164 = vadd.f32 %v5163, %v5129
        %v5165 = vadd.f32 %v5164, %v5130
        %v5166 = vadd.f32 %v5165, %v5131
        %v5167 = vadd.f32 %v5166, %v5132
        %v5168 = vadd.f32 %v5167, %v5133
        %v5169 = vadd.f32 %v5168, %v5134
        %v5170 = vadd.f32 %v5169, %v5135
        %v5171 = vadd.f32 %v5170, %v5136
        %v5172 = vadd.f32 %v5171, %v5137
        %v5173 = vadd.f32 %v5172, %v5138
        %v5174 = vadd.f32 %v5173, %v5139
        %v5175 = vrot.slane %v5174, 4
        %v5176 = vadd.f32 %v5174, %v5175
        %v5177 = vrot.slane %v5176, 2
        %v5178 = vadd.f32 %v5176, %v5177
        %v5179 = vrot.slane %v5178, 1
        %v5180 = vadd.f32 %v5178, %v5179
        %5181 = vst [vmem:[%s402 + $0x1] sm:$0x1] %v5180
        %s5182 = sand.u32 %s193, 1
        %s5183 = scalar_lea.sflag [#allocation6], %s5182
        %s5184 = sand.u32 %s193, 1
        %s5185 = smul.addr %s5184, 288
        %s5186 = scalar_lea.vmem [#allocation15], %s5185
        %s5187 = sand.u32 %s219, 1
        %s5188 = scalar_lea.sflag [#allocation17], %s5187
        %s5189 = sand.u32 %s219, 1
        %s5190 = smul.addr %s5189, 2
        %s5191 = scalar_lea.vmem [#allocation16], %s5190
        // Predicated region
        $region73: #{_residual_block_impl.4} parent=47 // pred_check
          %p5192 = pneg %p203
        $region74: #{_residual_block_impl.4} parent=47 // pred_check_branch
          %5194 = sbr.rel (%p5192) target = $region76
        $region75: #{_residual_block_impl.4} parent=47 // pred_region
          %s5196 = ssub.s32 4608, 4608
          %5197 = vsyncadd %s5183, %s5196
          %s5198 = smul.addr %s33, 36
          %s5199 = smul.addr %s5198, 128
          %s5200 = scalar_lea.hbm %s7, %s5199
          %s5201 = sshll.u32 %s5186, 4
          %s5202 = int_to_ptr.vmem [resolvable:$true] %s5201
          %5207 = dma.vmem_to_hbm [thread:$0]  %s5202, 4608, %s5200, %s5183, 128, 128, 8
        $region76: #{_residual_block_impl.4} parent=47 // pred_fallthru
          _
        // Predicated region
        $region77: #{_residual_block_impl.4} parent=47 // pred_check
          %p5208 = pneg %p229
        $region78: #{_residual_block_impl.4} parent=47 // pred_check_branch
          %5210 = sbr.rel (%p5208) target = $region80
        $region79: #{_residual_block_impl.4} parent=47 // pred_region
          %s5212 = ssub.s32 32, 32
          %5213 = vsyncadd %s5188, %s5212
          %s5214 = smul.addr %s33, 32
          %s5215 = scalar_lea.hbm %s8, %s5214
          %s5217 = sshll.u32 %s5191, 4
          %s5218 = int_to_ptr.vmem [resolvable:$true] %s5217
          %5220 = dma.vmem_to_hbm [thread:$0]  %s5218, 32, %s5215, %s5188
        $region80: #{_residual_block_impl.4} parent=47 // pred_fallthru
          _
      $region48: #{_residual_block_impl.4} parent=5 // pred_fallthru
        _
      %p5221 = scmp.le.s32.totalorder 2, %s28
      // Predicated region
      $region81: #{_residual_block_impl.4} parent=5 // pred_check
        %p5222 = pneg %p5221
      $region82: #{_residual_block_impl.4} parent=5 // pred_check_branch
        %5224 = sbr.rel (%p5222) target = $region84
      $region83: #{_residual_block_impl.4} parent=5 // pred_region
        %s5225 = ssub.s32 %s28, 2
        // Predicated region
        $region85: #{_residual_block_impl.4} parent=83 // pred_check
          %p5226 = pneg %p209
        $region86: #{_residual_block_impl.4} parent=83 // pred_check_branch
          %5228 = sbr.rel (%p5226) target = $region88
        $region87: #{_residual_block_impl.4} parent=83 // pred_region
          %s5229 = sand.u32 %s194, 1
          %s5230 = scalar_lea.sflag [#allocation6], %s5229
          %s5231 = sand.u32 %s194, 1
          %s5232 = smul.addr %s5231, 288
          %s5233 = scalar_lea.vmem [#allocation15], %s5232
          %5234 = dma.done %s5230, 4608
        $region88: #{_residual_block_impl.4} parent=83 // pred_fallthru
          _
        // Predicated region
        $region89: #{_residual_block_impl.4} parent=83 // pred_check
          %p5235 = pneg %p235
        $region90: #{_residual_block_impl.4} parent=83 // pred_check_branch
          %5237 = sbr.rel (%p5235) target = $region92
        $region91: #{_residual_block_impl.4} parent=83 // pred_region
          %s5238 = sand.u32 %s220, 1
          %s5239 = scalar_lea.sflag [#allocation17], %s5238
          %s5240 = sand.u32 %s220, 1
          %s5241 = smul.addr %s5240, 2
          %s5242 = scalar_lea.vmem [#allocation16], %s5241
          %5243 = dma.done %s5239, 32
        $region92: #{_residual_block_impl.4} parent=83 // pred_fallthru
          _
      $region84: #{_residual_block_impl.4} parent=5 // pred_fallthru
        _
    $region6: #{_residual_block_impl.4} parent=1 // loop_footer
      %s32 = sadd.s32 1, %s28
    $region7: #{_residual_block_impl.4} parent=1 // loop_footer_branch
      %27 = sbr.rel target = $region3
    $region8: #{_residual_block_impl.4} parent=1 // loop_exit
      _
    %5244 = vsyncpa [#allocation5], 1
    %s5245 = scalar_lea.sflag [#allocation5], 1
    %5246 = vsyncpa %s5245, 1
    %5247 = vsyncpa [#allocation8], 1
    %5248 = vsyncpa [#allocation11], 1
    %5249 = vsyncpa [#allocation14], 1
    %5250 = vsyncpa [#allocation6], 1
    %s5251 = scalar_lea.sflag [#allocation6], 1
    %5252 = vsyncpa %s5251, 1
    %5253 = vsyncpa [#allocation17], 1
    %s5254 = scalar_lea.sflag [#allocation17], 1
    %5255 = vsyncpa %s5254, 1

// kernel: _residual_block_impl.3
$region0: #{_residual_block_impl.3}
  #allocation0 [shape = 'u32[]', space=smem, size = 0x4, offset = 0x4, fixed_abs, tag = 'smem constant byte address 0x4 - core index']
  #allocation1 [shape = 'u32[144,128]{1,0:T(1,128)}', space=vmem, size = 0x12000, scoped, tag = 'internal scratch']
  %s0 = inlined_call_operand.hbm [shape: f32[2,342,4], index: 0, kind: input, shape index: {}]
  %s1 = inlined_call_operand.hbm [shape: f32[9,4,128], index: 1, kind: input, shape index: {}]
  %s2 = inlined_call_operand.hbm [shape: f32[1,128], index: 2, kind: input, shape index: {}]
  %s3 = inlined_call_operand.hbm [shape: f32[288,1], index: 3, kind: input, shape index: {}]
  %s4 = inlined_call_operand.hbm [shape: f32[2,288,128], index: 4, kind: output, shape index: {0}]
  %s5 = inlined_call_operand.hbm [shape: f32[2,2,128], index: 5, kind: output, shape index: {1}]
  %6 = xla_tuple %s4, %s5
  %s7 = sld [smem:[#allocation0]]
  $region73: #{_residual_block_impl.3} parent=0
    _
  %s9 = ssub.s32 1, %s7
  %s10 = scalar_select 0, %s9, %s7
  $region1: #{_residual_block_impl.3} parent=0
    #allocation2 [shape = 'u8[352256]{0}', space=vmem, size = 0x56000, scoped, tag = 'input window, operand 0']
    #allocation3 [shape = 's32[2]{0}', space=sflag, size = 0x8, scoped, tag = 'scoped memory for _residual_block_impl.3']
    #allocation4 [shape = 's32[2]{0}', space=sflag, size = 0x8, scoped, tag = 'scoped memory for _residual_block_impl.3']
    #allocation5 [shape = 'u8[18432]{0}', space=vmem, size = 0x4800, scoped, tag = 'input window, operand 1, single buffered']
    #allocation6 [shape = 's32[1]{0}', space=sflag, size = 0x4, scoped, tag = 'scoped memory for _residual_block_impl.3']
    #allocation7 [shape = 'u8[512]{0}', space=vmem, size = 0x400, scoped, tag = 'input window, operand 2, single buffered']
    #allocation8 [shape = 'u8[147456]{0}', space=vmem, size = 0x24000, scoped, tag = 'input window, operand 3, single buffered']
    #allocation9 [shape = 's32[1]{0}', space=sflag, size = 0x4, scoped, tag = 'scoped memory for _residual_block_impl.3']
    #allocation10 [shape = 'u8[294912]{0}', space=vmem, size = 0x48000, scoped, tag = 'output window, operand 0']
    #allocation11 [shape = 'u8[2048]{0}', space=vmem, size = 0x800, scoped, tag = 'output window, operand 1']
    #allocation12 [shape = 's32[2]{0}', space=sflag, size = 0x8, scoped, tag = 'scoped memory for _residual_block_impl.3']
    %11 = vsyncpa [#allocation3], 0
    %s12 = scalar_lea.sflag [#allocation3], 1
    %13 = vsyncpa %s12, 0
    %14 = vsyncpa [#allocation6], 0
    %15 = vsyncpa [#allocation9], 0
    %16 = vsyncpa [#allocation4], 0
    %s17 = scalar_lea.sflag [#allocation4], 1
    %18 = vsyncpa %s17, 0
    %19 = vsyncpa [#allocation12], 0
    %s20 = scalar_lea.sflag [#allocation12], 1
    %21 = vsyncpa %s20, 0
    loop: start=0, step=1, limit=4
    $region2: #{_residual_block_impl.3} parent=1 // loop_pre_header
      _
    $region3: #{_residual_block_impl.3} parent=1 // loop_header
      %s23 = sphi 0, %s27
      %p24 = scmp.ge.s32.totalorder %s23, 4
      %s33 = sphi 0, %s35
      %s36 = sphi 0, %s33
      %s37 = sphi 0, %s36
      %s53 = sphi 0, %s37
      %s57 = sphi 0, %s57
      %s59 = sphi 0, %s57
      %s60 = sphi 0, %s59
      %s74 = sphi 0, %s60
      %s78 = sphi 0, %s78
      %s80 = sphi 0, %s78
      %s81 = sphi 0, %s80
      %s95 = sphi 0, %s81
      %s99 = sphi 0, %s99
      %s101 = sphi 0, %s99
      %s102 = sphi 0, %s101
      %s116 = sphi 0, %s102
      %s122 = sphi 0, %s124
      %s125 = sphi 0, %s122
      %s126 = sphi 0, %s125
      %s142 = sphi 0, %s126
      %s148 = sphi 0, %s150
      %s151 = sphi 0, %s148
      %s152 = sphi 0, %s151
      %s168 = sphi 0, %s152
    $region4: #{_residual_block_impl.3} parent=1 // loop_header_branch
      %26 = sbr.rel (%p24) target = $region8
    $region5: #{_residual_block_impl.3} parent=1 // loop_body
      %s28 = ssub.s32 %s23, 1
      %s29 = ssub.s32 %s23, 2
      %s30 = sadd.s32 %s23, 1
      %s31 = ssub.s32 %s23, %s30
      %p32 = scmp.eq.s32.totalorder %s31, 0
      %s34 = sadd.s32 %s33, 1
      %s35 = scalar_select %p32, %s33, %s34
      %p38 = pneg %p32
      %p39 = scmp.eq.s32.totalorder %s23, 1
      %p40 = por %p38, %p39
      %p41 = scmp.ne.s32.totalorder %s33, %s36
      %p42 = scmp.eq.s32.totalorder %s23, 0
      %p43 = por %p41, %p42
      %p44 = scmp.ne.s32.totalorder %s33, %s36
      %p45 = scmp.eq.s32.totalorder %s28, 1
      %p46 = por %p44, %p45
      %p47 = scmp.ne.s32.totalorder %s36, %s37
      %p48 = scmp.eq.s32.totalorder %s28, 0
      %p49 = por %p47, %p48
      %p50 = scmp.ne.s32.totalorder %s36, %s37
      %p51 = scmp.eq.s32.totalorder %s29, 1
      %p52 = por %p50, %p51
      %p54 = scmp.ne.s32.totalorder %s37, %s53
      %p55 = scmp.eq.s32.totalorder %s29, 0
      %p56 = por %p54, %p55
      %s58 = sadd.s32 %s57, 1
      %p61 = scmp.eq.s32.totalorder %s23, 1
      %p62 = scmp.ne.s32.totalorder %s57, %s59
      %p63 = scmp.eq.s32.totalorder %s23, 0
      %p64 = por %p62, %p63
      %p65 = scmp.ne.s32.totalorder %s57, %s59
      %p66 = scmp.eq.s32.totalorder %s28, 1
      %p67 = por %p65, %p66
      %p68 = scmp.ne.s32.totalorder %s59, %s60
      %p69 = scmp.eq.s32.totalorder %s28, 0
      %p70 = por %p68, %p69
      %p71 = scmp.ne.s32.totalorder %s59, %s60
      %p72 = scmp.eq.s32.totalorder %s29, 1
      %p73 = por %p71, %p72
      %p75 = scmp.ne.s32.totalorder %s60, %s74
      %p76 = scmp.eq.s32.totalorder %s29, 0
      %p77 = por %p75, %p76
      %s79 = sadd.s32 %s78, 1
      %p82 = scmp.eq.s32.totalorder %s23, 1
      %p83 = scmp.ne.s32.totalorder %s78, %s80
      %p84 = scmp.eq.s32.totalorder %s23, 0
      %p85 = por %p83, %p84
      %p86 = scmp.ne.s32.totalorder %s78, %s80
      %p87 = scmp.eq.s32.totalorder %s28, 1
      %p88 = por %p86, %p87
      %p89 = scmp.ne.s32.totalorder %s80, %s81
      %p90 = scmp.eq.s32.totalorder %s28, 0
      %p91 = por %p89, %p90
      %p92 = scmp.ne.s32.totalorder %s80, %s81
      %p93 = scmp.eq.s32.totalorder %s29, 1
      %p94 = por %p92, %p93
      %p96 = scmp.ne.s32.totalorder %s81, %s95
      %p97 = scmp.eq.s32.totalorder %s29, 0
      %p98 = por %p96, %p97
      %s100 = sadd.s32 %s99, 1
      %p103 = scmp.eq.s32.totalorder %s23, 1
      %p104 = scmp.ne.s32.totalorder %s99, %s101
      %p105 = scmp.eq.s32.totalorder %s23, 0
      %p106 = por %p104, %p105
      %p107 = scmp.ne.s32.totalorder %s99, %s101
      %p108 = scmp.eq.s32.totalorder %s28, 1
      %p109 = por %p107, %p108
      %p110 = scmp.ne.s32.totalorder %s101, %s102
      %p111 = scmp.eq.s32.totalorder %s28, 0
      %p112 = por %p110, %p111
      %p113 = scmp.ne.s32.totalorder %s101, %s102
      %p114 = scmp.eq.s32.totalorder %s29, 1
      %p115 = por %p113, %p114
      %p117 = scmp.ne.s32.totalorder %s102, %s116
      %p118 = scmp.eq.s32.totalorder %s29, 0
      %p119 = por %p117, %p118
      %s120 = ssub.s32 %s23, %s30
      %p121 = scmp.eq.s32.totalorder %s120, 0
      %s123 = sadd.s32 %s122, 1
      %s124 = scalar_select %p121, %s122, %s123
      %p127 = pneg %p121
      %p128 = scmp.eq.s32.totalorder %s23, 1
      %p129 = por %p127, %p128
      %p130 = scmp.ne.s32.totalorder %s122, %s125
      %p131 = scmp.eq.s32.totalorder %s23, 0
      %p132 = por %p130, %p131
      %p133 = scmp.ne.s32.totalorder %s122, %s125
      %p134 = scmp.eq.s32.totalorder %s28, 1
      %p135 = por %p133, %p134
      %p136 = scmp.ne.s32.totalorder %s125, %s126
      %p137 = scmp.eq.s32.totalorder %s28, 0
      %p138 = por %p136, %p137
      %p139 = scmp.ne.s32.totalorder %s125, %s126
      %p140 = scmp.eq.s32.totalorder %s29, 1
      %p141 = por %p139, %p140
      %p143 = scmp.ne.s32.totalorder %s126, %s142
      %p144 = scmp.eq.s32.totalorder %s29, 0
      %p145 = por %p143, %p144
      %s146 = ssub.s32 %s23, %s30
      %p147 = scmp.eq.s32.totalorder %s146, 0
      %s149 = sadd.s32 %s148, 1
      %s150 = scalar_select %p147, %s148, %s149
      %p153 = pneg %p147
      %p154 = scmp.eq.s32.totalorder %s23, 1
      %p155 = por %p153, %p154
      %p156 = scmp.ne.s32.totalorder %s148, %s151
      %p157 = scmp.eq.s32.totalorder %s23, 0
      %p158 = por %p156, %p157
      %p159 = scmp.ne.s32.totalorder %s148, %s151
      %p160 = scmp.eq.s32.totalorder %s28, 1
      %p161 = por %p159, %p160
      %p162 = scmp.ne.s32.totalorder %s151, %s152
      %p163 = scmp.eq.s32.totalorder %s28, 0
      %p164 = por %p162, %p163
      %p165 = scmp.ne.s32.totalorder %s151, %s152
      %p166 = scmp.eq.s32.totalorder %s29, 1
      %p167 = por %p165, %p166
      %p169 = scmp.ne.s32.totalorder %s152, %s168
      %p170 = scmp.eq.s32.totalorder %s29, 0
      %p171 = por %p169, %p170
      %p172 = scmp.le.s32.totalorder 1, %s23
      %p173 = scmp.lt.s32.totalorder %s23, 3
      %p174 = pnand %p172, %p173
      %p175 = pneg %p174
      // Predicated region
      $region9: #{_residual_block_impl.3} parent=5 // pred_check
        _
      $region10: #{_residual_block_impl.3} parent=5 // pred_check_branch
        %177 = sbr.rel (%p174) target = $region12
      $region11: #{_residual_block_impl.3} parent=5 // pred_region
        %s178 = ssub.s32 %s23, 1
        // Predicated region
        $region13: #{_residual_block_impl.3} parent=11 // pred_check
          %p179 = pneg %p70
        $region14: #{_residual_block_impl.3} parent=11 // pred_check_branch
          %181 = sbr.rel (%p179) target = $region16
        $region15: #{_residual_block_impl.3} parent=11 // pred_region
          %s183 = ssub.s32 576, 576
          %184 = vsyncadd [#allocation6], %s183
          %s185 = sshll.u32 [#allocation5], 4
          %s186 = int_to_ptr.vmem [resolvable:$true] %s185
          %191 = dma.hbm_to_vmem [thread:$0]  %s1, 576, %s186, [#allocation6], 64, 64, 4
        $region16: #{_residual_block_impl.3} parent=11 // pred_fallthru
          _
        // Predicated region
        $region17: #{_residual_block_impl.3} parent=11 // pred_check
          %p192 = pneg %p91
        $region18: #{_residual_block_impl.3} parent=11 // pred_check_branch
          %194 = sbr.rel (%p192) target = $region20
        $region19: #{_residual_block_impl.3} parent=11 // pred_region
          %s196 = ssub.s32 16, 16
          %197 = vsyncadd [#allocation6], %s196
          %s199 = sshll.u32 [#allocation7], 4
          %s200 = int_to_ptr.vmem [resolvable:$true] %s199
          %202 = dma.hbm_to_vmem [thread:$0]  %s2, 16, %s200, [#allocation6]
        $region20: #{_residual_block_impl.3} parent=11 // pred_fallthru
          _
        // Predicated region
        $region21: #{_residual_block_impl.3} parent=11 // pred_check
          %p203 = pneg %p112
        $region22: #{_residual_block_impl.3} parent=11 // pred_check_branch
          %205 = sbr.rel (%p203) target = $region24
        $region23: #{_residual_block_impl.3} parent=11 // pred_region
          %s207 = ssub.s32 4608, 4608
          %208 = vsyncadd [#allocation9], %s207
          %s209 = sshll.u32 [#allocation8], 4
          %s210 = int_to_ptr.vmem [resolvable:$true] %s209
          %215 = dma.hbm_to_vmem [thread:$0]  %s3, 4608, %s210, [#allocation9], 128, 128, 8
        $region24: #{_residual_block_impl.3} parent=11 // pred_fallthru
          _
      $region12: #{_residual_block_impl.3} parent=5 // pred_fallthru
        _
      %p216 = scmp.lt.s32.totalorder %s23, 2
      // Predicated region
      $region25: #{_residual_block_impl.3} parent=5 // pred_check
        %p217 = pneg %p216
      $region26: #{_residual_block_impl.3} parent=5 // pred_check_branch
        %219 = sbr.rel (%p217) target = $region28
      $region27: #{_residual_block_impl.3} parent=5 // pred_region
        // Predicated region
        $region29: #{_residual_block_impl.3} parent=27 // pred_check
          %p220 = pneg %p43
        $region30: #{_residual_block_impl.3} parent=27 // pred_check_branch
          %222 = sbr.rel (%p220) target = $region32
        $region31: #{_residual_block_impl.3} parent=27 // pred_region
          %s223 = sand.u32 %s33, 1
          %s224 = scalar_lea.sflag [#allocation3], %s223
          %s225 = sand.u32 %s33, 1
          %s226 = smul.addr %s225, 344
          %s227 = scalar_lea.vmem [#allocation2], %s226
          %s229 = ssub.s32 5504, 5504
          %230 = vsyncadd %s224, %s229
          %s231 = smul.addr %s23, 43
          %s232 = smul.addr %s231, 128
          %s233 = scalar_lea.hbm %s0, %s232
          %s234 = sshll.u32 %s227, 4
          %s235 = int_to_ptr.vmem [resolvable:$true] %s234
          %240 = dma.hbm_to_vmem [thread:$0]  %s233, 5504, %s235, %s224, 128, 128, 8
        $region32: #{_residual_block_impl.3} parent=27 // pred_fallthru
          _
      $region28: #{_residual_block_impl.3} parent=5 // pred_fallthru
        _
      %p241 = scmp.le.s32.totalorder 1, %s23
      %p242 = scmp.lt.s32.totalorder %s23, 3
      %p243 = pnand %p241, %p242
      %p244 = pneg %p243
      // Predicated region
      $region33: #{_residual_block_impl.3} parent=5 // pred_check
        _
      $region34: #{_residual_block_impl.3} parent=5 // pred_check_branch
        %246 = sbr.rel (%p243) target = $region36
      $region35: #{_residual_block_impl.3} parent=5 // pred_region
        %s247 = ssub.s32 %s23, 1
        %s248 = sand.u32 %s36, 1
        %s249 = scalar_lea.sflag [#allocation3], %s248
        %s250 = sand.u32 %s36, 1
        %s251 = smul.addr %s250, 344
        %s252 = scalar_lea.vmem [#allocation2], %s251
        // Predicated region
        $region37: #{_residual_block_impl.3} parent=35 // pred_check
          %p253 = pneg %p49
        $region38: #{_residual_block_impl.3} parent=35 // pred_check_branch
          %255 = sbr.rel (%p253) target = $region40
        $region39: #{_residual_block_impl.3} parent=35 // pred_region
          %256 = dma.done %s249, 5504
        $region40: #{_residual_block_impl.3} parent=35 // pred_fallthru
          _
        // Predicated region
        $region41: #{_residual_block_impl.3} parent=35 // pred_check
          %p257 = pneg %p70
        $region42: #{_residual_block_impl.3} parent=35 // pred_check_branch
          %259 = sbr.rel (%p257) target = $region44
        $region43: #{_residual_block_impl.3} parent=35 // pred_region
          %260 = dma.done [#allocation6], 576
        $region44: #{_residual_block_impl.3} parent=35 // pred_fallthru
          _
        // Predicated region
        $region45: #{_residual_block_impl.3} parent=35 // pred_check
          %p261 = pneg %p91
        $region46: #{_residual_block_impl.3} parent=35 // pred_check_branch
          %263 = sbr.rel (%p261) target = $region48
        $region47: #{_residual_block_impl.3} parent=35 // pred_region
          %264 = dma.done [#allocation6], 16
        $region48: #{_residual_block_impl.3} parent=35 // pred_fallthru
          _
        // Predicated region
        $region49: #{_residual_block_impl.3} parent=35 // pred_check
          %p265 = pneg %p112
        $region50: #{_residual_block_impl.3} parent=35 // pred_check_branch
          %267 = sbr.rel (%p265) target = $region52
        $region51: #{_residual_block_impl.3} parent=35 // pred_region
          %268 = dma.done [#allocation9], 4608
        $region52: #{_residual_block_impl.3} parent=35 // pred_fallthru
          _
        %s269 = sand.u32 %s36, 1
        %s270 = scalar_lea.sflag [#allocation3], %s269
        %s271 = sand.u32 %s36, 1
        %s272 = smul.addr %s271, 344
        %s273 = scalar_lea.vmem [#allocation2], %s272
        %p274 = pneg %p49
        %p275 = pneg %p46
        %p276 = pneg %p70
        %p277 = pneg %p67
        %p278 = pneg %p91
        %p279 = pneg %p88
        %p280 = pneg %p112
        %p281 = pneg %p109
        %p282 = pneg %p138
        %p283 = pneg %p135
        %s284 = sand.u32 %s125, 1
        %s285 = scalar_lea.sflag [#allocation4], %s284
        %s286 = sand.u32 %s125, 1
        %s287 = smul.addr %s286, 288
        %s288 = scalar_lea.vmem [#allocation10], %s287
        %p289 = pneg %p164
        %p290 = pneg %p161
        %s291 = sand.u32 %s151, 1
        %s292 = scalar_lea.sflag [#allocation12], %s291
        %s293 = sand.u32 %s151, 1
        %s294 = smul.addr %s293, 2
        %s295 = scalar_lea.vmem [#allocation11], %s294
        %v296 = vld [vmem:[%s252] sm:$0xff]
        %v297 = vld [vmem:[%s252 + $0x8] sm:$0xff]
        %v298 = vld [vmem:[%s252 + $0x10] sm:$0xff]
        %v299 = vld [vmem:[%s252 + $0x18] sm:$0xff]
        %v300 = vld [vmem:[%s252 + $0x20] sm:$0xff]
        %v301 = vld [vmem:[%s252 + $0x28] sm:$0xff]
        %v302 = vld [vmem:[%s252 + $0x30] sm:$0xff]
        %v303 = vld [vmem:[%s252 + $0x38] sm:$0xff]
        %v304 = vld [vmem:[%s252 + $0x40] sm:$0xff]
        %v305 = vld [vmem:[%s252 + $0x48] sm:$0xff]
        %v306 = vld [vmem:[%s252 + $0x50] sm:$0xff]
        %v307 = vld [vmem:[%s252 + $0x58] sm:$0xff]
        %v308 = vld [vmem:[%s252 + $0x60] sm:$0xff]
        %v309 = vld [vmem:[%s252 + $0x68] sm:$0xff]
        %v310 = vld [vmem:[%s252 + $0x70] sm:$0xff]
        %v311 = vld [vmem:[%s252 + $0x78] sm:$0xff]
        %v312 = vld [vmem:[%s252 + $0x80] sm:$0xff]
        %v313 = vld [vmem:[%s252 + $0x88] sm:$0xff]
        %v314 = vld [vmem:[%s252 + $0x90] sm:$0xff]
        %v315 = vld [vmem:[%s252 + $0x98] sm:$0xff]
        %v316 = vld [vmem:[%s252 + $0xa0] sm:$0xff]
        %v317 = vld [vmem:[%s252 + $0xa8] sm:$0xff]
        %v318 = vld [vmem:[%s252 + $0xb0] sm:$0xff]
        %v319 = vld [vmem:[%s252 + $0xb8] sm:$0xff]
        %v320 = vld [vmem:[%s252 + $0xc0] sm:$0xff]
        %v321 = vld [vmem:[%s252 + $0xc8] sm:$0xff]
        %v322 = vld [vmem:[%s252 + $0xd0] sm:$0xff]
        %v323 = vld [vmem:[%s252 + $0xd8] sm:$0xff]
        %v324 = vld [vmem:[%s252 + $0xe0] sm:$0xff]
        %v325 = vld [vmem:[%s252 + $0xe8] sm:$0xff]
        %v326 = vld [vmem:[%s252 + $0xf0] sm:$0xff]
        %v327 = vld [vmem:[%s252 + $0xf8] sm:$0xff]
        %v328 = vld [vmem:[%s252 + $0x100] sm:$0xff]
        %v329 = vld [vmem:[%s252 + $0x108] sm:$0xff]
        %v330 = vld [vmem:[%s252 + $0x110] sm:$0xff]
        %v331 = vld [vmem:[%s252 + $0x118] sm:$0xff]
        %v332 = vld [vmem:[#allocation5] sm:$0xf]
        %v333 = vld [vmem:[%s252 + $0x1] sm:$0xff]
        %v334 = vld [vmem:[%s252 + $0x9] sm:$0xff]
        %v335 = vld [vmem:[%s252 + $0x11] sm:$0xff]
        %v336 = vld [vmem:[%s252 + $0x19] sm:$0xff]
        %v337 = vld [vmem:[%s252 + $0x21] sm:$0xff]
        %v338 = vld [vmem:[%s252 + $0x29] sm:$0xff]
        %v339 = vld [vmem:[%s252 + $0x31] sm:$0xff]
        %v340 = vld [vmem:[%s252 + $0x39] sm:$0xff]
        %v341 = vld [vmem:[%s252 + $0x41] sm:$0xff]
        %v342 = vld [vmem:[%s252 + $0x49] sm:$0xff]
        %v343 = vld [vmem:[%s252 + $0x51] sm:$0xff]
        %v344 = vld [vmem:[%s252 + $0x59] sm:$0xff]
        %v345 = vld [vmem:[%s252 + $0x61] sm:$0xff]
        %v346 = vld [vmem:[%s252 + $0x69] sm:$0xff]
        %v347 = vld [vmem:[%s252 + $0x71] sm:$0xff]
        %v348 = vld [vmem:[%s252 + $0x79] sm:$0xff]
        %v349 = vld [vmem:[%s252 + $0x81] sm:$0xff]
        %v350 = vld [vmem:[%s252 + $0x89] sm:$0xff]
        %v351 = vld [vmem:[%s252 + $0x91] sm:$0xff]
        %v352 = vld [vmem:[%s252 + $0x99] sm:$0xff]
        %v353 = vld [vmem:[%s252 + $0xa1] sm:$0xff]
        %v354 = vld [vmem:[%s252 + $0xa9] sm:$0xff]
        %v355 = vld [vmem:[%s252 + $0xb1] sm:$0xff]
        %v356 = vld [vmem:[%s252 + $0xb9] sm:$0xff]
        %v357 = vld [vmem:[%s252 + $0xc1] sm:$0xff]
        %v358 = vld [vmem:[%s252 + $0xc9] sm:$0xff]
        %v359 = vld [vmem:[%s252 + $0xd1] sm:$0xff]
        %v360 = vld [vmem:[%s252 + $0xd9] sm:$0xff]
        %v361 = vld [vmem:[%s252 + $0xe1] sm:$0xff]
        %v362 = vld [vmem:[%s252 + $0xe9] sm:$0xff]
        %v363 = vld [vmem:[%s252 + $0xf1] sm:$0xff]
        %v364 = vld [vmem:[%s252 + $0xf9] sm:$0xff]
        %v365 = vld [vmem:[%s252 + $0x101] sm:$0xff]
        %v366 = vld [vmem:[%s252 + $0x109] sm:$0xff]
        %v367 = vld [vmem:[%s252 + $0x111] sm:$0xff]
        %v368 = vld [vmem:[%s252 + $0x119] sm:$0xff]
        %s369 = scalar_lea.vmem [#allocation5], 4
        %v370 = vld [vmem:[%s369] sm:$0xf]
        %vm371 = vcmask 31744
        %v373 = vsel %vm371, %v333, 0
        %v376 = vsel %vm371, %v334, 0
        %v379 = vsel %vm371, %v335, 0
        %v382 = vsel %vm371, %v336, 0
        %v385 = vsel %vm371, %v337, 0
        %v388 = vsel %vm371, %v338, 0
        %v391 = vsel %vm371, %v339, 0
        %v394 = vsel %vm371, %v340, 0
        %v397 = vsel %vm371, %v341, 0
        %v400 = vsel %vm371, %v342, 0
        %v403 = vsel %vm371, %v343, 0
        %v406 = vsel %vm371, %v344, 0
        %v409 = vsel %vm371, %v345, 0
        %v412 = vsel %vm371, %v346, 0
        %v415 = vsel %vm371, %v347, 0
        %v418 = vsel %vm371, %v348, 0
        %v421 = vsel %vm371, %v349, 0
        %v424 = vsel %vm371, %v350, 0
        %v427 = vsel %vm371, %v351, 0
        %v430 = vsel %vm371, %v352, 0
        %v433 = vsel %vm371, %v353, 0
        %v436 = vsel %vm371, %v354, 0
        %v439 = vsel %vm371, %v355, 0
        %v442 = vsel %vm371, %v356, 0
        %v445 = vsel %vm371, %v357, 0
        %v448 = vsel %vm371, %v358, 0
        %v451 = vsel %vm371, %v359, 0
        %v454 = vsel %vm371, %v360, 0
        %v457 = vsel %vm371, %v361, 0
        %v460 = vsel %vm371, %v362, 0
        %v463 = vsel %vm371, %v363, 0
        %v466 = vsel %vm371, %v364, 0
        %v469 = vsel %vm371, %v365, 0
        %v472 = vsel %vm371, %v366, 0
        %v475 = vsel %vm371, %v367, 0
        %v478 = vsel %vm371, %v368, 0
        %vm480 = vcmask 1043456
        %v482 = vsel %vm480, %v370, 0
        %484 = vmatprep.subr.mxu0 0.0
        %485 = vmatpush1.msra.mxu0 %v482
        %486 = vmatprep.subr.mxu0 0.0
        %487 = vmatpush1.msra.mxu0 0.0
        %488 = vmatprep.subr.mxu0 0.0
        %489 = vmatpush1.msra.mxu0 0.0
        %490 = vmatprep.subr.mxu0 0.0
        %491 = vmatpush1.msra.mxu0 0.0
        %492 = vmatprep.subr.mxu0 0.0
        %493 = vmatpush1.msra.mxu0 0.0
        %494 = vmatprep.subr.mxu0 0.0
        %495 = vmatpush1.msra.mxu0 0.0
        %496 = vmatprep.subr.mxu0 0.0
        %497 = vmatpush1.msra.mxu0 0.0
        %498 = vmatprep.subr.mxu0 0.0
        %499 = vmatpush1.msra.mxu0 0.0
        %500 = vmatprep.subr.mxu0 0.0
        %501 = vmatpush1.msra.mxu0 0.0
        %502 = vmatprep.subr.mxu0 0.0
        %503 = vmatpush1.msra.mxu0 0.0
        %504 = vmatprep.subr.mxu0 0.0
        %505 = vmatpush1.msra.mxu0 0.0
        %506 = vmatprep.subr.mxu0 0.0
        %507 = vmatpush1.msra.mxu0 0.0
        %508 = vmatprep.subr.mxu0 0.0
        %509 = vmatpush1.msra.mxu0 0.0
        %510 = vmatprep.subr.mxu0 0.0
        %511 = vmatpush1.msra.mxu0 0.0
        %512 = vmatprep.subr.mxu0 0.0
        %513 = vmatpush1.msra.mxu0 0.0
        %514 = vmatprep.subr.mxu0 0.0
        %515 = vmatpush1.msra.mxu0 0.0
        %516 = vmatprep.subr.mxu0 0.0
        %517 = vmatpush1.msra.mxu0 0.0
        %518 = vmatprep.subr.mxu0 0.0
        %519 = vmatpush1.msra.mxu0 0.0
        %520 = vmatprep.subr.mxu0 0.0
        %521 = vmatpush1.msra.mxu0 0.0
        %522 = vmatprep.subr.mxu0 0.0
        %523 = vmatpush1.msra.mxu0 0.0
        %524 = vmatprep.subr.mxu0 0.0
        %525 = vmatpush1.msra.mxu0 0.0
        %526 = vmatprep.subr.mxu0 0.0
        %527 = vmatpush1.msra.mxu0 0.0
        %528 = vmatprep.subr.mxu0 0.0
        %529 = vmatpush1.msra.mxu0 0.0
        %530 = vmatprep.subr.mxu0 0.0
        %531 = vmatpush1.msra.mxu0 0.0
        %532 = vmatprep.subr.mxu0 0.0
        %533 = vmatpush1.msra.mxu0 0.0
        %534 = vmatprep.subr.mxu0 0.0
        %535 = vmatpush1.msra.mxu0 0.0
        %536 = vmatprep.subr.mxu0 0.0
        %537 = vmatpush1.msra.mxu0 0.0
        %538 = vmatprep.subr.mxu0 0.0
        %539 = vmatpush1.msra.mxu0 0.0
        %540 = vmatprep.subr.mxu0 0.0
        %541 = vmatpush1.msra.mxu0 0.0
        %542 = vmatprep.subr.mxu0 0.0
        %543 = vmatpush1.msra.mxu0 0.0
        %544 = vmatprep.subr.mxu0 0.0
        %545 = vmatpush1.msra.mxu0 0.0
        %546 = vmatprep.subr.mxu0 0.0
        %547 = vmatpush1.msra.mxu0 0.0
        %548 = vmatprep.mubr.f32.mxu0 0.0
        %549 = vmatmul.mubr.f32.gmra.mrb[0].mxu0 %v373
        %v550 = vpop.f32.mrb[0].mxu0
        %v551 = vadd.f32 0.0, %v550
        %v552 = vpop.f32.mrb[0].mxu0
        %553 = vmatprep.mubr.f32.mxu0 0.0
        %554 = vmatmul.mubr.f32.gmra.mrb[0].mxu0 %v376
        %v555 = vpop.f32.mrb[0].mxu0
        %v556 = vadd.f32 0.0, %v555
        %v557 = vpop.f32.mrb[0].mxu0
        %558 = vmatprep.mubr.f32.mxu0 0.0
        %559 = vmatmul.mubr.f32.gmra.mrb[0].mxu0 %v379
        %v560 = vpop.f32.mrb[0].mxu0
        %v561 = vadd.f32 0.0, %v560
        %v562 = vpop.f32.mrb[0].mxu0
        %563 = vmatprep.mubr.f32.mxu0 0.0
        %564 = vmatmul.mubr.f32.gmra.mrb[0].mxu0 %v382
        %v565 = vpop.f32.mrb[0].mxu0
        %v566 = vadd.f32 0.0, %v565
        %v567 = vpop.f32.mrb[0].mxu0
        %568 = vmatprep.mubr.f32.mxu0 0.0
        %569 = vmatmul.mubr.f32.gmra.mrb[0].mxu0 %v385
        %v570 = vpop.f32.mrb[0].mxu0
        %v571 = vadd.f32 0.0, %v570
        %v572 = vpop.f32.mrb[0].mxu0
        %573 = vmatprep.mubr.f32.mxu0 0.0
        %574 = vmatmul.mubr.f32.gmra.mrb[0].mxu0 %v388
        %v575 = vpop.f32.mrb[0].mxu0
        %v576 = vadd.f32 0.0, %v575
        %v577 = vpop.f32.mrb[0].mxu0
        %578 = vmatprep.mubr.f32.mxu0 0.0
        %579 = vmatmul.mubr.f32.gmra.mrb[0].mxu0 %v391
        %v580 = vpop.f32.mrb[0].mxu0
        %v581 = vadd.f32 0.0, %v580
        %v582 = vpop.f32.mrb[0].mxu0
        %583 = vmatprep.mubr.f32.mxu0 0.0
        %584 = vmatmul.mubr.f32.gmra.mrb[0].mxu0 %v394
        %v585 = vpop.f32.mrb[0].mxu0
        %v586 = vadd.f32 0.0, %v585
        %v587 = vpop.f32.mrb[0].mxu0
        %588 = vmatprep.mubr.f32.mxu0 0.0
        %589 = vmatmul.mubr.f32.gmra.mrb[0].mxu0 %v397
        %v590 = vpop.f32.mrb[0].mxu0
        %v591 = vadd.f32 0.0, %v590
        %v592 = vpop.f32.mrb[0].mxu0
        %593 = vmatprep.mubr.f32.mxu0 0.0
        %594 = vmatmul.mubr.f32.gmra.mrb[0].mxu0 %v400
        %v595 = vpop.f32.mrb[0].mxu0
        %v596 = vadd.f32 0.0, %v595
        %v597 = vpop.f32.mrb[0].mxu0
        %598 = vmatprep.mubr.f32.mxu0 0.0
        %599 = vmatmul.mubr.f32.gmra.mrb[0].mxu0 %v403
        %v600 = vpop.f32.mrb[0].mxu0
        %v601 = vadd.f32 0.0, %v600
        %v602 = vpop.f32.mrb[0].mxu0
        %603 = vmatprep.mubr.f32.mxu0 0.0
        %604 = vmatmul.mubr.f32.gmra.mrb[0].mxu0 %v406
        %v605 = vpop.f32.mrb[0].mxu0
        %v606 = vadd.f32 0.0, %v605
        %v607 = vpop.f32.mrb[0].mxu0
        %608 = vmatprep.mubr.f32.mxu0 0.0
        %609 = vmatmul.mubr.f32.gmra.mrb[0].mxu0 %v409
        %v610 = vpop.f32.mrb[0].mxu0
        %v611 = vadd.f32 0.0, %v610
        %v612 = vpop.f32.mrb[0].mxu0
        %613 = vmatprep.mubr.f32.mxu0 0.0
        %614 = vmatmul.mubr.f32.gmra.mrb[0].mxu0 %v412
        %v615 = vpop.f32.mrb[0].mxu0
        %v616 = vadd.f32 0.0, %v615
        %v617 = vpop.f32.mrb[0].mxu0
        %618 = vmatprep.mubr.f32.mxu0 0.0
        %619 = vmatmul.mubr.f32.gmra.mrb[0].mxu0 %v415
        %v620 = vpop.f32.mrb[0].mxu0
        %v621 = vadd.f32 0.0, %v620
        %v622 = vpop.f32.mrb[0].mxu0
        %623 = vmatprep.mubr.f32.mxu0 0.0
        %624 = vmatmul.mubr.f32.gmra.mrb[0].mxu0 %v418
        %v625 = vpop.f32.mrb[0].mxu0
        %v626 = vadd.f32 0.0, %v625
        %v627 = vpop.f32.mrb[0].mxu0
        %628 = vmatprep.mubr.f32.mxu0 0.0
        %629 = vmatmul.mubr.f32.gmra.mrb[0].mxu0 %v421
        %v630 = vpop.f32.mrb[0].mxu0
        %v631 = vadd.f32 0.0, %v630
        %v632 = vpop.f32.mrb[0].mxu0
        %633 = vmatprep.mubr.f32.mxu0 0.0
        %634 = vmatmul.mubr.f32.gmra.mrb[0].mxu0 %v424
        %v635 = vpop.f32.mrb[0].mxu0
        %v636 = vadd.f32 0.0, %v635
        %v637 = vpop.f32.mrb[0].mxu0
        %638 = vmatprep.mubr.f32.mxu0 0.0
        %639 = vmatmul.mubr.f32.gmra.mrb[0].mxu0 %v427
        %v640 = vpop.f32.mrb[0].mxu0
        %v641 = vadd.f32 0.0, %v640
        %v642 = vpop.f32.mrb[0].mxu0
        %643 = vmatprep.mubr.f32.mxu0 0.0
        %644 = vmatmul.mubr.f32.gmra.mrb[0].mxu0 %v430
        %v645 = vpop.f32.mrb[0].mxu0
        %v646 = vadd.f32 0.0, %v645
        %v647 = vpop.f32.mrb[0].mxu0
        %648 = vmatprep.mubr.f32.mxu0 0.0
        %649 = vmatmul.mubr.f32.gmra.mrb[0].mxu0 %v433
        %v650 = vpop.f32.mrb[0].mxu0
        %v651 = vadd.f32 0.0, %v650
        %v652 = vpop.f32.mrb[0].mxu0
        %653 = vmatprep.mubr.f32.mxu0 0.0
        %654 = vmatmul.mubr.f32.gmra.mrb[0].mxu0 %v436
        %v655 = vpop.f32.mrb[0].mxu0
        %v656 = vadd.f32 0.0, %v655
        %v657 = vpop.f32.mrb[0].mxu0
        %658 = vmatprep.mubr.f32.mxu0 0.0
        %659 = vmatmul.mubr.f32.gmra.mrb[0].mxu0 %v439
        %v660 = vpop.f32.mrb[0].mxu0
        %v661 = vadd.f32 0.0, %v660
        %v662 = vpop.f32.mrb[0].mxu0
        %663 = vmatprep.mubr.f32.mxu0 0.0
        %664 = vmatmul.mubr.f32.gmra.mrb[0].mxu0 %v442
        %v665 = vpop.f32.mrb[0].mxu0
        %v666 = vadd.f32 0.0, %v665
        %v667 = vpop.f32.mrb[0].mxu0
        %668 = vmatprep.mubr.f32.mxu0 0.0
        %669 = vmatmul.mubr.f32.gmra.mrb[0].mxu0 %v445
        %v670 = vpop.f32.mrb[0].mxu0
        %v671 = vadd.f32 0.0, %v670
        %v672 = vpop.f32.mrb[0].mxu0
        %673 = vmatprep.mubr.f32.mxu0 0.0
        %674 = vmatmul.mubr.f32.gmra.mrb[0].mxu0 %v448
        %v675 = vpop.f32.mrb[0].mxu0
        %v676 = vadd.f32 0.0, %v675
        %v677 = vpop.f32.mrb[0].mxu0
        %678 = vmatprep.mubr.f32.mxu0 0.0
        %679 = vmatmul.mubr.f32.gmra.mrb[0].mxu0 %v451
        %v680 = vpop.f32.mrb[0].mxu0
        %v681 = vadd.f32 0.0, %v680
        %v682 = vpop.f32.mrb[0].mxu0
        %683 = vmatprep.mubr.f32.mxu0 0.0
        %684 = vmatmul.mubr.f32.gmra.mrb[0].mxu0 %v454
        %v685 = vpop.f32.mrb[0].mxu0
        %v686 = vadd.f32 0.0, %v685
        %v687 = vpop.f32.mrb[0].mxu0
        %688 = vmatprep.mubr.f32.mxu0 0.0
        %689 = vmatmul.mubr.f32.gmra.mrb[0].mxu0 %v457
        %v690 = vpop.f32.mrb[0].mxu0
        %v691 = vadd.f32 0.0, %v690
        %v692 = vpop.f32.mrb[0].mxu0
        %693 = vmatprep.mubr.f32.mxu0 0.0
        %694 = vmatmul.mubr.f32.gmra.mrb[0].mxu0 %v460
        %v695 = vpop.f32.mrb[0].mxu0
        %v696 = vadd.f32 0.0, %v695
        %v697 = vpop.f32.mrb[0].mxu0
        %698 = vmatprep.mubr.f32.mxu0 0.0
        %699 = vmatmul.mubr.f32.gmra.mrb[0].mxu0 %v463
        %v700 = vpop.f32.mrb[0].mxu0
        %v701 = vadd.f32 0.0, %v700
        %v702 = vpop.f32.mrb[0].mxu0
        %703 = vmatprep.mubr.f32.mxu0 0.0
        %704 = vmatmul.mubr.f32.gmra.mrb[0].mxu0 %v466
        %v705 = vpop.f32.mrb[0].mxu0
        %v706 = vadd.f32 0.0, %v705
        %v707 = vpop.f32.mrb[0].mxu0
        %708 = vmatprep.mubr.f32.mxu0 0.0
        %709 = vmatmul.mubr.f32.gmra.mrb[0].mxu0 %v469
        %v710 = vpop.f32.mrb[0].mxu0
        %v711 = vadd.f32 0.0, %v710
        %v712 = vpop.f32.mrb[0].mxu0
        %713 = vmatprep.mubr.f32.mxu0 0.0
        %714 = vmatmul.mubr.f32.gmra.mrb[0].mxu0 %v472
        %v715 = vpop.f32.mrb[0].mxu0
        %v716 = vadd.f32 0.0, %v715
        %v717 = vpop.f32.mrb[0].mxu0
        %718 = vmatprep.mubr.f32.mxu0 0.0
        %719 = vmatmul.mubr.f32.gmra.mrb[0].mxu0 %v475
        %v720 = vpop.f32.mrb[0].mxu0
        %v721 = vadd.f32 0.0, %v720
        %v722 = vpop.f32.mrb[0].mxu0
        %723 = vmatprep.mubr.f32.mxu0 0.0
        %724 = vmatmul.mubr.f32.gmra.mrb[0].mxu0 %v478
        %v725 = vpop.f32.mrb[0].mxu0
        %v726 = vadd.f32 0.0, %v725
        %v727 = vpop.f32.mrb[0].mxu0
        %728 = vdwg.mxu0
        %v730 = vsel %vm371, %v296, 0
        %v733 = vsel %vm371, %v297, 0
        %v736 = vsel %vm371, %v298, 0
        %v739 = vsel %vm371, %v299, 0
        %v742 = vsel %vm371, %v300, 0
        %v745 = vsel %vm371, %v301, 0
        %v748 = vsel %vm371, %v302, 0
        %v751 = vsel %vm371, %v303, 0
        %v754 = vsel %vm371, %v304, 0
        %v757 = vsel %vm371, %v305, 0
        %v760 = vsel %vm371, %v306, 0
        %v763 = vsel %vm371, %v307, 0
        %v766 = vsel %vm371, %v308, 0
        %v769 = vsel %vm371, %v309, 0
        %v772 = vsel %vm371, %v310, 0
        %v775 = vsel %vm371, %v311, 0
        %v778 = vsel %vm371, %v312, 0
        %v781 = vsel %vm371, %v313, 0
        %v784 = vsel %vm371, %v314, 0
        %v787 = vsel %vm371, %v315, 0
        %v790 = vsel %vm371, %v316, 0
        %v793 = vsel %vm371, %v317, 0
        %v796 = vsel %vm371, %v318, 0
        %v799 = vsel %vm371, %v319, 0
        %v802 = vsel %vm371, %v320, 0
        %v805 = vsel %vm371, %v321, 0
        %v808 = vsel %vm371, %v322, 0
        %v811 = vsel %vm371, %v323, 0
        %v814 = vsel %vm371, %v324, 0
        %v817 = vsel %vm371, %v325, 0
        %v820 = vsel %vm371, %v326, 0
        %v823 = vsel %vm371, %v327, 0
        %v826 = vsel %vm371, %v328, 0
        %v829 = vsel %vm371, %v329, 0
        %v832 = vsel %vm371, %v330, 0
        %v835 = vsel %vm371, %v331, 0
        %v838 = vsel %vm480, %v332, 0
        %840 = vmatprep.subr.mxu0 0.0
        %841 = vmatpush1.msra.mxu0 %v838
        %842 = vmatprep.subr.mxu0 0.0
        %843 = vmatpush1.msra.mxu0 0.0
        %844 = vmatprep.subr.mxu0 0.0
        %845 = vmatpush1.msra.mxu0 0.0
        %846 = vmatprep.subr.mxu0 0.0
        %847 = vmatpush1.msra.mxu0 0.0
        %848 = vmatprep.subr.mxu0 0.0
        %849 = vmatpush1.msra.mxu0 0.0
        %850 = vmatprep.subr.mxu0 0.0
        %851 = vmatpush1.msra.mxu0 0.0
        %852 = vmatprep.subr.mxu0 0.0
        %853 = vmatpush1.msra.mxu0 0.0
        %854 = vmatprep.subr.mxu0 0.0
        %855 = vmatpush1.msra.mxu0 0.0
        %856 = vmatprep.subr.mxu0 0.0
        %857 = vmatpush1.msra.mxu0 0.0
        %858 = vmatprep.subr.mxu0 0.0
        %859 = vmatpush1.msra.mxu0 0.0
        %860 = vmatprep.subr.mxu0 0.0
        %861 = vmatpush1.msra.mxu0 0.0
        %862 = vmatprep.subr.mxu0 0.0
        %863 = vmatpush1.msra.mxu0 0.0
        %864 = vmatprep.subr.mxu0 0.0
        %865 = vmatpush1.msra.mxu0 0.0
        %866 = vmatprep.subr.mxu0 0.0
        %867 = vmatpush1.msra.mxu0 0.0
        %868 = vmatprep.subr.mxu0 0.0
        %869 = vmatpush1.msra.mxu0 0.0
        %870 = vmatprep.subr.mxu0 0.0
        %871 = vmatpush1.msra.mxu0 0.0
        %872 = vmatprep.subr.mxu0 0.0
        %873 = vmatpush1.msra.mxu0 0.0
        %874 = vmatprep.subr.mxu0 0.0
        %875 = vmatpush1.msra.mxu0 0.0
        %876 = vmatprep.subr.mxu0 0.0
        %877 = vmatpush1.msra.mxu0 0.0
        %878 = vmatprep.subr.mxu0 0.0
        %879 = vmatpush1.msra.mxu0 0.0
        %880 = vmatprep.subr.mxu0 0.0
        %881 = vmatpush1.msra.mxu0 0.0
        %882 = vmatprep.subr.mxu0 0.0
        %883 = vmatpush1.msra.mxu0 0.0
        %884 = vmatprep.subr.mxu0 0.0
        %885 = vmatpush1.msra.mxu0 0.0
        %886 = vmatprep.subr.mxu0 0.0
        %887 = vmatpush1.msra.mxu0 0.0
        %888 = vmatprep.subr.mxu0 0.0
        %889 = vmatpush1.msra.mxu0 0.0
        %890 = vmatprep.subr.mxu0 0.0
        %891 = vmatpush1.msra.mxu0 0.0
        %892 = vmatprep.subr.mxu0 0.0
        %893 = vmatpush1.msra.mxu0 0.0
        %894 = vmatprep.subr.mxu0 0.0
        %895 = vmatpush1.msra.mxu0 0.0
        %896 = vmatprep.subr.mxu0 0.0
        %897 = vmatpush1.msra.mxu0 0.0
        %898 = vmatprep.subr.mxu0 0.0
        %899 = vmatpush1.msra.mxu0 0.0
        %900 = vmatprep.subr.mxu0 0.0
        %901 = vmatpush1.msra.mxu0 0.0
        %902 = vmatprep.subr.mxu0 0.0
        %903 = vmatpush1.msra.mxu0 0.0
        %904 = vmatprep.mubr.f32.mxu0 0.0
        %905 = vmatmul.mubr.f32.gmra.mrb[0].mxu0 %v730
        %v906 = vpop.f32.mrb[0].mxu0
        %v907 = vadd.f32 %v551, %v906
        %v908 = vpop.f32.mrb[0].mxu0
        %909 = vmatprep.mubr.f32.mxu0 0.0
        %910 = vmatmul.mubr.f32.gmra.mrb[0].mxu0 %v733
        %v911 = vpop.f32.mrb[0].mxu0
        %v912 = vadd.f32 %v556, %v911
        %v913 = vpop.f32.mrb[0].mxu0
        %914 = vmatprep.mubr.f32.mxu0 0.0
        %915 = vmatmul.mubr.f32.gmra.mrb[0].mxu0 %v736
        %v916 = vpop.f32.mrb[0].mxu0
        %v917 = vadd.f32 %v561, %v916
        %v918 = vpop.f32.mrb[0].mxu0
        %919 = vmatprep.mubr.f32.mxu0 0.0
        %920 = vmatmul.mubr.f32.gmra.mrb[0].mxu0 %v739
        %v921 = vpop.f32.mrb[0].mxu0
        %v922 = vadd.f32 %v566, %v921
        %v923 = vpop.f32.mrb[0].mxu0
        %924 = vmatprep.mubr.f32.mxu0 0.0
        %925 = vmatmul.mubr.f32.gmra.mrb[0].mxu0 %v742
        %v926 = vpop.f32.mrb[0].mxu0
        %v927 = vadd.f32 %v571, %v926
        %v928 = vpop.f32.mrb[0].mxu0
        %929 = vmatprep.mubr.f32.mxu0 0.0
        %930 = vmatmul.mubr.f32.gmra.mrb[0].mxu0 %v745
        %v931 = vpop.f32.mrb[0].mxu0
        %v932 = vadd.f32 %v576, %v931
        %v933 = vpop.f32.mrb[0].mxu0
        %934 = vmatprep.mubr.f32.mxu0 0.0
        %935 = vmatmul.mubr.f32.gmra.mrb[0].mxu0 %v748
        %v936 = vpop.f32.mrb[0].mxu0
        %v937 = vadd.f32 %v581, %v936
        %v938 = vpop.f32.mrb[0].mxu0
        %939 = vmatprep.mubr.f32.mxu0 0.0
        %940 = vmatmul.mubr.f32.gmra.mrb[0].mxu0 %v751
        %v941 = vpop.f32.mrb[0].mxu0
        %v942 = vadd.f32 %v586, %v941
        %v943 = vpop.f32.mrb[0].mxu0
        %944 = vmatprep.mubr.f32.mxu0 0.0
        %945 = vmatmul.mubr.f32.gmra.mrb[0].mxu0 %v754
        %v946 = vpop.f32.mrb[0].mxu0
        %v947 = vadd.f32 %v591, %v946
        %v948 = vpop.f32.mrb[0].mxu0
        %949 = vmatprep.mubr.f32.mxu0 0.0
        %950 = vmatmul.mubr.f32.gmra.mrb[0].mxu0 %v757
        %v951 = vpop.f32.mrb[0].mxu0
        %v952 = vadd.f32 %v596, %v951
        %v953 = vpop.f32.mrb[0].mxu0
        %954 = vmatprep.mubr.f32.mxu0 0.0
        %955 = vmatmul.mubr.f32.gmra.mrb[0].mxu0 %v760
        %v956 = vpop.f32.mrb[0].mxu0
        %v957 = vadd.f32 %v601, %v956
        %v958 = vpop.f32.mrb[0].mxu0
        %959 = vmatprep.mubr.f32.mxu0 0.0
        %960 = vmatmul.mubr.f32.gmra.mrb[0].mxu0 %v763
        %v961 = vpop.f32.mrb[0].mxu0
        %v962 = vadd.f32 %v606, %v961
        %v963 = vpop.f32.mrb[0].mxu0
        %964 = vmatprep.mubr.f32.mxu0 0.0
        %965 = vmatmul.mubr.f32.gmra.mrb[0].mxu0 %v766
        %v966 = vpop.f32.mrb[0].mxu0
        %v967 = vadd.f32 %v611, %v966
        %v968 = vpop.f32.mrb[0].mxu0
        %969 = vmatprep.mubr.f32.mxu0 0.0
        %970 = vmatmul.mubr.f32.gmra.mrb[0].mxu0 %v769
        %v971 = vpop.f32.mrb[0].mxu0
        %v972 = vadd.f32 %v616, %v971
        %v973 = vpop.f32.mrb[0].mxu0
        %974 = vmatprep.mubr.f32.mxu0 0.0
        %975 = vmatmul.mubr.f32.gmra.mrb[0].mxu0 %v772
        %v976 = vpop.f32.mrb[0].mxu0
        %v977 = vadd.f32 %v621, %v976
        %v978 = vpop.f32.mrb[0].mxu0
        %979 = vmatprep.mubr.f32.mxu0 0.0
        %980 = vmatmul.mubr.f32.gmra.mrb[0].mxu0 %v775
        %v981 = vpop.f32.mrb[0].mxu0
        %v982 = vadd.f32 %v626, %v981
        %v983 = vpop.f32.mrb[0].mxu0
        %984 = vmatprep.mubr.f32.mxu0 0.0
        %985 = vmatmul.mubr.f32.gmra.mrb[0].mxu0 %v778
        %v986 = vpop.f32.mrb[0].mxu0
        %v987 = vadd.f32 %v631, %v986
        %v988 = vpop.f32.mrb[0].mxu0
        %989 = vmatprep.mubr.f32.mxu0 0.0
        %990 = vmatmul.mubr.f32.gmra.mrb[0].mxu0 %v781
        %v991 = vpop.f32.mrb[0].mxu0
        %v992 = vadd.f32 %v636, %v991
        %v993 = vpop.f32.mrb[0].mxu0
        %994 = vmatprep.mubr.f32.mxu0 0.0
        %995 = vmatmul.mubr.f32.gmra.mrb[0].mxu0 %v784
        %v996 = vpop.f32.mrb[0].mxu0
        %v997 = vadd.f32 %v641, %v996
        %v998 = vpop.f32.mrb[0].mxu0
        %999 = vmatprep.mubr.f32.mxu0 0.0
        %1000 = vmatmul.mubr.f32.gmra.mrb[0].mxu0 %v787
        %v1001 = vpop.f32.mrb[0].mxu0
        %v1002 = vadd.f32 %v646, %v1001
        %v1003 = vpop.f32.mrb[0].mxu0
        %1004 = vmatprep.mubr.f32.mxu0 0.0
        %1005 = vmatmul.mubr.f32.gmra.mrb[0].mxu0 %v790
        %v1006 = vpop.f32.mrb[0].mxu0
        %v1007 = vadd.f32 %v651, %v1006
        %v1008 = vpop.f32.mrb[0].mxu0
        %1009 = vmatprep.mubr.f32.mxu0 0.0
        %1010 = vmatmul.mubr.f32.gmra.mrb[0].mxu0 %v793
        %v1011 = vpop.f32.mrb[0].mxu0
        %v1012 = vadd.f32 %v656, %v1011
        %v1013 = vpop.f32.mrb[0].mxu0
        %1014 = vmatprep.mubr.f32.mxu0 0.0
        %1015 = vmatmul.mubr.f32.gmra.mrb[0].mxu0 %v796
        %v1016 = vpop.f32.mrb[0].mxu0
        %v1017 = vadd.f32 %v661, %v1016
        %v1018 = vpop.f32.mrb[0].mxu0
        %1019 = vmatprep.mubr.f32.mxu0 0.0
        %1020 = vmatmul.mubr.f32.gmra.mrb[0].mxu0 %v799
        %v1021 = vpop.f32.mrb[0].mxu0
        %v1022 = vadd.f32 %v666, %v1021
        %v1023 = vpop.f32.mrb[0].mxu0
        %1024 = vmatprep.mubr.f32.mxu0 0.0
        %1025 = vmatmul.mubr.f32.gmra.mrb[0].mxu0 %v802
        %v1026 = vpop.f32.mrb[0].mxu0
        %v1027 = vadd.f32 %v671, %v1026
        %v1028 = vpop.f32.mrb[0].mxu0
        %1029 = vmatprep.mubr.f32.mxu0 0.0
        %1030 = vmatmul.mubr.f32.gmra.mrb[0].mxu0 %v805
        %v1031 = vpop.f32.mrb[0].mxu0
        %v1032 = vadd.f32 %v676, %v1031
        %v1033 = vpop.f32.mrb[0].mxu0
        %1034 = vmatprep.mubr.f32.mxu0 0.0
        %1035 = vmatmul.mubr.f32.gmra.mrb[0].mxu0 %v808
        %v1036 = vpop.f32.mrb[0].mxu0
        %v1037 = vadd.f32 %v681, %v1036
        %v1038 = vpop.f32.mrb[0].mxu0
        %1039 = vmatprep.mubr.f32.mxu0 0.0
        %1040 = vmatmul.mubr.f32.gmra.mrb[0].mxu0 %v811
        %v1041 = vpop.f32.mrb[0].mxu0
        %v1042 = vadd.f32 %v686, %v1041
        %v1043 = vpop.f32.mrb[0].mxu0
        %1044 = vmatprep.mubr.f32.mxu0 0.0
        %1045 = vmatmul.mubr.f32.gmra.mrb[0].mxu0 %v814
        %v1046 = vpop.f32.mrb[0].mxu0
        %v1047 = vadd.f32 %v691, %v1046
        %v1048 = vpop.f32.mrb[0].mxu0
        %1049 = vmatprep.mubr.f32.mxu0 0.0
        %1050 = vmatmul.mubr.f32.gmra.mrb[0].mxu0 %v817
        %v1051 = vpop.f32.mrb[0].mxu0
        %v1052 = vadd.f32 %v696, %v1051
        %v1053 = vpop.f32.mrb[0].mxu0
        %1054 = vmatprep.mubr.f32.mxu0 0.0
        %1055 = vmatmul.mubr.f32.gmra.mrb[0].mxu0 %v820
        %v1056 = vpop.f32.mrb[0].mxu0
        %v1057 = vadd.f32 %v701, %v1056
        %v1058 = vpop.f32.mrb[0].mxu0
        %1059 = vmatprep.mubr.f32.mxu0 0.0
        %1060 = vmatmul.mubr.f32.gmra.mrb[0].mxu0 %v823
        %v1061 = vpop.f32.mrb[0].mxu0
        %v1062 = vadd.f32 %v706, %v1061
        %v1063 = vpop.f32.mrb[0].mxu0
        %1064 = vmatprep.mubr.f32.mxu0 0.0
        %1065 = vmatmul.mubr.f32.gmra.mrb[0].mxu0 %v826
        %v1066 = vpop.f32.mrb[0].mxu0
        %v1067 = vadd.f32 %v711, %v1066
        %v1068 = vpop.f32.mrb[0].mxu0
        %1069 = vmatprep.mubr.f32.mxu0 0.0
        %1070 = vmatmul.mubr.f32.gmra.mrb[0].mxu0 %v829
        %v1071 = vpop.f32.mrb[0].mxu0
        %v1072 = vadd.f32 %v716, %v1071
        %v1073 = vpop.f32.mrb[0].mxu0
        %1074 = vmatprep.mubr.f32.mxu0 0.0
        %1075 = vmatmul.mubr.f32.gmra.mrb[0].mxu0 %v832
        %v1076 = vpop.f32.mrb[0].mxu0
        %v1077 = vadd.f32 %v721, %v1076
        %v1078 = vpop.f32.mrb[0].mxu0
        %1079 = vmatprep.mubr.f32.mxu0 0.0
        %1080 = vmatmul.mubr.f32.gmra.mrb[0].mxu0 %v835
        %v1081 = vpop.f32.mrb[0].mxu0
        %v1082 = vadd.f32 %v726, %v1081
        %v1083 = vpop.f32.mrb[0].mxu0
        %1084 = vdwg.mxu0
        %v1085 = vld [vmem:[%s252 + $0x2] sm:$0xff]
        %v1086 = vld [vmem:[%s252 + $0xa] sm:$0xff]
        %v1087 = vld [vmem:[%s252 + $0x12] sm:$0xff]
        %v1088 = vld [vmem:[%s252 + $0x1a] sm:$0xff]
        %v1089 = vld [vmem:[%s252 + $0x22] sm:$0xff]
        %v1090 = vld [vmem:[%s252 + $0x2a] sm:$0xff]
        %v1091 = vld [vmem:[%s252 + $0x32] sm:$0xff]
        %v1092 = vld [vmem:[%s252 + $0x3a] sm:$0xff]
        %v1093 = vld [vmem:[%s252 + $0x42] sm:$0xff]
        %v1094 = vld [vmem:[%s252 + $0x4a] sm:$0xff]
        %v1095 = vld [vmem:[%s252 + $0x52] sm:$0xff]
        %v1096 = vld [vmem:[%s252 + $0x5a] sm:$0xff]
        %v1097 = vld [vmem:[%s252 + $0x62] sm:$0xff]
        %v1098 = vld [vmem:[%s252 + $0x6a] sm:$0xff]
        %v1099 = vld [vmem:[%s252 + $0x72] sm:$0xff]
        %v1100 = vld [vmem:[%s252 + $0x7a] sm:$0xff]
        %v1101 = vld [vmem:[%s252 + $0x82] sm:$0xff]
        %v1102 = vld [vmem:[%s252 + $0x8a] sm:$0xff]
        %v1103 = vld [vmem:[%s252 + $0x92] sm:$0xff]
        %v1104 = vld [vmem:[%s252 + $0x9a] sm:$0xff]
        %v1105 = vld [vmem:[%s252 + $0xa2] sm:$0xff]
        %v1106 = vld [vmem:[%s252 + $0xaa] sm:$0xff]
        %v1107 = vld [vmem:[%s252 + $0xb2] sm:$0xff]
        %v1108 = vld [vmem:[%s252 + $0xba] sm:$0xff]
        %v1109 = vld [vmem:[%s252 + $0xc2] sm:$0xff]
        %v1110 = vld [vmem:[%s252 + $0xca] sm:$0xff]
        %v1111 = vld [vmem:[%s252 + $0xd2] sm:$0xff]
        %v1112 = vld [vmem:[%s252 + $0xda] sm:$0xff]
        %v1113 = vld [vmem:[%s252 + $0xe2] sm:$0xff]
        %v1114 = vld [vmem:[%s252 + $0xea] sm:$0xff]
        %v1115 = vld [vmem:[%s252 + $0xf2] sm:$0xff]
        %v1116 = vld [vmem:[%s252 + $0xfa] sm:$0xff]
        %v1117 = vld [vmem:[%s252 + $0x102] sm:$0xff]
        %v1118 = vld [vmem:[%s252 + $0x10a] sm:$0xff]
        %v1119 = vld [vmem:[%s252 + $0x112] sm:$0xff]
        %v1120 = vld [vmem:[%s252 + $0x11a] sm:$0xff]
        %s1121 = scalar_lea.vmem [#allocation5], 8
        %v1122 = vld [vmem:[%s1121] sm:$0xf]
        %v1124 = vsel %vm371, %v1085, 0
        %v1127 = vsel %vm371, %v1086, 0
        %v1130 = vsel %vm371, %v1087, 0
        %v1133 = vsel %vm371, %v1088, 0
        %v1136 = vsel %vm371, %v1089, 0
        %v1139 = vsel %vm371, %v1090, 0
        %v1142 = vsel %vm371, %v1091, 0
        %v1145 = vsel %vm371, %v1092, 0
        %v1148 = vsel %vm371, %v1093, 0
        %v1151 = vsel %vm371, %v1094, 0
        %v1154 = vsel %vm371, %v1095, 0
        %v1157 = vsel %vm371, %v1096, 0
        %v1160 = vsel %vm371, %v1097, 0
        %v1163 = vsel %vm371, %v1098, 0
        %v1166 = vsel %vm371, %v1099, 0
        %v1169 = vsel %vm371, %v1100, 0
        %v1172 = vsel %vm371, %v1101, 0
        %v1175 = vsel %vm371, %v1102, 0
        %v1178 = vsel %vm371, %v1103, 0
        %v1181 = vsel %vm371, %v1104, 0
        %v1184 = vsel %vm371, %v1105, 0
        %v1187 = vsel %vm371, %v1106, 0
        %v1190 = vsel %vm371, %v1107, 0
        %v1193 = vsel %vm371, %v1108, 0
        %v1196 = vsel %vm371, %v1109, 0
        %v1199 = vsel %vm371, %v1110, 0
        %v1202 = vsel %vm371, %v1111, 0
        %v1205 = vsel %vm371, %v1112, 0
        %v1208 = vsel %vm371, %v1113, 0
        %v1211 = vsel %vm371, %v1114, 0
        %v1214 = vsel %vm371, %v1115, 0
        %v1217 = vsel %vm371, %v1116, 0
        %v1220 = vsel %vm371, %v1117, 0
        %v1223 = vsel %vm371, %v1118, 0
        %v1226 = vsel %vm371, %v1119, 0
        %v1229 = vsel %vm371, %v1120, 0
        %v1232 = vsel %vm480, %v1122, 0
        %1234 = vmatprep.subr.mxu0 0.0
        %1235 = vmatpush1.msra.mxu0 %v1232
        %1236 = vmatprep.subr.mxu0 0.0
        %1237 = vmatpush1.msra.mxu0 0.0
        %1238 = vmatprep.subr.mxu0 0.0
        %1239 = vmatpush1.msra.mxu0 0.0
        %1240 = vmatprep.subr.mxu0 0.0
        %1241 = vmatpush1.msra.mxu0 0.0
        %1242 = vmatprep.subr.mxu0 0.0
        %1243 = vmatpush1.msra.mxu0 0.0
        %1244 = vmatprep.subr.mxu0 0.0
        %1245 = vmatpush1.msra.mxu0 0.0
        %1246 = vmatprep.subr.mxu0 0.0
        %1247 = vmatpush1.msra.mxu0 0.0
        %1248 = vmatprep.subr.mxu0 0.0
        %1249 = vmatpush1.msra.mxu0 0.0
        %1250 = vmatprep.subr.mxu0 0.0
        %1251 = vmatpush1.msra.mxu0 0.0
        %1252 = vmatprep.subr.mxu0 0.0
        %1253 = vmatpush1.msra.mxu0 0.0
        %1254 = vmatprep.subr.mxu0 0.0
        %1255 = vmatpush1.msra.mxu0 0.0
        %1256 = vmatprep.subr.mxu0 0.0
        %1257 = vmatpush1.msra.mxu0 0.0
        %1258 = vmatprep.subr.mxu0 0.0
        %1259 = vmatpush1.msra.mxu0 0.0
        %1260 = vmatprep.subr.mxu0 0.0
        %1261 = vmatpush1.msra.mxu0 0.0
        %1262 = vmatprep.subr.mxu0 0.0
        %1263 = vmatpush1.msra.mxu0 0.0
        %1264 = vmatprep.subr.mxu0 0.0
        %1265 = vmatpush1.msra.mxu0 0.0
        %1266 = vmatprep.subr.mxu0 0.0
        %1267 = vmatpush1.msra.mxu0 0.0
        %1268 = vmatprep.subr.mxu0 0.0
        %1269 = vmatpush1.msra.mxu0 0.0
        %1270 = vmatprep.subr.mxu0 0.0
        %1271 = vmatpush1.msra.mxu0 0.0
        %1272 = vmatprep.subr.mxu0 0.0
        %1273 = vmatpush1.msra.mxu0 0.0
        %1274 = vmatprep.subr.mxu0 0.0
        %1275 = vmatpush1.msra.mxu0 0.0
        %1276 = vmatprep.subr.mxu0 0.0
        %1277 = vmatpush1.msra.mxu0 0.0
        %1278 = vmatprep.subr.mxu0 0.0
        %1279 = vmatpush1.msra.mxu0 0.0
        %1280 = vmatprep.subr.mxu0 0.0
        %1281 = vmatpush1.msra.mxu0 0.0
        %1282 = vmatprep.subr.mxu0 0.0
        %1283 = vmatpush1.msra.mxu0 0.0
        %1284 = vmatprep.subr.mxu0 0.0
        %1285 = vmatpush1.msra.mxu0 0.0
        %1286 = vmatprep.subr.mxu0 0.0
        %1287 = vmatpush1.msra.mxu0 0.0
        %1288 = vmatprep.subr.mxu0 0.0
        %1289 = vmatpush1.msra.mxu0 0.0
        %1290 = vmatprep.subr.mxu0 0.0
        %1291 = vmatpush1.msra.mxu0 0.0
        %1292 = vmatprep.subr.mxu0 0.0
        %1293 = vmatpush1.msra.mxu0 0.0
        %1294 = vmatprep.subr.mxu0 0.0
        %1295 = vmatpush1.msra.mxu0 0.0
        %1296 = vmatprep.subr.mxu0 0.0
        %1297 = vmatpush1.msra.mxu0 0.0
        %1298 = vmatprep.mubr.f32.mxu0 0.0
        %1299 = vmatmul.mubr.f32.gmra.mrb[0].mxu0 %v1124
        %v1300 = vpop.f32.mrb[0].mxu0
        %v1301 = vadd.f32 0.0, %v1300
        %v1302 = vpop.f32.mrb[0].mxu0
        %1303 = vmatprep.mubr.f32.mxu0 0.0
        %1304 = vmatmul.mubr.f32.gmra.mrb[0].mxu0 %v1127
        %v1305 = vpop.f32.mrb[0].mxu0
        %v1306 = vadd.f32 0.0, %v1305
        %v1307 = vpop.f32.mrb[0].mxu0
        %1308 = vmatprep.mubr.f32.mxu0 0.0
        %1309 = vmatmul.mubr.f32.gmra.mrb[0].mxu0 %v1130
        %v1310 = vpop.f32.mrb[0].mxu0
        %v1311 = vadd.f32 0.0, %v1310
        %v1312 = vpop.f32.mrb[0].mxu0
        %1313 = vmatprep.mubr.f32.mxu0 0.0
        %1314 = vmatmul.mubr.f32.gmra.mrb[0].mxu0 %v1133
        %v1315 = vpop.f32.mrb[0].mxu0
        %v1316 = vadd.f32 0.0, %v1315
        %v1317 = vpop.f32.mrb[0].mxu0
        %1318 = vmatprep.mubr.f32.mxu0 0.0
        %1319 = vmatmul.mubr.f32.gmra.mrb[0].mxu0 %v1136
        %v1320 = vpop.f32.mrb[0].mxu0
        %v1321 = vadd.f32 0.0, %v1320
        %v1322 = vpop.f32.mrb[0].mxu0
        %1323 = vmatprep.mubr.f32.mxu0 0.0
        %1324 = vmatmul.mubr.f32.gmra.mrb[0].mxu0 %v1139
        %v1325 = vpop.f32.mrb[0].mxu0
        %v1326 = vadd.f32 0.0, %v1325
        %v1327 = vpop.f32.mrb[0].mxu0
        %1328 = vmatprep.mubr.f32.mxu0 0.0
        %1329 = vmatmul.mubr.f32.gmra.mrb[0].mxu0 %v1142
        %v1330 = vpop.f32.mrb[0].mxu0
        %v1331 = vadd.f32 0.0, %v1330
        %v1332 = vpop.f32.mrb[0].mxu0
        %1333 = vmatprep.mubr.f32.mxu0 0.0
        %1334 = vmatmul.mubr.f32.gmra.mrb[0].mxu0 %v1145
        %v1335 = vpop.f32.mrb[0].mxu0
        %v1336 = vadd.f32 0.0, %v1335
        %v1337 = vpop.f32.mrb[0].mxu0
        %1338 = vmatprep.mubr.f32.mxu0 0.0
        %1339 = vmatmul.mubr.f32.gmra.mrb[0].mxu0 %v1148
        %v1340 = vpop.f32.mrb[0].mxu0
        %v1341 = vadd.f32 0.0, %v1340
        %v1342 = vpop.f32.mrb[0].mxu0
        %1343 = vmatprep.mubr.f32.mxu0 0.0
        %1344 = vmatmul.mubr.f32.gmra.mrb[0].mxu0 %v1151
        %v1345 = vpop.f32.mrb[0].mxu0
        %v1346 = vadd.f32 0.0, %v1345
        %v1347 = vpop.f32.mrb[0].mxu0
        %1348 = vmatprep.mubr.f32.mxu0 0.0
        %1349 = vmatmul.mubr.f32.gmra.mrb[0].mxu0 %v1154
        %v1350 = vpop.f32.mrb[0].mxu0
        %v1351 = vadd.f32 0.0, %v1350
        %v1352 = vpop.f32.mrb[0].mxu0
        %1353 = vmatprep.mubr.f32.mxu0 0.0
        %1354 = vmatmul.mubr.f32.gmra.mrb[0].mxu0 %v1157
        %v1355 = vpop.f32.mrb[0].mxu0
        %v1356 = vadd.f32 0.0, %v1355
        %v1357 = vpop.f32.mrb[0].mxu0
        %1358 = vmatprep.mubr.f32.mxu0 0.0
        %1359 = vmatmul.mubr.f32.gmra.mrb[0].mxu0 %v1160
        %v1360 = vpop.f32.mrb[0].mxu0
        %v1361 = vadd.f32 0.0, %v1360
        %v1362 = vpop.f32.mrb[0].mxu0
        %1363 = vmatprep.mubr.f32.mxu0 0.0
        %1364 = vmatmul.mubr.f32.gmra.mrb[0].mxu0 %v1163
        %v1365 = vpop.f32.mrb[0].mxu0
        %v1366 = vadd.f32 0.0, %v1365
        %v1367 = vpop.f32.mrb[0].mxu0
        %1368 = vmatprep.mubr.f32.mxu0 0.0
        %1369 = vmatmul.mubr.f32.gmra.mrb[0].mxu0 %v1166
        %v1370 = vpop.f32.mrb[0].mxu0
        %v1371 = vadd.f32 0.0, %v1370
        %v1372 = vpop.f32.mrb[0].mxu0
        %1373 = vmatprep.mubr.f32.mxu0 0.0
        %1374 = vmatmul.mubr.f32.gmra.mrb[0].mxu0 %v1169
        %v1375 = vpop.f32.mrb[0].mxu0
        %v1376 = vadd.f32 0.0, %v1375
        %v1377 = vpop.f32.mrb[0].mxu0
        %1378 = vmatprep.mubr.f32.mxu0 0.0
        %1379 = vmatmul.mubr.f32.gmra.mrb[0].mxu0 %v1172
        %v1380 = vpop.f32.mrb[0].mxu0
        %v1381 = vadd.f32 0.0, %v1380
        %v1382 = vpop.f32.mrb[0].mxu0
        %1383 = vmatprep.mubr.f32.mxu0 0.0
        %1384 = vmatmul.mubr.f32.gmra.mrb[0].mxu0 %v1175
        %v1385 = vpop.f32.mrb[0].mxu0
        %v1386 = vadd.f32 0.0, %v1385
        %v1387 = vpop.f32.mrb[0].mxu0
        %1388 = vmatprep.mubr.f32.mxu0 0.0
        %1389 = vmatmul.mubr.f32.gmra.mrb[0].mxu0 %v1178
        %v1390 = vpop.f32.mrb[0].mxu0
        %v1391 = vadd.f32 0.0, %v1390
        %v1392 = vpop.f32.mrb[0].mxu0
        %1393 = vmatprep.mubr.f32.mxu0 0.0
        %1394 = vmatmul.mubr.f32.gmra.mrb[0].mxu0 %v1181
        %v1395 = vpop.f32.mrb[0].mxu0
        %v1396 = vadd.f32 0.0, %v1395
        %v1397 = vpop.f32.mrb[0].mxu0
        %1398 = vmatprep.mubr.f32.mxu0 0.0
        %1399 = vmatmul.mubr.f32.gmra.mrb[0].mxu0 %v1184
        %v1400 = vpop.f32.mrb[0].mxu0
        %v1401 = vadd.f32 0.0, %v1400
        %v1402 = vpop.f32.mrb[0].mxu0
        %1403 = vmatprep.mubr.f32.mxu0 0.0
        %1404 = vmatmul.mubr.f32.gmra.mrb[0].mxu0 %v1187
        %v1405 = vpop.f32.mrb[0].mxu0
        %v1406 = vadd.f32 0.0, %v1405
        %v1407 = vpop.f32.mrb[0].mxu0
        %1408 = vmatprep.mubr.f32.mxu0 0.0
        %1409 = vmatmul.mubr.f32.gmra.mrb[0].mxu0 %v1190
        %v1410 = vpop.f32.mrb[0].mxu0
        %v1411 = vadd.f32 0.0, %v1410
        %v1412 = vpop.f32.mrb[0].mxu0
        %1413 = vmatprep.mubr.f32.mxu0 0.0
        %1414 = vmatmul.mubr.f32.gmra.mrb[0].mxu0 %v1193
        %v1415 = vpop.f32.mrb[0].mxu0
        %v1416 = vadd.f32 0.0, %v1415
        %v1417 = vpop.f32.mrb[0].mxu0
        %1418 = vmatprep.mubr.f32.mxu0 0.0
        %1419 = vmatmul.mubr.f32.gmra.mrb[0].mxu0 %v1196
        %v1420 = vpop.f32.mrb[0].mxu0
        %v1421 = vadd.f32 0.0, %v1420
        %v1422 = vpop.f32.mrb[0].mxu0
        %1423 = vmatprep.mubr.f32.mxu0 0.0
        %1424 = vmatmul.mubr.f32.gmra.mrb[0].mxu0 %v1199
        %v1425 = vpop.f32.mrb[0].mxu0
        %v1426 = vadd.f32 0.0, %v1425
        %v1427 = vpop.f32.mrb[0].mxu0
        %1428 = vmatprep.mubr.f32.mxu0 0.0
        %1429 = vmatmul.mubr.f32.gmra.mrb[0].mxu0 %v1202
        %v1430 = vpop.f32.mrb[0].mxu0
        %v1431 = vadd.f32 0.0, %v1430
        %v1432 = vpop.f32.mrb[0].mxu0
        %1433 = vmatprep.mubr.f32.mxu0 0.0
        %1434 = vmatmul.mubr.f32.gmra.mrb[0].mxu0 %v1205
        %v1435 = vpop.f32.mrb[0].mxu0
        %v1436 = vadd.f32 0.0, %v1435
        %v1437 = vpop.f32.mrb[0].mxu0
        %1438 = vmatprep.mubr.f32.mxu0 0.0
        %1439 = vmatmul.mubr.f32.gmra.mrb[0].mxu0 %v1208
        %v1440 = vpop.f32.mrb[0].mxu0
        %v1441 = vadd.f32 0.0, %v1440
        %v1442 = vpop.f32.mrb[0].mxu0
        %1443 = vmatprep.mubr.f32.mxu0 0.0
        %1444 = vmatmul.mubr.f32.gmra.mrb[0].mxu0 %v1211
        %v1445 = vpop.f32.mrb[0].mxu0
        %v1446 = vadd.f32 0.0, %v1445
        %v1447 = vpop.f32.mrb[0].mxu0
        %1448 = vmatprep.mubr.f32.mxu0 0.0
        %1449 = vmatmul.mubr.f32.gmra.mrb[0].mxu0 %v1214
        %v1450 = vpop.f32.mrb[0].mxu0
        %v1451 = vadd.f32 0.0, %v1450
        %v1452 = vpop.f32.mrb[0].mxu0
        %1453 = vmatprep.mubr.f32.mxu0 0.0
        %1454 = vmatmul.mubr.f32.gmra.mrb[0].mxu0 %v1217
        %v1455 = vpop.f32.mrb[0].mxu0
        %v1456 = vadd.f32 0.0, %v1455
        %v1457 = vpop.f32.mrb[0].mxu0
        %1458 = vmatprep.mubr.f32.mxu0 0.0
        %1459 = vmatmul.mubr.f32.gmra.mrb[0].mxu0 %v1220
        %v1460 = vpop.f32.mrb[0].mxu0
        %v1461 = vadd.f32 0.0, %v1460
        %v1462 = vpop.f32.mrb[0].mxu0
        %1463 = vmatprep.mubr.f32.mxu0 0.0
        %1464 = vmatmul.mubr.f32.gmra.mrb[0].mxu0 %v1223
        %v1465 = vpop.f32.mrb[0].mxu0
        %v1466 = vadd.f32 0.0, %v1465
        %v1467 = vpop.f32.mrb[0].mxu0
        %1468 = vmatprep.mubr.f32.mxu0 0.0
        %1469 = vmatmul.mubr.f32.gmra.mrb[0].mxu0 %v1226
        %v1470 = vpop.f32.mrb[0].mxu0
        %v1471 = vadd.f32 0.0, %v1470
        %v1472 = vpop.f32.mrb[0].mxu0
        %1473 = vmatprep.mubr.f32.mxu0 0.0
        %1474 = vmatmul.mubr.f32.gmra.mrb[0].mxu0 %v1229
        %v1475 = vpop.f32.mrb[0].mxu0
        %v1476 = vadd.f32 0.0, %v1475
        %v1477 = vpop.f32.mrb[0].mxu0
        %1478 = vdwg.mxu0
        %v1479 = vadd.f32 %v907, %v1301
        %v1480 = vadd.f32 %v912, %v1306
        %v1481 = vadd.f32 %v917, %v1311
        %v1482 = vadd.f32 %v922, %v1316
        %v1483 = vadd.f32 %v927, %v1321
        %v1484 = vadd.f32 %v932, %v1326
        %v1485 = vadd.f32 %v937, %v1331
        %v1486 = vadd.f32 %v942, %v1336
        %v1487 = vadd.f32 %v947, %v1341
        %v1488 = vadd.f32 %v952, %v1346
        %v1489 = vadd.f32 %v957, %v1351
        %v1490 = vadd.f32 %v962, %v1356
        %v1491 = vadd.f32 %v967, %v1361
        %v1492 = vadd.f32 %v972, %v1366
        %v1493 = vadd.f32 %v977, %v1371
        %v1494 = vadd.f32 %v982, %v1376
        %v1495 = vadd.f32 %v987, %v1381
        %v1496 = vadd.f32 %v992, %v1386
        %v1497 = vadd.f32 %v997, %v1391
        %v1498 = vadd.f32 %v1002, %v1396
        %v1499 = vadd.f32 %v1007, %v1401
        %v1500 = vadd.f32 %v1012, %v1406
        %v1501 = vadd.f32 %v1017, %v1411
        %v1502 = vadd.f32 %v1022, %v1416
        %v1503 = vadd.f32 %v1027, %v1421
        %v1504 = vadd.f32 %v1032, %v1426
        %v1505 = vadd.f32 %v1037, %v1431
        %v1506 = vadd.f32 %v1042, %v1436
        %v1507 = vadd.f32 %v1047, %v1441
        %v1508 = vadd.f32 %v1052, %v1446
        %v1509 = vadd.f32 %v1057, %v1451
        %v1510 = vadd.f32 %v1062, %v1456
        %v1511 = vadd.f32 %v1067, %v1461
        %v1512 = vadd.f32 %v1072, %v1466
        %v1513 = vadd.f32 %v1077, %v1471
        %v1514 = vadd.f32 %v1082, %v1476
        %v1515 = vld [vmem:[%s252 + $0x12] sm:$0xff]
        %v1516 = vld [vmem:[%s252 + $0x1a] sm:$0xff]
        %v1517 = vld [vmem:[%s252 + $0x22] sm:$0xff]
        %v1518 = vld [vmem:[%s252 + $0x2a] sm:$0xff]
        %v1519 = vld [vmem:[%s252 + $0x32] sm:$0xff]
        %v1520 = vld [vmem:[%s252 + $0x3a] sm:$0xff]
        %v1521 = vld [vmem:[%s252 + $0x42] sm:$0xff]
        %v1522 = vld [vmem:[%s252 + $0x4a] sm:$0xff]
        %v1523 = vld [vmem:[%s252 + $0x52] sm:$0xff]
        %v1524 = vld [vmem:[%s252 + $0x5a] sm:$0xff]
        %v1525 = vld [vmem:[%s252 + $0x62] sm:$0xff]
        %v1526 = vld [vmem:[%s252 + $0x6a] sm:$0xff]
        %v1527 = vld [vmem:[%s252 + $0x72] sm:$0xff]
        %v1528 = vld [vmem:[%s252 + $0x7a] sm:$0xff]
        %v1529 = vld [vmem:[%s252 + $0x82] sm:$0xff]
        %v1530 = vld [vmem:[%s252 + $0x8a] sm:$0xff]
        %v1531 = vld [vmem:[%s252 + $0x92] sm:$0xff]
        %v1532 = vld [vmem:[%s252 + $0x9a] sm:$0xff]
        %v1533 = vld [vmem:[%s252 + $0xa2] sm:$0xff]
        %v1534 = vld [vmem:[%s252 + $0xaa] sm:$0xff]
        %v1535 = vld [vmem:[%s252 + $0xb2] sm:$0xff]
        %v1536 = vld [vmem:[%s252 + $0xba] sm:$0xff]
        %v1537 = vld [vmem:[%s252 + $0xc2] sm:$0xff]
        %v1538 = vld [vmem:[%s252 + $0xca] sm:$0xff]
        %v1539 = vld [vmem:[%s252 + $0xd2] sm:$0xff]
        %v1540 = vld [vmem:[%s252 + $0xda] sm:$0xff]
        %v1541 = vld [vmem:[%s252 + $0xe2] sm:$0xff]
        %v1542 = vld [vmem:[%s252 + $0xea] sm:$0xff]
        %v1543 = vld [vmem:[%s252 + $0xf2] sm:$0xff]
        %v1544 = vld [vmem:[%s252 + $0xfa] sm:$0xff]
        %v1545 = vld [vmem:[%s252 + $0x102] sm:$0xff]
        %v1546 = vld [vmem:[%s252 + $0x10a] sm:$0xff]
        %v1547 = vld [vmem:[%s252 + $0x112] sm:$0xff]
        %v1548 = vld [vmem:[%s252 + $0x11a] sm:$0xff]
        %v1549 = vld [vmem:[%s252 + $0x122] sm:$0xff]
        %v1550 = vld [vmem:[%s252 + $0x12a] sm:$0xff]
        %s1551 = scalar_lea.vmem [#allocation5], 12
        %v1552 = vld [vmem:[%s1551] sm:$0xf]
        %v1554 = vsel %vm371, %v1515, 0
        %v1557 = vsel %vm371, %v1516, 0
        %v1560 = vsel %vm371, %v1517, 0
        %v1563 = vsel %vm371, %v1518, 0
        %v1566 = vsel %vm371, %v1519, 0
        %v1569 = vsel %vm371, %v1520, 0
        %v1572 = vsel %vm371, %v1521, 0
        %v1575 = vsel %vm371, %v1522, 0
        %v1578 = vsel %vm371, %v1523, 0
        %v1581 = vsel %vm371, %v1524, 0
        %v1584 = vsel %vm371, %v1525, 0
        %v1587 = vsel %vm371, %v1526, 0
        %v1590 = vsel %vm371, %v1527, 0
        %v1593 = vsel %vm371, %v1528, 0
        %v1596 = vsel %vm371, %v1529, 0
        %v1599 = vsel %vm371, %v1530, 0
        %v1602 = vsel %vm371, %v1531, 0
        %v1605 = vsel %vm371, %v1532, 0
        %v1608 = vsel %vm371, %v1533, 0
        %v1611 = vsel %vm371, %v1534, 0
        %v1614 = vsel %vm371, %v1535, 0
        %v1617 = vsel %vm371, %v1536, 0
        %v1620 = vsel %vm371, %v1537, 0
        %v1623 = vsel %vm371, %v1538, 0
        %v1626 = vsel %vm371, %v1539, 0
        %v1629 = vsel %vm371, %v1540, 0
        %v1632 = vsel %vm371, %v1541, 0
        %v1635 = vsel %vm371, %v1542, 0
        %v1638 = vsel %vm371, %v1543, 0
        %v1641 = vsel %vm371, %v1544, 0
        %v1644 = vsel %vm371, %v1545, 0
        %v1647 = vsel %vm371, %v1546, 0
        %v1650 = vsel %vm371, %v1547, 0
        %v1653 = vsel %vm371, %v1548, 0
        %v1656 = vsel %vm371, %v1549, 0
        %v1659 = vsel %vm371, %v1550, 0
        %v1662 = vsel %vm480, %v1552, 0
        %1664 = vmatprep.subr.mxu0 0.0
        %1665 = vmatpush1.msra.mxu0 %v1662
        %1666 = vmatprep.subr.mxu0 0.0
        %1667 = vmatpush1.msra.mxu0 0.0
        %1668 = vmatprep.subr.mxu0 0.0
        %1669 = vmatpush1.msra.mxu0 0.0
        %1670 = vmatprep.subr.mxu0 0.0
        %1671 = vmatpush1.msra.mxu0 0.0
        %1672 = vmatprep.subr.mxu0 0.0
        %1673 = vmatpush1.msra.mxu0 0.0
        %1674 = vmatprep.subr.mxu0 0.0
        %1675 = vmatpush1.msra.mxu0 0.0
        %1676 = vmatprep.subr.mxu0 0.0
        %1677 = vmatpush1.msra.mxu0 0.0
        %1678 = vmatprep.subr.mxu0 0.0
        %1679 = vmatpush1.msra.mxu0 0.0
        %1680 = vmatprep.subr.mxu0 0.0
        %1681 = vmatpush1.msra.mxu0 0.0
        %1682 = vmatprep.subr.mxu0 0.0
        %1683 = vmatpush1.msra.mxu0 0.0
        %1684 = vmatprep.subr.mxu0 0.0
        %1685 = vmatpush1.msra.mxu0 0.0
        %1686 = vmatprep.subr.mxu0 0.0
        %1687 = vmatpush1.msra.mxu0 0.0
        %1688 = vmatprep.subr.mxu0 0.0
        %1689 = vmatpush1.msra.mxu0 0.0
        %1690 = vmatprep.subr.mxu0 0.0
        %1691 = vmatpush1.msra.mxu0 0.0
        %1692 = vmatprep.subr.mxu0 0.0
        %1693 = vmatpush1.msra.mxu0 0.0
        %1694 = vmatprep.subr.mxu0 0.0
        %1695 = vmatpush1.msra.mxu0 0.0
        %1696 = vmatprep.subr.mxu0 0.0
        %1697 = vmatpush1.msra.mxu0 0.0
        %1698 = vmatprep.subr.mxu0 0.0
        %1699 = vmatpush1.msra.mxu0 0.0
        %1700 = vmatprep.subr.mxu0 0.0
        %1701 = vmatpush1.msra.mxu0 0.0
        %1702 = vmatprep.subr.mxu0 0.0
        %1703 = vmatpush1.msra.mxu0 0.0
        %1704 = vmatprep.subr.mxu0 0.0
        %1705 = vmatpush1.msra.mxu0 0.0
        %1706 = vmatprep.subr.mxu0 0.0
        %1707 = vmatpush1.msra.mxu0 0.0
        %1708 = vmatprep.subr.mxu0 0.0
        %1709 = vmatpush1.msra.mxu0 0.0
        %1710 = vmatprep.subr.mxu0 0.0
        %1711 = vmatpush1.msra.mxu0 0.0
        %1712 = vmatprep.subr.mxu0 0.0
        %1713 = vmatpush1.msra.mxu0 0.0
        %1714 = vmatprep.subr.mxu0 0.0
        %1715 = vmatpush1.msra.mxu0 0.0
        %1716 = vmatprep.subr.mxu0 0.0
        %1717 = vmatpush1.msra.mxu0 0.0
        %1718 = vmatprep.subr.mxu0 0.0
        %1719 = vmatpush1.msra.mxu0 0.0
        %1720 = vmatprep.subr.mxu0 0.0
        %1721 = vmatpush1.msra.mxu0 0.0
        %1722 = vmatprep.subr.mxu0 0.0
        %1723 = vmatpush1.msra.mxu0 0.0
        %1724 = vmatprep.subr.mxu0 0.0
        %1725 = vmatpush1.msra.mxu0 0.0
        %1726 = vmatprep.subr.mxu0 0.0
        %1727 = vmatpush1.msra.mxu0 0.0
        %1728 = vmatprep.mubr.f32.mxu0 0.0
        %1729 = vmatmul.mubr.f32.gmra.mrb[0].mxu0 %v1554
        %v1730 = vpop.f32.mrb[0].mxu0
        %v1731 = vadd.f32 0.0, %v1730
        %v1732 = vpop.f32.mrb[0].mxu0
        %1733 = vmatprep.mubr.f32.mxu0 0.0
        %1734 = vmatmul.mubr.f32.gmra.mrb[0].mxu0 %v1557
        %v1735 = vpop.f32.mrb[0].mxu0
        %v1736 = vadd.f32 0.0, %v1735
        %v1737 = vpop.f32.mrb[0].mxu0
        %1738 = vmatprep.mubr.f32.mxu0 0.0
        %1739 = vmatmul.mubr.f32.gmra.mrb[0].mxu0 %v1560
        %v1740 = vpop.f32.mrb[0].mxu0
        %v1741 = vadd.f32 0.0, %v1740
        %v1742 = vpop.f32.mrb[0].mxu0
        %1743 = vmatprep.mubr.f32.mxu0 0.0
        %1744 = vmatmul.mubr.f32.gmra.mrb[0].mxu0 %v1563
        %v1745 = vpop.f32.mrb[0].mxu0
        %v1746 = vadd.f32 0.0, %v1745
        %v1747 = vpop.f32.mrb[0].mxu0
        %1748 = vmatprep.mubr.f32.mxu0 0.0
        %1749 = vmatmul.mubr.f32.gmra.mrb[0].mxu0 %v1566
        %v1750 = vpop.f32.mrb[0].mxu0
        %v1751 = vadd.f32 0.0, %v1750
        %v1752 = vpop.f32.mrb[0].mxu0
        %1753 = vmatprep.mubr.f32.mxu0 0.0
        %1754 = vmatmul.mubr.f32.gmra.mrb[0].mxu0 %v1569
        %v1755 = vpop.f32.mrb[0].mxu0
        %v1756 = vadd.f32 0.0, %v1755
        %v1757 = vpop.f32.mrb[0].mxu0
        %1758 = vmatprep.mubr.f32.mxu0 0.0
        %1759 = vmatmul.mubr.f32.gmra.mrb[0].mxu0 %v1572
        %v1760 = vpop.f32.mrb[0].mxu0
        %v1761 = vadd.f32 0.0, %v1760
        %v1762 = vpop.f32.mrb[0].mxu0
        %1763 = vmatprep.mubr.f32.mxu0 0.0
        %1764 = vmatmul.mubr.f32.gmra.mrb[0].mxu0 %v1575
        %v1765 = vpop.f32.mrb[0].mxu0
        %v1766 = vadd.f32 0.0, %v1765
        %v1767 = vpop.f32.mrb[0].mxu0
        %1768 = vmatprep.mubr.f32.mxu0 0.0
        %1769 = vmatmul.mubr.f32.gmra.mrb[0].mxu0 %v1578
        %v1770 = vpop.f32.mrb[0].mxu0
        %v1771 = vadd.f32 0.0, %v1770
        %v1772 = vpop.f32.mrb[0].mxu0
        %1773 = vmatprep.mubr.f32.mxu0 0.0
        %1774 = vmatmul.mubr.f32.gmra.mrb[0].mxu0 %v1581
        %v1775 = vpop.f32.mrb[0].mxu0
        %v1776 = vadd.f32 0.0, %v1775
        %v1777 = vpop.f32.mrb[0].mxu0
        %1778 = vmatprep.mubr.f32.mxu0 0.0
        %1779 = vmatmul.mubr.f32.gmra.mrb[0].mxu0 %v1584
        %v1780 = vpop.f32.mrb[0].mxu0
        %v1781 = vadd.f32 0.0, %v1780
        %v1782 = vpop.f32.mrb[0].mxu0
        %1783 = vmatprep.mubr.f32.mxu0 0.0
        %1784 = vmatmul.mubr.f32.gmra.mrb[0].mxu0 %v1587
        %v1785 = vpop.f32.mrb[0].mxu0
        %v1786 = vadd.f32 0.0, %v1785
        %v1787 = vpop.f32.mrb[0].mxu0
        %1788 = vmatprep.mubr.f32.mxu0 0.0
        %1789 = vmatmul.mubr.f32.gmra.mrb[0].mxu0 %v1590
        %v1790 = vpop.f32.mrb[0].mxu0
        %v1791 = vadd.f32 0.0, %v1790
        %v1792 = vpop.f32.mrb[0].mxu0
        %1793 = vmatprep.mubr.f32.mxu0 0.0
        %1794 = vmatmul.mubr.f32.gmra.mrb[0].mxu0 %v1593
        %v1795 = vpop.f32.mrb[0].mxu0
        %v1796 = vadd.f32 0.0, %v1795
        %v1797 = vpop.f32.mrb[0].mxu0
        %1798 = vmatprep.mubr.f32.mxu0 0.0
        %1799 = vmatmul.mubr.f32.gmra.mrb[0].mxu0 %v1596
        %v1800 = vpop.f32.mrb[0].mxu0
        %v1801 = vadd.f32 0.0, %v1800
        %v1802 = vpop.f32.mrb[0].mxu0
        %1803 = vmatprep.mubr.f32.mxu0 0.0
        %1804 = vmatmul.mubr.f32.gmra.mrb[0].mxu0 %v1599
        %v1805 = vpop.f32.mrb[0].mxu0
        %v1806 = vadd.f32 0.0, %v1805
        %v1807 = vpop.f32.mrb[0].mxu0
        %1808 = vmatprep.mubr.f32.mxu0 0.0
        %1809 = vmatmul.mubr.f32.gmra.mrb[0].mxu0 %v1602
        %v1810 = vpop.f32.mrb[0].mxu0
        %v1811 = vadd.f32 0.0, %v1810
        %v1812 = vpop.f32.mrb[0].mxu0
        %1813 = vmatprep.mubr.f32.mxu0 0.0
        %1814 = vmatmul.mubr.f32.gmra.mrb[0].mxu0 %v1605
        %v1815 = vpop.f32.mrb[0].mxu0
        %v1816 = vadd.f32 0.0, %v1815
        %v1817 = vpop.f32.mrb[0].mxu0
        %1818 = vmatprep.mubr.f32.mxu0 0.0
        %1819 = vmatmul.mubr.f32.gmra.mrb[0].mxu0 %v1608
        %v1820 = vpop.f32.mrb[0].mxu0
        %v1821 = vadd.f32 0.0, %v1820
        %v1822 = vpop.f32.mrb[0].mxu0
        %1823 = vmatprep.mubr.f32.mxu0 0.0
        %1824 = vmatmul.mubr.f32.gmra.mrb[0].mxu0 %v1611
        %v1825 = vpop.f32.mrb[0].mxu0
        %v1826 = vadd.f32 0.0, %v1825
        %v1827 = vpop.f32.mrb[0].mxu0
        %1828 = vmatprep.mubr.f32.mxu0 0.0
        %1829 = vmatmul.mubr.f32.gmra.mrb[0].mxu0 %v1614
        %v1830 = vpop.f32.mrb[0].mxu0
        %v1831 = vadd.f32 0.0, %v1830
        %v1832 = vpop.f32.mrb[0].mxu0
        %1833 = vmatprep.mubr.f32.mxu0 0.0
        %1834 = vmatmul.mubr.f32.gmra.mrb[0].mxu0 %v1617
        %v1835 = vpop.f32.mrb[0].mxu0
        %v1836 = vadd.f32 0.0, %v1835
        %v1837 = vpop.f32.mrb[0].mxu0
        %1838 = vmatprep.mubr.f32.mxu0 0.0
        %1839 = vmatmul.mubr.f32.gmra.mrb[0].mxu0 %v1620
        %v1840 = vpop.f32.mrb[0].mxu0
        %v1841 = vadd.f32 0.0, %v1840
        %v1842 = vpop.f32.mrb[0].mxu0
        %1843 = vmatprep.mubr.f32.mxu0 0.0
        %1844 = vmatmul.mubr.f32.gmra.mrb[0].mxu0 %v1623
        %v1845 = vpop.f32.mrb[0].mxu0
        %v1846 = vadd.f32 0.0, %v1845
        %v1847 = vpop.f32.mrb[0].mxu0
        %1848 = vmatprep.mubr.f32.mxu0 0.0
        %1849 = vmatmul.mubr.f32.gmra.mrb[0].mxu0 %v1626
        %v1850 = vpop.f32.mrb[0].mxu0
        %v1851 = vadd.f32 0.0, %v1850
        %v1852 = vpop.f32.mrb[0].mxu0
        %1853 = vmatprep.mubr.f32.mxu0 0.0
        %1854 = vmatmul.mubr.f32.gmra.mrb[0].mxu0 %v1629
        %v1855 = vpop.f32.mrb[0].mxu0
        %v1856 = vadd.f32 0.0, %v1855
        %v1857 = vpop.f32.mrb[0].mxu0
        %1858 = vmatprep.mubr.f32.mxu0 0.0
        %1859 = vmatmul.mubr.f32.gmra.mrb[0].mxu0 %v1632
        %v1860 = vpop.f32.mrb[0].mxu0
        %v1861 = vadd.f32 0.0, %v1860
        %v1862 = vpop.f32.mrb[0].mxu0
        %1863 = vmatprep.mubr.f32.mxu0 0.0
        %1864 = vmatmul.mubr.f32.gmra.mrb[0].mxu0 %v1635
        %v1865 = vpop.f32.mrb[0].mxu0
        %v1866 = vadd.f32 0.0, %v1865
        %v1867 = vpop.f32.mrb[0].mxu0
        %1868 = vmatprep.mubr.f32.mxu0 0.0
        %1869 = vmatmul.mubr.f32.gmra.mrb[0].mxu0 %v1638
        %v1870 = vpop.f32.mrb[0].mxu0
        %v1871 = vadd.f32 0.0, %v1870
        %v1872 = vpop.f32.mrb[0].mxu0
        %1873 = vmatprep.mubr.f32.mxu0 0.0
        %1874 = vmatmul.mubr.f32.gmra.mrb[0].mxu0 %v1641
        %v1875 = vpop.f32.mrb[0].mxu0
        %v1876 = vadd.f32 0.0, %v1875
        %v1877 = vpop.f32.mrb[0].mxu0
        %1878 = vmatprep.mubr.f32.mxu0 0.0
        %1879 = vmatmul.mubr.f32.gmra.mrb[0].mxu0 %v1644
        %v1880 = vpop.f32.mrb[0].mxu0
        %v1881 = vadd.f32 0.0, %v1880
        %v1882 = vpop.f32.mrb[0].mxu0
        %1883 = vmatprep.mubr.f32.mxu0 0.0
        %1884 = vmatmul.mubr.f32.gmra.mrb[0].mxu0 %v1647
        %v1885 = vpop.f32.mrb[0].mxu0
        %v1886 = vadd.f32 0.0, %v1885
        %v1887 = vpop.f32.mrb[0].mxu0
        %1888 = vmatprep.mubr.f32.mxu0 0.0
        %1889 = vmatmul.mubr.f32.gmra.mrb[0].mxu0 %v1650
        %v1890 = vpop.f32.mrb[0].mxu0
        %v1891 = vadd.f32 0.0, %v1890
        %v1892 = vpop.f32.mrb[0].mxu0
        %1893 = vmatprep.mubr.f32.mxu0 0.0
        %1894 = vmatmul.mubr.f32.gmra.mrb[0].mxu0 %v1653
        %v1895 = vpop.f32.mrb[0].mxu0
        %v1896 = vadd.f32 0.0, %v1895
        %v1897 = vpop.f32.mrb[0].mxu0
        %1898 = vmatprep.mubr.f32.mxu0 0.0
        %1899 = vmatmul.mubr.f32.gmra.mrb[0].mxu0 %v1656
        %v1900 = vpop.f32.mrb[0].mxu0
        %v1901 = vadd.f32 0.0, %v1900
        %v1902 = vpop.f32.mrb[0].mxu0
        %1903 = vmatprep.mubr.f32.mxu0 0.0
        %1904 = vmatmul.mubr.f32.gmra.mrb[0].mxu0 %v1659
        %v1905 = vpop.f32.mrb[0].mxu0
        %v1906 = vadd.f32 0.0, %v1905
        %v1907 = vpop.f32.mrb[0].mxu0
        %1908 = vdwg.mxu0
        %v1909 = vadd.f32 %v1479, %v1731
        %v1910 = vadd.f32 %v1480, %v1736
        %v1911 = vadd.f32 %v1481, %v1741
        %v1912 = vadd.f32 %v1482, %v1746
        %v1913 = vadd.f32 %v1483, %v1751
        %v1914 = vadd.f32 %v1484, %v1756
        %v1915 = vadd.f32 %v1485, %v1761
        %v1916 = vadd.f32 %v1486, %v1766
        %v1917 = vadd.f32 %v1487, %v1771
        %v1918 = vadd.f32 %v1488, %v1776
        %v1919 = vadd.f32 %v1489, %v1781
        %v1920 = vadd.f32 %v1490, %v1786
        %v1921 = vadd.f32 %v1491, %v1791
        %v1922 = vadd.f32 %v1492, %v1796
        %v1923 = vadd.f32 %v1493, %v1801
        %v1924 = vadd.f32 %v1494, %v1806
        %v1925 = vadd.f32 %v1495, %v1811
        %v1926 = vadd.f32 %v1496, %v1816
        %v1927 = vadd.f32 %v1497, %v1821
        %v1928 = vadd.f32 %v1498, %v1826
        %v1929 = vadd.f32 %v1499, %v1831
        %v1930 = vadd.f32 %v1500, %v1836
        %v1931 = vadd.f32 %v1501, %v1841
        %v1932 = vadd.f32 %v1502, %v1846
        %v1933 = vadd.f32 %v1503, %v1851
        %v1934 = vadd.f32 %v1504, %v1856
        %v1935 = vadd.f32 %v1505, %v1861
        %v1936 = vadd.f32 %v1506, %v1866
        %v1937 = vadd.f32 %v1507, %v1871
        %v1938 = vadd.f32 %v1508, %v1876
        %v1939 = vadd.f32 %v1509, %v1881
        %v1940 = vadd.f32 %v1510, %v1886
        %v1941 = vadd.f32 %v1511, %v1891
        %v1942 = vadd.f32 %v1512, %v1896
        %v1943 = vadd.f32 %v1513, %v1901
        %v1944 = vadd.f32 %v1514, %v1906
        %v1945 = vld [vmem:[%s252 + $0x13] sm:$0xff]
        %v1946 = vld [vmem:[%s252 + $0x1b] sm:$0xff]
        %v1947 = vld [vmem:[%s252 + $0x23] sm:$0xff]
        %v1948 = vld [vmem:[%s252 + $0x2b] sm:$0xff]
        %v1949 = vld [vmem:[%s252 + $0x33] sm:$0xff]
        %v1950 = vld [vmem:[%s252 + $0x3b] sm:$0xff]
        %v1951 = vld [vmem:[%s252 + $0x43] sm:$0xff]
        %v1952 = vld [vmem:[%s252 + $0x4b] sm:$0xff]
        %v1953 = vld [vmem:[%s252 + $0x53] sm:$0xff]
        %v1954 = vld [vmem:[%s252 + $0x5b] sm:$0xff]
        %v1955 = vld [vmem:[%s252 + $0x63] sm:$0xff]
        %v1956 = vld [vmem:[%s252 + $0x6b] sm:$0xff]
        %v1957 = vld [vmem:[%s252 + $0x73] sm:$0xff]
        %v1958 = vld [vmem:[%s252 + $0x7b] sm:$0xff]
        %v1959 = vld [vmem:[%s252 + $0x83] sm:$0xff]
        %v1960 = vld [vmem:[%s252 + $0x8b] sm:$0xff]
        %v1961 = vld [vmem:[%s252 + $0x93] sm:$0xff]
        %v1962 = vld [vmem:[%s252 + $0x9b] sm:$0xff]
        %v1963 = vld [vmem:[%s252 + $0xa3] sm:$0xff]
        %v1964 = vld [vmem:[%s252 + $0xab] sm:$0xff]
        %v1965 = vld [vmem:[%s252 + $0xb3] sm:$0xff]
        %v1966 = vld [vmem:[%s252 + $0xbb] sm:$0xff]
        %v1967 = vld [vmem:[%s252 + $0xc3] sm:$0xff]
        %v1968 = vld [vmem:[%s252 + $0xcb] sm:$0xff]
        %v1969 = vld [vmem:[%s252 + $0xd3] sm:$0xff]
        %v1970 = vld [vmem:[%s252 + $0xdb] sm:$0xff]
        %v1971 = vld [vmem:[%s252 + $0xe3] sm:$0xff]
        %v1972 = vld [vmem:[%s252 + $0xeb] sm:$0xff]
        %v1973 = vld [vmem:[%s252 + $0xf3] sm:$0xff]
        %v1974 = vld [vmem:[%s252 + $0xfb] sm:$0xff]
        %v1975 = vld [vmem:[%s252 + $0x103] sm:$0xff]
        %v1976 = vld [vmem:[%s252 + $0x10b] sm:$0xff]
        %v1977 = vld [vmem:[%s252 + $0x113] sm:$0xff]
        %v1978 = vld [vmem:[%s252 + $0x11b] sm:$0xff]
        %v1979 = vld [vmem:[%s252 + $0x123] sm:$0xff]
        %v1980 = vld [vmem:[%s252 + $0x12b] sm:$0xff]
        %s1981 = scalar_lea.vmem [#allocation5], 16
        %v1982 = vld [vmem:[%s1981] sm:$0xf]
        %v1984 = vsel %vm371, %v1945, 0
        %v1987 = vsel %vm371, %v1946, 0
        %v1990 = vsel %vm371, %v1947, 0
        %v1993 = vsel %vm371, %v1948, 0
        %v1996 = vsel %vm371, %v1949, 0
        %v1999 = vsel %vm371, %v1950, 0
        %v2002 = vsel %vm371, %v1951, 0
        %v2005 = vsel %vm371, %v1952, 0
        %v2008 = vsel %vm371, %v1953, 0
        %v2011 = vsel %vm371, %v1954, 0
        %v2014 = vsel %vm371, %v1955, 0
        %v2017 = vsel %vm371, %v1956, 0
        %v2020 = vsel %vm371, %v1957, 0
        %v2023 = vsel %vm371, %v1958, 0
        %v2026 = vsel %vm371, %v1959, 0
        %v2029 = vsel %vm371, %v1960, 0
        %v2032 = vsel %vm371, %v1961, 0
        %v2035 = vsel %vm371, %v1962, 0
        %v2038 = vsel %vm371, %v1963, 0
        %v2041 = vsel %vm371, %v1964, 0
        %v2044 = vsel %vm371, %v1965, 0
        %v2047 = vsel %vm371, %v1966, 0
        %v2050 = vsel %vm371, %v1967, 0
        %v2053 = vsel %vm371, %v1968, 0
        %v2056 = vsel %vm371, %v1969, 0
        %v2059 = vsel %vm371, %v1970, 0
        %v2062 = vsel %vm371, %v1971, 0
        %v2065 = vsel %vm371, %v1972, 0
        %v2068 = vsel %vm371, %v1973, 0
        %v2071 = vsel %vm371, %v1974, 0
        %v2074 = vsel %vm371, %v1975, 0
        %v2077 = vsel %vm371, %v1976, 0
        %v2080 = vsel %vm371, %v1977, 0
        %v2083 = vsel %vm371, %v1978, 0
        %v2086 = vsel %vm371, %v1979, 0
        %v2089 = vsel %vm371, %v1980, 0
        %v2092 = vsel %vm480, %v1982, 0
        %2094 = vmatprep.subr.mxu0 0.0
        %2095 = vmatpush1.msra.mxu0 %v2092
        %2096 = vmatprep.subr.mxu0 0.0
        %2097 = vmatpush1.msra.mxu0 0.0
        %2098 = vmatprep.subr.mxu0 0.0
        %2099 = vmatpush1.msra.mxu0 0.0
        %2100 = vmatprep.subr.mxu0 0.0
        %2101 = vmatpush1.msra.mxu0 0.0
        %2102 = vmatprep.subr.mxu0 0.0
        %2103 = vmatpush1.msra.mxu0 0.0
        %2104 = vmatprep.subr.mxu0 0.0
        %2105 = vmatpush1.msra.mxu0 0.0
        %2106 = vmatprep.subr.mxu0 0.0
        %2107 = vmatpush1.msra.mxu0 0.0
        %2108 = vmatprep.subr.mxu0 0.0
        %2109 = vmatpush1.msra.mxu0 0.0
        %2110 = vmatprep.subr.mxu0 0.0
        %2111 = vmatpush1.msra.mxu0 0.0
        %2112 = vmatprep.subr.mxu0 0.0
        %2113 = vmatpush1.msra.mxu0 0.0
        %2114 = vmatprep.subr.mxu0 0.0
        %2115 = vmatpush1.msra.mxu0 0.0
        %2116 = vmatprep.subr.mxu0 0.0
        %2117 = vmatpush1.msra.mxu0 0.0
        %2118 = vmatprep.subr.mxu0 0.0
        %2119 = vmatpush1.msra.mxu0 0.0
        %2120 = vmatprep.subr.mxu0 0.0
        %2121 = vmatpush1.msra.mxu0 0.0
        %2122 = vmatprep.subr.mxu0 0.0
        %2123 = vmatpush1.msra.mxu0 0.0
        %2124 = vmatprep.subr.mxu0 0.0
        %2125 = vmatpush1.msra.mxu0 0.0
        %2126 = vmatprep.subr.mxu0 0.0
        %2127 = vmatpush1.msra.mxu0 0.0
        %2128 = vmatprep.subr.mxu0 0.0
        %2129 = vmatpush1.msra.mxu0 0.0
        %2130 = vmatprep.subr.mxu0 0.0
        %2131 = vmatpush1.msra.mxu0 0.0
        %2132 = vmatprep.subr.mxu0 0.0
        %2133 = vmatpush1.msra.mxu0 0.0
        %2134 = vmatprep.subr.mxu0 0.0
        %2135 = vmatpush1.msra.mxu0 0.0
        %2136 = vmatprep.subr.mxu0 0.0
        %2137 = vmatpush1.msra.mxu0 0.0
        %2138 = vmatprep.subr.mxu0 0.0
        %2139 = vmatpush1.msra.mxu0 0.0
        %2140 = vmatprep.subr.mxu0 0.0
        %2141 = vmatpush1.msra.mxu0 0.0
        %2142 = vmatprep.subr.mxu0 0.0
        %2143 = vmatpush1.msra.mxu0 0.0
        %2144 = vmatprep.subr.mxu0 0.0
        %2145 = vmatpush1.msra.mxu0 0.0
        %2146 = vmatprep.subr.mxu0 0.0
        %2147 = vmatpush1.msra.mxu0 0.0
        %2148 = vmatprep.subr.mxu0 0.0
        %2149 = vmatpush1.msra.mxu0 0.0
        %2150 = vmatprep.subr.mxu0 0.0
        %2151 = vmatpush1.msra.mxu0 0.0
        %2152 = vmatprep.subr.mxu0 0.0
        %2153 = vmatpush1.msra.mxu0 0.0
        %2154 = vmatprep.subr.mxu0 0.0
        %2155 = vmatpush1.msra.mxu0 0.0
        %2156 = vmatprep.subr.mxu0 0.0
        %2157 = vmatpush1.msra.mxu0 0.0
        %2158 = vmatprep.mubr.f32.mxu0 0.0
        %2159 = vmatmul.mubr.f32.gmra.mrb[0].mxu0 %v1984
        %v2160 = vpop.f32.mrb[0].mxu0
        %v2161 = vadd.f32 0.0, %v2160
        %v2162 = vpop.f32.mrb[0].mxu0
        %2163 = vmatprep.mubr.f32.mxu0 0.0
        %2164 = vmatmul.mubr.f32.gmra.mrb[0].mxu0 %v1987
        %v2165 = vpop.f32.mrb[0].mxu0
        %v2166 = vadd.f32 0.0, %v2165
        %v2167 = vpop.f32.mrb[0].mxu0
        %2168 = vmatprep.mubr.f32.mxu0 0.0
        %2169 = vmatmul.mubr.f32.gmra.mrb[0].mxu0 %v1990
        %v2170 = vpop.f32.mrb[0].mxu0
        %v2171 = vadd.f32 0.0, %v2170
        %v2172 = vpop.f32.mrb[0].mxu0
        %2173 = vmatprep.mubr.f32.mxu0 0.0
        %2174 = vmatmul.mubr.f32.gmra.mrb[0].mxu0 %v1993
        %v2175 = vpop.f32.mrb[0].mxu0
        %v2176 = vadd.f32 0.0, %v2175
        %v2177 = vpop.f32.mrb[0].mxu0
        %2178 = vmatprep.mubr.f32.mxu0 0.0
        %2179 = vmatmul.mubr.f32.gmra.mrb[0].mxu0 %v1996
        %v2180 = vpop.f32.mrb[0].mxu0
        %v2181 = vadd.f32 0.0, %v2180
        %v2182 = vpop.f32.mrb[0].mxu0
        %2183 = vmatprep.mubr.f32.mxu0 0.0
        %2184 = vmatmul.mubr.f32.gmra.mrb[0].mxu0 %v1999
        %v2185 = vpop.f32.mrb[0].mxu0
        %v2186 = vadd.f32 0.0, %v2185
        %v2187 = vpop.f32.mrb[0].mxu0
        %2188 = vmatprep.mubr.f32.mxu0 0.0
        %2189 = vmatmul.mubr.f32.gmra.mrb[0].mxu0 %v2002
        %v2190 = vpop.f32.mrb[0].mxu0
        %v2191 = vadd.f32 0.0, %v2190
        %v2192 = vpop.f32.mrb[0].mxu0
        %2193 = vmatprep.mubr.f32.mxu0 0.0
        %2194 = vmatmul.mubr.f32.gmra.mrb[0].mxu0 %v2005
        %v2195 = vpop.f32.mrb[0].mxu0
        %v2196 = vadd.f32 0.0, %v2195
        %v2197 = vpop.f32.mrb[0].mxu0
        %2198 = vmatprep.mubr.f32.mxu0 0.0
        %2199 = vmatmul.mubr.f32.gmra.mrb[0].mxu0 %v2008
        %v2200 = vpop.f32.mrb[0].mxu0
        %v2201 = vadd.f32 0.0, %v2200
        %v2202 = vpop.f32.mrb[0].mxu0
        %2203 = vmatprep.mubr.f32.mxu0 0.0
        %2204 = vmatmul.mubr.f32.gmra.mrb[0].mxu0 %v2011
        %v2205 = vpop.f32.mrb[0].mxu0
        %v2206 = vadd.f32 0.0, %v2205
        %v2207 = vpop.f32.mrb[0].mxu0
        %2208 = vmatprep.mubr.f32.mxu0 0.0
        %2209 = vmatmul.mubr.f32.gmra.mrb[0].mxu0 %v2014
        %v2210 = vpop.f32.mrb[0].mxu0
        %v2211 = vadd.f32 0.0, %v2210
        %v2212 = vpop.f32.mrb[0].mxu0
        %2213 = vmatprep.mubr.f32.mxu0 0.0
        %2214 = vmatmul.mubr.f32.gmra.mrb[0].mxu0 %v2017
        %v2215 = vpop.f32.mrb[0].mxu0
        %v2216 = vadd.f32 0.0, %v2215
        %v2217 = vpop.f32.mrb[0].mxu0
        %2218 = vmatprep.mubr.f32.mxu0 0.0
        %2219 = vmatmul.mubr.f32.gmra.mrb[0].mxu0 %v2020
        %v2220 = vpop.f32.mrb[0].mxu0
        %v2221 = vadd.f32 0.0, %v2220
        %v2222 = vpop.f32.mrb[0].mxu0
        %2223 = vmatprep.mubr.f32.mxu0 0.0
        %2224 = vmatmul.mubr.f32.gmra.mrb[0].mxu0 %v2023
        %v2225 = vpop.f32.mrb[0].mxu0
        %v2226 = vadd.f32 0.0, %v2225
        %v2227 = vpop.f32.mrb[0].mxu0
        %2228 = vmatprep.mubr.f32.mxu0 0.0
        %2229 = vmatmul.mubr.f32.gmra.mrb[0].mxu0 %v2026
        %v2230 = vpop.f32.mrb[0].mxu0
        %v2231 = vadd.f32 0.0, %v2230
        %v2232 = vpop.f32.mrb[0].mxu0
        %2233 = vmatprep.mubr.f32.mxu0 0.0
        %2234 = vmatmul.mubr.f32.gmra.mrb[0].mxu0 %v2029
        %v2235 = vpop.f32.mrb[0].mxu0
        %v2236 = vadd.f32 0.0, %v2235
        %v2237 = vpop.f32.mrb[0].mxu0
        %2238 = vmatprep.mubr.f32.mxu0 0.0
        %2239 = vmatmul.mubr.f32.gmra.mrb[0].mxu0 %v2032
        %v2240 = vpop.f32.mrb[0].mxu0
        %v2241 = vadd.f32 0.0, %v2240
        %v2242 = vpop.f32.mrb[0].mxu0
        %2243 = vmatprep.mubr.f32.mxu0 0.0
        %2244 = vmatmul.mubr.f32.gmra.mrb[0].mxu0 %v2035
        %v2245 = vpop.f32.mrb[0].mxu0
        %v2246 = vadd.f32 0.0, %v2245
        %v2247 = vpop.f32.mrb[0].mxu0
        %2248 = vmatprep.mubr.f32.mxu0 0.0
        %2249 = vmatmul.mubr.f32.gmra.mrb[0].mxu0 %v2038
        %v2250 = vpop.f32.mrb[0].mxu0
        %v2251 = vadd.f32 0.0, %v2250
        %v2252 = vpop.f32.mrb[0].mxu0
        %2253 = vmatprep.mubr.f32.mxu0 0.0
        %2254 = vmatmul.mubr.f32.gmra.mrb[0].mxu0 %v2041
        %v2255 = vpop.f32.mrb[0].mxu0
        %v2256 = vadd.f32 0.0, %v2255
        %v2257 = vpop.f32.mrb[0].mxu0
        %2258 = vmatprep.mubr.f32.mxu0 0.0
        %2259 = vmatmul.mubr.f32.gmra.mrb[0].mxu0 %v2044
        %v2260 = vpop.f32.mrb[0].mxu0
        %v2261 = vadd.f32 0.0, %v2260
        %v2262 = vpop.f32.mrb[0].mxu0
        %2263 = vmatprep.mubr.f32.mxu0 0.0
        %2264 = vmatmul.mubr.f32.gmra.mrb[0].mxu0 %v2047
        %v2265 = vpop.f32.mrb[0].mxu0
        %v2266 = vadd.f32 0.0, %v2265
        %v2267 = vpop.f32.mrb[0].mxu0
        %2268 = vmatprep.mubr.f32.mxu0 0.0
        %2269 = vmatmul.mubr.f32.gmra.mrb[0].mxu0 %v2050
        %v2270 = vpop.f32.mrb[0].mxu0
        %v2271 = vadd.f32 0.0, %v2270
        %v2272 = vpop.f32.mrb[0].mxu0
        %2273 = vmatprep.mubr.f32.mxu0 0.0
        %2274 = vmatmul.mubr.f32.gmra.mrb[0].mxu0 %v2053
        %v2275 = vpop.f32.mrb[0].mxu0
        %v2276 = vadd.f32 0.0, %v2275
        %v2277 = vpop.f32.mrb[0].mxu0
        %2278 = vmatprep.mubr.f32.mxu0 0.0
        %2279 = vmatmul.mubr.f32.gmra.mrb[0].mxu0 %v2056
        %v2280 = vpop.f32.mrb[0].mxu0
        %v2281 = vadd.f32 0.0, %v2280
        %v2282 = vpop.f32.mrb[0].mxu0
        %2283 = vmatprep.mubr.f32.mxu0 0.0
        %2284 = vmatmul.mubr.f32.gmra.mrb[0].mxu0 %v2059
        %v2285 = vpop.f32.mrb[0].mxu0
        %v2286 = vadd.f32 0.0, %v2285
        %v2287 = vpop.f32.mrb[0].mxu0
        %2288 = vmatprep.mubr.f32.mxu0 0.0
        %2289 = vmatmul.mubr.f32.gmra.mrb[0].mxu0 %v2062
        %v2290 = vpop.f32.mrb[0].mxu0
        %v2291 = vadd.f32 0.0, %v2290
        %v2292 = vpop.f32.mrb[0].mxu0
        %2293 = vmatprep.mubr.f32.mxu0 0.0
        %2294 = vmatmul.mubr.f32.gmra.mrb[0].mxu0 %v2065
        %v2295 = vpop.f32.mrb[0].mxu0
        %v2296 = vadd.f32 0.0, %v2295
        %v2297 = vpop.f32.mrb[0].mxu0
        %2298 = vmatprep.mubr.f32.mxu0 0.0
        %2299 = vmatmul.mubr.f32.gmra.mrb[0].mxu0 %v2068
        %v2300 = vpop.f32.mrb[0].mxu0
        %v2301 = vadd.f32 0.0, %v2300
        %v2302 = vpop.f32.mrb[0].mxu0
        %2303 = vmatprep.mubr.f32.mxu0 0.0
        %2304 = vmatmul.mubr.f32.gmra.mrb[0].mxu0 %v2071
        %v2305 = vpop.f32.mrb[0].mxu0
        %v2306 = vadd.f32 0.0, %v2305
        %v2307 = vpop.f32.mrb[0].mxu0
        %2308 = vmatprep.mubr.f32.mxu0 0.0
        %2309 = vmatmul.mubr.f32.gmra.mrb[0].mxu0 %v2074
        %v2310 = vpop.f32.mrb[0].mxu0
        %v2311 = vadd.f32 0.0, %v2310
        %v2312 = vpop.f32.mrb[0].mxu0
        %2313 = vmatprep.mubr.f32.mxu0 0.0
        %2314 = vmatmul.mubr.f32.gmra.mrb[0].mxu0 %v2077
        %v2315 = vpop.f32.mrb[0].mxu0
        %v2316 = vadd.f32 0.0, %v2315
        %v2317 = vpop.f32.mrb[0].mxu0
        %2318 = vmatprep.mubr.f32.mxu0 0.0
        %2319 = vmatmul.mubr.f32.gmra.mrb[0].mxu0 %v2080
        %v2320 = vpop.f32.mrb[0].mxu0
        %v2321 = vadd.f32 0.0, %v2320
        %v2322 = vpop.f32.mrb[0].mxu0
        %2323 = vmatprep.mubr.f32.mxu0 0.0
        %2324 = vmatmul.mubr.f32.gmra.mrb[0].mxu0 %v2083
        %v2325 = vpop.f32.mrb[0].mxu0
        %v2326 = vadd.f32 0.0, %v2325
        %v2327 = vpop.f32.mrb[0].mxu0
        %2328 = vmatprep.mubr.f32.mxu0 0.0
        %2329 = vmatmul.mubr.f32.gmra.mrb[0].mxu0 %v2086
        %v2330 = vpop.f32.mrb[0].mxu0
        %v2331 = vadd.f32 0.0, %v2330
        %v2332 = vpop.f32.mrb[0].mxu0
        %2333 = vmatprep.mubr.f32.mxu0 0.0
        %2334 = vmatmul.mubr.f32.gmra.mrb[0].mxu0 %v2089
        %v2335 = vpop.f32.mrb[0].mxu0
        %v2336 = vadd.f32 0.0, %v2335
        %v2337 = vpop.f32.mrb[0].mxu0
        %2338 = vdwg.mxu0
        %v2339 = vadd.f32 %v1909, %v2161
        %v2340 = vadd.f32 %v1910, %v2166
        %v2341 = vadd.f32 %v1911, %v2171
        %v2342 = vadd.f32 %v1912, %v2176
        %v2343 = vadd.f32 %v1913, %v2181
        %v2344 = vadd.f32 %v1914, %v2186
        %v2345 = vadd.f32 %v1915, %v2191
        %v2346 = vadd.f32 %v1916, %v2196
        %v2347 = vadd.f32 %v1917, %v2201
        %v2348 = vadd.f32 %v1918, %v2206
        %v2349 = vadd.f32 %v1919, %v2211
        %v2350 = vadd.f32 %v1920, %v2216
        %v2351 = vadd.f32 %v1921, %v2221
        %v2352 = vadd.f32 %v1922, %v2226
        %v2353 = vadd.f32 %v1923, %v2231
        %v2354 = vadd.f32 %v1924, %v2236
        %v2355 = vadd.f32 %v1925, %v2241
        %v2356 = vadd.f32 %v1926, %v2246
        %v2357 = vadd.f32 %v1927, %v2251
        %v2358 = vadd.f32 %v1928, %v2256
        %v2359 = vadd.f32 %v1929, %v2261
        %v2360 = vadd.f32 %v1930, %v2266
        %v2361 = vadd.f32 %v1931, %v2271
        %v2362 = vadd.f32 %v1932, %v2276
        %v2363 = vadd.f32 %v1933, %v2281
        %v2364 = vadd.f32 %v1934, %v2286
        %v2365 = vadd.f32 %v1935, %v2291
        %v2366 = vadd.f32 %v1936, %v2296
        %v2367 = vadd.f32 %v1937, %v2301
        %v2368 = vadd.f32 %v1938, %v2306
        %v2369 = vadd.f32 %v1939, %v2311
        %v2370 = vadd.f32 %v1940, %v2316
        %v2371 = vadd.f32 %v1941, %v2321
        %v2372 = vadd.f32 %v1942, %v2326
        %v2373 = vadd.f32 %v1943, %v2331
        %v2374 = vadd.f32 %v1944, %v2336
        %v2375 = vld [vmem:[%s252 + $0x14] sm:$0xff]
        %v2376 = vld [vmem:[%s252 + $0x1c] sm:$0xff]
        %v2377 = vld [vmem:[%s252 + $0x24] sm:$0xff]
        %v2378 = vld [vmem:[%s252 + $0x2c] sm:$0xff]
        %v2379 = vld [vmem:[%s252 + $0x34] sm:$0xff]
        %v2380 = vld [vmem:[%s252 + $0x3c] sm:$0xff]
        %v2381 = vld [vmem:[%s252 + $0x44] sm:$0xff]
        %v2382 = vld [vmem:[%s252 + $0x4c] sm:$0xff]
        %v2383 = vld [vmem:[%s252 + $0x54] sm:$0xff]
        %v2384 = vld [vmem:[%s252 + $0x5c] sm:$0xff]
        %v2385 = vld [vmem:[%s252 + $0x64] sm:$0xff]
        %v2386 = vld [vmem:[%s252 + $0x6c] sm:$0xff]
        %v2387 = vld [vmem:[%s252 + $0x74] sm:$0xff]
        %v2388 = vld [vmem:[%s252 + $0x7c] sm:$0xff]
        %v2389 = vld [vmem:[%s252 + $0x84] sm:$0xff]
        %v2390 = vld [vmem:[%s252 + $0x8c] sm:$0xff]
        %v2391 = vld [vmem:[%s252 + $0x94] sm:$0xff]
        %v2392 = vld [vmem:[%s252 + $0x9c] sm:$0xff]
        %v2393 = vld [vmem:[%s252 + $0xa4] sm:$0xff]
        %v2394 = vld [vmem:[%s252 + $0xac] sm:$0xff]
        %v2395 = vld [vmem:[%s252 + $0xb4] sm:$0xff]
        %v2396 = vld [vmem:[%s252 + $0xbc] sm:$0xff]
        %v2397 = vld [vmem:[%s252 + $0xc4] sm:$0xff]
        %v2398 = vld [vmem:[%s252 + $0xcc] sm:$0xff]
        %v2399 = vld [vmem:[%s252 + $0xd4] sm:$0xff]
        %v2400 = vld [vmem:[%s252 + $0xdc] sm:$0xff]
        %v2401 = vld [vmem:[%s252 + $0xe4] sm:$0xff]
        %v2402 = vld [vmem:[%s252 + $0xec] sm:$0xff]
        %v2403 = vld [vmem:[%s252 + $0xf4] sm:$0xff]
        %v2404 = vld [vmem:[%s252 + $0xfc] sm:$0xff]
        %v2405 = vld [vmem:[%s252 + $0x104] sm:$0xff]
        %v2406 = vld [vmem:[%s252 + $0x10c] sm:$0xff]
        %v2407 = vld [vmem:[%s252 + $0x114] sm:$0xff]
        %v2408 = vld [vmem:[%s252 + $0x11c] sm:$0xff]
        %v2409 = vld [vmem:[%s252 + $0x124] sm:$0xff]
        %v2410 = vld [vmem:[%s252 + $0x12c] sm:$0xff]
        %s2411 = scalar_lea.vmem [#allocation5], 20
        %v2412 = vld [vmem:[%s2411] sm:$0xf]
        %v2414 = vsel %vm371, %v2375, 0
        %v2417 = vsel %vm371, %v2376, 0
        %v2420 = vsel %vm371, %v2377, 0
        %v2423 = vsel %vm371, %v2378, 0
        %v2426 = vsel %vm371, %v2379, 0
        %v2429 = vsel %vm371, %v2380, 0
        %v2432 = vsel %vm371, %v2381, 0
        %v2435 = vsel %vm371, %v2382, 0
        %v2438 = vsel %vm371, %v2383, 0
        %v2441 = vsel %vm371, %v2384, 0
        %v2444 = vsel %vm371, %v2385, 0
        %v2447 = vsel %vm371, %v2386, 0
        %v2450 = vsel %vm371, %v2387, 0
        %v2453 = vsel %vm371, %v2388, 0
        %v2456 = vsel %vm371, %v2389, 0
        %v2459 = vsel %vm371, %v2390, 0
        %v2462 = vsel %vm371, %v2391, 0
        %v2465 = vsel %vm371, %v2392, 0
        %v2468 = vsel %vm371, %v2393, 0
        %v2471 = vsel %vm371, %v2394, 0
        %v2474 = vsel %vm371, %v2395, 0
        %v2477 = vsel %vm371, %v2396, 0
        %v2480 = vsel %vm371, %v2397, 0
        %v2483 = vsel %vm371, %v2398, 0
        %v2486 = vsel %vm371, %v2399, 0
        %v2489 = vsel %vm371, %v2400, 0
        %v2492 = vsel %vm371, %v2401, 0
        %v2495 = vsel %vm371, %v2402, 0
        %v2498 = vsel %vm371, %v2403, 0
        %v2501 = vsel %vm371, %v2404, 0
        %v2504 = vsel %vm371, %v2405, 0
        %v2507 = vsel %vm371, %v2406, 0
        %v2510 = vsel %vm371, %v2407, 0
        %v2513 = vsel %vm371, %v2408, 0
        %v2516 = vsel %vm371, %v2409, 0
        %v2519 = vsel %vm371, %v2410, 0
        %v2522 = vsel %vm480, %v2412, 0
        %2524 = vmatprep.subr.mxu0 0.0
        %2525 = vmatpush1.msra.mxu0 %v2522
        %2526 = vmatprep.subr.mxu0 0.0
        %2527 = vmatpush1.msra.mxu0 0.0
        %2528 = vmatprep.subr.mxu0 0.0
        %2529 = vmatpush1.msra.mxu0 0.0
        %2530 = vmatprep.subr.mxu0 0.0
        %2531 = vmatpush1.msra.mxu0 0.0
        %2532 = vmatprep.subr.mxu0 0.0
        %2533 = vmatpush1.msra.mxu0 0.0
        %2534 = vmatprep.subr.mxu0 0.0
        %2535 = vmatpush1.msra.mxu0 0.0
        %2536 = vmatprep.subr.mxu0 0.0
        %2537 = vmatpush1.msra.mxu0 0.0
        %2538 = vmatprep.subr.mxu0 0.0
        %2539 = vmatpush1.msra.mxu0 0.0
        %2540 = vmatprep.subr.mxu0 0.0
        %2541 = vmatpush1.msra.mxu0 0.0
        %2542 = vmatprep.subr.mxu0 0.0
        %2543 = vmatpush1.msra.mxu0 0.0
        %2544 = vmatprep.subr.mxu0 0.0
        %2545 = vmatpush1.msra.mxu0 0.0
        %2546 = vmatprep.subr.mxu0 0.0
        %2547 = vmatpush1.msra.mxu0 0.0
        %2548 = vmatprep.subr.mxu0 0.0
        %2549 = vmatpush1.msra.mxu0 0.0
        %2550 = vmatprep.subr.mxu0 0.0
        %2551 = vmatpush1.msra.mxu0 0.0
        %2552 = vmatprep.subr.mxu0 0.0
        %2553 = vmatpush1.msra.mxu0 0.0
        %2554 = vmatprep.subr.mxu0 0.0
        %2555 = vmatpush1.msra.mxu0 0.0
        %2556 = vmatprep.subr.mxu0 0.0
        %2557 = vmatpush1.msra.mxu0 0.0
        %2558 = vmatprep.subr.mxu0 0.0
        %2559 = vmatpush1.msra.mxu0 0.0
        %2560 = vmatprep.subr.mxu0 0.0
        %2561 = vmatpush1.msra.mxu0 0.0
        %2562 = vmatprep.subr.mxu0 0.0
        %2563 = vmatpush1.msra.mxu0 0.0
        %2564 = vmatprep.subr.mxu0 0.0
        %2565 = vmatpush1.msra.mxu0 0.0
        %2566 = vmatprep.subr.mxu0 0.0
        %2567 = vmatpush1.msra.mxu0 0.0
        %2568 = vmatprep.subr.mxu0 0.0
        %2569 = vmatpush1.msra.mxu0 0.0
        %2570 = vmatprep.subr.mxu0 0.0
        %2571 = vmatpush1.msra.mxu0 0.0
        %2572 = vmatprep.subr.mxu0 0.0
        %2573 = vmatpush1.msra.mxu0 0.0
        %2574 = vmatprep.subr.mxu0 0.0
        %2575 = vmatpush1.msra.mxu0 0.0
        %2576 = vmatprep.subr.mxu0 0.0
        %2577 = vmatpush1.msra.mxu0 0.0
        %2578 = vmatprep.subr.mxu0 0.0
        %2579 = vmatpush1.msra.mxu0 0.0
        %2580 = vmatprep.subr.mxu0 0.0
        %2581 = vmatpush1.msra.mxu0 0.0
        %2582 = vmatprep.subr.mxu0 0.0
        %2583 = vmatpush1.msra.mxu0 0.0
        %2584 = vmatprep.subr.mxu0 0.0
        %2585 = vmatpush1.msra.mxu0 0.0
        %2586 = vmatprep.subr.mxu0 0.0
        %2587 = vmatpush1.msra.mxu0 0.0
        %2588 = vmatprep.mubr.f32.mxu0 0.0
        %2589 = vmatmul.mubr.f32.gmra.mrb[0].mxu0 %v2414
        %v2590 = vpop.f32.mrb[0].mxu0
        %v2591 = vadd.f32 0.0, %v2590
        %v2592 = vpop.f32.mrb[0].mxu0
        %2593 = vmatprep.mubr.f32.mxu0 0.0
        %2594 = vmatmul.mubr.f32.gmra.mrb[0].mxu0 %v2417
        %v2595 = vpop.f32.mrb[0].mxu0
        %v2596 = vadd.f32 0.0, %v2595
        %v2597 = vpop.f32.mrb[0].mxu0
        %2598 = vmatprep.mubr.f32.mxu0 0.0
        %2599 = vmatmul.mubr.f32.gmra.mrb[0].mxu0 %v2420
        %v2600 = vpop.f32.mrb[0].mxu0
        %v2601 = vadd.f32 0.0, %v2600
        %v2602 = vpop.f32.mrb[0].mxu0
        %2603 = vmatprep.mubr.f32.mxu0 0.0
        %2604 = vmatmul.mubr.f32.gmra.mrb[0].mxu0 %v2423
        %v2605 = vpop.f32.mrb[0].mxu0
        %v2606 = vadd.f32 0.0, %v2605
        %v2607 = vpop.f32.mrb[0].mxu0
        %2608 = vmatprep.mubr.f32.mxu0 0.0
        %2609 = vmatmul.mubr.f32.gmra.mrb[0].mxu0 %v2426
        %v2610 = vpop.f32.mrb[0].mxu0
        %v2611 = vadd.f32 0.0, %v2610
        %v2612 = vpop.f32.mrb[0].mxu0
        %2613 = vmatprep.mubr.f32.mxu0 0.0
        %2614 = vmatmul.mubr.f32.gmra.mrb[0].mxu0 %v2429
        %v2615 = vpop.f32.mrb[0].mxu0
        %v2616 = vadd.f32 0.0, %v2615
        %v2617 = vpop.f32.mrb[0].mxu0
        %2618 = vmatprep.mubr.f32.mxu0 0.0
        %2619 = vmatmul.mubr.f32.gmra.mrb[0].mxu0 %v2432
        %v2620 = vpop.f32.mrb[0].mxu0
        %v2621 = vadd.f32 0.0, %v2620
        %v2622 = vpop.f32.mrb[0].mxu0
        %2623 = vmatprep.mubr.f32.mxu0 0.0
        %2624 = vmatmul.mubr.f32.gmra.mrb[0].mxu0 %v2435
        %v2625 = vpop.f32.mrb[0].mxu0
        %v2626 = vadd.f32 0.0, %v2625
        %v2627 = vpop.f32.mrb[0].mxu0
        %2628 = vmatprep.mubr.f32.mxu0 0.0
        %2629 = vmatmul.mubr.f32.gmra.mrb[0].mxu0 %v2438
        %v2630 = vpop.f32.mrb[0].mxu0
        %v2631 = vadd.f32 0.0, %v2630
        %v2632 = vpop.f32.mrb[0].mxu0
        %2633 = vmatprep.mubr.f32.mxu0 0.0
        %2634 = vmatmul.mubr.f32.gmra.mrb[0].mxu0 %v2441
        %v2635 = vpop.f32.mrb[0].mxu0
        %v2636 = vadd.f32 0.0, %v2635
        %v2637 = vpop.f32.mrb[0].mxu0
        %2638 = vmatprep.mubr.f32.mxu0 0.0
        %2639 = vmatmul.mubr.f32.gmra.mrb[0].mxu0 %v2444
        %v2640 = vpop.f32.mrb[0].mxu0
        %v2641 = vadd.f32 0.0, %v2640
        %v2642 = vpop.f32.mrb[0].mxu0
        %2643 = vmatprep.mubr.f32.mxu0 0.0
        %2644 = vmatmul.mubr.f32.gmra.mrb[0].mxu0 %v2447
        %v2645 = vpop.f32.mrb[0].mxu0
        %v2646 = vadd.f32 0.0, %v2645
        %v2647 = vpop.f32.mrb[0].mxu0
        %2648 = vmatprep.mubr.f32.mxu0 0.0
        %2649 = vmatmul.mubr.f32.gmra.mrb[0].mxu0 %v2450
        %v2650 = vpop.f32.mrb[0].mxu0
        %v2651 = vadd.f32 0.0, %v2650
        %v2652 = vpop.f32.mrb[0].mxu0
        %2653 = vmatprep.mubr.f32.mxu0 0.0
        %2654 = vmatmul.mubr.f32.gmra.mrb[0].mxu0 %v2453
        %v2655 = vpop.f32.mrb[0].mxu0
        %v2656 = vadd.f32 0.0, %v2655
        %v2657 = vpop.f32.mrb[0].mxu0
        %2658 = vmatprep.mubr.f32.mxu0 0.0
        %2659 = vmatmul.mubr.f32.gmra.mrb[0].mxu0 %v2456
        %v2660 = vpop.f32.mrb[0].mxu0
        %v2661 = vadd.f32 0.0, %v2660
        %v2662 = vpop.f32.mrb[0].mxu0
        %2663 = vmatprep.mubr.f32.mxu0 0.0
        %2664 = vmatmul.mubr.f32.gmra.mrb[0].mxu0 %v2459
        %v2665 = vpop.f32.mrb[0].mxu0
        %v2666 = vadd.f32 0.0, %v2665
        %v2667 = vpop.f32.mrb[0].mxu0
        %2668 = vmatprep.mubr.f32.mxu0 0.0
        %2669 = vmatmul.mubr.f32.gmra.mrb[0].mxu0 %v2462
        %v2670 = vpop.f32.mrb[0].mxu0
        %v2671 = vadd.f32 0.0, %v2670
        %v2672 = vpop.f32.mrb[0].mxu0
        %2673 = vmatprep.mubr.f32.mxu0 0.0
        %2674 = vmatmul.mubr.f32.gmra.mrb[0].mxu0 %v2465
        %v2675 = vpop.f32.mrb[0].mxu0
        %v2676 = vadd.f32 0.0, %v2675
        %v2677 = vpop.f32.mrb[0].mxu0
        %2678 = vmatprep.mubr.f32.mxu0 0.0
        %2679 = vmatmul.mubr.f32.gmra.mrb[0].mxu0 %v2468
        %v2680 = vpop.f32.mrb[0].mxu0
        %v2681 = vadd.f32 0.0, %v2680
        %v2682 = vpop.f32.mrb[0].mxu0
        %2683 = vmatprep.mubr.f32.mxu0 0.0
        %2684 = vmatmul.mubr.f32.gmra.mrb[0].mxu0 %v2471
        %v2685 = vpop.f32.mrb[0].mxu0
        %v2686 = vadd.f32 0.0, %v2685
        %v2687 = vpop.f32.mrb[0].mxu0
        %2688 = vmatprep.mubr.f32.mxu0 0.0
        %2689 = vmatmul.mubr.f32.gmra.mrb[0].mxu0 %v2474
        %v2690 = vpop.f32.mrb[0].mxu0
        %v2691 = vadd.f32 0.0, %v2690
        %v2692 = vpop.f32.mrb[0].mxu0
        %2693 = vmatprep.mubr.f32.mxu0 0.0
        %2694 = vmatmul.mubr.f32.gmra.mrb[0].mxu0 %v2477
        %v2695 = vpop.f32.mrb[0].mxu0
        %v2696 = vadd.f32 0.0, %v2695
        %v2697 = vpop.f32.mrb[0].mxu0
        %2698 = vmatprep.mubr.f32.mxu0 0.0
        %2699 = vmatmul.mubr.f32.gmra.mrb[0].mxu0 %v2480
        %v2700 = vpop.f32.mrb[0].mxu0
        %v2701 = vadd.f32 0.0, %v2700
        %v2702 = vpop.f32.mrb[0].mxu0
        %2703 = vmatprep.mubr.f32.mxu0 0.0
        %2704 = vmatmul.mubr.f32.gmra.mrb[0].mxu0 %v2483
        %v2705 = vpop.f32.mrb[0].mxu0
        %v2706 = vadd.f32 0.0, %v2705
        %v2707 = vpop.f32.mrb[0].mxu0
        %2708 = vmatprep.mubr.f32.mxu0 0.0
        %2709 = vmatmul.mubr.f32.gmra.mrb[0].mxu0 %v2486
        %v2710 = vpop.f32.mrb[0].mxu0
        %v2711 = vadd.f32 0.0, %v2710
        %v2712 = vpop.f32.mrb[0].mxu0
        %2713 = vmatprep.mubr.f32.mxu0 0.0
        %2714 = vmatmul.mubr.f32.gmra.mrb[0].mxu0 %v2489
        %v2715 = vpop.f32.mrb[0].mxu0
        %v2716 = vadd.f32 0.0, %v2715
        %v2717 = vpop.f32.mrb[0].mxu0
        %2718 = vmatprep.mubr.f32.mxu0 0.0
        %2719 = vmatmul.mubr.f32.gmra.mrb[0].mxu0 %v2492
        %v2720 = vpop.f32.mrb[0].mxu0
        %v2721 = vadd.f32 0.0, %v2720
        %v2722 = vpop.f32.mrb[0].mxu0
        %2723 = vmatprep.mubr.f32.mxu0 0.0
        %2724 = vmatmul.mubr.f32.gmra.mrb[0].mxu0 %v2495
        %v2725 = vpop.f32.mrb[0].mxu0
        %v2726 = vadd.f32 0.0, %v2725
        %v2727 = vpop.f32.mrb[0].mxu0
        %2728 = vmatprep.mubr.f32.mxu0 0.0
        %2729 = vmatmul.mubr.f32.gmra.mrb[0].mxu0 %v2498
        %v2730 = vpop.f32.mrb[0].mxu0
        %v2731 = vadd.f32 0.0, %v2730
        %v2732 = vpop.f32.mrb[0].mxu0
        %2733 = vmatprep.mubr.f32.mxu0 0.0
        %2734 = vmatmul.mubr.f32.gmra.mrb[0].mxu0 %v2501
        %v2735 = vpop.f32.mrb[0].mxu0
        %v2736 = vadd.f32 0.0, %v2735
        %v2737 = vpop.f32.mrb[0].mxu0
        %2738 = vmatprep.mubr.f32.mxu0 0.0
        %2739 = vmatmul.mubr.f32.gmra.mrb[0].mxu0 %v2504
        %v2740 = vpop.f32.mrb[0].mxu0
        %v2741 = vadd.f32 0.0, %v2740
        %v2742 = vpop.f32.mrb[0].mxu0
        %2743 = vmatprep.mubr.f32.mxu0 0.0
        %2744 = vmatmul.mubr.f32.gmra.mrb[0].mxu0 %v2507
        %v2745 = vpop.f32.mrb[0].mxu0
        %v2746 = vadd.f32 0.0, %v2745
        %v2747 = vpop.f32.mrb[0].mxu0
        %2748 = vmatprep.mubr.f32.mxu0 0.0
        %2749 = vmatmul.mubr.f32.gmra.mrb[0].mxu0 %v2510
        %v2750 = vpop.f32.mrb[0].mxu0
        %v2751 = vadd.f32 0.0, %v2750
        %v2752 = vpop.f32.mrb[0].mxu0
        %2753 = vmatprep.mubr.f32.mxu0 0.0
        %2754 = vmatmul.mubr.f32.gmra.mrb[0].mxu0 %v2513
        %v2755 = vpop.f32.mrb[0].mxu0
        %v2756 = vadd.f32 0.0, %v2755
        %v2757 = vpop.f32.mrb[0].mxu0
        %2758 = vmatprep.mubr.f32.mxu0 0.0
        %2759 = vmatmul.mubr.f32.gmra.mrb[0].mxu0 %v2516
        %v2760 = vpop.f32.mrb[0].mxu0
        %v2761 = vadd.f32 0.0, %v2760
        %v2762 = vpop.f32.mrb[0].mxu0
        %2763 = vmatprep.mubr.f32.mxu0 0.0
        %2764 = vmatmul.mubr.f32.gmra.mrb[0].mxu0 %v2519
        %v2765 = vpop.f32.mrb[0].mxu0
        %v2766 = vadd.f32 0.0, %v2765
        %v2767 = vpop.f32.mrb[0].mxu0
        %2768 = vdwg.mxu0
        %v2769 = vadd.f32 %v2339, %v2591
        %v2770 = vadd.f32 %v2340, %v2596
        %v2771 = vadd.f32 %v2341, %v2601
        %v2772 = vadd.f32 %v2342, %v2606
        %v2773 = vadd.f32 %v2343, %v2611
        %v2774 = vadd.f32 %v2344, %v2616
        %v2775 = vadd.f32 %v2345, %v2621
        %v2776 = vadd.f32 %v2346, %v2626
        %v2777 = vadd.f32 %v2347, %v2631
        %v2778 = vadd.f32 %v2348, %v2636
        %v2779 = vadd.f32 %v2349, %v2641
        %v2780 = vadd.f32 %v2350, %v2646
        %v2781 = vadd.f32 %v2351, %v2651
        %v2782 = vadd.f32 %v2352, %v2656
        %v2783 = vadd.f32 %v2353, %v2661
        %v2784 = vadd.f32 %v2354, %v2666
        %v2785 = vadd.f32 %v2355, %v2671
        %v2786 = vadd.f32 %v2356, %v2676
        %v2787 = vadd.f32 %v2357, %v2681
        %v2788 = vadd.f32 %v2358, %v2686
        %v2789 = vadd.f32 %v2359, %v2691
        %v2790 = vadd.f32 %v2360, %v2696
        %v2791 = vadd.f32 %v2361, %v2701
        %v2792 = vadd.f32 %v2362, %v2706
        %v2793 = vadd.f32 %v2363, %v2711
        %v2794 = vadd.f32 %v2364, %v2716
        %v2795 = vadd.f32 %v2365, %v2721
        %v2796 = vadd.f32 %v2366, %v2726
        %v2797 = vadd.f32 %v2367, %v2731
        %v2798 = vadd.f32 %v2368, %v2736
        %v2799 = vadd.f32 %v2369, %v2741
        %v2800 = vadd.f32 %v2370, %v2746
        %v2801 = vadd.f32 %v2371, %v2751
        %v2802 = vadd.f32 %v2372, %v2756
        %v2803 = vadd.f32 %v2373, %v2761
        %v2804 = vadd.f32 %v2374, %v2766
        %v2805 = vld [vmem:[%s252 + $0x24] sm:$0xff]
        %v2806 = vld [vmem:[%s252 + $0x2c] sm:$0xff]
        %v2807 = vld [vmem:[%s252 + $0x34] sm:$0xff]
        %v2808 = vld [vmem:[%s252 + $0x3c] sm:$0xff]
        %v2809 = vld [vmem:[%s252 + $0x44] sm:$0xff]
        %v2810 = vld [vmem:[%s252 + $0x4c] sm:$0xff]
        %v2811 = vld [vmem:[%s252 + $0x54] sm:$0xff]
        %v2812 = vld [vmem:[%s252 + $0x5c] sm:$0xff]
        %v2813 = vld [vmem:[%s252 + $0x64] sm:$0xff]
        %v2814 = vld [vmem:[%s252 + $0x6c] sm:$0xff]
        %v2815 = vld [vmem:[%s252 + $0x74] sm:$0xff]
        %v2816 = vld [vmem:[%s252 + $0x7c] sm:$0xff]
        %v2817 = vld [vmem:[%s252 + $0x84] sm:$0xff]
        %v2818 = vld [vmem:[%s252 + $0x8c] sm:$0xff]
        %v2819 = vld [vmem:[%s252 + $0x94] sm:$0xff]
        %v2820 = vld [vmem:[%s252 + $0x9c] sm:$0xff]
        %v2821 = vld [vmem:[%s252 + $0xa4] sm:$0xff]
        %v2822 = vld [vmem:[%s252 + $0xac] sm:$0xff]
        %v2823 = vld [vmem:[%s252 + $0xb4] sm:$0xff]
        %v2824 = vld [vmem:[%s252 + $0xbc] sm:$0xff]
        %v2825 = vld [vmem:[%s252 + $0xc4] sm:$0xff]
        %v2826 = vld [vmem:[%s252 + $0xcc] sm:$0xff]
        %v2827 = vld [vmem:[%s252 + $0xd4] sm:$0xff]
        %v2828 = vld [vmem:[%s252 + $0xdc] sm:$0xff]
        %v2829 = vld [vmem:[%s252 + $0xe4] sm:$0xff]
        %v2830 = vld [vmem:[%s252 + $0xec] sm:$0xff]
        %v2831 = vld [vmem:[%s252 + $0xf4] sm:$0xff]
        %v2832 = vld [vmem:[%s252 + $0xfc] sm:$0xff]
        %v2833 = vld [vmem:[%s252 + $0x104] sm:$0xff]
        %v2834 = vld [vmem:[%s252 + $0x10c] sm:$0xff]
        %v2835 = vld [vmem:[%s252 + $0x114] sm:$0xff]
        %v2836 = vld [vmem:[%s252 + $0x11c] sm:$0xff]
        %v2837 = vld [vmem:[%s252 + $0x124] sm:$0xff]
        %v2838 = vld [vmem:[%s252 + $0x12c] sm:$0xff]
        %v2839 = vld [vmem:[%s252 + $0x134] sm:$0xff]
        %v2840 = vld [vmem:[%s252 + $0x13c] sm:$0xff]
        %s2841 = scalar_lea.vmem [#allocation5], 24
        %v2842 = vld [vmem:[%s2841] sm:$0xf]
        %v2844 = vsel %vm371, %v2805, 0
        %v2847 = vsel %vm371, %v2806, 0
        %v2850 = vsel %vm371, %v2807, 0
        %v2853 = vsel %vm371, %v2808, 0
        %v2856 = vsel %vm371, %v2809, 0
        %v2859 = vsel %vm371, %v2810, 0
        %v2862 = vsel %vm371, %v2811, 0
        %v2865 = vsel %vm371, %v2812, 0
        %v2868 = vsel %vm371, %v2813, 0
        %v2871 = vsel %vm371, %v2814, 0
        %v2874 = vsel %vm371, %v2815, 0
        %v2877 = vsel %vm371, %v2816, 0
        %v2880 = vsel %vm371, %v2817, 0
        %v2883 = vsel %vm371, %v2818, 0
        %v2886 = vsel %vm371, %v2819, 0
        %v2889 = vsel %vm371, %v2820, 0
        %v2892 = vsel %vm371, %v2821, 0
        %v2895 = vsel %vm371, %v2822, 0
        %v2898 = vsel %vm371, %v2823, 0
        %v2901 = vsel %vm371, %v2824, 0
        %v2904 = vsel %vm371, %v2825, 0
        %v2907 = vsel %vm371, %v2826, 0
        %v2910 = vsel %vm371, %v2827, 0
        %v2913 = vsel %vm371, %v2828, 0
        %v2916 = vsel %vm371, %v2829, 0
        %v2919 = vsel %vm371, %v2830, 0
        %v2922 = vsel %vm371, %v2831, 0
        %v2925 = vsel %vm371, %v2832, 0
        %v2928 = vsel %vm371, %v2833, 0
        %v2931 = vsel %vm371, %v2834, 0
        %v2934 = vsel %vm371, %v2835, 0
        %v2937 = vsel %vm371, %v2836, 0
        %v2940 = vsel %vm371, %v2837, 0
        %v2943 = vsel %vm371, %v2838, 0
        %v2946 = vsel %vm371, %v2839, 0
        %v2949 = vsel %vm371, %v2840, 0
        %v2952 = vsel %vm480, %v2842, 0
        %2954 = vmatprep.subr.mxu0 0.0
        %2955 = vmatpush1.msra.mxu0 %v2952
        %2956 = vmatprep.subr.mxu0 0.0
        %2957 = vmatpush1.msra.mxu0 0.0
        %2958 = vmatprep.subr.mxu0 0.0
        %2959 = vmatpush1.msra.mxu0 0.0
        %2960 = vmatprep.subr.mxu0 0.0
        %2961 = vmatpush1.msra.mxu0 0.0
        %2962 = vmatprep.subr.mxu0 0.0
        %2963 = vmatpush1.msra.mxu0 0.0
        %2964 = vmatprep.subr.mxu0 0.0
        %2965 = vmatpush1.msra.mxu0 0.0
        %2966 = vmatprep.subr.mxu0 0.0
        %2967 = vmatpush1.msra.mxu0 0.0
        %2968 = vmatprep.subr.mxu0 0.0
        %2969 = vmatpush1.msra.mxu0 0.0
        %2970 = vmatprep.subr.mxu0 0.0
        %2971 = vmatpush1.msra.mxu0 0.0
        %2972 = vmatprep.subr.mxu0 0.0
        %2973 = vmatpush1.msra.mxu0 0.0
        %2974 = vmatprep.subr.mxu0 0.0
        %2975 = vmatpush1.msra.mxu0 0.0
        %2976 = vmatprep.subr.mxu0 0.0
        %2977 = vmatpush1.msra.mxu0 0.0
        %2978 = vmatprep.subr.mxu0 0.0
        %2979 = vmatpush1.msra.mxu0 0.0
        %2980 = vmatprep.subr.mxu0 0.0
        %2981 = vmatpush1.msra.mxu0 0.0
        %2982 = vmatprep.subr.mxu0 0.0
        %2983 = vmatpush1.msra.mxu0 0.0
        %2984 = vmatprep.subr.mxu0 0.0
        %2985 = vmatpush1.msra.mxu0 0.0
        %2986 = vmatprep.subr.mxu0 0.0
        %2987 = vmatpush1.msra.mxu0 0.0
        %2988 = vmatprep.subr.mxu0 0.0
        %2989 = vmatpush1.msra.mxu0 0.0
        %2990 = vmatprep.subr.mxu0 0.0
        %2991 = vmatpush1.msra.mxu0 0.0
        %2992 = vmatprep.subr.mxu0 0.0
        %2993 = vmatpush1.msra.mxu0 0.0
        %2994 = vmatprep.subr.mxu0 0.0
        %2995 = vmatpush1.msra.mxu0 0.0
        %2996 = vmatprep.subr.mxu0 0.0
        %2997 = vmatpush1.msra.mxu0 0.0
        %2998 = vmatprep.subr.mxu0 0.0
        %2999 = vmatpush1.msra.mxu0 0.0
        %3000 = vmatprep.subr.mxu0 0.0
        %3001 = vmatpush1.msra.mxu0 0.0
        %3002 = vmatprep.subr.mxu0 0.0
        %3003 = vmatpush1.msra.mxu0 0.0
        %3004 = vmatprep.subr.mxu0 0.0
        %3005 = vmatpush1.msra.mxu0 0.0
        %3006 = vmatprep.subr.mxu0 0.0
        %3007 = vmatpush1.msra.mxu0 0.0
        %3008 = vmatprep.subr.mxu0 0.0
        %3009 = vmatpush1.msra.mxu0 0.0
        %3010 = vmatprep.subr.mxu0 0.0
        %3011 = vmatpush1.msra.mxu0 0.0
        %3012 = vmatprep.subr.mxu0 0.0
        %3013 = vmatpush1.msra.mxu0 0.0
        %3014 = vmatprep.subr.mxu0 0.0
        %3015 = vmatpush1.msra.mxu0 0.0
        %3016 = vmatprep.subr.mxu0 0.0
        %3017 = vmatpush1.msra.mxu0 0.0
        %3018 = vmatprep.mubr.f32.mxu0 0.0
        %3019 = vmatmul.mubr.f32.gmra.mrb[0].mxu0 %v2844
        %v3020 = vpop.f32.mrb[0].mxu0
        %v3021 = vadd.f32 0.0, %v3020
        %v3022 = vpop.f32.mrb[0].mxu0
        %3023 = vmatprep.mubr.f32.mxu0 0.0
        %3024 = vmatmul.mubr.f32.gmra.mrb[0].mxu0 %v2847
        %v3025 = vpop.f32.mrb[0].mxu0
        %v3026 = vadd.f32 0.0, %v3025
        %v3027 = vpop.f32.mrb[0].mxu0
        %3028 = vmatprep.mubr.f32.mxu0 0.0
        %3029 = vmatmul.mubr.f32.gmra.mrb[0].mxu0 %v2850
        %v3030 = vpop.f32.mrb[0].mxu0
        %v3031 = vadd.f32 0.0, %v3030
        %v3032 = vpop.f32.mrb[0].mxu0
        %3033 = vmatprep.mubr.f32.mxu0 0.0
        %3034 = vmatmul.mubr.f32.gmra.mrb[0].mxu0 %v2853
        %v3035 = vpop.f32.mrb[0].mxu0
        %v3036 = vadd.f32 0.0, %v3035
        %v3037 = vpop.f32.mrb[0].mxu0
        %3038 = vmatprep.mubr.f32.mxu0 0.0
        %3039 = vmatmul.mubr.f32.gmra.mrb[0].mxu0 %v2856
        %v3040 = vpop.f32.mrb[0].mxu0
        %v3041 = vadd.f32 0.0, %v3040
        %v3042 = vpop.f32.mrb[0].mxu0
        %3043 = vmatprep.mubr.f32.mxu0 0.0
        %3044 = vmatmul.mubr.f32.gmra.mrb[0].mxu0 %v2859
        %v3045 = vpop.f32.mrb[0].mxu0
        %v3046 = vadd.f32 0.0, %v3045
        %v3047 = vpop.f32.mrb[0].mxu0
        %3048 = vmatprep.mubr.f32.mxu0 0.0
        %3049 = vmatmul.mubr.f32.gmra.mrb[0].mxu0 %v2862
        %v3050 = vpop.f32.mrb[0].mxu0
        %v3051 = vadd.f32 0.0, %v3050
        %v3052 = vpop.f32.mrb[0].mxu0
        %3053 = vmatprep.mubr.f32.mxu0 0.0
        %3054 = vmatmul.mubr.f32.gmra.mrb[0].mxu0 %v2865
        %v3055 = vpop.f32.mrb[0].mxu0
        %v3056 = vadd.f32 0.0, %v3055
        %v3057 = vpop.f32.mrb[0].mxu0
        %3058 = vmatprep.mubr.f32.mxu0 0.0
        %3059 = vmatmul.mubr.f32.gmra.mrb[0].mxu0 %v2868
        %v3060 = vpop.f32.mrb[0].mxu0
        %v3061 = vadd.f32 0.0, %v3060
        %v3062 = vpop.f32.mrb[0].mxu0
        %3063 = vmatprep.mubr.f32.mxu0 0.0
        %3064 = vmatmul.mubr.f32.gmra.mrb[0].mxu0 %v2871
        %v3065 = vpop.f32.mrb[0].mxu0
        %v3066 = vadd.f32 0.0, %v3065
        %v3067 = vpop.f32.mrb[0].mxu0
        %3068 = vmatprep.mubr.f32.mxu0 0.0
        %3069 = vmatmul.mubr.f32.gmra.mrb[0].mxu0 %v2874
        %v3070 = vpop.f32.mrb[0].mxu0
        %v3071 = vadd.f32 0.0, %v3070
        %v3072 = vpop.f32.mrb[0].mxu0
        %3073 = vmatprep.mubr.f32.mxu0 0.0
        %3074 = vmatmul.mubr.f32.gmra.mrb[0].mxu0 %v2877
        %v3075 = vpop.f32.mrb[0].mxu0
        %v3076 = vadd.f32 0.0, %v3075
        %v3077 = vpop.f32.mrb[0].mxu0
        %3078 = vmatprep.mubr.f32.mxu0 0.0
        %3079 = vmatmul.mubr.f32.gmra.mrb[0].mxu0 %v2880
        %v3080 = vpop.f32.mrb[0].mxu0
        %v3081 = vadd.f32 0.0, %v3080
        %v3082 = vpop.f32.mrb[0].mxu0
        %3083 = vmatprep.mubr.f32.mxu0 0.0
        %3084 = vmatmul.mubr.f32.gmra.mrb[0].mxu0 %v2883
        %v3085 = vpop.f32.mrb[0].mxu0
        %v3086 = vadd.f32 0.0, %v3085
        %v3087 = vpop.f32.mrb[0].mxu0
        %3088 = vmatprep.mubr.f32.mxu0 0.0
        %3089 = vmatmul.mubr.f32.gmra.mrb[0].mxu0 %v2886
        %v3090 = vpop.f32.mrb[0].mxu0
        %v3091 = vadd.f32 0.0, %v3090
        %v3092 = vpop.f32.mrb[0].mxu0
        %3093 = vmatprep.mubr.f32.mxu0 0.0
        %3094 = vmatmul.mubr.f32.gmra.mrb[0].mxu0 %v2889
        %v3095 = vpop.f32.mrb[0].mxu0
        %v3096 = vadd.f32 0.0, %v3095
        %v3097 = vpop.f32.mrb[0].mxu0
        %3098 = vmatprep.mubr.f32.mxu0 0.0
        %3099 = vmatmul.mubr.f32.gmra.mrb[0].mxu0 %v2892
        %v3100 = vpop.f32.mrb[0].mxu0
        %v3101 = vadd.f32 0.0, %v3100
        %v3102 = vpop.f32.mrb[0].mxu0
        %3103 = vmatprep.mubr.f32.mxu0 0.0
        %3104 = vmatmul.mubr.f32.gmra.mrb[0].mxu0 %v2895
        %v3105 = vpop.f32.mrb[0].mxu0
        %v3106 = vadd.f32 0.0, %v3105
        %v3107 = vpop.f32.mrb[0].mxu0
        %3108 = vmatprep.mubr.f32.mxu0 0.0
        %3109 = vmatmul.mubr.f32.gmra.mrb[0].mxu0 %v2898
        %v3110 = vpop.f32.mrb[0].mxu0
        %v3111 = vadd.f32 0.0, %v3110
        %v3112 = vpop.f32.mrb[0].mxu0
        %3113 = vmatprep.mubr.f32.mxu0 0.0
        %3114 = vmatmul.mubr.f32.gmra.mrb[0].mxu0 %v2901
        %v3115 = vpop.f32.mrb[0].mxu0
        %v3116 = vadd.f32 0.0, %v3115
        %v3117 = vpop.f32.mrb[0].mxu0
        %3118 = vmatprep.mubr.f32.mxu0 0.0
        %3119 = vmatmul.mubr.f32.gmra.mrb[0].mxu0 %v2904
        %v3120 = vpop.f32.mrb[0].mxu0
        %v3121 = vadd.f32 0.0, %v3120
        %v3122 = vpop.f32.mrb[0].mxu0
        %3123 = vmatprep.mubr.f32.mxu0 0.0
        %3124 = vmatmul.mubr.f32.gmra.mrb[0].mxu0 %v2907
        %v3125 = vpop.f32.mrb[0].mxu0
        %v3126 = vadd.f32 0.0, %v3125
        %v3127 = vpop.f32.mrb[0].mxu0
        %3128 = vmatprep.mubr.f32.mxu0 0.0
        %3129 = vmatmul.mubr.f32.gmra.mrb[0].mxu0 %v2910
        %v3130 = vpop.f32.mrb[0].mxu0
        %v3131 = vadd.f32 0.0, %v3130
        %v3132 = vpop.f32.mrb[0].mxu0
        %3133 = vmatprep.mubr.f32.mxu0 0.0
        %3134 = vmatmul.mubr.f32.gmra.mrb[0].mxu0 %v2913
        %v3135 = vpop.f32.mrb[0].mxu0
        %v3136 = vadd.f32 0.0, %v3135
        %v3137 = vpop.f32.mrb[0].mxu0
        %3138 = vmatprep.mubr.f32.mxu0 0.0
        %3139 = vmatmul.mubr.f32.gmra.mrb[0].mxu0 %v2916
        %v3140 = vpop.f32.mrb[0].mxu0
        %v3141 = vadd.f32 0.0, %v3140
        %v3142 = vpop.f32.mrb[0].mxu0
        %3143 = vmatprep.mubr.f32.mxu0 0.0
        %3144 = vmatmul.mubr.f32.gmra.mrb[0].mxu0 %v2919
        %v3145 = vpop.f32.mrb[0].mxu0
        %v3146 = vadd.f32 0.0, %v3145
        %v3147 = vpop.f32.mrb[0].mxu0
        %3148 = vmatprep.mubr.f32.mxu0 0.0
        %3149 = vmatmul.mubr.f32.gmra.mrb[0].mxu0 %v2922
        %v3150 = vpop.f32.mrb[0].mxu0
        %v3151 = vadd.f32 0.0, %v3150
        %v3152 = vpop.f32.mrb[0].mxu0
        %3153 = vmatprep.mubr.f32.mxu0 0.0
        %3154 = vmatmul.mubr.f32.gmra.mrb[0].mxu0 %v2925
        %v3155 = vpop.f32.mrb[0].mxu0
        %v3156 = vadd.f32 0.0, %v3155
        %v3157 = vpop.f32.mrb[0].mxu0
        %3158 = vmatprep.mubr.f32.mxu0 0.0
        %3159 = vmatmul.mubr.f32.gmra.mrb[0].mxu0 %v2928
        %v3160 = vpop.f32.mrb[0].mxu0
        %v3161 = vadd.f32 0.0, %v3160
        %v3162 = vpop.f32.mrb[0].mxu0
        %3163 = vmatprep.mubr.f32.mxu0 0.0
        %3164 = vmatmul.mubr.f32.gmra.mrb[0].mxu0 %v2931
        %v3165 = vpop.f32.mrb[0].mxu0
        %v3166 = vadd.f32 0.0, %v3165
        %v3167 = vpop.f32.mrb[0].mxu0
        %3168 = vmatprep.mubr.f32.mxu0 0.0
        %3169 = vmatmul.mubr.f32.gmra.mrb[0].mxu0 %v2934
        %v3170 = vpop.f32.mrb[0].mxu0
        %v3171 = vadd.f32 0.0, %v3170
        %v3172 = vpop.f32.mrb[0].mxu0
        %3173 = vmatprep.mubr.f32.mxu0 0.0
        %3174 = vmatmul.mubr.f32.gmra.mrb[0].mxu0 %v2937
        %v3175 = vpop.f32.mrb[0].mxu0
        %v3176 = vadd.f32 0.0, %v3175
        %v3177 = vpop.f32.mrb[0].mxu0
        %3178 = vmatprep.mubr.f32.mxu0 0.0
        %3179 = vmatmul.mubr.f32.gmra.mrb[0].mxu0 %v2940
        %v3180 = vpop.f32.mrb[0].mxu0
        %v3181 = vadd.f32 0.0, %v3180
        %v3182 = vpop.f32.mrb[0].mxu0
        %3183 = vmatprep.mubr.f32.mxu0 0.0
        %3184 = vmatmul.mubr.f32.gmra.mrb[0].mxu0 %v2943
        %v3185 = vpop.f32.mrb[0].mxu0
        %v3186 = vadd.f32 0.0, %v3185
        %v3187 = vpop.f32.mrb[0].mxu0
        %3188 = vmatprep.mubr.f32.mxu0 0.0
        %3189 = vmatmul.mubr.f32.gmra.mrb[0].mxu0 %v2946
        %v3190 = vpop.f32.mrb[0].mxu0
        %v3191 = vadd.f32 0.0, %v3190
        %v3192 = vpop.f32.mrb[0].mxu0
        %3193 = vmatprep.mubr.f32.mxu0 0.0
        %3194 = vmatmul.mubr.f32.gmra.mrb[0].mxu0 %v2949
        %v3195 = vpop.f32.mrb[0].mxu0
        %v3196 = vadd.f32 0.0, %v3195
        %v3197 = vpop.f32.mrb[0].mxu0
        %3198 = vdwg.mxu0
        %v3199 = vadd.f32 %v2769, %v3021
        %v3200 = vadd.f32 %v2770, %v3026
        %v3201 = vadd.f32 %v2771, %v3031
        %v3202 = vadd.f32 %v2772, %v3036
        %v3203 = vadd.f32 %v2773, %v3041
        %v3204 = vadd.f32 %v2774, %v3046
        %v3205 = vadd.f32 %v2775, %v3051
        %v3206 = vadd.f32 %v2776, %v3056
        %v3207 = vadd.f32 %v2777, %v3061
        %v3208 = vadd.f32 %v2778, %v3066
        %v3209 = vadd.f32 %v2779, %v3071
        %v3210 = vadd.f32 %v2780, %v3076
        %v3211 = vadd.f32 %v2781, %v3081
        %v3212 = vadd.f32 %v2782, %v3086
        %v3213 = vadd.f32 %v2783, %v3091
        %v3214 = vadd.f32 %v2784, %v3096
        %v3215 = vadd.f32 %v2785, %v3101
        %v3216 = vadd.f32 %v2786, %v3106
        %v3217 = vadd.f32 %v2787, %v3111
        %v3218 = vadd.f32 %v2788, %v3116
        %v3219 = vadd.f32 %v2789, %v3121
        %v3220 = vadd.f32 %v2790, %v3126
        %v3221 = vadd.f32 %v2791, %v3131
        %v3222 = vadd.f32 %v2792, %v3136
        %v3223 = vadd.f32 %v2793, %v3141
        %v3224 = vadd.f32 %v2794, %v3146
        %v3225 = vadd.f32 %v2795, %v3151
        %v3226 = vadd.f32 %v2796, %v3156
        %v3227 = vadd.f32 %v2797, %v3161
        %v3228 = vadd.f32 %v2798, %v3166
        %v3229 = vadd.f32 %v2799, %v3171
        %v3230 = vadd.f32 %v2800, %v3176
        %v3231 = vadd.f32 %v2801, %v3181
        %v3232 = vadd.f32 %v2802, %v3186
        %v3233 = vadd.f32 %v2803, %v3191
        %v3234 = vadd.f32 %v2804, %v3196
        %v3235 = vld [vmem:[%s252 + $0x25] sm:$0xff]
        %v3236 = vld [vmem:[%s252 + $0x2d] sm:$0xff]
        %v3237 = vld [vmem:[%s252 + $0x35] sm:$0xff]
        %v3238 = vld [vmem:[%s252 + $0x3d] sm:$0xff]
        %v3239 = vld [vmem:[%s252 + $0x45] sm:$0xff]
        %v3240 = vld [vmem:[%s252 + $0x4d] sm:$0xff]
        %v3241 = vld [vmem:[%s252 + $0x55] sm:$0xff]
        %v3242 = vld [vmem:[%s252 + $0x5d] sm:$0xff]
        %v3243 = vld [vmem:[%s252 + $0x65] sm:$0xff]
        %v3244 = vld [vmem:[%s252 + $0x6d] sm:$0xff]
        %v3245 = vld [vmem:[%s252 + $0x75] sm:$0xff]
        %v3246 = vld [vmem:[%s252 + $0x7d] sm:$0xff]
        %v3247 = vld [vmem:[%s252 + $0x85] sm:$0xff]
        %v3248 = vld [vmem:[%s252 + $0x8d] sm:$0xff]
        %v3249 = vld [vmem:[%s252 + $0x95] sm:$0xff]
        %v3250 = vld [vmem:[%s252 + $0x9d] sm:$0xff]
        %v3251 = vld [vmem:[%s252 + $0xa5] sm:$0xff]
        %v3252 = vld [vmem:[%s252 + $0xad] sm:$0xff]
        %v3253 = vld [vmem:[%s252 + $0xb5] sm:$0xff]
        %v3254 = vld [vmem:[%s252 + $0xbd] sm:$0xff]
        %v3255 = vld [vmem:[%s252 + $0xc5] sm:$0xff]
        %v3256 = vld [vmem:[%s252 + $0xcd] sm:$0xff]
        %v3257 = vld [vmem:[%s252 + $0xd5] sm:$0xff]
        %v3258 = vld [vmem:[%s252 + $0xdd] sm:$0xff]
        %v3259 = vld [vmem:[%s252 + $0xe5] sm:$0xff]
        %v3260 = vld [vmem:[%s252 + $0xed] sm:$0xff]
        %v3261 = vld [vmem:[%s252 + $0xf5] sm:$0xff]
        %v3262 = vld [vmem:[%s252 + $0xfd] sm:$0xff]
        %v3263 = vld [vmem:[%s252 + $0x105] sm:$0xff]
        %v3264 = vld [vmem:[%s252 + $0x10d] sm:$0xff]
        %v3265 = vld [vmem:[%s252 + $0x115] sm:$0xff]
        %v3266 = vld [vmem:[%s252 + $0x11d] sm:$0xff]
        %v3267 = vld [vmem:[%s252 + $0x125] sm:$0xff]
        %v3268 = vld [vmem:[%s252 + $0x12d] sm:$0xff]
        %v3269 = vld [vmem:[%s252 + $0x135] sm:$0xff]
        %v3270 = vld [vmem:[%s252 + $0x13d] sm:$0xff]
        %s3271 = scalar_lea.vmem [#allocation5], 28
        %v3272 = vld [vmem:[%s3271] sm:$0xf]
        %v3274 = vsel %vm371, %v3235, 0
        %v3277 = vsel %vm371, %v3236, 0
        %v3280 = vsel %vm371, %v3237, 0
        %v3283 = vsel %vm371, %v3238, 0
        %v3286 = vsel %vm371, %v3239, 0
        %v3289 = vsel %vm371, %v3240, 0
        %v3292 = vsel %vm371, %v3241, 0
        %v3295 = vsel %vm371, %v3242, 0
        %v3298 = vsel %vm371, %v3243, 0
        %v3301 = vsel %vm371, %v3244, 0
        %v3304 = vsel %vm371, %v3245, 0
        %v3307 = vsel %vm371, %v3246, 0
        %v3310 = vsel %vm371, %v3247, 0
        %v3313 = vsel %vm371, %v3248, 0
        %v3316 = vsel %vm371, %v3249, 0
        %v3319 = vsel %vm371, %v3250, 0
        %v3322 = vsel %vm371, %v3251, 0
        %v3325 = vsel %vm371, %v3252, 0
        %v3328 = vsel %vm371, %v3253, 0
        %v3331 = vsel %vm371, %v3254, 0
        %v3334 = vsel %vm371, %v3255, 0
        %v3337 = vsel %vm371, %v3256, 0
        %v3340 = vsel %vm371, %v3257, 0
        %v3343 = vsel %vm371, %v3258, 0
        %v3346 = vsel %vm371, %v3259, 0
        %v3349 = vsel %vm371, %v3260, 0
        %v3352 = vsel %vm371, %v3261, 0
        %v3355 = vsel %vm371, %v3262, 0
        %v3358 = vsel %vm371, %v3263, 0
        %v3361 = vsel %vm371, %v3264, 0
        %v3364 = vsel %vm371, %v3265, 0
        %v3367 = vsel %vm371, %v3266, 0
        %v3370 = vsel %vm371, %v3267, 0
        %v3373 = vsel %vm371, %v3268, 0
        %v3376 = vsel %vm371, %v3269, 0
        %v3379 = vsel %vm371, %v3270, 0
        %v3382 = vsel %vm480, %v3272, 0
        %3384 = vmatprep.subr.mxu0 0.0
        %3385 = vmatpush1.msra.mxu0 %v3382
        %3386 = vmatprep.subr.mxu0 0.0
        %3387 = vmatpush1.msra.mxu0 0.0
        %3388 = vmatprep.subr.mxu0 0.0
        %3389 = vmatpush1.msra.mxu0 0.0
        %3390 = vmatprep.subr.mxu0 0.0
        %3391 = vmatpush1.msra.mxu0 0.0
        %3392 = vmatprep.subr.mxu0 0.0
        %3393 = vmatpush1.msra.mxu0 0.0
        %3394 = vmatprep.subr.mxu0 0.0
        %3395 = vmatpush1.msra.mxu0 0.0
        %3396 = vmatprep.subr.mxu0 0.0
        %3397 = vmatpush1.msra.mxu0 0.0
        %3398 = vmatprep.subr.mxu0 0.0
        %3399 = vmatpush1.msra.mxu0 0.0
        %3400 = vmatprep.subr.mxu0 0.0
        %3401 = vmatpush1.msra.mxu0 0.0
        %3402 = vmatprep.subr.mxu0 0.0
        %3403 = vmatpush1.msra.mxu0 0.0
        %3404 = vmatprep.subr.mxu0 0.0
        %3405 = vmatpush1.msra.mxu0 0.0
        %3406 = vmatprep.subr.mxu0 0.0
        %3407 = vmatpush1.msra.mxu0 0.0
        %3408 = vmatprep.subr.mxu0 0.0
        %3409 = vmatpush1.msra.mxu0 0.0
        %3410 = vmatprep.subr.mxu0 0.0
        %3411 = vmatpush1.msra.mxu0 0.0
        %3412 = vmatprep.subr.mxu0 0.0
        %3413 = vmatpush1.msra.mxu0 0.0
        %3414 = vmatprep.subr.mxu0 0.0
        %3415 = vmatpush1.msra.mxu0 0.0
        %3416 = vmatprep.subr.mxu0 0.0
        %3417 = vmatpush1.msra.mxu0 0.0
        %3418 = vmatprep.subr.mxu0 0.0
        %3419 = vmatpush1.msra.mxu0 0.0
        %3420 = vmatprep.subr.mxu0 0.0
        %3421 = vmatpush1.msra.mxu0 0.0
        %3422 = vmatprep.subr.mxu0 0.0
        %3423 = vmatpush1.msra.mxu0 0.0
        %3424 = vmatprep.subr.mxu0 0.0
        %3425 = vmatpush1.msra.mxu0 0.0
        %3426 = vmatprep.subr.mxu0 0.0
        %3427 = vmatpush1.msra.mxu0 0.0
        %3428 = vmatprep.subr.mxu0 0.0
        %3429 = vmatpush1.msra.mxu0 0.0
        %3430 = vmatprep.subr.mxu0 0.0
        %3431 = vmatpush1.msra.mxu0 0.0
        %3432 = vmatprep.subr.mxu0 0.0
        %3433 = vmatpush1.msra.mxu0 0.0
        %3434 = vmatprep.subr.mxu0 0.0
        %3435 = vmatpush1.msra.mxu0 0.0
        %3436 = vmatprep.subr.mxu0 0.0
        %3437 = vmatpush1.msra.mxu0 0.0
        %3438 = vmatprep.subr.mxu0 0.0
        %3439 = vmatpush1.msra.mxu0 0.0
        %3440 = vmatprep.subr.mxu0 0.0
        %3441 = vmatpush1.msra.mxu0 0.0
        %3442 = vmatprep.subr.mxu0 0.0
        %3443 = vmatpush1.msra.mxu0 0.0
        %3444 = vmatprep.subr.mxu0 0.0
        %3445 = vmatpush1.msra.mxu0 0.0
        %3446 = vmatprep.subr.mxu0 0.0
        %3447 = vmatpush1.msra.mxu0 0.0
        %3448 = vmatprep.mubr.f32.mxu0 0.0
        %3449 = vmatmul.mubr.f32.gmra.mrb[0].mxu0 %v3274
        %v3450 = vpop.f32.mrb[0].mxu0
        %v3451 = vadd.f32 0.0, %v3450
        %v3452 = vpop.f32.mrb[0].mxu0
        %3453 = vmatprep.mubr.f32.mxu0 0.0
        %3454 = vmatmul.mubr.f32.gmra.mrb[0].mxu0 %v3277
        %v3455 = vpop.f32.mrb[0].mxu0
        %v3456 = vadd.f32 0.0, %v3455
        %v3457 = vpop.f32.mrb[0].mxu0
        %3458 = vmatprep.mubr.f32.mxu0 0.0
        %3459 = vmatmul.mubr.f32.gmra.mrb[0].mxu0 %v3280
        %v3460 = vpop.f32.mrb[0].mxu0
        %v3461 = vadd.f32 0.0, %v3460
        %v3462 = vpop.f32.mrb[0].mxu0
        %3463 = vmatprep.mubr.f32.mxu0 0.0
        %3464 = vmatmul.mubr.f32.gmra.mrb[0].mxu0 %v3283
        %v3465 = vpop.f32.mrb[0].mxu0
        %v3466 = vadd.f32 0.0, %v3465
        %v3467 = vpop.f32.mrb[0].mxu0
        %3468 = vmatprep.mubr.f32.mxu0 0.0
        %3469 = vmatmul.mubr.f32.gmra.mrb[0].mxu0 %v3286
        %v3470 = vpop.f32.mrb[0].mxu0
        %v3471 = vadd.f32 0.0, %v3470
        %v3472 = vpop.f32.mrb[0].mxu0
        %3473 = vmatprep.mubr.f32.mxu0 0.0
        %3474 = vmatmul.mubr.f32.gmra.mrb[0].mxu0 %v3289
        %v3475 = vpop.f32.mrb[0].mxu0
        %v3476 = vadd.f32 0.0, %v3475
        %v3477 = vpop.f32.mrb[0].mxu0
        %3478 = vmatprep.mubr.f32.mxu0 0.0
        %3479 = vmatmul.mubr.f32.gmra.mrb[0].mxu0 %v3292
        %v3480 = vpop.f32.mrb[0].mxu0
        %v3481 = vadd.f32 0.0, %v3480
        %v3482 = vpop.f32.mrb[0].mxu0
        %3483 = vmatprep.mubr.f32.mxu0 0.0
        %3484 = vmatmul.mubr.f32.gmra.mrb[0].mxu0 %v3295
        %v3485 = vpop.f32.mrb[0].mxu0
        %v3486 = vadd.f32 0.0, %v3485
        %v3487 = vpop.f32.mrb[0].mxu0
        %3488 = vmatprep.mubr.f32.mxu0 0.0
        %3489 = vmatmul.mubr.f32.gmra.mrb[0].mxu0 %v3298
        %v3490 = vpop.f32.mrb[0].mxu0
        %v3491 = vadd.f32 0.0, %v3490
        %v3492 = vpop.f32.mrb[0].mxu0
        %3493 = vmatprep.mubr.f32.mxu0 0.0
        %3494 = vmatmul.mubr.f32.gmra.mrb[0].mxu0 %v3301
        %v3495 = vpop.f32.mrb[0].mxu0
        %v3496 = vadd.f32 0.0, %v3495
        %v3497 = vpop.f32.mrb[0].mxu0
        %3498 = vmatprep.mubr.f32.mxu0 0.0
        %3499 = vmatmul.mubr.f32.gmra.mrb[0].mxu0 %v3304
        %v3500 = vpop.f32.mrb[0].mxu0
        %v3501 = vadd.f32 0.0, %v3500
        %v3502 = vpop.f32.mrb[0].mxu0
        %3503 = vmatprep.mubr.f32.mxu0 0.0
        %3504 = vmatmul.mubr.f32.gmra.mrb[0].mxu0 %v3307
        %v3505 = vpop.f32.mrb[0].mxu0
        %v3506 = vadd.f32 0.0, %v3505
        %v3507 = vpop.f32.mrb[0].mxu0
        %3508 = vmatprep.mubr.f32.mxu0 0.0
        %3509 = vmatmul.mubr.f32.gmra.mrb[0].mxu0 %v3310
        %v3510 = vpop.f32.mrb[0].mxu0
        %v3511 = vadd.f32 0.0, %v3510
        %v3512 = vpop.f32.mrb[0].mxu0
        %3513 = vmatprep.mubr.f32.mxu0 0.0
        %3514 = vmatmul.mubr.f32.gmra.mrb[0].mxu0 %v3313
        %v3515 = vpop.f32.mrb[0].mxu0
        %v3516 = vadd.f32 0.0, %v3515
        %v3517 = vpop.f32.mrb[0].mxu0
        %3518 = vmatprep.mubr.f32.mxu0 0.0
        %3519 = vmatmul.mubr.f32.gmra.mrb[0].mxu0 %v3316
        %v3520 = vpop.f32.mrb[0].mxu0
        %v3521 = vadd.f32 0.0, %v3520
        %v3522 = vpop.f32.mrb[0].mxu0
        %3523 = vmatprep.mubr.f32.mxu0 0.0
        %3524 = vmatmul.mubr.f32.gmra.mrb[0].mxu0 %v3319
        %v3525 = vpop.f32.mrb[0].mxu0
        %v3526 = vadd.f32 0.0, %v3525
        %v3527 = vpop.f32.mrb[0].mxu0
        %3528 = vmatprep.mubr.f32.mxu0 0.0
        %3529 = vmatmul.mubr.f32.gmra.mrb[0].mxu0 %v3322
        %v3530 = vpop.f32.mrb[0].mxu0
        %v3531 = vadd.f32 0.0, %v3530
        %v3532 = vpop.f32.mrb[0].mxu0
        %3533 = vmatprep.mubr.f32.mxu0 0.0
        %3534 = vmatmul.mubr.f32.gmra.mrb[0].mxu0 %v3325
        %v3535 = vpop.f32.mrb[0].mxu0
        %v3536 = vadd.f32 0.0, %v3535
        %v3537 = vpop.f32.mrb[0].mxu0
        %3538 = vmatprep.mubr.f32.mxu0 0.0
        %3539 = vmatmul.mubr.f32.gmra.mrb[0].mxu0 %v3328
        %v3540 = vpop.f32.mrb[0].mxu0
        %v3541 = vadd.f32 0.0, %v3540
        %v3542 = vpop.f32.mrb[0].mxu0
        %3543 = vmatprep.mubr.f32.mxu0 0.0
        %3544 = vmatmul.mubr.f32.gmra.mrb[0].mxu0 %v3331
        %v3545 = vpop.f32.mrb[0].mxu0
        %v3546 = vadd.f32 0.0, %v3545
        %v3547 = vpop.f32.mrb[0].mxu0
        %3548 = vmatprep.mubr.f32.mxu0 0.0
        %3549 = vmatmul.mubr.f32.gmra.mrb[0].mxu0 %v3334
        %v3550 = vpop.f32.mrb[0].mxu0
        %v3551 = vadd.f32 0.0, %v3550
        %v3552 = vpop.f32.mrb[0].mxu0
        %3553 = vmatprep.mubr.f32.mxu0 0.0
        %3554 = vmatmul.mubr.f32.gmra.mrb[0].mxu0 %v3337
        %v3555 = vpop.f32.mrb[0].mxu0
        %v3556 = vadd.f32 0.0, %v3555
        %v3557 = vpop.f32.mrb[0].mxu0
        %3558 = vmatprep.mubr.f32.mxu0 0.0
        %3559 = vmatmul.mubr.f32.gmra.mrb[0].mxu0 %v3340
        %v3560 = vpop.f32.mrb[0].mxu0
        %v3561 = vadd.f32 0.0, %v3560
        %v3562 = vpop.f32.mrb[0].mxu0
        %3563 = vmatprep.mubr.f32.mxu0 0.0
        %3564 = vmatmul.mubr.f32.gmra.mrb[0].mxu0 %v3343
        %v3565 = vpop.f32.mrb[0].mxu0
        %v3566 = vadd.f32 0.0, %v3565
        %v3567 = vpop.f32.mrb[0].mxu0
        %3568 = vmatprep.mubr.f32.mxu0 0.0
        %3569 = vmatmul.mubr.f32.gmra.mrb[0].mxu0 %v3346
        %v3570 = vpop.f32.mrb[0].mxu0
        %v3571 = vadd.f32 0.0, %v3570
        %v3572 = vpop.f32.mrb[0].mxu0
        %3573 = vmatprep.mubr.f32.mxu0 0.0
        %3574 = vmatmul.mubr.f32.gmra.mrb[0].mxu0 %v3349
        %v3575 = vpop.f32.mrb[0].mxu0
        %v3576 = vadd.f32 0.0, %v3575
        %v3577 = vpop.f32.mrb[0].mxu0
        %3578 = vmatprep.mubr.f32.mxu0 0.0
        %3579 = vmatmul.mubr.f32.gmra.mrb[0].mxu0 %v3352
        %v3580 = vpop.f32.mrb[0].mxu0
        %v3581 = vadd.f32 0.0, %v3580
        %v3582 = vpop.f32.mrb[0].mxu0
        %3583 = vmatprep.mubr.f32.mxu0 0.0
        %3584 = vmatmul.mubr.f32.gmra.mrb[0].mxu0 %v3355
        %v3585 = vpop.f32.mrb[0].mxu0
        %v3586 = vadd.f32 0.0, %v3585
        %v3587 = vpop.f32.mrb[0].mxu0
        %3588 = vmatprep.mubr.f32.mxu0 0.0
        %3589 = vmatmul.mubr.f32.gmra.mrb[0].mxu0 %v3358
        %v3590 = vpop.f32.mrb[0].mxu0
        %v3591 = vadd.f32 0.0, %v3590
        %v3592 = vpop.f32.mrb[0].mxu0
        %3593 = vmatprep.mubr.f32.mxu0 0.0
        %3594 = vmatmul.mubr.f32.gmra.mrb[0].mxu0 %v3361
        %v3595 = vpop.f32.mrb[0].mxu0
        %v3596 = vadd.f32 0.0, %v3595
        %v3597 = vpop.f32.mrb[0].mxu0
        %3598 = vmatprep.mubr.f32.mxu0 0.0
        %3599 = vmatmul.mubr.f32.gmra.mrb[0].mxu0 %v3364
        %v3600 = vpop.f32.mrb[0].mxu0
        %v3601 = vadd.f32 0.0, %v3600
        %v3602 = vpop.f32.mrb[0].mxu0
        %3603 = vmatprep.mubr.f32.mxu0 0.0
        %3604 = vmatmul.mubr.f32.gmra.mrb[0].mxu0 %v3367
        %v3605 = vpop.f32.mrb[0].mxu0
        %v3606 = vadd.f32 0.0, %v3605
        %v3607 = vpop.f32.mrb[0].mxu0
        %3608 = vmatprep.mubr.f32.mxu0 0.0
        %3609 = vmatmul.mubr.f32.gmra.mrb[0].mxu0 %v3370
        %v3610 = vpop.f32.mrb[0].mxu0
        %v3611 = vadd.f32 0.0, %v3610
        %v3612 = vpop.f32.mrb[0].mxu0
        %3613 = vmatprep.mubr.f32.mxu0 0.0
        %3614 = vmatmul.mubr.f32.gmra.mrb[0].mxu0 %v3373
        %v3615 = vpop.f32.mrb[0].mxu0
        %v3616 = vadd.f32 0.0, %v3615
        %v3617 = vpop.f32.mrb[0].mxu0
        %3618 = vmatprep.mubr.f32.mxu0 0.0
        %3619 = vmatmul.mubr.f32.gmra.mrb[0].mxu0 %v3376
        %v3620 = vpop.f32.mrb[0].mxu0
        %v3621 = vadd.f32 0.0, %v3620
        %v3622 = vpop.f32.mrb[0].mxu0
        %3623 = vmatprep.mubr.f32.mxu0 0.0
        %3624 = vmatmul.mubr.f32.gmra.mrb[0].mxu0 %v3379
        %v3625 = vpop.f32.mrb[0].mxu0
        %v3626 = vadd.f32 0.0, %v3625
        %v3627 = vpop.f32.mrb[0].mxu0
        %3628 = vdwg.mxu0
        %v3629 = vadd.f32 %v3199, %v3451
        %v3630 = vadd.f32 %v3200, %v3456
        %v3631 = vadd.f32 %v3201, %v3461
        %v3632 = vadd.f32 %v3202, %v3466
        %v3633 = vadd.f32 %v3203, %v3471
        %v3634 = vadd.f32 %v3204, %v3476
        %v3635 = vadd.f32 %v3205, %v3481
        %v3636 = vadd.f32 %v3206, %v3486
        %v3637 = vadd.f32 %v3207, %v3491
        %v3638 = vadd.f32 %v3208, %v3496
        %v3639 = vadd.f32 %v3209, %v3501
        %v3640 = vadd.f32 %v3210, %v3506
        %v3641 = vadd.f32 %v3211, %v3511
        %v3642 = vadd.f32 %v3212, %v3516
        %v3643 = vadd.f32 %v3213, %v3521
        %v3644 = vadd.f32 %v3214, %v3526
        %v3645 = vadd.f32 %v3215, %v3531
        %v3646 = vadd.f32 %v3216, %v3536
        %v3647 = vadd.f32 %v3217, %v3541
        %v3648 = vadd.f32 %v3218, %v3546
        %v3649 = vadd.f32 %v3219, %v3551
        %v3650 = vadd.f32 %v3220, %v3556
        %v3651 = vadd.f32 %v3221, %v3561
        %v3652 = vadd.f32 %v3222, %v3566
        %v3653 = vadd.f32 %v3223, %v3571
        %v3654 = vadd.f32 %v3224, %v3576
        %v3655 = vadd.f32 %v3225, %v3581
        %v3656 = vadd.f32 %v3226, %v3586
        %v3657 = vadd.f32 %v3227, %v3591
        %v3658 = vadd.f32 %v3228, %v3596
        %v3659 = vadd.f32 %v3229, %v3601
        %v3660 = vadd.f32 %v3230, %v3606
        %v3661 = vadd.f32 %v3231, %v3611
        %v3662 = vadd.f32 %v3232, %v3616
        %v3663 = vadd.f32 %v3233, %v3621
        %v3664 = vadd.f32 %v3234, %v3626
        %v3665 = vld [vmem:[%s252 + $0x26] sm:$0xff]
        %v3666 = vld [vmem:[%s252 + $0x2e] sm:$0xff]
        %v3667 = vld [vmem:[%s252 + $0x36] sm:$0xff]
        %v3668 = vld [vmem:[%s252 + $0x3e] sm:$0xff]
        %v3669 = vld [vmem:[%s252 + $0x46] sm:$0xff]
        %v3670 = vld [vmem:[%s252 + $0x4e] sm:$0xff]
        %v3671 = vld [vmem:[%s252 + $0x56] sm:$0xff]
        %v3672 = vld [vmem:[%s252 + $0x5e] sm:$0xff]
        %v3673 = vld [vmem:[%s252 + $0x66] sm:$0xff]
        %v3674 = vld [vmem:[%s252 + $0x6e] sm:$0xff]
        %v3675 = vld [vmem:[%s252 + $0x76] sm:$0xff]
        %v3676 = vld [vmem:[%s252 + $0x7e] sm:$0xff]
        %v3677 = vld [vmem:[%s252 + $0x86] sm:$0xff]
        %v3678 = vld [vmem:[%s252 + $0x8e] sm:$0xff]
        %v3679 = vld [vmem:[%s252 + $0x96] sm:$0xff]
        %v3680 = vld [vmem:[%s252 + $0x9e] sm:$0xff]
        %v3681 = vld [vmem:[%s252 + $0xa6] sm:$0xff]
        %v3682 = vld [vmem:[%s252 + $0xae] sm:$0xff]
        %v3683 = vld [vmem:[%s252 + $0xb6] sm:$0xff]
        %v3684 = vld [vmem:[%s252 + $0xbe] sm:$0xff]
        %v3685 = vld [vmem:[%s252 + $0xc6] sm:$0xff]
        %v3686 = vld [vmem:[%s252 + $0xce] sm:$0xff]
        %v3687 = vld [vmem:[%s252 + $0xd6] sm:$0xff]
        %v3688 = vld [vmem:[%s252 + $0xde] sm:$0xff]
        %v3689 = vld [vmem:[%s252 + $0xe6] sm:$0xff]
        %v3690 = vld [vmem:[%s252 + $0xee] sm:$0xff]
        %v3691 = vld [vmem:[%s252 + $0xf6] sm:$0xff]
        %v3692 = vld [vmem:[%s252 + $0xfe] sm:$0xff]
        %v3693 = vld [vmem:[%s252 + $0x106] sm:$0xff]
        %v3694 = vld [vmem:[%s252 + $0x10e] sm:$0xff]
        %v3695 = vld [vmem:[%s252 + $0x116] sm:$0xff]
        %v3696 = vld [vmem:[%s252 + $0x11e] sm:$0xff]
        %v3697 = vld [vmem:[%s252 + $0x126] sm:$0xff]
        %v3698 = vld [vmem:[%s252 + $0x12e] sm:$0xff]
        %v3699 = vld [vmem:[%s252 + $0x136] sm:$0xff]
        %v3700 = vld [vmem:[%s252 + $0x13e] sm:$0xff]
        %s3701 = scalar_lea.vmem [#allocation5], 32
        %v3702 = vld [vmem:[%s3701] sm:$0xf]
        %v3704 = vsel %vm371, %v3665, 0
        %v3707 = vsel %vm371, %v3666, 0
        %v3710 = vsel %vm371, %v3667, 0
        %v3713 = vsel %vm371, %v3668, 0
        %v3716 = vsel %vm371, %v3669, 0
        %v3719 = vsel %vm371, %v3670, 0
        %v3722 = vsel %vm371, %v3671, 0
        %v3725 = vsel %vm371, %v3672, 0
        %v3728 = vsel %vm371, %v3673, 0
        %v3731 = vsel %vm371, %v3674, 0
        %v3734 = vsel %vm371, %v3675, 0
        %v3737 = vsel %vm371, %v3676, 0
        %v3740 = vsel %vm371, %v3677, 0
        %v3743 = vsel %vm371, %v3678, 0
        %v3746 = vsel %vm371, %v3679, 0
        %v3749 = vsel %vm371, %v3680, 0
        %v3752 = vsel %vm371, %v3681, 0
        %v3755 = vsel %vm371, %v3682, 0
        %v3758 = vsel %vm371, %v3683, 0
        %v3761 = vsel %vm371, %v3684, 0
        %v3764 = vsel %vm371, %v3685, 0
        %v3767 = vsel %vm371, %v3686, 0
        %v3770 = vsel %vm371, %v3687, 0
        %v3773 = vsel %vm371, %v3688, 0
        %v3776 = vsel %vm371, %v3689, 0
        %v3779 = vsel %vm371, %v3690, 0
        %v3782 = vsel %vm371, %v3691, 0
        %v3785 = vsel %vm371, %v3692, 0
        %v3788 = vsel %vm371, %v3693, 0
        %v3791 = vsel %vm371, %v3694, 0
        %v3794 = vsel %vm371, %v3695, 0
        %v3797 = vsel %vm371, %v3696, 0
        %v3800 = vsel %vm371, %v3697, 0
        %v3803 = vsel %vm371, %v3698, 0
        %v3806 = vsel %vm371, %v3699, 0
        %v3809 = vsel %vm371, %v3700, 0
        %v3812 = vsel %vm480, %v3702, 0
        %3814 = vmatprep.subr.mxu0 0.0
        %3815 = vmatpush1.msra.mxu0 %v3812
        %3816 = vmatprep.subr.mxu0 0.0
        %3817 = vmatpush1.msra.mxu0 0.0
        %3818 = vmatprep.subr.mxu0 0.0
        %3819 = vmatpush1.msra.mxu0 0.0
        %3820 = vmatprep.subr.mxu0 0.0
        %3821 = vmatpush1.msra.mxu0 0.0
        %3822 = vmatprep.subr.mxu0 0.0
        %3823 = vmatpush1.msra.mxu0 0.0
        %3824 = vmatprep.subr.mxu0 0.0
        %3825 = vmatpush1.msra.mxu0 0.0
        %3826 = vmatprep.subr.mxu0 0.0
        %3827 = vmatpush1.msra.mxu0 0.0
        %3828 = vmatprep.subr.mxu0 0.0
        %3829 = vmatpush1.msra.mxu0 0.0
        %3830 = vmatprep.subr.mxu0 0.0
        %3831 = vmatpush1.msra.mxu0 0.0
        %3832 = vmatprep.subr.mxu0 0.0
        %3833 = vmatpush1.msra.mxu0 0.0
        %3834 = vmatprep.subr.mxu0 0.0
        %3835 = vmatpush1.msra.mxu0 0.0
        %3836 = vmatprep.subr.mxu0 0.0
        %3837 = vmatpush1.msra.mxu0 0.0
        %3838 = vmatprep.subr.mxu0 0.0
        %3839 = vmatpush1.msra.mxu0 0.0
        %3840 = vmatprep.subr.mxu0 0.0
        %3841 = vmatpush1.msra.mxu0 0.0
        %3842 = vmatprep.subr.mxu0 0.0
        %3843 = vmatpush1.msra.mxu0 0.0
        %3844 = vmatprep.subr.mxu0 0.0
        %3845 = vmatpush1.msra.mxu0 0.0
        %3846 = vmatprep.subr.mxu0 0.0
        %3847 = vmatpush1.msra.mxu0 0.0
        %3848 = vmatprep.subr.mxu0 0.0
        %3849 = vmatpush1.msra.mxu0 0.0
        %3850 = vmatprep.subr.mxu0 0.0
        %3851 = vmatpush1.msra.mxu0 0.0
        %3852 = vmatprep.subr.mxu0 0.0
        %3853 = vmatpush1.msra.mxu0 0.0
        %3854 = vmatprep.subr.mxu0 0.0
        %3855 = vmatpush1.msra.mxu0 0.0
        %3856 = vmatprep.subr.mxu0 0.0
        %3857 = vmatpush1.msra.mxu0 0.0
        %3858 = vmatprep.subr.mxu0 0.0
        %3859 = vmatpush1.msra.mxu0 0.0
        %3860 = vmatprep.subr.mxu0 0.0
        %3861 = vmatpush1.msra.mxu0 0.0
        %3862 = vmatprep.subr.mxu0 0.0
        %3863 = vmatpush1.msra.mxu0 0.0
        %3864 = vmatprep.subr.mxu0 0.0
        %3865 = vmatpush1.msra.mxu0 0.0
        %3866 = vmatprep.subr.mxu0 0.0
        %3867 = vmatpush1.msra.mxu0 0.0
        %3868 = vmatprep.subr.mxu0 0.0
        %3869 = vmatpush1.msra.mxu0 0.0
        %3870 = vmatprep.subr.mxu0 0.0
        %3871 = vmatpush1.msra.mxu0 0.0
        %3872 = vmatprep.subr.mxu0 0.0
        %3873 = vmatpush1.msra.mxu0 0.0
        %3874 = vmatprep.subr.mxu0 0.0
        %3875 = vmatpush1.msra.mxu0 0.0
        %3876 = vmatprep.subr.mxu0 0.0
        %3877 = vmatpush1.msra.mxu0 0.0
        %3878 = vmatprep.mubr.f32.mxu0 0.0
        %3879 = vmatmul.mubr.f32.gmra.mrb[0].mxu0 %v3704
        %v3880 = vpop.f32.mrb[0].mxu0
        %v3881 = vadd.f32 0.0, %v3880
        %v3882 = vpop.f32.mrb[0].mxu0
        %3883 = vmatprep.mubr.f32.mxu0 0.0
        %3884 = vmatmul.mubr.f32.gmra.mrb[0].mxu0 %v3707
        %v3885 = vpop.f32.mrb[0].mxu0
        %v3886 = vadd.f32 0.0, %v3885
        %v3887 = vpop.f32.mrb[0].mxu0
        %3888 = vmatprep.mubr.f32.mxu0 0.0
        %3889 = vmatmul.mubr.f32.gmra.mrb[0].mxu0 %v3710
        %v3890 = vpop.f32.mrb[0].mxu0
        %v3891 = vadd.f32 0.0, %v3890
        %v3892 = vpop.f32.mrb[0].mxu0
        %3893 = vmatprep.mubr.f32.mxu0 0.0
        %3894 = vmatmul.mubr.f32.gmra.mrb[0].mxu0 %v3713
        %v3895 = vpop.f32.mrb[0].mxu0
        %v3896 = vadd.f32 0.0, %v3895
        %v3897 = vpop.f32.mrb[0].mxu0
        %3898 = vmatprep.mubr.f32.mxu0 0.0
        %3899 = vmatmul.mubr.f32.gmra.mrb[0].mxu0 %v3716
        %v3900 = vpop.f32.mrb[0].mxu0
        %v3901 = vadd.f32 0.0, %v3900
        %v3902 = vpop.f32.mrb[0].mxu0
        %3903 = vmatprep.mubr.f32.mxu0 0.0
        %3904 = vmatmul.mubr.f32.gmra.mrb[0].mxu0 %v3719
        %v3905 = vpop.f32.mrb[0].mxu0
        %v3906 = vadd.f32 0.0, %v3905
        %v3907 = vpop.f32.mrb[0].mxu0
        %3908 = vmatprep.mubr.f32.mxu0 0.0
        %3909 = vmatmul.mubr.f32.gmra.mrb[0].mxu0 %v3722
        %v3910 = vpop.f32.mrb[0].mxu0
        %v3911 = vadd.f32 0.0, %v3910
        %v3912 = vpop.f32.mrb[0].mxu0
        %3913 = vmatprep.mubr.f32.mxu0 0.0
        %3914 = vmatmul.mubr.f32.gmra.mrb[0].mxu0 %v3725
        %v3915 = vpop.f32.mrb[0].mxu0
        %v3916 = vadd.f32 0.0, %v3915
        %v3917 = vpop.f32.mrb[0].mxu0
        %3918 = vmatprep.mubr.f32.mxu0 0.0
        %3919 = vmatmul.mubr.f32.gmra.mrb[0].mxu0 %v3728
        %v3920 = vpop.f32.mrb[0].mxu0
        %v3921 = vadd.f32 0.0, %v3920
        %v3922 = vpop.f32.mrb[0].mxu0
        %3923 = vmatprep.mubr.f32.mxu0 0.0
        %3924 = vmatmul.mubr.f32.gmra.mrb[0].mxu0 %v3731
        %v3925 = vpop.f32.mrb[0].mxu0
        %v3926 = vadd.f32 0.0, %v3925
        %v3927 = vpop.f32.mrb[0].mxu0
        %3928 = vmatprep.mubr.f32.mxu0 0.0
        %3929 = vmatmul.mubr.f32.gmra.mrb[0].mxu0 %v3734
        %v3930 = vpop.f32.mrb[0].mxu0
        %v3931 = vadd.f32 0.0, %v3930
        %v3932 = vpop.f32.mrb[0].mxu0
        %3933 = vmatprep.mubr.f32.mxu0 0.0
        %3934 = vmatmul.mubr.f32.gmra.mrb[0].mxu0 %v3737
        %v3935 = vpop.f32.mrb[0].mxu0
        %v3936 = vadd.f32 0.0, %v3935
        %v3937 = vpop.f32.mrb[0].mxu0
        %3938 = vmatprep.mubr.f32.mxu0 0.0
        %3939 = vmatmul.mubr.f32.gmra.mrb[0].mxu0 %v3740
        %v3940 = vpop.f32.mrb[0].mxu0
        %v3941 = vadd.f32 0.0, %v3940
        %v3942 = vpop.f32.mrb[0].mxu0
        %3943 = vmatprep.mubr.f32.mxu0 0.0
        %3944 = vmatmul.mubr.f32.gmra.mrb[0].mxu0 %v3743
        %v3945 = vpop.f32.mrb[0].mxu0
        %v3946 = vadd.f32 0.0, %v3945
        %v3947 = vpop.f32.mrb[0].mxu0
        %3948 = vmatprep.mubr.f32.mxu0 0.0
        %3949 = vmatmul.mubr.f32.gmra.mrb[0].mxu0 %v3746
        %v3950 = vpop.f32.mrb[0].mxu0
        %v3951 = vadd.f32 0.0, %v3950
        %v3952 = vpop.f32.mrb[0].mxu0
        %3953 = vmatprep.mubr.f32.mxu0 0.0
        %3954 = vmatmul.mubr.f32.gmra.mrb[0].mxu0 %v3749
        %v3955 = vpop.f32.mrb[0].mxu0
        %v3956 = vadd.f32 0.0, %v3955
        %v3957 = vpop.f32.mrb[0].mxu0
        %3958 = vmatprep.mubr.f32.mxu0 0.0
        %3959 = vmatmul.mubr.f32.gmra.mrb[0].mxu0 %v3752
        %v3960 = vpop.f32.mrb[0].mxu0
        %v3961 = vadd.f32 0.0, %v3960
        %v3962 = vpop.f32.mrb[0].mxu0
        %3963 = vmatprep.mubr.f32.mxu0 0.0
        %3964 = vmatmul.mubr.f32.gmra.mrb[0].mxu0 %v3755
        %v3965 = vpop.f32.mrb[0].mxu0
        %v3966 = vadd.f32 0.0, %v3965
        %v3967 = vpop.f32.mrb[0].mxu0
        %3968 = vmatprep.mubr.f32.mxu0 0.0
        %3969 = vmatmul.mubr.f32.gmra.mrb[0].mxu0 %v3758
        %v3970 = vpop.f32.mrb[0].mxu0
        %v3971 = vadd.f32 0.0, %v3970
        %v3972 = vpop.f32.mrb[0].mxu0
        %3973 = vmatprep.mubr.f32.mxu0 0.0
        %3974 = vmatmul.mubr.f32.gmra.mrb[0].mxu0 %v3761
        %v3975 = vpop.f32.mrb[0].mxu0
        %v3976 = vadd.f32 0.0, %v3975
        %v3977 = vpop.f32.mrb[0].mxu0
        %3978 = vmatprep.mubr.f32.mxu0 0.0
        %3979 = vmatmul.mubr.f32.gmra.mrb[0].mxu0 %v3764
        %v3980 = vpop.f32.mrb[0].mxu0
        %v3981 = vadd.f32 0.0, %v3980
        %v3982 = vpop.f32.mrb[0].mxu0
        %3983 = vmatprep.mubr.f32.mxu0 0.0
        %3984 = vmatmul.mubr.f32.gmra.mrb[0].mxu0 %v3767
        %v3985 = vpop.f32.mrb[0].mxu0
        %v3986 = vadd.f32 0.0, %v3985
        %v3987 = vpop.f32.mrb[0].mxu0
        %3988 = vmatprep.mubr.f32.mxu0 0.0
        %3989 = vmatmul.mubr.f32.gmra.mrb[0].mxu0 %v3770
        %v3990 = vpop.f32.mrb[0].mxu0
        %v3991 = vadd.f32 0.0, %v3990
        %v3992 = vpop.f32.mrb[0].mxu0
        %3993 = vmatprep.mubr.f32.mxu0 0.0
        %3994 = vmatmul.mubr.f32.gmra.mrb[0].mxu0 %v3773
        %v3995 = vpop.f32.mrb[0].mxu0
        %v3996 = vadd.f32 0.0, %v3995
        %v3997 = vpop.f32.mrb[0].mxu0
        %3998 = vmatprep.mubr.f32.mxu0 0.0
        %3999 = vmatmul.mubr.f32.gmra.mrb[0].mxu0 %v3776
        %v4000 = vpop.f32.mrb[0].mxu0
        %v4001 = vadd.f32 0.0, %v4000
        %v4002 = vpop.f32.mrb[0].mxu0
        %4003 = vmatprep.mubr.f32.mxu0 0.0
        %4004 = vmatmul.mubr.f32.gmra.mrb[0].mxu0 %v3779
        %v4005 = vpop.f32.mrb[0].mxu0
        %v4006 = vadd.f32 0.0, %v4005
        %v4007 = vpop.f32.mrb[0].mxu0
        %4008 = vmatprep.mubr.f32.mxu0 0.0
        %4009 = vmatmul.mubr.f32.gmra.mrb[0].mxu0 %v3782
        %v4010 = vpop.f32.mrb[0].mxu0
        %v4011 = vadd.f32 0.0, %v4010
        %v4012 = vpop.f32.mrb[0].mxu0
        %4013 = vmatprep.mubr.f32.mxu0 0.0
        %4014 = vmatmul.mubr.f32.gmra.mrb[0].mxu0 %v3785
        %v4015 = vpop.f32.mrb[0].mxu0
        %v4016 = vadd.f32 0.0, %v4015
        %v4017 = vpop.f32.mrb[0].mxu0
        %4018 = vmatprep.mubr.f32.mxu0 0.0
        %4019 = vmatmul.mubr.f32.gmra.mrb[0].mxu0 %v3788
        %v4020 = vpop.f32.mrb[0].mxu0
        %v4021 = vadd.f32 0.0, %v4020
        %v4022 = vpop.f32.mrb[0].mxu0
        %4023 = vmatprep.mubr.f32.mxu0 0.0
        %4024 = vmatmul.mubr.f32.gmra.mrb[0].mxu0 %v3791
        %v4025 = vpop.f32.mrb[0].mxu0
        %v4026 = vadd.f32 0.0, %v4025
        %v4027 = vpop.f32.mrb[0].mxu0
        %4028 = vmatprep.mubr.f32.mxu0 0.0
        %4029 = vmatmul.mubr.f32.gmra.mrb[0].mxu0 %v3794
        %v4030 = vpop.f32.mrb[0].mxu0
        %v4031 = vadd.f32 0.0, %v4030
        %v4032 = vpop.f32.mrb[0].mxu0
        %4033 = vmatprep.mubr.f32.mxu0 0.0
        %4034 = vmatmul.mubr.f32.gmra.mrb[0].mxu0 %v3797
        %v4035 = vpop.f32.mrb[0].mxu0
        %v4036 = vadd.f32 0.0, %v4035
        %v4037 = vpop.f32.mrb[0].mxu0
        %4038 = vmatprep.mubr.f32.mxu0 0.0
        %4039 = vmatmul.mubr.f32.gmra.mrb[0].mxu0 %v3800
        %v4040 = vpop.f32.mrb[0].mxu0
        %v4041 = vadd.f32 0.0, %v4040
        %v4042 = vpop.f32.mrb[0].mxu0
        %4043 = vmatprep.mubr.f32.mxu0 0.0
        %4044 = vmatmul.mubr.f32.gmra.mrb[0].mxu0 %v3803
        %v4045 = vpop.f32.mrb[0].mxu0
        %v4046 = vadd.f32 0.0, %v4045
        %v4047 = vpop.f32.mrb[0].mxu0
        %4048 = vmatprep.mubr.f32.mxu0 0.0
        %4049 = vmatmul.mubr.f32.gmra.mrb[0].mxu0 %v3806
        %v4050 = vpop.f32.mrb[0].mxu0
        %v4051 = vadd.f32 0.0, %v4050
        %v4052 = vpop.f32.mrb[0].mxu0
        %4053 = vmatprep.mubr.f32.mxu0 0.0
        %4054 = vmatmul.mubr.f32.gmra.mrb[0].mxu0 %v3809
        %v4055 = vpop.f32.mrb[0].mxu0
        %v4056 = vadd.f32 0.0, %v4055
        %v4057 = vpop.f32.mrb[0].mxu0
        %4058 = vdwg.mxu0
        %v4059 = vadd.f32 %v3629, %v3881
        %v4060 = vadd.f32 %v3630, %v3886
        %v4061 = vadd.f32 %v3631, %v3891
        %v4062 = vadd.f32 %v3632, %v3896
        %v4063 = vadd.f32 %v3633, %v3901
        %v4064 = vadd.f32 %v3634, %v3906
        %v4065 = vadd.f32 %v3635, %v3911
        %v4066 = vadd.f32 %v3636, %v3916
        %v4067 = vadd.f32 %v3637, %v3921
        %v4068 = vadd.f32 %v3638, %v3926
        %v4069 = vadd.f32 %v3639, %v3931
        %v4070 = vadd.f32 %v3640, %v3936
        %v4071 = vadd.f32 %v3641, %v3941
        %v4072 = vadd.f32 %v3642, %v3946
        %v4073 = vadd.f32 %v3643, %v3951
        %v4074 = vadd.f32 %v3644, %v3956
        %v4075 = vadd.f32 %v3645, %v3961
        %v4076 = vadd.f32 %v3646, %v3966
        %v4077 = vadd.f32 %v3647, %v3971
        %v4078 = vadd.f32 %v3648, %v3976
        %v4079 = vadd.f32 %v3649, %v3981
        %v4080 = vadd.f32 %v3650, %v3986
        %v4081 = vadd.f32 %v3651, %v3991
        %v4082 = vadd.f32 %v3652, %v3996
        %v4083 = vadd.f32 %v3653, %v4001
        %v4084 = vadd.f32 %v3654, %v4006
        %v4085 = vadd.f32 %v3655, %v4011
        %v4086 = vadd.f32 %v3656, %v4016
        %v4087 = vadd.f32 %v3657, %v4021
        %v4088 = vadd.f32 %v3658, %v4026
        %v4089 = vadd.f32 %v3659, %v4031
        %v4090 = vadd.f32 %v3660, %v4036
        %v4091 = vadd.f32 %v3661, %v4041
        %v4092 = vadd.f32 %v3662, %v4046
        %v4093 = vadd.f32 %v3663, %v4051
        %v4094 = vadd.f32 %v3664, %v4056
        %v4095 = vld [vmem:[#allocation7] sm:$0x1]
        %v4097 = vlaneseq
        %v4098 = vshrl.u32 %v4097, 7
        %v4099 = vsub.s32 0, %v4098
        %v4100 = vrot.slane %v4095, %v4099
        %v4102 = vadd.f32 %v4059, %v4100
        %v4103 = vadd.f32 %v4060, %v4100
        %v4104 = vadd.f32 %v4061, %v4100
        %v4105 = vadd.f32 %v4062, %v4100
        %v4106 = vadd.f32 %v4063, %v4100
        %v4107 = vadd.f32 %v4064, %v4100
        %v4108 = vadd.f32 %v4065, %v4100
        %v4109 = vadd.f32 %v4066, %v4100
        %v4110 = vadd.f32 %v4067, %v4100
        %v4111 = vadd.f32 %v4068, %v4100
        %v4112 = vadd.f32 %v4069, %v4100
        %v4113 = vadd.f32 %v4070, %v4100
        %v4114 = vadd.f32 %v4071, %v4100
        %v4115 = vadd.f32 %v4072, %v4100
        %v4116 = vadd.f32 %v4073, %v4100
        %v4117 = vadd.f32 %v4074, %v4100
        %v4118 = vadd.f32 %v4075, %v4100
        %v4119 = vadd.f32 %v4076, %v4100
        %v4120 = vadd.f32 %v4077, %v4100
        %v4121 = vadd.f32 %v4078, %v4100
        %v4122 = vadd.f32 %v4079, %v4100
        %v4123 = vadd.f32 %v4080, %v4100
        %v4124 = vadd.f32 %v4081, %v4100
        %v4125 = vadd.f32 %v4082, %v4100
        %v4126 = vadd.f32 %v4083, %v4100
        %v4127 = vadd.f32 %v4084, %v4100
        %v4128 = vadd.f32 %v4085, %v4100
        %v4129 = vadd.f32 %v4086, %v4100
        %v4130 = vadd.f32 %v4087, %v4100
        %v4131 = vadd.f32 %v4088, %v4100
        %v4132 = vadd.f32 %v4089, %v4100
        %v4133 = vadd.f32 %v4090, %v4100
        %v4134 = vadd.f32 %v4091, %v4100
        %v4135 = vadd.f32 %v4092, %v4100
        %v4136 = vadd.f32 %v4093, %v4100
        %v4137 = vadd.f32 %v4094, %v4100
        %4138 = vst [vmem:[%s288] sm:$0xff] %v4102
        %4139 = vst [vmem:[%s288 + $0x8] sm:$0xff] %v4103
        %4140 = vst [vmem:[%s288 + $0x10] sm:$0xff] %v4104
        %4141 = vst [vmem:[%s288 + $0x18] sm:$0xff] %v4105
        %4142 = vst [vmem:[%s288 + $0x20] sm:$0xff] %v4106
        %4143 = vst [vmem:[%s288 + $0x28] sm:$0xff] %v4107
        %4144 = vst [vmem:[%s288 + $0x30] sm:$0xff] %v4108
        %4145 = vst [vmem:[%s288 + $0x38] sm:$0xff] %v4109
        %4146 = vst [vmem:[%s288 + $0x40] sm:$0xff] %v4110
        %4147 = vst [vmem:[%s288 + $0x48] sm:$0xff] %v4111
        %4148 = vst [vmem:[%s288 + $0x50] sm:$0xff] %v4112
        %4149 = vst [vmem:[%s288 + $0x58] sm:$0xff] %v4113
        %4150 = vst [vmem:[%s288 + $0x60] sm:$0xff] %v4114
        %4151 = vst [vmem:[%s288 + $0x68] sm:$0xff] %v4115
        %4152 = vst [vmem:[%s288 + $0x70] sm:$0xff] %v4116
        %4153 = vst [vmem:[%s288 + $0x78] sm:$0xff] %v4117
        %4154 = vst [vmem:[%s288 + $0x80] sm:$0xff] %v4118
        %4155 = vst [vmem:[%s288 + $0x88] sm:$0xff] %v4119
        %4156 = vst [vmem:[%s288 + $0x90] sm:$0xff] %v4120
        %4157 = vst [vmem:[%s288 + $0x98] sm:$0xff] %v4121
        %4158 = vst [vmem:[%s288 + $0xa0] sm:$0xff] %v4122
        %4159 = vst [vmem:[%s288 + $0xa8] sm:$0xff] %v4123
        %4160 = vst [vmem:[%s288 + $0xb0] sm:$0xff] %v4124
        %4161 = vst [vmem:[%s288 + $0xb8] sm:$0xff] %v4125
        %4162 = vst [vmem:[%s288 + $0xc0] sm:$0xff] %v4126
        %4163 = vst [vmem:[%s288 + $0xc8] sm:$0xff] %v4127
        %4164 = vst [vmem:[%s288 + $0xd0] sm:$0xff] %v4128
        %4165 = vst [vmem:[%s288 + $0xd8] sm:$0xff] %v4129
        %4166 = vst [vmem:[%s288 + $0xe0] sm:$0xff] %v4130
        %4167 = vst [vmem:[%s288 + $0xe8] sm:$0xff] %v4131
        %4168 = vst [vmem:[%s288 + $0xf0] sm:$0xff] %v4132
        %4169 = vst [vmem:[%s288 + $0xf8] sm:$0xff] %v4133
        %4170 = vst [vmem:[%s288 + $0x100] sm:$0xff] %v4134
        %4171 = vst [vmem:[%s288 + $0x108] sm:$0xff] %v4135
        %4172 = vst [vmem:[%s288 + $0x110] sm:$0xff] %v4136
        %4173 = vst [vmem:[%s288 + $0x118] sm:$0xff] %v4137
        %v4174 = vld [vmem:[#allocation8] sm:$0xff]
        %v4175 = vld [vmem:[#allocation8 + $0x8] sm:$0xff]
        %v4176 = vld [vmem:[#allocation8 + $0x10] sm:$0xff]
        %v4177 = vld [vmem:[#allocation8 + $0x18] sm:$0xff]
        %v4178 = vld [vmem:[#allocation8 + $0x20] sm:$0xff]
        %v4179 = vld [vmem:[#allocation8 + $0x28] sm:$0xff]
        %v4180 = vld [vmem:[#allocation8 + $0x30] sm:$0xff]
        %v4181 = vld [vmem:[#allocation8 + $0x38] sm:$0xff]
        %v4182 = vld [vmem:[#allocation8 + $0x40] sm:$0xff]
        %v4183 = vld [vmem:[#allocation8 + $0x48] sm:$0xff]
        %v4184 = vld [vmem:[#allocation8 + $0x50] sm:$0xff]
        %v4185 = vld [vmem:[#allocation8 + $0x58] sm:$0xff]
        %v4186 = vld [vmem:[#allocation8 + $0x60] sm:$0xff]
        %v4187 = vld [vmem:[#allocation8 + $0x68] sm:$0xff]
        %v4188 = vld [vmem:[#allocation8 + $0x70] sm:$0xff]
        %v4189 = vld [vmem:[#allocation8 + $0x78] sm:$0xff]
        %v4190 = vld [vmem:[#allocation8 + $0x80] sm:$0xff]
        %v4191 = vld [vmem:[#allocation8 + $0x88] sm:$0xff]
        %v4192 = vld [vmem:[#allocation8 + $0x90] sm:$0xff]
        %v4193 = vld [vmem:[#allocation8 + $0x98] sm:$0xff]
        %v4194 = vld [vmem:[#allocation8 + $0xa0] sm:$0xff]
        %v4195 = vld [vmem:[#allocation8 + $0xa8] sm:$0xff]
        %v4196 = vld [vmem:[#allocation8 + $0xb0] sm:$0xff]
        %v4197 = vld [vmem:[#allocation8 + $0xb8] sm:$0xff]
        %v4198 = vld [vmem:[#allocation8 + $0xc0] sm:$0xff]
        %v4199 = vld [vmem:[#allocation8 + $0xc8] sm:$0xff]
        %v4200 = vld [vmem:[#allocation8 + $0xd0] sm:$0xff]
        %v4201 = vld [vmem:[#allocation8 + $0xd8] sm:$0xff]
        %v4202 = vld [vmem:[#allocation8 + $0xe0] sm:$0xff]
        %v4203 = vld [vmem:[#allocation8 + $0xe8] sm:$0xff]
        %v4204 = vld [vmem:[#allocation8 + $0xf0] sm:$0xff]
        %v4205 = vld [vmem:[#allocation8 + $0xf8] sm:$0xff]
        %v4206 = vld [vmem:[#allocation8 + $0x100] sm:$0xff]
        %v4207 = vld [vmem:[#allocation8 + $0x108] sm:$0xff]
        %v4208 = vld [vmem:[#allocation8 + $0x110] sm:$0xff]
        %v4209 = vld [vmem:[#allocation8 + $0x118] sm:$0xff]
        %4211 = vset.pattern.permute.xlu0 0
        %4212 = vperm.xlu0 %4211, %v4174
        %v4213 = vpop.permute.xlu0 %4212
        %4216 = vset.pattern.permute.xlu0 0
        %4217 = vperm.xlu0 %4216, %v4175
        %v4218 = vpop.permute.xlu0 %4217
        %4221 = vset.pattern.permute.xlu0 0
        %4222 = vperm.xlu0 %4221, %v4176
        %v4223 = vpop.permute.xlu0 %4222
        %4226 = vset.pattern.permute.xlu0 0
        %4227 = vperm.xlu0 %4226, %v4177
        %v4228 = vpop.permute.xlu0 %4227
        %4231 = vset.pattern.permute.xlu0 0
        %4232 = vperm.xlu0 %4231, %v4178
        %v4233 = vpop.permute.xlu0 %4232
        %4236 = vset.pattern.permute.xlu0 0
        %4237 = vperm.xlu0 %4236, %v4179
        %v4238 = vpop.permute.xlu0 %4237
        %4241 = vset.pattern.permute.xlu0 0
        %4242 = vperm.xlu0 %4241, %v4180
        %v4243 = vpop.permute.xlu0 %4242
        %4246 = vset.pattern.permute.xlu0 0
        %4247 = vperm.xlu0 %4246, %v4181
        %v4248 = vpop.permute.xlu0 %4247
        %4251 = vset.pattern.permute.xlu0 0
        %4252 = vperm.xlu0 %4251, %v4182
        %v4253 = vpop.permute.xlu0 %4252
        %4256 = vset.pattern.permute.xlu0 0
        %4257 = vperm.xlu0 %4256, %v4183
        %v4258 = vpop.permute.xlu0 %4257
        %4261 = vset.pattern.permute.xlu0 0
        %4262 = vperm.xlu0 %4261, %v4184
        %v4263 = vpop.permute.xlu0 %4262
        %4266 = vset.pattern.permute.xlu0 0
        %4267 = vperm.xlu0 %4266, %v4185
        %v4268 = vpop.permute.xlu0 %4267
        %4271 = vset.pattern.permute.xlu0 0
        %4272 = vperm.xlu0 %4271, %v4186
        %v4273 = vpop.permute.xlu0 %4272
        %4276 = vset.pattern.permute.xlu0 0
        %4277 = vperm.xlu0 %4276, %v4187
        %v4278 = vpop.permute.xlu0 %4277
        %4281 = vset.pattern.permute.xlu0 0
        %4282 = vperm.xlu0 %4281, %v4188
        %v4283 = vpop.permute.xlu0 %4282
        %4286 = vset.pattern.permute.xlu0 0
        %4287 = vperm.xlu0 %4286, %v4189
        %v4288 = vpop.permute.xlu0 %4287
        %4291 = vset.pattern.permute.xlu0 0
        %4292 = vperm.xlu0 %4291, %v4190
        %v4293 = vpop.permute.xlu0 %4292
        %4296 = vset.pattern.permute.xlu0 0
        %4297 = vperm.xlu0 %4296, %v4191
        %v4298 = vpop.permute.xlu0 %4297
        %4301 = vset.pattern.permute.xlu0 0
        %4302 = vperm.xlu0 %4301, %v4192
        %v4303 = vpop.permute.xlu0 %4302
        %4306 = vset.pattern.permute.xlu0 0
        %4307 = vperm.xlu0 %4306, %v4193
        %v4308 = vpop.permute.xlu0 %4307
        %4311 = vset.pattern.permute.xlu0 0
        %4312 = vperm.xlu0 %4311, %v4194
        %v4313 = vpop.permute.xlu0 %4312
        %4316 = vset.pattern.permute.xlu0 0
        %4317 = vperm.xlu0 %4316, %v4195
        %v4318 = vpop.permute.xlu0 %4317
        %4321 = vset.pattern.permute.xlu0 0
        %4322 = vperm.xlu0 %4321, %v4196
        %v4323 = vpop.permute.xlu0 %4322
        %4326 = vset.pattern.permute.xlu0 0
        %4327 = vperm.xlu0 %4326, %v4197
        %v4328 = vpop.permute.xlu0 %4327
        %4331 = vset.pattern.permute.xlu0 0
        %4332 = vperm.xlu0 %4331, %v4198
        %v4333 = vpop.permute.xlu0 %4332
        %4336 = vset.pattern.permute.xlu0 0
        %4337 = vperm.xlu0 %4336, %v4199
        %v4338 = vpop.permute.xlu0 %4337
        %4341 = vset.pattern.permute.xlu0 0
        %4342 = vperm.xlu0 %4341, %v4200
        %v4343 = vpop.permute.xlu0 %4342
        %4346 = vset.pattern.permute.xlu0 0
        %4347 = vperm.xlu0 %4346, %v4201
        %v4348 = vpop.permute.xlu0 %4347
        %4351 = vset.pattern.permute.xlu0 0
        %4352 = vperm.xlu0 %4351, %v4202
        %v4353 = vpop.permute.xlu0 %4352
        %4356 = vset.pattern.permute.xlu0 0
        %4357 = vperm.xlu0 %4356, %v4203
        %v4358 = vpop.permute.xlu0 %4357
        %4361 = vset.pattern.permute.xlu0 0
        %4362 = vperm.xlu0 %4361, %v4204
        %v4363 = vpop.permute.xlu0 %4362
        %4366 = vset.pattern.permute.xlu0 0
        %4367 = vperm.xlu0 %4366, %v4205
        %v4368 = vpop.permute.xlu0 %4367
        %4371 = vset.pattern.permute.xlu0 0
        %4372 = vperm.xlu0 %4371, %v4206
        %v4373 = vpop.permute.xlu0 %4372
        %4376 = vset.pattern.permute.xlu0 0
        %4377 = vperm.xlu0 %4376, %v4207
        %v4378 = vpop.permute.xlu0 %4377
        %4381 = vset.pattern.permute.xlu0 0
        %4382 = vperm.xlu0 %4381, %v4208
        %v4383 = vpop.permute.xlu0 %4382
        %4386 = vset.pattern.permute.xlu0 0
        %4387 = vperm.xlu0 %4386, %v4209
        %v4388 = vpop.permute.xlu0 %4387
        %v4390 = vmul.f32 %v4102, %v4213
        %v4391 = vmul.f32 %v4103, %v4218
        %v4392 = vmul.f32 %v4104, %v4223
        %v4393 = vmul.f32 %v4105, %v4228
        %v4394 = vmul.f32 %v4106, %v4233
        %v4395 = vmul.f32 %v4107, %v4238
        %v4396 = vmul.f32 %v4108, %v4243
        %v4397 = vmul.f32 %v4109, %v4248
        %v4398 = vmul.f32 %v4110, %v4253
        %v4399 = vmul.f32 %v4111, %v4258
        %v4400 = vmul.f32 %v4112, %v4263
        %v4401 = vmul.f32 %v4113, %v4268
        %v4402 = vmul.f32 %v4114, %v4273
        %v4403 = vmul.f32 %v4115, %v4278
        %v4404 = vmul.f32 %v4116, %v4283
        %v4405 = vmul.f32 %v4117, %v4288
        %v4406 = vmul.f32 %v4118, %v4293
        %v4407 = vmul.f32 %v4119, %v4298
        %v4408 = vmul.f32 %v4120, %v4303
        %v4409 = vmul.f32 %v4121, %v4308
        %v4410 = vmul.f32 %v4122, %v4313
        %v4411 = vmul.f32 %v4123, %v4318
        %v4412 = vmul.f32 %v4124, %v4323
        %v4413 = vmul.f32 %v4125, %v4328
        %v4414 = vmul.f32 %v4126, %v4333
        %v4415 = vmul.f32 %v4127, %v4338
        %v4416 = vmul.f32 %v4128, %v4343
        %v4417 = vmul.f32 %v4129, %v4348
        %v4418 = vmul.f32 %v4130, %v4353
        %v4419 = vmul.f32 %v4131, %v4358
        %v4420 = vmul.f32 %v4132, %v4363
        %v4421 = vmul.f32 %v4133, %v4368
        %v4422 = vmul.f32 %v4134, %v4373
        %v4423 = vmul.f32 %v4135, %v4378
        %v4424 = vmul.f32 %v4136, %v4383
        %v4425 = vmul.f32 %v4137, %v4388
        %v4426 = vadd.f32 %v4390, %v4391
        %v4427 = vadd.f32 %v4426, %v4392
        %v4428 = vadd.f32 %v4427, %v4393
        %v4429 = vadd.f32 %v4428, %v4394
        %v4430 = vadd.f32 %v4429, %v4395
        %v4431 = vadd.f32 %v4430, %v4396
        %v4432 = vadd.f32 %v4431, %v4397
        %v4433 = vadd.f32 %v4432, %v4398
        %v4434 = vadd.f32 %v4433, %v4399
        %v4435 = vadd.f32 %v4434, %v4400
        %v4436 = vadd.f32 %v4435, %v4401
        %v4437 = vadd.f32 %v4436, %v4402
        %v4438 = vadd.f32 %v4437, %v4403
        %v4439 = vadd.f32 %v4438, %v4404
        %v4440 = vadd.f32 %v4439, %v4405
        %v4441 = vadd.f32 %v4440, %v4406
        %v4442 = vadd.f32 %v4441, %v4407
        %v4443 = vadd.f32 %v4442, %v4408
        %v4444 = vadd.f32 %v4443, %v4409
        %v4445 = vadd.f32 %v4444, %v4410
        %v4446 = vadd.f32 %v4445, %v4411
        %v4447 = vadd.f32 %v4446, %v4412
        %v4448 = vadd.f32 %v4447, %v4413
        %v4449 = vadd.f32 %v4448, %v4414
        %v4450 = vadd.f32 %v4449, %v4415
        %v4451 = vadd.f32 %v4450, %v4416
        %v4452 = vadd.f32 %v4451, %v4417
        %v4453 = vadd.f32 %v4452, %v4418
        %v4454 = vadd.f32 %v4453, %v4419
        %v4455 = vadd.f32 %v4454, %v4420
        %v4456 = vadd.f32 %v4455, %v4421
        %v4457 = vadd.f32 %v4456, %v4422
        %v4458 = vadd.f32 %v4457, %v4423
        %v4459 = vadd.f32 %v4458, %v4424
        %v4460 = vadd.f32 %v4459, %v4425
        %v4461 = vrot.slane %v4460, 4
        %v4462 = vadd.f32 %v4460, %v4461
        %v4463 = vrot.slane %v4462, 2
        %v4464 = vadd.f32 %v4462, %v4463
        %v4465 = vrot.slane %v4464, 1
        %v4466 = vadd.f32 %v4464, %v4465
        %4467 = vst [vmem:[%s295] sm:$0x1] %v4466
        %v4468 = vmul.f32 %v4390, %v4102
        %v4469 = vmul.f32 %v4391, %v4103
        %v4470 = vmul.f32 %v4392, %v4104
        %v4471 = vmul.f32 %v4393, %v4105
        %v4472 = vmul.f32 %v4394, %v4106
        %v4473 = vmul.f32 %v4395, %v4107
        %v4474 = vmul.f32 %v4396, %v4108
        %v4475 = vmul.f32 %v4397, %v4109
        %v4476 = vmul.f32 %v4398, %v4110
        %v4477 = vmul.f32 %v4399, %v4111
        %v4478 = vmul.f32 %v4400, %v4112
        %v4479 = vmul.f32 %v4401, %v4113
        %v4480 = vmul.f32 %v4402, %v4114
        %v4481 = vmul.f32 %v4403, %v4115
        %v4482 = vmul.f32 %v4404, %v4116
        %v4483 = vmul.f32 %v4405, %v4117
        %v4484 = vmul.f32 %v4406, %v4118
        %v4485 = vmul.f32 %v4407, %v4119
        %v4486 = vmul.f32 %v4408, %v4120
        %v4487 = vmul.f32 %v4409, %v4121
        %v4488 = vmul.f32 %v4410, %v4122
        %v4489 = vmul.f32 %v4411, %v4123
        %v4490 = vmul.f32 %v4412, %v4124
        %v4491 = vmul.f32 %v4413, %v4125
        %v4492 = vmul.f32 %v4414, %v4126
        %v4493 = vmul.f32 %v4415, %v4127
        %v4494 = vmul.f32 %v4416, %v4128
        %v4495 = vmul.f32 %v4417, %v4129
        %v4496 = vmul.f32 %v4418, %v4130
        %v4497 = vmul.f32 %v4419, %v4131
        %v4498 = vmul.f32 %v4420, %v4132
        %v4499 = vmul.f32 %v4421, %v4133
        %v4500 = vmul.f32 %v4422, %v4134
        %v4501 = vmul.f32 %v4423, %v4135
        %v4502 = vmul.f32 %v4424, %v4136
        %v4503 = vmul.f32 %v4425, %v4137
        %v4504 = vadd.f32 %v4468, %v4469
        %v4505 = vadd.f32 %v4504, %v4470
        %v4506 = vadd.f32 %v4505, %v4471
        %v4507 = vadd.f32 %v4506, %v4472
        %v4508 = vadd.f32 %v4507, %v4473
        %v4509 = vadd.f32 %v4508, %v4474
        %v4510 = vadd.f32 %v4509, %v4475
        %v4511 = vadd.f32 %v4510, %v4476
        %v4512 = vadd.f32 %v4511, %v4477
        %v4513 = vadd.f32 %v4512, %v4478
        %v4514 = vadd.f32 %v4513, %v4479
        %v4515 = vadd.f32 %v4514, %v4480
        %v4516 = vadd.f32 %v4515, %v4481
        %v4517 = vadd.f32 %v4516, %v4482
        %v4518 = vadd.f32 %v4517, %v4483
        %v4519 = vadd.f32 %v4518, %v4484
        %v4520 = vadd.f32 %v4519, %v4485
        %v4521 = vadd.f32 %v4520, %v4486
        %v4522 = vadd.f32 %v4521, %v4487
        %v4523 = vadd.f32 %v4522, %v4488
        %v4524 = vadd.f32 %v4523, %v4489
        %v4525 = vadd.f32 %v4524, %v4490
        %v4526 = vadd.f32 %v4525, %v4491
        %v4527 = vadd.f32 %v4526, %v4492
        %v4528 = vadd.f32 %v4527, %v4493
        %v4529 = vadd.f32 %v4528, %v4494
        %v4530 = vadd.f32 %v4529, %v4495
        %v4531 = vadd.f32 %v4530, %v4496
        %v4532 = vadd.f32 %v4531, %v4497
        %v4533 = vadd.f32 %v4532, %v4498
        %v4534 = vadd.f32 %v4533, %v4499
        %v4535 = vadd.f32 %v4534, %v4500
        %v4536 = vadd.f32 %v4535, %v4501
        %v4537 = vadd.f32 %v4536, %v4502
        %v4538 = vadd.f32 %v4537, %v4503
        %v4539 = vrot.slane %v4538, 4
        %v4540 = vadd.f32 %v4538, %v4539
        %v4541 = vrot.slane %v4540, 2
        %v4542 = vadd.f32 %v4540, %v4541
        %v4543 = vrot.slane %v4542, 1
        %v4544 = vadd.f32 %v4542, %v4543
        %4545 = vst [vmem:[%s295 + $0x1] sm:$0x1] %v4544
        %s4546 = sand.u32 %s125, 1
        %s4547 = scalar_lea.sflag [#allocation4], %s4546
        %s4548 = sand.u32 %s125, 1
        %s4549 = smul.addr %s4548, 288
        %s4550 = scalar_lea.vmem [#allocation10], %s4549
        %s4551 = sand.u32 %s151, 1
        %s4552 = scalar_lea.sflag [#allocation12], %s4551
        %s4553 = sand.u32 %s151, 1
        %s4554 = smul.addr %s4553, 2
        %s4555 = scalar_lea.vmem [#allocation11], %s4554
        // Predicated region
        $region53: #{_residual_block_impl.3} parent=35 // pred_check
          %p4556 = pneg %p135
        $region54: #{_residual_block_impl.3} parent=35 // pred_check_branch
          %4558 = sbr.rel (%p4556) target = $region56
        $region55: #{_residual_block_impl.3} parent=35 // pred_region
          %s4560 = ssub.s32 4608, 4608
          %4561 = vsyncadd %s4547, %s4560
          %s4562 = smul.addr %s28, 36
          %s4563 = smul.addr %s4562, 128
          %s4564 = scalar_lea.hbm %s4, %s4563
          %s4565 = sshll.u32 %s4550, 4
          %s4566 = int_to_ptr.vmem [resolvable:$true] %s4565
          %4571 = dma.vmem_to_hbm [thread:$0]  %s4566, 4608, %s4564, %s4547, 128, 128, 8
        $region56: #{_residual_block_impl.3} parent=35 // pred_fallthru
          _
        // Predicated region
        $region57: #{_residual_block_impl.3} parent=35 // pred_check
          %p4572 = pneg %p161
        $region58: #{_residual_block_impl.3} parent=35 // pred_check_branch
          %4574 = sbr.rel (%p4572) target = $region60
        $region59: #{_residual_block_impl.3} parent=35 // pred_region
          %s4576 = ssub.s32 32, 32
          %4577 = vsyncadd %s4552, %s4576
          %s4578 = smul.addr %s28, 32
          %s4579 = scalar_lea.hbm %s5, %s4578
          %s4581 = sshll.u32 %s4555, 4
          %s4582 = int_to_ptr.vmem [resolvable:$true] %s4581
          %4584 = dma.vmem_to_hbm [thread:$0]  %s4582, 32, %s4579, %s4552
        $region60: #{_residual_block_impl.3} parent=35 // pred_fallthru
          _
      $region36: #{_residual_block_impl.3} parent=5 // pred_fallthru
        _
      %p4585 = scmp.le.s32.totalorder 2, %s23
      // Predicated region
      $region61: #{_residual_block_impl.3} parent=5 // pred_check
        %p4586 = pneg %p4585
      $region62: #{_residual_block_impl.3} parent=5 // pred_check_branch
        %4588 = sbr.rel (%p4586) target = $region64
      $region63: #{_residual_block_impl.3} parent=5 // pred_region
        %s4589 = ssub.s32 %s23, 2
        // Predicated region
        $region65: #{_residual_block_impl.3} parent=63 // pred_check
          %p4590 = pneg %p141
        $region66: #{_residual_block_impl.3} parent=63 // pred_check_branch
          %4592 = sbr.rel (%p4590) target = $region68
        $region67: #{_residual_block_impl.3} parent=63 // pred_region
          %s4593 = sand.u32 %s126, 1
          %s4594 = scalar_lea.sflag [#allocation4], %s4593
          %s4595 = sand.u32 %s126, 1
          %s4596 = smul.addr %s4595, 288
          %s4597 = scalar_lea.vmem [#allocation10], %s4596
          %4598 = dma.done %s4594, 4608
        $region68: #{_residual_block_impl.3} parent=63 // pred_fallthru
          _
        // Predicated region
        $region69: #{_residual_block_impl.3} parent=63 // pred_check
          %p4599 = pneg %p167
        $region70: #{_residual_block_impl.3} parent=63 // pred_check_branch
          %4601 = sbr.rel (%p4599) target = $region72
        $region71: #{_residual_block_impl.3} parent=63 // pred_region
          %s4602 = sand.u32 %s152, 1
          %s4603 = scalar_lea.sflag [#allocation12], %s4602
          %s4604 = sand.u32 %s152, 1
          %s4605 = smul.addr %s4604, 2
          %s4606 = scalar_lea.vmem [#allocation11], %s4605
          %4607 = dma.done %s4603, 32
        $region72: #{_residual_block_impl.3} parent=63 // pred_fallthru
          _
      $region64: #{_residual_block_impl.3} parent=5 // pred_fallthru
        _
    $region6: #{_residual_block_impl.3} parent=1 // loop_footer
      %s27 = sadd.s32 1, %s23
    $region7: #{_residual_block_impl.3} parent=1 // loop_footer_branch
      %22 = sbr.rel target = $region3
    $region8: #{_residual_block_impl.3} parent=1 // loop_exit
      _
    %4608 = vsyncpa [#allocation3], 1
    %s4609 = scalar_lea.sflag [#allocation3], 1
    %4610 = vsyncpa %s4609, 1
    %4611 = vsyncpa [#allocation6], 1
    %4612 = vsyncpa [#allocation9], 1
    %4613 = vsyncpa [#allocation4], 1
    %s4614 = scalar_lea.sflag [#allocation4], 1
    %4615 = vsyncpa %s4614, 1
    %4616 = vsyncpa [#allocation12], 1
    %s4617 = scalar_lea.sflag [#allocation12], 1
    %4618 = vsyncpa %s4617, 1

</llo_original>
